<compile_context>
chip_gen: v7x
topology: tpu7x:2x2x1
jax: 0.10.0
libtpu: 0.0.40
codegen_flags: <defaults>
</compile_context>

<pallas_src>
import functools

import jax
import jax.numpy as jnp
from jax.experimental import pallas as pl
from jax.experimental.pallas import tpu as pltpu


# -----------------------------------------------------------------------------
# Fused  W(Cout,K) @ X(K,M) + shift  [+ LeakyReLU]   Pallas kernel (lane-dense)
# -----------------------------------------------------------------------------
def _fused_matmul_kernel(x_ref, w_ref, shift_ref, o_ref, *, leaky, slope):
    # bf16 operands, f32 accumulation on the MXU.
    acc = jax.lax.dot_general(
        w_ref[...], x_ref[...],
        dimension_numbers=(((1,), (0,)), ((), ())),
        preferred_element_type=jnp.float32)
    y = acc + shift_ref[...]                       # (Cout, 1) broadcast over lanes
    if leaky:
        y = jnp.where(y > 0, y, slope * y)
    o_ref[...] = y.astype(o_ref.dtype)


def _pick_row_tile(m, cap=4096):
    """Lane-axis (minor) tile: multiple of 128 that divides M, kept <= cap to
    bound VMEM, and chosen so that large layers still get >= 2 grid steps
    (keeps both v7x TensorCores busy via the 'parallel' grid axis)."""
    if m % 256 != 0:
        return m                                   # tiny axis — take it whole
    tm = min(cap, m // 2)
    tm = max(128, (tm // 128) * 128)
    while m % tm:
        tm -= 128
    return tm


def fused_matmul_t(x_t, w, shift, *, leaky, slope=0.01, out_dtype=jnp.bfloat16):
    """out(Cout, M) = [leakyrelu]( W(Cout,K) @ X(K,M) + shift(Cout,1) ).

    X is the (already transposed) im2col / feature matrix with the pixel axis on
    the lanes; the output is lane-dense regardless of how small Cout is.
    """
    K, M = x_t.shape
    Cout, K2 = w.shape
    assert K == K2
    tm = _pick_row_tile(M)
    grid = (M // tm,)

    kernel = functools.partial(_fused_matmul_kernel, leaky=leaky, slope=slope)
    return pl.pallas_call(
        kernel,
        out_shape=jax.ShapeDtypeStruct((Cout, M), out_dtype),
        grid=grid,
        in_specs=[
            pl.BlockSpec((K, tm), lambda i: (0, i)),      # X tile (lanes = pixels)
            pl.BlockSpec((Cout, K), lambda i: (0, 0)),    # weights, resident
            pl.BlockSpec((Cout, 1), lambda i: (0, 0)),    # per-channel shift
        ],
        out_specs=pl.BlockSpec((Cout, tm), lambda i: (0, i)),
        compiler_params=pltpu.CompilerParams(
            dimension_semantics=("parallel",)),
    )(x_t.astype(jnp.bfloat16), w.astype(jnp.bfloat16),
      shift.reshape(Cout, 1).astype(jnp.float32))


# -----------------------------------------------------------------------------
# Transposed im2col for kernel=4, stride=2, padding=1 (pure data rearrangement,
# kept in bf16 and in (K, M) channel-major form so the kernel reads it directly)
# -----------------------------------------------------------------------------
def im2col_t_4s2p1(x_cm):
    """x_cm: channel-major activation (C, N, H, W) -> cols_T (16*C, N*Ho*Wo)."""
    C, N, H, W = x_cm.shape
    Ho, Wo = H // 2, W // 2
    xp = jnp.pad(x_cm, ((0, 0), (0, 0), (1, 1), (1, 1)))
    taps = []
    for dy in range(4):
        for dx in range(4):
            taps.append(xp[:, :, dy:dy + 2 * Ho:2, dx:dx + 2 * Wo:2])
    cols = jnp.stack(taps, axis=0)                  # (16, C, N, Ho, Wo)
    return cols.reshape(16 * C, N * Ho * Wo), (N, Ho, Wo)


def conv_bn_lrelu(x_cm, wm, shift):
    """4x4/s2/p1 conv + BN(inference, scale pre-folded into wm) + LeakyReLU."""
    cols_t, (N, Ho, Wo) = im2col_t_4s2p1(x_cm)
    out = fused_matmul_t(cols_t, wm, shift, leaky=True)      # (Cout, N*Ho*Wo)
    return out.reshape(wm.shape[0], N, Ho, Wo)               # channel-major


# -----------------------------------------------------------------------------
# Parameter construction (PyTorch-shaped) and one-time folding / packing
# -----------------------------------------------------------------------------
def init_params(key, input_channels, channels, latent_size):
    def conv_block(key, cin, cout):
        k1, k2, k3, k4, k5, k6 = jax.random.split(key, 6)
        w = 0.05 * jax.random.normal(k1, (cout, cin, 4, 4), jnp.float32)
        b = 0.01 * jax.random.normal(k2, (cout,), jnp.float32)
        gamma = 1.0 + 0.05 * jax.random.normal(k3, (cout,), jnp.float32)
        beta = 0.01 * jax.random.normal(k4, (cout,), jnp.float32)
        rmean = 0.01 * jax.random.normal(k5, (cout,), jnp.float32)
        rvar = 1.0 + 0.1 * jnp.abs(jax.random.normal(k6, (cout,), jnp.float32))
        return (w, b, gamma, beta, rmean, rvar)

    keys = jax.random.split(key, 7)
    c = channels
    params = {
        "conv1": conv_block(keys[0], input_channels, c),
        "conv2": conv_block(keys[1], c, 2 * c),
        "conv3": conv_block(keys[2], 2 * c, 4 * c),
        "conv4": conv_block(keys[3], 4 * c, 8 * c),
        "conv5": conv_block(keys[4], 8 * c, 8 * c),
    }
    fc_in = c * 8 * 8 * 8
    k1, k2 = jax.random.split(keys[5])
    params["fc1_w"] = 0.02 * jax.random.normal(k1, (latent_size, fc_in), jnp.float32)
    params["fc1_b"] = 0.01 * jax.random.normal(k2, (latent_size,), jnp.float32)
    k1, k2 = jax.random.split(keys[6])
    params["fc2_w"] = 0.02 * jax.random.normal(k1, (latent_size, fc_in), jnp.float32)
    params["fc2_b"] = 0.01 * jax.random.normal(k2, (latent_size,), jnp.float32)
    return params


def prepare_params(params, eps=1e-5):
    """One-time (outside the hot path): fold BN scale into the conv weight
    matrix, pack weights as (Cout, K) bf16, merge the two FC heads."""
    prepped = {}
    for name in ("conv1", "conv2", "conv3", "conv4", "conv5"):
        w, b, gamma, beta, rmean, rvar = params[name]
        cout, cin = w.shape[0], w.shape[1]
        scale = gamma / jnp.sqrt(rvar + eps)
        # (Cout, Cin, 4, 4) -> (Cout, 16*Cin) with K ordered (dy, dx, ci),
        # matching im2col_t_4s2p1's tap-major / channel-minor K ordering.
        wm = jnp.transpose(w, (0, 2, 3, 1)).reshape(cout, 16 * cin)
        wm = (wm * scale[:, None]).astype(jnp.bfloat16)       # BN scale folded in
        shift = ((b - rmean) * scale + beta).astype(jnp.float32)
        prepped[name] = (wm, shift)
    # merged FC heads: (2*latent, fc_in), single matmul, split afterwards
    w_fc = jnp.concatenate([params["fc1_w"], params["fc2_w"]], axis=0)
    b_fc = jnp.concatenate([params["fc1_b"], params["fc2_b"]], axis=0)
    prepped["fc"] = (w_fc.astype(jnp.bfloat16), b_fc.astype(jnp.float32))
    return prepped


# -----------------------------------------------------------------------------
# Forward pass (mirrors Aleatoric_Uncertainty_Estimation_Module_Post.forward)
# -----------------------------------------------------------------------------
def forward(prepped, x_nchw):
    # NCHW -> channel-major (C, N, H, W); bf16 for the HBM-read-bound X path.
    x_cm = jnp.transpose(x_nchw, (1, 0, 2, 3)).astype(jnp.bfloat16)
    for name in ("conv1", "conv2", "conv3", "conv4", "conv5"):
        wm, shift = prepped[name]
        x_cm = conv_bn_lrelu(x_cm, wm, shift)                 # (C, N, H/2, W/2)

    # PyTorch's output.view(-1, C*8*8): per-sample flatten in (c, h, w) order.
    C5, N, Ho, Wo = x_cm.shape
    flat_t = jnp.transpose(x_cm, (0, 2, 3, 1)).reshape(C5 * Ho * Wo, N)

    w_fc, b_fc = prepped["fc"]
    fc_out = fused_matmul_t(flat_t, w_fc, b_fc, leaky=False,
                            out_dtype=jnp.float32)            # (2*latent, N)
    latent = fc_out.shape[0] // 2
    mu = fc_out[:latent].T
    logvar = fc_out[latent:].T
    # dist = Independent(Normal(loc=mu, scale=exp(logvar)), 1)  — spec uses
    # exp(logvar) (not exp(0.5*logvar)), so we match it exactly.
    return mu, logvar, (mu, jnp.exp(logvar))


if __name__ == "__main__":
    # The fc layers require the five stride-2 convs to end at 8x8 spatial, so
    # the spatial input must be 256x256. Keep batch / channels / latent small.
    batch = 2
    input_channels = 3
    channels = 4
    latent_size = 8

    key = jax.random.PRNGKey(0)
    k_inp, k_par = jax.random.split(key)
    x = jax.random.normal(k_inp, (batch, input_channels, 256, 256), jnp.float32)

    params = init_params(k_par, input_channels, channels, latent_size)
    prepped = prepare_params(params)

    fwd = jax.jit(forward)
    mu, logvar, (loc, scale) = fwd(prepped, x)
    jax.block_until_ready((mu, logvar, loc, scale))

    assert mu.shape == (batch, latent_size)
    assert logvar.shape == (batch, latent_size)
    assert loc.shape == (batch, latent_size)
    assert scale.shape == (batch, latent_size)
    assert bool(jnp.all(jnp.isfinite(mu))) and bool(jnp.all(jnp.isfinite(logvar)))
    assert bool(jnp.all(jnp.isfinite(scale)))
    print("KERNEL_OK")
</pallas_src>

<mosaic_0001>
module attributes {stable_mosaic.version = 11 : i64} {
  func.func @_fused_matmul_kernel(%arg0: i32, %arg1: memref<48x4096xbf16, #tpu.memory_space<vmem>>, %arg2: memref<4x48xbf16, #tpu.memory_space<vmem>>, %arg3: memref<4x1xf32, #tpu.memory_space<vmem>>, %arg4: memref<4x4096xbf16, #tpu.memory_space<vmem>>) attributes {dimension_semantics = [#tpu.dimension_semantics<parallel>], iteration_bounds = array<i64: 8>, scalar_prefetch = 0 : i64, scratch_operands = 0 : i64, tpu.core_type = #tpu.core_type<tc>, window_params = [{transform_indices = @transform_0, window_bounds = array<i64: 48, 4096>}, {pipeline_mode = #tpu.pipeline_mode<synchronous>, transform_indices = @transform_1, window_bounds = array<i64: 4, 48>}, {pipeline_mode = #tpu.pipeline_mode<synchronous>, transform_indices = @transform_2, window_bounds = array<i64: 4, 1>}, {transform_indices = @transform_3, window_bounds = array<i64: 4, 4096>}]} {
    %c0 = arith.constant 0 : index
    %c0_0 = arith.constant 0 : index
    %0 = vector.load %arg2[%c0, %c0_0] : memref<4x48xbf16, #tpu.memory_space<vmem>>, vector<4x48xbf16>
    %c0_1 = arith.constant 0 : index
    %c0_2 = arith.constant 0 : index
    %1 = vector.load %arg1[%c0_1, %c0_2] : memref<48x4096xbf16, #tpu.memory_space<vmem>>, vector<48x4096xbf16>
    %cst = arith.constant dense<0.000000e+00> : vector<4x4096xf32>
    %2 = tpu.matmul %0, %1, %cst {dimension_numbers = #tpu.dot_dimension_numbers<[1], [0], [0], [1], [0, 0, 1, 1], [], []>} : vector<4x48xbf16>, vector<48x4096xbf16>, vector<4x4096xf32> -> vector<4x4096xf32>
    %c0_3 = arith.constant 0 : index
    %c0_4 = arith.constant 0 : index
    %3 = vector.load %arg3[%c0_3, %c0_4] : memref<4x1xf32, #tpu.memory_space<vmem>>, vector<4x1xf32>
    %4 = vector.broadcast %3 : vector<4x1xf32> to vector<4x4096xf32>
    %5 = arith.addf %2, %4 : vector<4x4096xf32>
    %cst_5 = arith.constant 0.000000e+00 : f32
    %6 = vector.broadcast %cst_5 : f32 to vector<4x4096xf32>
    %7 = arith.cmpf ogt, %5, %6 : vector<4x4096xf32>
    %cst_6 = arith.constant 0.00999999977 : f32
    %8 = vector.broadcast %cst_6 : f32 to vector<4x4096xf32>
    %9 = arith.mulf %8, %5 : vector<4x4096xf32>
    %10 = arith.select %7, %5, %9 : vector<4x4096xi1>, vector<4x4096xf32>
    %11 = arith.truncf %10 : vector<4x4096xf32> to vector<4x4096xbf16>
    %c0_7 = arith.constant 0 : index
    %c0_8 = arith.constant 0 : index
    %12 = vector.load %arg4[%c0_7, %c0_8] : memref<4x4096xbf16, #tpu.memory_space<vmem>>, vector<4x4096xbf16>
    tpu.vector_store %arg4[%c0_7, %c0_8], %11 {strides = array<i32>} : memref<4x4096xbf16, #tpu.memory_space<vmem>>, vector<4x4096xbf16>,
    return
  }
  func.func @transform_0(%arg0: i32) -> (i32, i32) {
    %c0_i32 = arith.constant 0 : i32
    %c0_i32_0 = arith.constant 0 : i32
    return %c0_i32, %arg0 : i32, i32
  }
  func.func @transform_1(%arg0: i32) -> (i32, i32) {
    %c0_i32 = arith.constant 0 : i32
    %c0_i32_0 = arith.constant 0 : i32
    %c0_i32_1 = arith.constant 0 : i32
    return %c0_i32, %c0_i32_0 : i32, i32
  }
  func.func @transform_2(%arg0: i32) -> (i32, i32) {
    %c0_i32 = arith.constant 0 : i32
    %c0_i32_0 = arith.constant 0 : i32
    %c0_i32_1 = arith.constant 0 : i32
    return %c0_i32, %c0_i32_0 : i32, i32
  }
  func.func @transform_3(%arg0: i32) -> (i32, i32) {
    %c0_i32 = arith.constant 0 : i32
    %c0_i32_0 = arith.constant 0 : i32
    return %c0_i32, %arg0 : i32, i32
  }
}

module attributes {stable_mosaic.version = 11 : i64} {
  func.func @_fused_matmul_kernel(%arg0: i32, %arg1: memref<64x4096xbf16, #tpu.memory_space<vmem>>, %arg2: memref<8x64xbf16, #tpu.memory_space<vmem>>, %arg3: memref<8x1xf32, #tpu.memory_space<vmem>>, %arg4: memref<8x4096xbf16, #tpu.memory_space<vmem>>) attributes {dimension_semantics = [#tpu.dimension_semantics<parallel>], iteration_bounds = array<i64: 2>, scalar_prefetch = 0 : i64, scratch_operands = 0 : i64, tpu.core_type = #tpu.core_type<tc>, window_params = [{transform_indices = @transform_0, window_bounds = array<i64: 64, 4096>}, {pipeline_mode = #tpu.pipeline_mode<synchronous>, transform_indices = @transform_1, window_bounds = array<i64: 8, 64>}, {pipeline_mode = #tpu.pipeline_mode<synchronous>, transform_indices = @transform_2, window_bounds = array<i64: 8, 1>}, {transform_indices = @transform_3, window_bounds = array<i64: 8, 4096>}]} {
    %c0 = arith.constant 0 : index
    %c0_0 = arith.constant 0 : index
    %0 = vector.load %arg2[%c0, %c0_0] : memref<8x64xbf16, #tpu.memory_space<vmem>>, vector<8x64xbf16>
    %c0_1 = arith.constant 0 : index
    %c0_2 = arith.constant 0 : index
    %1 = vector.load %arg1[%c0_1, %c0_2] : memref<64x4096xbf16, #tpu.memory_space<vmem>>, vector<64x4096xbf16>
    %cst = arith.constant dense<0.000000e+00> : vector<8x4096xf32>
    %2 = tpu.matmul %0, %1, %cst {dimension_numbers = #tpu.dot_dimension_numbers<[1], [0], [0], [1], [0, 0, 1, 1], [], []>} : vector<8x64xbf16>, vector<64x4096xbf16>, vector<8x4096xf32> -> vector<8x4096xf32>
    %c0_3 = arith.constant 0 : index
    %c0_4 = arith.constant 0 : index
    %3 = vector.load %arg3[%c0_3, %c0_4] : memref<8x1xf32, #tpu.memory_space<vmem>>, vector<8x1xf32>
    %4 = vector.broadcast %3 : vector<8x1xf32> to vector<8x4096xf32>
    %5 = arith.addf %2, %4 : vector<8x4096xf32>
    %cst_5 = arith.constant 0.000000e+00 : f32
    %6 = vector.broadcast %cst_5 : f32 to vector<8x4096xf32>
    %7 = arith.cmpf ogt, %5, %6 : vector<8x4096xf32>
    %cst_6 = arith.constant 0.00999999977 : f32
    %8 = vector.broadcast %cst_6 : f32 to vector<8x4096xf32>
    %9 = arith.mulf %8, %5 : vector<8x4096xf32>
    %10 = arith.select %7, %5, %9 : vector<8x4096xi1>, vector<8x4096xf32>
    %11 = arith.truncf %10 : vector<8x4096xf32> to vector<8x4096xbf16>
    %c0_7 = arith.constant 0 : index
    %c0_8 = arith.constant 0 : index
    %12 = vector.load %arg4[%c0_7, %c0_8] : memref<8x4096xbf16, #tpu.memory_space<vmem>>, vector<8x4096xbf16>
    tpu.vector_store %arg4[%c0_7, %c0_8], %11 {strides = array<i32>} : memref<8x4096xbf16, #tpu.memory_space<vmem>>, vector<8x4096xbf16>,
    return
  }
  func.func @transform_0(%arg0: i32) -> (i32, i32) {
    %c0_i32 = arith.constant 0 : i32
    %c0_i32_0 = arith.constant 0 : i32
    return %c0_i32, %arg0 : i32, i32
  }
  func.func @transform_1(%arg0: i32) -> (i32, i32) {
    %c0_i32 = arith.constant 0 : i32
    %c0_i32_0 = arith.constant 0 : i32
    %c0_i32_1 = arith.constant 0 : i32
    return %c0_i32, %c0_i32_0 : i32, i32
  }
  func.func @transform_2(%arg0: i32) -> (i32, i32) {
    %c0_i32 = arith.constant 0 : i32
    %c0_i32_0 = arith.constant 0 : i32
    %c0_i32_1 = arith.constant 0 : i32
    return %c0_i32, %c0_i32_0 : i32, i32
  }
  func.func @transform_3(%arg0: i32) -> (i32, i32) {
    %c0_i32 = arith.constant 0 : i32
    %c0_i32_0 = arith.constant 0 : i32
    return %c0_i32, %arg0 : i32, i32
  }
}

module attributes {stable_mosaic.version = 11 : i64} {
  func.func @_fused_matmul_kernel(%arg0: i32, %arg1: memref<128x1024xbf16, #tpu.memory_space<vmem>>, %arg2: memref<16x128xbf16, #tpu.memory_space<vmem>>, %arg3: memref<16x1xf32, #tpu.memory_space<vmem>>, %arg4: memref<16x1024xbf16, #tpu.memory_space<vmem>>) attributes {dimension_semantics = [#tpu.dimension_semantics<parallel>], iteration_bounds = array<i64: 2>, scalar_prefetch = 0 : i64, scratch_operands = 0 : i64, tpu.core_type = #tpu.core_type<tc>, window_params = [{transform_indices = @transform_0, window_bounds = array<i64: 128, 1024>}, {pipeline_mode = #tpu.pipeline_mode<synchronous>, transform_indices = @transform_1, window_bounds = array<i64: 16, 128>}, {pipeline_mode = #tpu.pipeline_mode<synchronous>, transform_indices = @transform_2, window_bounds = array<i64: 16, 1>}, {transform_indices = @transform_3, window_bounds = array<i64: 16, 1024>}]} {
    %c0 = arith.constant 0 : index
    %c0_0 = arith.constant 0 : index
    %0 = vector.load %arg2[%c0, %c0_0] : memref<16x128xbf16, #tpu.memory_space<vmem>>, vector<16x128xbf16>
    %c0_1 = arith.constant 0 : index
    %c0_2 = arith.constant 0 : index
    %1 = vector.load %arg1[%c0_1, %c0_2] : memref<128x1024xbf16, #tpu.memory_space<vmem>>, vector<128x1024xbf16>
    %cst = arith.constant dense<0.000000e+00> : vector<16x1024xf32>
    %2 = tpu.matmul %0, %1, %cst {dimension_numbers = #tpu.dot_dimension_numbers<[1], [0], [0], [1], [0, 0, 1, 1], [], []>} : vector<16x128xbf16>, vector<128x1024xbf16>, vector<16x1024xf32> -> vector<16x1024xf32>
    %c0_3 = arith.constant 0 : index
    %c0_4 = arith.constant 0 : index
    %3 = vector.load %arg3[%c0_3, %c0_4] : memref<16x1xf32, #tpu.memory_space<vmem>>, vector<16x1xf32>
    %4 = vector.broadcast %3 : vector<16x1xf32> to vector<16x1024xf32>
    %5 = arith.addf %2, %4 : vector<16x1024xf32>
    %cst_5 = arith.constant 0.000000e+00 : f32
    %6 = vector.broadcast %cst_5 : f32 to vector<16x1024xf32>
    %7 = arith.cmpf ogt, %5, %6 : vector<16x1024xf32>
    %cst_6 = arith.constant 0.00999999977 : f32
    %8 = vector.broadcast %cst_6 : f32 to vector<16x1024xf32>
    %9 = arith.mulf %8, %5 : vector<16x1024xf32>
    %10 = arith.select %7, %5, %9 : vector<16x1024xi1>, vector<16x1024xf32>
    %11 = arith.truncf %10 : vector<16x1024xf32> to vector<16x1024xbf16>
    %c0_7 = arith.constant 0 : index
    %c0_8 = arith.constant 0 : index
    %12 = vector.load %arg4[%c0_7, %c0_8] : memref<16x1024xbf16, #tpu.memory_space<vmem>>, vector<16x1024xbf16>
    tpu.vector_store %arg4[%c0_7, %c0_8], %11 {strides = array<i32>} : memref<16x1024xbf16, #tpu.memory_space<vmem>>, vector<16x1024xbf16>,
    return
  }
  func.func @transform_0(%arg0: i32) -> (i32, i32) {
    %c0_i32 = arith.constant 0 : i32
    %c0_i32_0 = arith.constant 0 : i32
    return %c0_i32, %arg0 : i32, i32
  }
  func.func @transform_1(%arg0: i32) -> (i32, i32) {
    %c0_i32 = arith.constant 0 : i32
    %c0_i32_0 = arith.constant 0 : i32
    %c0_i32_1 = arith.constant 0 : i32
    return %c0_i32, %c0_i32_0 : i32, i32
  }
  func.func @transform_2(%arg0: i32) -> (i32, i32) {
    %c0_i32 = arith.constant 0 : i32
    %c0_i32_0 = arith.constant 0 : i32
    %c0_i32_1 = arith.constant 0 : i32
    return %c0_i32, %c0_i32_0 : i32, i32
  }
  func.func @transform_3(%arg0: i32) -> (i32, i32) {
    %c0_i32 = arith.constant 0 : i32
    %c0_i32_0 = arith.constant 0 : i32
    return %c0_i32, %arg0 : i32, i32
  }
}

module attributes {stable_mosaic.version = 11 : i64} {
  func.func @_fused_matmul_kernel(%arg0: i32, %arg1: memref<256x256xbf16, #tpu.memory_space<vmem>>, %arg2: memref<32x256xbf16, #tpu.memory_space<vmem>>, %arg3: memref<32x1xf32, #tpu.memory_space<vmem>>, %arg4: memref<32x256xbf16, #tpu.memory_space<vmem>>) attributes {dimension_semantics = [#tpu.dimension_semantics<parallel>], iteration_bounds = array<i64: 2>, scalar_prefetch = 0 : i64, scratch_operands = 0 : i64, tpu.core_type = #tpu.core_type<tc>, window_params = [{transform_indices = @transform_0, window_bounds = array<i64: 256, 256>}, {pipeline_mode = #tpu.pipeline_mode<synchronous>, transform_indices = @transform_1, window_bounds = array<i64: 32, 256>}, {pipeline_mode = #tpu.pipeline_mode<synchronous>, transform_indices = @transform_2, window_bounds = array<i64: 32, 1>}, {transform_indices = @transform_3, window_bounds = array<i64: 32, 256>}]} {
    %c0 = arith.constant 0 : index
    %c0_0 = arith.constant 0 : index
    %0 = vector.load %arg2[%c0, %c0_0] : memref<32x256xbf16, #tpu.memory_space<vmem>>, vector<32x256xbf16>
    %c0_1 = arith.constant 0 : index
    %c0_2 = arith.constant 0 : index
    %1 = vector.load %arg1[%c0_1, %c0_2] : memref<256x256xbf16, #tpu.memory_space<vmem>>, vector<256x256xbf16>
    %cst = arith.constant dense<0.000000e+00> : vector<32x256xf32>
    %2 = tpu.matmul %0, %1, %cst {dimension_numbers = #tpu.dot_dimension_numbers<[1], [0], [0], [1], [0, 0, 1, 1], [], []>} : vector<32x256xbf16>, vector<256x256xbf16>, vector<32x256xf32> -> vector<32x256xf32>
    %c0_3 = arith.constant 0 : index
    %c0_4 = arith.constant 0 : index
    %3 = vector.load %arg3[%c0_3, %c0_4] : memref<32x1xf32, #tpu.memory_space<vmem>>, vector<32x1xf32>
    %4 = vector.broadcast %3 : vector<32x1xf32> to vector<32x256xf32>
    %5 = arith.addf %2, %4 : vector<32x256xf32>
    %cst_5 = arith.constant 0.000000e+00 : f32
    %6 = vector.broadcast %cst_5 : f32 to vector<32x256xf32>
    %7 = arith.cmpf ogt, %5, %6 : vector<32x256xf32>
    %cst_6 = arith.constant 0.00999999977 : f32
    %8 = vector.broadcast %cst_6 : f32 to vector<32x256xf32>
    %9 = arith.mulf %8, %5 : vector<32x256xf32>
    %10 = arith.select %7, %5, %9 : vector<32x256xi1>, vector<32x256xf32>
    %11 = arith.truncf %10 : vector<32x256xf32> to vector<32x256xbf16>
    %c0_7 = arith.constant 0 : index
    %c0_8 = arith.constant 0 : index
    %12 = vector.load %arg4[%c0_7, %c0_8] : memref<32x256xbf16, #tpu.memory_space<vmem>>, vector<32x256xbf16>
    tpu.vector_store %arg4[%c0_7, %c0_8], %11 {strides = array<i32>} : memref<32x256xbf16, #tpu.memory_space<vmem>>, vector<32x256xbf16>,
    return
  }
  func.func @transform_0(%arg0: i32) -> (i32, i32) {
    %c0_i32 = arith.constant 0 : i32
    %c0_i32_0 = arith.constant 0 : i32
    return %c0_i32, %arg0 : i32, i32
  }
  func.func @transform_1(%arg0: i32) -> (i32, i32) {
    %c0_i32 = arith.constant 0 : i32
    %c0_i32_0 = arith.constant 0 : i32
    %c0_i32_1 = arith.constant 0 : i32
    return %c0_i32, %c0_i32_0 : i32, i32
  }
  func.func @transform_2(%arg0: i32) -> (i32, i32) {
    %c0_i32 = arith.constant 0 : i32
    %c0_i32_0 = arith.constant 0 : i32
    %c0_i32_1 = arith.constant 0 : i32
    return %c0_i32, %c0_i32_0 : i32, i32
  }
  func.func @transform_3(%arg0: i32) -> (i32, i32) {
    %c0_i32 = arith.constant 0 : i32
    %c0_i32_0 = arith.constant 0 : i32
    return %c0_i32, %arg0 : i32, i32
  }
}

module attributes {stable_mosaic.version = 11 : i64} {
  func.func @_fused_matmul_kernel(%arg0: i32, %arg1: memref<512x128xbf16, #tpu.memory_space<vmem>>, %arg2: memref<32x512xbf16, #tpu.memory_space<vmem>>, %arg3: memref<32x1xf32, #tpu.memory_space<vmem>>, %arg4: memref<32x128xbf16, #tpu.memory_space<vmem>>) attributes {dimension_semantics = [#tpu.dimension_semantics<parallel>], iteration_bounds = array<i64: 1>, scalar_prefetch = 0 : i64, scratch_operands = 0 : i64, tpu.core_type = #tpu.core_type<tc>, window_params = [{transform_indices = @transform_0, window_bounds = array<i64: 512, 128>}, {pipeline_mode = #tpu.pipeline_mode<synchronous>, transform_indices = @transform_1, window_bounds = array<i64: 32, 512>}, {pipeline_mode = #tpu.pipeline_mode<synchronous>, transform_indices = @transform_2, window_bounds = array<i64: 32, 1>}, {transform_indices = @transform_3, window_bounds = array<i64: 32, 128>}]} {
    %c0 = arith.constant 0 : index
    %c0_0 = arith.constant 0 : index
    %0 = vector.load %arg2[%c0, %c0_0] : memref<32x512xbf16, #tpu.memory_space<vmem>>, vector<32x512xbf16>
    %c0_1 = arith.constant 0 : index
    %c0_2 = arith.constant 0 : index
    %1 = vector.load %arg1[%c0_1, %c0_2] : memref<512x128xbf16, #tpu.memory_space<vmem>>, vector<512x128xbf16>
    %cst = arith.constant dense<0.000000e+00> : vector<32x128xf32>
    %2 = tpu.matmul %0, %1, %cst {dimension_numbers = #tpu.dot_dimension_numbers<[1], [0], [0], [1], [0, 0, 1, 1], [], []>} : vector<32x512xbf16>, vector<512x128xbf16>, vector<32x128xf32> -> vector<32x128xf32>
    %c0_3 = arith.constant 0 : index
    %c0_4 = arith.constant 0 : index
    %3 = vector.load %arg3[%c0_3, %c0_4] : memref<32x1xf32, #tpu.memory_space<vmem>>, vector<32x1xf32>
    %4 = vector.broadcast %3 : vector<32x1xf32> to vector<32x128xf32>
    %5 = arith.addf %2, %4 : vector<32x128xf32>
    %cst_5 = arith.constant 0.000000e+00 : f32
    %6 = vector.broadcast %cst_5 : f32 to vector<32x128xf32>
    %7 = arith.cmpf ogt, %5, %6 : vector<32x128xf32>
    %cst_6 = arith.constant 0.00999999977 : f32
    %8 = vector.broadcast %cst_6 : f32 to vector<32x128xf32>
    %9 = arith.mulf %8, %5 : vector<32x128xf32>
    %10 = arith.select %7, %5, %9 : vector<32x128xi1>, vector<32x128xf32>
    %11 = arith.truncf %10 : vector<32x128xf32> to vector<32x128xbf16>
    %c0_7 = arith.constant 0 : index
    %c0_8 = arith.constant 0 : index
    %12 = vector.load %arg4[%c0_7, %c0_8] : memref<32x128xbf16, #tpu.memory_space<vmem>>, vector<32x128xbf16>
    tpu.vector_store %arg4[%c0_7, %c0_8], %11 {strides = array<i32>} : memref<32x128xbf16, #tpu.memory_space<vmem>>, vector<32x128xbf16>,
    return
  }
  func.func @transform_0(%arg0: i32) -> (i32, i32) {
    %c0_i32 = arith.constant 0 : i32
    %c0_i32_0 = arith.constant 0 : i32
    return %c0_i32, %arg0 : i32, i32
  }
  func.func @transform_1(%arg0: i32) -> (i32, i32) {
    %c0_i32 = arith.constant 0 : i32
    %c0_i32_0 = arith.constant 0 : i32
    %c0_i32_1 = arith.constant 0 : i32
    return %c0_i32, %c0_i32_0 : i32, i32
  }
  func.func @transform_2(%arg0: i32) -> (i32, i32) {
    %c0_i32 = arith.constant 0 : i32
    %c0_i32_0 = arith.constant 0 : i32
    %c0_i32_1 = arith.constant 0 : i32
    return %c0_i32, %c0_i32_0 : i32, i32
  }
  func.func @transform_3(%arg0: i32) -> (i32, i32) {
    %c0_i32 = arith.constant 0 : i32
    %c0_i32_0 = arith.constant 0 : i32
    return %c0_i32, %arg0 : i32, i32
  }
}

module attributes {stable_mosaic.version = 11 : i64} {
  func.func @_fused_matmul_kernel(%arg0: i32, %arg1: memref<2048x2xbf16, #tpu.memory_space<vmem>>, %arg2: memref<16x2048xbf16, #tpu.memory_space<vmem>>, %arg3: memref<16x1xf32, #tpu.memory_space<vmem>>, %arg4: memref<16x2xf32, #tpu.memory_space<vmem>>) attributes {dimension_semantics = [#tpu.dimension_semantics<parallel>], iteration_bounds = array<i64: 1>, scalar_prefetch = 0 : i64, scratch_operands = 0 : i64, tpu.core_type = #tpu.core_type<tc>, window_params = [{transform_indices = @transform_0, window_bounds = array<i64: 2048, 2>}, {pipeline_mode = #tpu.pipeline_mode<synchronous>, transform_indices = @transform_1, window_bounds = array<i64: 16, 2048>}, {pipeline_mode = #tpu.pipeline_mode<synchronous>, transform_indices = @transform_2, window_bounds = array<i64: 16, 1>}, {transform_indices = @transform_3, window_bounds = array<i64: 16, 2>}]} {
    %c0 = arith.constant 0 : index
    %c0_0 = arith.constant 0 : index
    %0 = vector.load %arg2[%c0, %c0_0] : memref<16x2048xbf16, #tpu.memory_space<vmem>>, vector<16x2048xbf16>
    %c0_1 = arith.constant 0 : index
    %c0_2 = arith.constant 0 : index
    %1 = vector.load %arg1[%c0_1, %c0_2] : memref<2048x2xbf16, #tpu.memory_space<vmem>>, vector<2048x2xbf16>
    %cst = arith.constant dense<0.000000e+00> : vector<16x2xf32>
    %2 = tpu.matmul %0, %1, %cst {dimension_numbers = #tpu.dot_dimension_numbers<[1], [0], [0], [1], [0, 0, 1, 1], [], []>} : vector<16x2048xbf16>, vector<2048x2xbf16>, vector<16x2xf32> -> vector<16x2xf32>
    %c0_3 = arith.constant 0 : index
    %c0_4 = arith.constant 0 : index
    %3 = vector.load %arg3[%c0_3, %c0_4] : memref<16x1xf32, #tpu.memory_space<vmem>>, vector<16x1xf32>
    %4 = vector.broadcast %3 : vector<16x1xf32> to vector<16x2xf32>
    %5 = arith.addf %2, %4 : vector<16x2xf32>
    %c0_5 = arith.constant 0 : index
    %c0_6 = arith.constant 0 : index
    %6 = vector.load %arg4[%c0_5, %c0_6] : memref<16x2xf32, #tpu.memory_space<vmem>>, vector<16x2xf32>
    tpu.vector_store %arg4[%c0_5, %c0_6], %5 {strides = array<i32>} : memref<16x2xf32, #tpu.memory_space<vmem>>, vector<16x2xf32>,
    return
  }
  func.func @transform_0(%arg0: i32) -> (i32, i32) {
    %c0_i32 = arith.constant 0 : i32
    %c0_i32_0 = arith.constant 0 : i32
    return %c0_i32, %arg0 : i32, i32
  }
  func.func @transform_1(%arg0: i32) -> (i32, i32) {
    %c0_i32 = arith.constant 0 : i32
    %c0_i32_0 = arith.constant 0 : i32
    %c0_i32_1 = arith.constant 0 : i32
    return %c0_i32, %c0_i32_0 : i32, i32
  }
  func.func @transform_2(%arg0: i32) -> (i32, i32) {
    %c0_i32 = arith.constant 0 : i32
    %c0_i32_0 = arith.constant 0 : i32
    %c0_i32_1 = arith.constant 0 : i32
    return %c0_i32, %c0_i32_0 : i32, i32
  }
  func.func @transform_3(%arg0: i32) -> (i32, i32) {
    %c0_i32 = arith.constant 0 : i32
    %c0_i32_0 = arith.constant 0 : i32
    return %c0_i32, %arg0 : i32, i32
  }
}

</mosaic_0001>

<llo_original>
// kernel: forward.6
$region0: #{forward.6}
  #allocation0 [shape = 'u32[]', space=smem, size = 0x4, offset = 0x4, fixed_abs, tag = 'smem constant byte address 0x4 - core index']
  #allocation1 [shape = 'u32[144,128]{1,0:T(1,128)}', space=vmem, size = 0x12000, scoped, tag = 'internal scratch']
  %s0 = inlined_call_operand.vmem [shape: bf16[48,32768], index: 0, kind: input, shape index: {}]
  %s1 = inlined_call_operand.vmem [shape: bf16[4,48], index: 1, kind: input, shape index: {}]
  %s2 = inlined_call_operand.vmem [shape: f32[4,1], index: 2, kind: input, shape index: {}]
  %s3 = inlined_call_operand.vmem [shape: bf16[4,32768], index: 3, kind: output, shape index: {}]
  %s4 = sld [smem:[#allocation0]]
  $region68: #{forward.6} parent=0
    _
  %s6 = ssub.s32 1, %s4
  %s7 = scalar_select 0, %s6, %s4
  $region1: #{forward.6} parent=0
    #allocation2 [shape = 'u8[786432]{0}', space=vmem, size = 0xc0000, scoped, tag = 'input window, operand 0']
    loop: start=0, step=1, limit=10
    $region2: #{forward.6} parent=1 // loop_pre_header
      _
    $region3: #{forward.6} parent=1 // loop_header
      %s9 = sphi 0, %s13
      %p10 = scmp.ge.s32.totalorder %s9, 10
      %s19 = sphi 0, %s21
      %s22 = sphi 0, %s19
      %s23 = sphi 0, %s22
      %s39 = sphi 0, %s23
      %s43 = sphi 0, %s43
      %s45 = sphi 0, %s43
      %s46 = sphi 0, %s45
      %s60 = sphi 0, %s46
      %s64 = sphi 0, %s64
      %s66 = sphi 0, %s64
      %s67 = sphi 0, %s66
      %s81 = sphi 0, %s67
      %s87 = sphi 0, %s89
      %s90 = sphi 0, %s87
      %s91 = sphi 0, %s90
      %s107 = sphi 0, %s91
    $region4: #{forward.6} parent=1 // loop_header_branch
      %12 = sbr.rel (%p10) target = $region8
    $region5: #{forward.6} parent=1 // loop_body
      %s14 = ssub.s32 %s9, 1
      %s15 = ssub.s32 %s9, 2
      %s16 = sadd.s32 %s9, 1
      %s17 = ssub.s32 %s9, %s16
      %p18 = scmp.eq.s32.totalorder %s17, 0
      %s20 = sadd.s32 %s19, 1
      %s21 = scalar_select %p18, %s19, %s20
      %p24 = pneg %p18
      %p25 = scmp.eq.s32.totalorder %s9, 7
      %p26 = por %p24, %p25
      %p27 = scmp.ne.s32.totalorder %s19, %s22
      %p28 = scmp.eq.s32.totalorder %s9, 0
      %p29 = por %p27, %p28
      %p30 = scmp.ne.s32.totalorder %s19, %s22
      %p31 = scmp.eq.s32.totalorder %s14, 7
      %p32 = por %p30, %p31
      %p33 = scmp.ne.s32.totalorder %s22, %s23
      %p34 = scmp.eq.s32.totalorder %s14, 0
      %p35 = por %p33, %p34
      %p36 = scmp.ne.s32.totalorder %s22, %s23
      %p37 = scmp.eq.s32.totalorder %s15, 7
      %p38 = por %p36, %p37
      %p40 = scmp.ne.s32.totalorder %s23, %s39
      %p41 = scmp.eq.s32.totalorder %s15, 0
      %p42 = por %p40, %p41
      %s44 = sadd.s32 %s43, 1
      %p47 = scmp.eq.s32.totalorder %s9, 7
      %p48 = scmp.ne.s32.totalorder %s43, %s45
      %p49 = scmp.eq.s32.totalorder %s9, 0
      %p50 = por %p48, %p49
      %p51 = scmp.ne.s32.totalorder %s43, %s45
      %p52 = scmp.eq.s32.totalorder %s14, 7
      %p53 = por %p51, %p52
      %p54 = scmp.ne.s32.totalorder %s45, %s46
      %p55 = scmp.eq.s32.totalorder %s14, 0
      %p56 = por %p54, %p55
      %p57 = scmp.ne.s32.totalorder %s45, %s46
      %p58 = scmp.eq.s32.totalorder %s15, 7
      %p59 = por %p57, %p58
      %p61 = scmp.ne.s32.totalorder %s46, %s60
      %p62 = scmp.eq.s32.totalorder %s15, 0
      %p63 = por %p61, %p62
      %s65 = sadd.s32 %s64, 1
      %p68 = scmp.eq.s32.totalorder %s9, 7
      %p69 = scmp.ne.s32.totalorder %s64, %s66
      %p70 = scmp.eq.s32.totalorder %s9, 0
      %p71 = por %p69, %p70
      %p72 = scmp.ne.s32.totalorder %s64, %s66
      %p73 = scmp.eq.s32.totalorder %s14, 7
      %p74 = por %p72, %p73
      %p75 = scmp.ne.s32.totalorder %s66, %s67
      %p76 = scmp.eq.s32.totalorder %s14, 0
      %p77 = por %p75, %p76
      %p78 = scmp.ne.s32.totalorder %s66, %s67
      %p79 = scmp.eq.s32.totalorder %s15, 7
      %p80 = por %p78, %p79
      %p82 = scmp.ne.s32.totalorder %s67, %s81
      %p83 = scmp.eq.s32.totalorder %s15, 0
      %p84 = por %p82, %p83
      %s85 = ssub.s32 %s9, %s16
      %p86 = scmp.eq.s32.totalorder %s85, 0
      %s88 = sadd.s32 %s87, 1
      %s89 = scalar_select %p86, %s87, %s88
      %p92 = pneg %p86
      %p93 = scmp.eq.s32.totalorder %s9, 7
      %p94 = por %p92, %p93
      %p95 = scmp.ne.s32.totalorder %s87, %s90
      %p96 = scmp.eq.s32.totalorder %s9, 0
      %p97 = por %p95, %p96
      %p98 = scmp.ne.s32.totalorder %s87, %s90
      %p99 = scmp.eq.s32.totalorder %s14, 7
      %p100 = por %p98, %p99
      %p101 = scmp.ne.s32.totalorder %s90, %s91
      %p102 = scmp.eq.s32.totalorder %s14, 0
      %p103 = por %p101, %p102
      %p104 = scmp.ne.s32.totalorder %s90, %s91
      %p105 = scmp.eq.s32.totalorder %s15, 7
      %p106 = por %p104, %p105
      %p108 = scmp.ne.s32.totalorder %s91, %s107
      %p109 = scmp.eq.s32.totalorder %s15, 0
      %p110 = por %p108, %p109
      %p111 = scmp.le.s32.totalorder 1, %s9
      %p112 = scmp.lt.s32.totalorder %s9, 9
      %p113 = pnand %p111, %p112
      %p114 = pneg %p113
      // Predicated region
      $region9: #{forward.6} parent=5 // pred_check
        _
      $region10: #{forward.6} parent=5 // pred_check_branch
        %116 = sbr.rel (%p113) target = $region12
      $region11: #{forward.6} parent=5 // pred_region
        %s117 = ssub.s32 %s9, 1
        // Predicated region
        $region13: #{forward.6} parent=11 // pred_check
          %p118 = pneg %p56
        $region14: #{forward.6} parent=11 // pred_check_branch
          %120 = sbr.rel (%p118) target = $region16
        $region15: #{forward.6} parent=11 // pred_region
          _
        $region16: #{forward.6} parent=11 // pred_fallthru
          _
        // Predicated region
        $region17: #{forward.6} parent=11 // pred_check
          %p121 = pneg %p77
        $region18: #{forward.6} parent=11 // pred_check_branch
          %123 = sbr.rel (%p121) target = $region20
        $region19: #{forward.6} parent=11 // pred_region
          _
        $region20: #{forward.6} parent=11 // pred_fallthru
          _
      $region12: #{forward.6} parent=5 // pred_fallthru
        _
      %p124 = scmp.lt.s32.totalorder %s9, 8
      // Predicated region
      $region21: #{forward.6} parent=5 // pred_check
        %p125 = pneg %p124
      $region22: #{forward.6} parent=5 // pred_check_branch
        %127 = sbr.rel (%p125) target = $region24
      $region23: #{forward.6} parent=5 // pred_region
        // Predicated region
        $region25: #{forward.6} parent=23 // pred_check
          %p128 = pneg %p29
        $region26: #{forward.6} parent=23 // pred_check_branch
          %130 = sbr.rel (%p128) target = $region28
        $region27: #{forward.6} parent=23 // pred_region
          %s131 = sand.u32 %s19, 1
          %s132 = sand.u32 %s19, 1
          %s133 = smul.addr %s132, 768
          %s134 = scalar_lea.vmem [#allocation2], %s133
          %s135 = smul.u32 32, %s9
          %s136 = smul.addr %s135, 4
          %s137 = scalar_lea.vmem %s0, %s136
          // Predicated region
          $region29: #{forward.6} parent=27 // pred_check
            _
          $region30: #{forward.6} parent=27 // pred_check_branch
            %139 = sbr.rel (0) target = $region32
          $region31: #{forward.6} parent=27 // pred_region
            // Predicated region
            $region33: #{forward.6} parent=31 // pred_check
              _
            $region34: #{forward.6} parent=31 // pred_check_branch
              %141 = sbr.rel (0) target = $region36
            $region35: #{forward.6} parent=31 // pred_region
              loop: start=0, step=1, limit=1
              $region37: #{forward.6} parent=35 // loop_pre_header
                _
              $region38: #{forward.6} parent=35 // loop_header
                %s143 = sphi 0, %s147
                %p144 = scmp.ge.s32.totalorder %s143, 1
                %s148 = sphi %s137, %s137
                %s149 = sphi %s134, %s134
              $region39: #{forward.6} parent=35 // loop_header_branch
                %146 = sbr.rel (%p144) target = $region43
              $region40: #{forward.6} parent=35 // loop_body
                %v150 = vld [vmem:[%s148] sm:$0xff]
                %151 = vst [vmem:[%s149] sm:$0xff] %v150
                %v152 = vld [vmem:[%s148 + $0x8] sm:$0xff]
                %153 = vst [vmem:[%s149 + $0x8] sm:$0xff] %v152
                %v154 = vld [vmem:[%s148 + $0x10] sm:$0xff]
                %155 = vst [vmem:[%s149 + $0x10] sm:$0xff] %v154
                %v156 = vld [vmem:[%s148 + $0x18] sm:$0xff]
                %157 = vst [vmem:[%s149 + $0x18] sm:$0xff] %v156
                %v158 = vld [vmem:[%s148 + $0x20] sm:$0xff]
                %159 = vst [vmem:[%s149 + $0x20] sm:$0xff] %v158
                %v160 = vld [vmem:[%s148 + $0x28] sm:$0xff]
                %161 = vst [vmem:[%s149 + $0x28] sm:$0xff] %v160
                %v162 = vld [vmem:[%s148 + $0x30] sm:$0xff]
                %163 = vst [vmem:[%s149 + $0x30] sm:$0xff] %v162
                %v164 = vld [vmem:[%s148 + $0x38] sm:$0xff]
                %165 = vst [vmem:[%s149 + $0x38] sm:$0xff] %v164
                %v166 = vld [vmem:[%s148 + $0x40] sm:$0xff]
                %167 = vst [vmem:[%s149 + $0x40] sm:$0xff] %v166
                %v168 = vld [vmem:[%s148 + $0x48] sm:$0xff]
                %169 = vst [vmem:[%s149 + $0x48] sm:$0xff] %v168
                %v170 = vld [vmem:[%s148 + $0x50] sm:$0xff]
                %171 = vst [vmem:[%s149 + $0x50] sm:$0xff] %v170
                %v172 = vld [vmem:[%s148 + $0x58] sm:$0xff]
                %173 = vst [vmem:[%s149 + $0x58] sm:$0xff] %v172
                %v174 = vld [vmem:[%s148 + $0x60] sm:$0xff]
                %175 = vst [vmem:[%s149 + $0x60] sm:$0xff] %v174
                %v176 = vld [vmem:[%s148 + $0x68] sm:$0xff]
                %177 = vst [vmem:[%s149 + $0x68] sm:$0xff] %v176
                %v178 = vld [vmem:[%s148 + $0x70] sm:$0xff]
                %179 = vst [vmem:[%s149 + $0x70] sm:$0xff] %v178
                %v180 = vld [vmem:[%s148 + $0x78] sm:$0xff]
                %181 = vst [vmem:[%s149 + $0x78] sm:$0xff] %v180
                %v182 = vld [vmem:[%s148 + $0x400] sm:$0xff]
                %183 = vst [vmem:[%s149 + $0x80] sm:$0xff] %v182
                %v184 = vld [vmem:[%s148 + $0x408] sm:$0xff]
                %185 = vst [vmem:[%s149 + $0x88] sm:$0xff] %v184
                %v186 = vld [vmem:[%s148 + $0x410] sm:$0xff]
                %187 = vst [vmem:[%s149 + $0x90] sm:$0xff] %v186
                %v188 = vld [vmem:[%s148 + $0x418] sm:$0xff]
                %189 = vst [vmem:[%s149 + $0x98] sm:$0xff] %v188
                %v190 = vld [vmem:[%s148 + $0x420] sm:$0xff]
                %191 = vst [vmem:[%s149 + $0xa0] sm:$0xff] %v190
                %v192 = vld [vmem:[%s148 + $0x428] sm:$0xff]
                %193 = vst [vmem:[%s149 + $0xa8] sm:$0xff] %v192
                %v194 = vld [vmem:[%s148 + $0x430] sm:$0xff]
                %195 = vst [vmem:[%s149 + $0xb0] sm:$0xff] %v194
                %v196 = vld [vmem:[%s148 + $0x438] sm:$0xff]
                %197 = vst [vmem:[%s149 + $0xb8] sm:$0xff] %v196
                %v198 = vld [vmem:[%s148 + $0x440] sm:$0xff]
                %199 = vst [vmem:[%s149 + $0xc0] sm:$0xff] %v198
                %v200 = vld [vmem:[%s148 + $0x448] sm:$0xff]
                %201 = vst [vmem:[%s149 + $0xc8] sm:$0xff] %v200
                %v202 = vld [vmem:[%s148 + $0x450] sm:$0xff]
                %203 = vst [vmem:[%s149 + $0xd0] sm:$0xff] %v202
                %v204 = vld [vmem:[%s148 + $0x458] sm:$0xff]
                %205 = vst [vmem:[%s149 + $0xd8] sm:$0xff] %v204
                %v206 = vld [vmem:[%s148 + $0x460] sm:$0xff]
                %207 = vst [vmem:[%s149 + $0xe0] sm:$0xff] %v206
                %v208 = vld [vmem:[%s148 + $0x468] sm:$0xff]
                %209 = vst [vmem:[%s149 + $0xe8] sm:$0xff] %v208
                %v210 = vld [vmem:[%s148 + $0x470] sm:$0xff]
                %211 = vst [vmem:[%s149 + $0xf0] sm:$0xff] %v210
                %v212 = vld [vmem:[%s148 + $0x478] sm:$0xff]
                %213 = vst [vmem:[%s149 + $0xf8] sm:$0xff] %v212
                %v214 = vld [vmem:[%s148 + $0x800] sm:$0xff]
                %215 = vst [vmem:[%s149 + $0x100] sm:$0xff] %v214
                %v216 = vld [vmem:[%s148 + $0x808] sm:$0xff]
                %217 = vst [vmem:[%s149 + $0x108] sm:$0xff] %v216
                %v218 = vld [vmem:[%s148 + $0x810] sm:$0xff]
                %219 = vst [vmem:[%s149 + $0x110] sm:$0xff] %v218
                %v220 = vld [vmem:[%s148 + $0x818] sm:$0xff]
                %221 = vst [vmem:[%s149 + $0x118] sm:$0xff] %v220
                %v222 = vld [vmem:[%s148 + $0x820] sm:$0xff]
                %223 = vst [vmem:[%s149 + $0x120] sm:$0xff] %v222
                %v224 = vld [vmem:[%s148 + $0x828] sm:$0xff]
                %225 = vst [vmem:[%s149 + $0x128] sm:$0xff] %v224
                %v226 = vld [vmem:[%s148 + $0x830] sm:$0xff]
                %227 = vst [vmem:[%s149 + $0x130] sm:$0xff] %v226
                %v228 = vld [vmem:[%s148 + $0x838] sm:$0xff]
                %229 = vst [vmem:[%s149 + $0x138] sm:$0xff] %v228
                %v230 = vld [vmem:[%s148 + $0x840] sm:$0xff]
                %231 = vst [vmem:[%s149 + $0x140] sm:$0xff] %v230
                %v232 = vld [vmem:[%s148 + $0x848] sm:$0xff]
                %233 = vst [vmem:[%s149 + $0x148] sm:$0xff] %v232
                %v234 = vld [vmem:[%s148 + $0x850] sm:$0xff]
                %235 = vst [vmem:[%s149 + $0x150] sm:$0xff] %v234
                %v236 = vld [vmem:[%s148 + $0x858] sm:$0xff]
                %237 = vst [vmem:[%s149 + $0x158] sm:$0xff] %v236
                %v238 = vld [vmem:[%s148 + $0x860] sm:$0xff]
                %239 = vst [vmem:[%s149 + $0x160] sm:$0xff] %v238
                %v240 = vld [vmem:[%s148 + $0x868] sm:$0xff]
                %241 = vst [vmem:[%s149 + $0x168] sm:$0xff] %v240
                %v242 = vld [vmem:[%s148 + $0x870] sm:$0xff]
                %243 = vst [vmem:[%s149 + $0x170] sm:$0xff] %v242
                %v244 = vld [vmem:[%s148 + $0x878] sm:$0xff]
                %245 = vst [vmem:[%s149 + $0x178] sm:$0xff] %v244
                %v246 = vld [vmem:[%s148 + $0xc00] sm:$0xff]
                %247 = vst [vmem:[%s149 + $0x180] sm:$0xff] %v246
                %v248 = vld [vmem:[%s148 + $0xc08] sm:$0xff]
                %249 = vst [vmem:[%s149 + $0x188] sm:$0xff] %v248
                %v250 = vld [vmem:[%s148 + $0xc10] sm:$0xff]
                %251 = vst [vmem:[%s149 + $0x190] sm:$0xff] %v250
                %v252 = vld [vmem:[%s148 + $0xc18] sm:$0xff]
                %253 = vst [vmem:[%s149 + $0x198] sm:$0xff] %v252
                %v254 = vld [vmem:[%s148 + $0xc20] sm:$0xff]
                %255 = vst [vmem:[%s149 + $0x1a0] sm:$0xff] %v254
                %v256 = vld [vmem:[%s148 + $0xc28] sm:$0xff]
                %257 = vst [vmem:[%s149 + $0x1a8] sm:$0xff] %v256
                %v258 = vld [vmem:[%s148 + $0xc30] sm:$0xff]
                %259 = vst [vmem:[%s149 + $0x1b0] sm:$0xff] %v258
                %v260 = vld [vmem:[%s148 + $0xc38] sm:$0xff]
                %261 = vst [vmem:[%s149 + $0x1b8] sm:$0xff] %v260
                %v262 = vld [vmem:[%s148 + $0xc40] sm:$0xff]
                %263 = vst [vmem:[%s149 + $0x1c0] sm:$0xff] %v262
                %v264 = vld [vmem:[%s148 + $0xc48] sm:$0xff]
                %265 = vst [vmem:[%s149 + $0x1c8] sm:$0xff] %v264
                %v266 = vld [vmem:[%s148 + $0xc50] sm:$0xff]
                %267 = vst [vmem:[%s149 + $0x1d0] sm:$0xff] %v266
                %v268 = vld [vmem:[%s148 + $0xc58] sm:$0xff]
                %269 = vst [vmem:[%s149 + $0x1d8] sm:$0xff] %v268
                %v270 = vld [vmem:[%s148 + $0xc60] sm:$0xff]
                %271 = vst [vmem:[%s149 + $0x1e0] sm:$0xff] %v270
                %v272 = vld [vmem:[%s148 + $0xc68] sm:$0xff]
                %273 = vst [vmem:[%s149 + $0x1e8] sm:$0xff] %v272
                %v274 = vld [vmem:[%s148 + $0xc70] sm:$0xff]
                %275 = vst [vmem:[%s149 + $0x1f0] sm:$0xff] %v274
                %v276 = vld [vmem:[%s148 + $0xc78] sm:$0xff]
                %277 = vst [vmem:[%s149 + $0x1f8] sm:$0xff] %v276
                %v278 = vld [vmem:[%s148 + $0x1000] sm:$0xff]
                %279 = vst [vmem:[%s149 + $0x200] sm:$0xff] %v278
                %v280 = vld [vmem:[%s148 + $0x1008] sm:$0xff]
                %281 = vst [vmem:[%s149 + $0x208] sm:$0xff] %v280
                %v282 = vld [vmem:[%s148 + $0x1010] sm:$0xff]
                %283 = vst [vmem:[%s149 + $0x210] sm:$0xff] %v282
                %v284 = vld [vmem:[%s148 + $0x1018] sm:$0xff]
                %285 = vst [vmem:[%s149 + $0x218] sm:$0xff] %v284
                %v286 = vld [vmem:[%s148 + $0x1020] sm:$0xff]
                %287 = vst [vmem:[%s149 + $0x220] sm:$0xff] %v286
                %v288 = vld [vmem:[%s148 + $0x1028] sm:$0xff]
                %289 = vst [vmem:[%s149 + $0x228] sm:$0xff] %v288
                %v290 = vld [vmem:[%s148 + $0x1030] sm:$0xff]
                %291 = vst [vmem:[%s149 + $0x230] sm:$0xff] %v290
                %v292 = vld [vmem:[%s148 + $0x1038] sm:$0xff]
                %293 = vst [vmem:[%s149 + $0x238] sm:$0xff] %v292
                %v294 = vld [vmem:[%s148 + $0x1040] sm:$0xff]
                %295 = vst [vmem:[%s149 + $0x240] sm:$0xff] %v294
                %v296 = vld [vmem:[%s148 + $0x1048] sm:$0xff]
                %297 = vst [vmem:[%s149 + $0x248] sm:$0xff] %v296
                %v298 = vld [vmem:[%s148 + $0x1050] sm:$0xff]
                %299 = vst [vmem:[%s149 + $0x250] sm:$0xff] %v298
                %v300 = vld [vmem:[%s148 + $0x1058] sm:$0xff]
                %301 = vst [vmem:[%s149 + $0x258] sm:$0xff] %v300
                %v302 = vld [vmem:[%s148 + $0x1060] sm:$0xff]
                %303 = vst [vmem:[%s149 + $0x260] sm:$0xff] %v302
                %v304 = vld [vmem:[%s148 + $0x1068] sm:$0xff]
                %305 = vst [vmem:[%s149 + $0x268] sm:$0xff] %v304
                %v306 = vld [vmem:[%s148 + $0x1070] sm:$0xff]
                %307 = vst [vmem:[%s149 + $0x270] sm:$0xff] %v306
                %v308 = vld [vmem:[%s148 + $0x1078] sm:$0xff]
                %309 = vst [vmem:[%s149 + $0x278] sm:$0xff] %v308
                %v310 = vld [vmem:[%s148 + $0x1400] sm:$0xff]
                %311 = vst [vmem:[%s149 + $0x280] sm:$0xff] %v310
                %v312 = vld [vmem:[%s148 + $0x1408] sm:$0xff]
                %313 = vst [vmem:[%s149 + $0x288] sm:$0xff] %v312
                %v314 = vld [vmem:[%s148 + $0x1410] sm:$0xff]
                %315 = vst [vmem:[%s149 + $0x290] sm:$0xff] %v314
                %v316 = vld [vmem:[%s148 + $0x1418] sm:$0xff]
                %317 = vst [vmem:[%s149 + $0x298] sm:$0xff] %v316
                %v318 = vld [vmem:[%s148 + $0x1420] sm:$0xff]
                %319 = vst [vmem:[%s149 + $0x2a0] sm:$0xff] %v318
                %v320 = vld [vmem:[%s148 + $0x1428] sm:$0xff]
                %321 = vst [vmem:[%s149 + $0x2a8] sm:$0xff] %v320
                %v322 = vld [vmem:[%s148 + $0x1430] sm:$0xff]
                %323 = vst [vmem:[%s149 + $0x2b0] sm:$0xff] %v322
                %v324 = vld [vmem:[%s148 + $0x1438] sm:$0xff]
                %325 = vst [vmem:[%s149 + $0x2b8] sm:$0xff] %v324
                %v326 = vld [vmem:[%s148 + $0x1440] sm:$0xff]
                %327 = vst [vmem:[%s149 + $0x2c0] sm:$0xff] %v326
                %v328 = vld [vmem:[%s148 + $0x1448] sm:$0xff]
                %329 = vst [vmem:[%s149 + $0x2c8] sm:$0xff] %v328
                %v330 = vld [vmem:[%s148 + $0x1450] sm:$0xff]
                %331 = vst [vmem:[%s149 + $0x2d0] sm:$0xff] %v330
                %v332 = vld [vmem:[%s148 + $0x1458] sm:$0xff]
                %333 = vst [vmem:[%s149 + $0x2d8] sm:$0xff] %v332
                %v334 = vld [vmem:[%s148 + $0x1460] sm:$0xff]
                %335 = vst [vmem:[%s149 + $0x2e0] sm:$0xff] %v334
                %v336 = vld [vmem:[%s148 + $0x1468] sm:$0xff]
                %337 = vst [vmem:[%s149 + $0x2e8] sm:$0xff] %v336
                %v338 = vld [vmem:[%s148 + $0x1470] sm:$0xff]
                %339 = vst [vmem:[%s149 + $0x2f0] sm:$0xff] %v338
                %v340 = vld [vmem:[%s148 + $0x1478] sm:$0xff]
                %341 = vst [vmem:[%s149 + $0x2f8] sm:$0xff] %v340
              $region41: #{forward.6} parent=35 // loop_footer
                %s147 = sadd.s32 1, %s143
              $region42: #{forward.6} parent=35 // loop_footer_branch
                %142 = sbr.rel target = $region38
              $region43: #{forward.6} parent=35 // loop_exit
                _
            $region36: #{forward.6} parent=31 // pred_fallthru
              _
            // Predicated region
            $region44: #{forward.6} parent=31 // pred_check
              _
            $region45: #{forward.6} parent=31 // pred_check_branch
              %343 = sbr.rel target = $region47
            $region46: #{forward.6} parent=31 // pred_region
              _
            $region47: #{forward.6} parent=31 // pred_fallthru
              _
          $region32: #{forward.6} parent=27 // pred_fallthru
            _
          %344 = vnop
        $region28: #{forward.6} parent=23 // pred_fallthru
          _
      $region24: #{forward.6} parent=5 // pred_fallthru
        _
      %p345 = scmp.le.s32.totalorder 1, %s9
      %p346 = scmp.lt.s32.totalorder %s9, 9
      %p347 = pnand %p345, %p346
      %p348 = pneg %p347
      // Predicated region
      $region48: #{forward.6} parent=5 // pred_check
        _
      $region49: #{forward.6} parent=5 // pred_check_branch
        %350 = sbr.rel (%p347) target = $region51
      $region50: #{forward.6} parent=5 // pred_region
        %s351 = ssub.s32 %s9, 1
        %s352 = sand.u32 %s22, 1
        %s353 = sand.u32 %s22, 1
        %s354 = smul.addr %s353, 768
        %s355 = scalar_lea.vmem [#allocation2], %s354
        // Predicated region
        $region52: #{forward.6} parent=50 // pred_check
          %p356 = pneg %p35
        $region53: #{forward.6} parent=50 // pred_check_branch
          %358 = sbr.rel (%p356) target = $region55
        $region54: #{forward.6} parent=50 // pred_region
          _
        $region55: #{forward.6} parent=50 // pred_fallthru
          _
        %s359 = sand.u32 %s22, 1
        %s360 = sand.u32 %s22, 1
        %s361 = smul.addr %s360, 768
        %s362 = scalar_lea.vmem [#allocation2], %s361
        %p363 = pneg %p35
        %p364 = pneg %p32
        %p365 = pneg %p56
        %p366 = pneg %p53
        %p367 = pneg %p77
        %p368 = pneg %p74
        %p369 = pneg %p103
        %p370 = pneg %p100
        %s371 = smul.u32 32, %s14
        %p372 = scmp.lt.s32.totalorder %s371, 255
        %s373 = scalar_select %p372, %s371, 255
        %s374 = smul.addr %s373, 2
        %s375 = scalar_lea.vmem %s3, %s374
        %s376 = smul.u32 32, %s14
        %s377 = smul.u32 32, %s14
        %p378 = scmp.lt.s32.totalorder %s377, 255
        %s379 = scalar_select %p378, %s377, 255
        %s380 = smul.addr %s379, 2
        %s381 = scalar_lea.vmem %s3, %s380
        %s382 = smul.u32 32, %s14
        %v384 = vld [vmem:[%s1] sm:$0x3]
        %v385 = vld [vmem:[%s355] sm:$0xff]
        %v386 = vld [vmem:[%s355 + $0x8] sm:$0xff]
        %v387 = vld [vmem:[%s355 + $0x10] sm:$0xff]
        %v388 = vld [vmem:[%s355 + $0x18] sm:$0xff]
        %v389 = vld [vmem:[%s355 + $0x20] sm:$0xff]
        %v390 = vld [vmem:[%s355 + $0x28] sm:$0xff]
        %v391 = vld [vmem:[%s355 + $0x30] sm:$0xff]
        %v392 = vld [vmem:[%s355 + $0x38] sm:$0xff]
        %v393 = vld [vmem:[%s355 + $0x40] sm:$0xff]
        %v394 = vld [vmem:[%s355 + $0x48] sm:$0xff]
        %v395 = vld [vmem:[%s355 + $0x50] sm:$0xff]
        %v396 = vld [vmem:[%s355 + $0x58] sm:$0xff]
        %v397 = vld [vmem:[%s355 + $0x60] sm:$0xff]
        %v398 = vld [vmem:[%s355 + $0x68] sm:$0xff]
        %v399 = vld [vmem:[%s355 + $0x70] sm:$0xff]
        %v400 = vld [vmem:[%s355 + $0x78] sm:$0xff]
        %v401 = vld [vmem:[%s355 + $0x80] sm:$0xff]
        %v402 = vld [vmem:[%s355 + $0x88] sm:$0xff]
        %v403 = vld [vmem:[%s355 + $0x90] sm:$0xff]
        %v404 = vld [vmem:[%s355 + $0x98] sm:$0xff]
        %v405 = vld [vmem:[%s355 + $0xa0] sm:$0xff]
        %v406 = vld [vmem:[%s355 + $0xa8] sm:$0xff]
        %v407 = vld [vmem:[%s355 + $0xb0] sm:$0xff]
        %v408 = vld [vmem:[%s355 + $0xb8] sm:$0xff]
        %v409 = vld [vmem:[%s355 + $0xc0] sm:$0xff]
        %v410 = vld [vmem:[%s355 + $0xc8] sm:$0xff]
        %v411 = vld [vmem:[%s355 + $0xd0] sm:$0xff]
        %v412 = vld [vmem:[%s355 + $0xd8] sm:$0xff]
        %v413 = vld [vmem:[%s355 + $0xe0] sm:$0xff]
        %v414 = vld [vmem:[%s355 + $0xe8] sm:$0xff]
        %v415 = vld [vmem:[%s355 + $0xf0] sm:$0xff]
        %v416 = vld [vmem:[%s355 + $0xf8] sm:$0xff]
        %v417 = vld [vmem:[%s355 + $0x100] sm:$0xff]
        %v418 = vld [vmem:[%s355 + $0x108] sm:$0xff]
        %v419 = vld [vmem:[%s355 + $0x110] sm:$0xff]
        %v420 = vld [vmem:[%s355 + $0x118] sm:$0xff]
        %v421 = vld [vmem:[%s355 + $0x120] sm:$0xff]
        %v422 = vld [vmem:[%s355 + $0x128] sm:$0xff]
        %v423 = vld [vmem:[%s355 + $0x130] sm:$0xff]
        %v424 = vld [vmem:[%s355 + $0x138] sm:$0xff]
        %v425 = vld [vmem:[%s355 + $0x140] sm:$0xff]
        %v426 = vld [vmem:[%s355 + $0x148] sm:$0xff]
        %v427 = vld [vmem:[%s355 + $0x150] sm:$0xff]
        %v428 = vld [vmem:[%s355 + $0x158] sm:$0xff]
        %v429 = vld [vmem:[%s355 + $0x160] sm:$0xff]
        %v430 = vld [vmem:[%s355 + $0x168] sm:$0xff]
        %v431 = vld [vmem:[%s355 + $0x170] sm:$0xff]
        %v432 = vld [vmem:[%s355 + $0x178] sm:$0xff]
        %v433 = vld [vmem:[%s355 + $0x180] sm:$0xff]
        %v434 = vld [vmem:[%s355 + $0x188] sm:$0xff]
        %v435 = vld [vmem:[%s355 + $0x190] sm:$0xff]
        %v436 = vld [vmem:[%s355 + $0x198] sm:$0xff]
        %v437 = vld [vmem:[%s355 + $0x1a0] sm:$0xff]
        %v438 = vld [vmem:[%s355 + $0x1a8] sm:$0xff]
        %v439 = vld [vmem:[%s355 + $0x1b0] sm:$0xff]
        %v440 = vld [vmem:[%s355 + $0x1b8] sm:$0xff]
        %v441 = vld [vmem:[%s355 + $0x1c0] sm:$0xff]
        %v442 = vld [vmem:[%s355 + $0x1c8] sm:$0xff]
        %v443 = vld [vmem:[%s355 + $0x1d0] sm:$0xff]
        %v444 = vld [vmem:[%s355 + $0x1d8] sm:$0xff]
        %v445 = vld [vmem:[%s355 + $0x1e0] sm:$0xff]
        %v446 = vld [vmem:[%s355 + $0x1e8] sm:$0xff]
        %v447 = vld [vmem:[%s355 + $0x1f0] sm:$0xff]
        %v448 = vld [vmem:[%s355 + $0x1f8] sm:$0xff]
        %v449 = vld [vmem:[%s355 + $0x200] sm:$0xff]
        %v450 = vld [vmem:[%s355 + $0x208] sm:$0xff]
        %v451 = vld [vmem:[%s355 + $0x210] sm:$0xff]
        %v452 = vld [vmem:[%s355 + $0x218] sm:$0xff]
        %v453 = vld [vmem:[%s355 + $0x220] sm:$0xff]
        %v454 = vld [vmem:[%s355 + $0x228] sm:$0xff]
        %v455 = vld [vmem:[%s355 + $0x230] sm:$0xff]
        %v456 = vld [vmem:[%s355 + $0x238] sm:$0xff]
        %v457 = vld [vmem:[%s355 + $0x240] sm:$0xff]
        %v458 = vld [vmem:[%s355 + $0x248] sm:$0xff]
        %v459 = vld [vmem:[%s355 + $0x250] sm:$0xff]
        %v460 = vld [vmem:[%s355 + $0x258] sm:$0xff]
        %v461 = vld [vmem:[%s355 + $0x260] sm:$0xff]
        %v462 = vld [vmem:[%s355 + $0x268] sm:$0xff]
        %v463 = vld [vmem:[%s355 + $0x270] sm:$0xff]
        %v464 = vld [vmem:[%s355 + $0x278] sm:$0xff]
        %v465 = vld [vmem:[%s355 + $0x280] sm:$0xff]
        %v466 = vld [vmem:[%s355 + $0x288] sm:$0xff]
        %v467 = vld [vmem:[%s355 + $0x290] sm:$0xff]
        %v468 = vld [vmem:[%s355 + $0x298] sm:$0xff]
        %v469 = vld [vmem:[%s355 + $0x2a0] sm:$0xff]
        %v470 = vld [vmem:[%s355 + $0x2a8] sm:$0xff]
        %v471 = vld [vmem:[%s355 + $0x2b0] sm:$0xff]
        %v472 = vld [vmem:[%s355 + $0x2b8] sm:$0xff]
        %v473 = vld [vmem:[%s355 + $0x2c0] sm:$0xff]
        %v474 = vld [vmem:[%s355 + $0x2c8] sm:$0xff]
        %v475 = vld [vmem:[%s355 + $0x2d0] sm:$0xff]
        %v476 = vld [vmem:[%s355 + $0x2d8] sm:$0xff]
        %v477 = vld [vmem:[%s355 + $0x2e0] sm:$0xff]
        %v478 = vld [vmem:[%s355 + $0x2e8] sm:$0xff]
        %v479 = vld [vmem:[%s355 + $0x2f0] sm:$0xff]
        %v480 = vld [vmem:[%s355 + $0x2f8] sm:$0xff]
        %v481 = vld [vmem:[%s2] sm:$0xf]
        %483 = vset.pattern.permute.xlu0 0
        %484 = vperm.xlu0 %483, %v481
        %v485 = vpop.permute.xlu0 %484
        %v583 = vunpack.c.l.b16 %v385
        %v584 = vunpack.c.h.b16 %v385
        %v585 = vunpack.c.l.b16 %v386
        %v586 = vunpack.c.h.b16 %v386
        %v587 = vunpack.c.l.b16 %v387
        %v588 = vunpack.c.h.b16 %v387
        %v589 = vunpack.c.l.b16 %v388
        %v590 = vunpack.c.h.b16 %v388
        %v591 = vunpack.c.l.b16 %v389
        %v592 = vunpack.c.h.b16 %v389
        %v593 = vunpack.c.l.b16 %v390
        %v594 = vunpack.c.h.b16 %v390
        %v595 = vunpack.c.l.b16 %v391
        %v596 = vunpack.c.h.b16 %v391
        %v597 = vunpack.c.l.b16 %v392
        %v598 = vunpack.c.h.b16 %v392
        %v599 = vunpack.c.l.b16 %v393
        %v600 = vunpack.c.h.b16 %v393
        %v601 = vunpack.c.l.b16 %v394
        %v602 = vunpack.c.h.b16 %v394
        %v603 = vunpack.c.l.b16 %v395
        %v604 = vunpack.c.h.b16 %v395
        %v605 = vunpack.c.l.b16 %v396
        %v606 = vunpack.c.h.b16 %v396
        %v607 = vunpack.c.l.b16 %v397
        %v608 = vunpack.c.h.b16 %v397
        %v609 = vunpack.c.l.b16 %v398
        %v610 = vunpack.c.h.b16 %v398
        %v611 = vunpack.c.l.b16 %v399
        %v612 = vunpack.c.h.b16 %v399
        %v613 = vunpack.c.l.b16 %v400
        %v614 = vunpack.c.h.b16 %v400
        %v615 = vunpack.c.l.b16 %v401
        %v616 = vunpack.c.h.b16 %v401
        %v617 = vunpack.c.l.b16 %v402
        %v618 = vunpack.c.h.b16 %v402
        %v619 = vunpack.c.l.b16 %v403
        %v620 = vunpack.c.h.b16 %v403
        %v621 = vunpack.c.l.b16 %v404
        %v622 = vunpack.c.h.b16 %v404
        %v623 = vunpack.c.l.b16 %v405
        %v624 = vunpack.c.h.b16 %v405
        %v625 = vunpack.c.l.b16 %v406
        %v626 = vunpack.c.h.b16 %v406
        %v627 = vunpack.c.l.b16 %v407
        %v628 = vunpack.c.h.b16 %v407
        %v629 = vunpack.c.l.b16 %v408
        %v630 = vunpack.c.h.b16 %v408
        %v631 = vunpack.c.l.b16 %v409
        %v632 = vunpack.c.h.b16 %v409
        %v633 = vunpack.c.l.b16 %v410
        %v634 = vunpack.c.h.b16 %v410
        %v635 = vunpack.c.l.b16 %v411
        %v636 = vunpack.c.h.b16 %v411
        %v637 = vunpack.c.l.b16 %v412
        %v638 = vunpack.c.h.b16 %v412
        %v639 = vunpack.c.l.b16 %v413
        %v640 = vunpack.c.h.b16 %v413
        %v641 = vunpack.c.l.b16 %v414
        %v642 = vunpack.c.h.b16 %v414
        %v643 = vunpack.c.l.b16 %v415
        %v644 = vunpack.c.h.b16 %v415
        %v645 = vunpack.c.l.b16 %v416
        %v646 = vunpack.c.h.b16 %v416
        %v647 = vunpack.c.l.b16 %v417
        %v648 = vunpack.c.h.b16 %v417
        %v649 = vunpack.c.l.b16 %v418
        %v650 = vunpack.c.h.b16 %v418
        %v651 = vunpack.c.l.b16 %v419
        %v652 = vunpack.c.h.b16 %v419
        %v653 = vunpack.c.l.b16 %v420
        %v654 = vunpack.c.h.b16 %v420
        %v655 = vunpack.c.l.b16 %v421
        %v656 = vunpack.c.h.b16 %v421
        %v657 = vunpack.c.l.b16 %v422
        %v658 = vunpack.c.h.b16 %v422
        %v659 = vunpack.c.l.b16 %v423
        %v660 = vunpack.c.h.b16 %v423
        %v661 = vunpack.c.l.b16 %v424
        %v662 = vunpack.c.h.b16 %v424
        %v663 = vunpack.c.l.b16 %v425
        %v664 = vunpack.c.h.b16 %v425
        %v665 = vunpack.c.l.b16 %v426
        %v666 = vunpack.c.h.b16 %v426
        %v667 = vunpack.c.l.b16 %v427
        %v668 = vunpack.c.h.b16 %v427
        %v669 = vunpack.c.l.b16 %v428
        %v670 = vunpack.c.h.b16 %v428
        %v671 = vunpack.c.l.b16 %v429
        %v672 = vunpack.c.h.b16 %v429
        %v673 = vunpack.c.l.b16 %v430
        %v674 = vunpack.c.h.b16 %v430
        %v675 = vunpack.c.l.b16 %v431
        %v676 = vunpack.c.h.b16 %v431
        %v677 = vunpack.c.l.b16 %v432
        %v678 = vunpack.c.h.b16 %v432
        %v679 = vunpack.c.l.b16 %v433
        %v680 = vunpack.c.h.b16 %v433
        %v681 = vunpack.c.l.b16 %v434
        %v682 = vunpack.c.h.b16 %v434
        %v683 = vunpack.c.l.b16 %v435
        %v684 = vunpack.c.h.b16 %v435
        %v685 = vunpack.c.l.b16 %v436
        %v686 = vunpack.c.h.b16 %v436
        %v687 = vunpack.c.l.b16 %v437
        %v688 = vunpack.c.h.b16 %v437
        %v689 = vunpack.c.l.b16 %v438
        %v690 = vunpack.c.h.b16 %v438
        %v691 = vunpack.c.l.b16 %v439
        %v692 = vunpack.c.h.b16 %v439
        %v693 = vunpack.c.l.b16 %v440
        %v694 = vunpack.c.h.b16 %v440
        %v695 = vunpack.c.l.b16 %v441
        %v696 = vunpack.c.h.b16 %v441
        %v697 = vunpack.c.l.b16 %v442
        %v698 = vunpack.c.h.b16 %v442
        %v699 = vunpack.c.l.b16 %v443
        %v700 = vunpack.c.h.b16 %v443
        %v701 = vunpack.c.l.b16 %v444
        %v702 = vunpack.c.h.b16 %v444
        %v703 = vunpack.c.l.b16 %v445
        %v704 = vunpack.c.h.b16 %v445
        %v705 = vunpack.c.l.b16 %v446
        %v706 = vunpack.c.h.b16 %v446
        %v707 = vunpack.c.l.b16 %v447
        %v708 = vunpack.c.h.b16 %v447
        %v709 = vunpack.c.l.b16 %v448
        %v710 = vunpack.c.h.b16 %v448
        %v711 = vunpack.c.l.b16 %v449
        %v712 = vunpack.c.h.b16 %v449
        %v713 = vunpack.c.l.b16 %v450
        %v714 = vunpack.c.h.b16 %v450
        %v715 = vunpack.c.l.b16 %v451
        %v716 = vunpack.c.h.b16 %v451
        %v717 = vunpack.c.l.b16 %v452
        %v718 = vunpack.c.h.b16 %v452
        %v719 = vunpack.c.l.b16 %v453
        %v720 = vunpack.c.h.b16 %v453
        %v721 = vunpack.c.l.b16 %v454
        %v722 = vunpack.c.h.b16 %v454
        %v723 = vunpack.c.l.b16 %v455
        %v724 = vunpack.c.h.b16 %v455
        %v725 = vunpack.c.l.b16 %v456
        %v726 = vunpack.c.h.b16 %v456
        %v727 = vunpack.c.l.b16 %v457
        %v728 = vunpack.c.h.b16 %v457
        %v729 = vunpack.c.l.b16 %v458
        %v730 = vunpack.c.h.b16 %v458
        %v731 = vunpack.c.l.b16 %v459
        %v732 = vunpack.c.h.b16 %v459
        %v733 = vunpack.c.l.b16 %v460
        %v734 = vunpack.c.h.b16 %v460
        %v735 = vunpack.c.l.b16 %v461
        %v736 = vunpack.c.h.b16 %v461
        %v737 = vunpack.c.l.b16 %v462
        %v738 = vunpack.c.h.b16 %v462
        %v739 = vunpack.c.l.b16 %v463
        %v740 = vunpack.c.h.b16 %v463
        %v741 = vunpack.c.l.b16 %v464
        %v742 = vunpack.c.h.b16 %v464
        %v743 = vunpack.c.l.b16 %v465
        %v744 = vunpack.c.h.b16 %v465
        %v745 = vunpack.c.l.b16 %v466
        %v746 = vunpack.c.h.b16 %v466
        %v747 = vunpack.c.l.b16 %v467
        %v748 = vunpack.c.h.b16 %v467
        %v749 = vunpack.c.l.b16 %v468
        %v750 = vunpack.c.h.b16 %v468
        %v751 = vunpack.c.l.b16 %v469
        %v752 = vunpack.c.h.b16 %v469
        %v753 = vunpack.c.l.b16 %v470
        %v754 = vunpack.c.h.b16 %v470
        %v755 = vunpack.c.l.b16 %v471
        %v756 = vunpack.c.h.b16 %v471
        %v757 = vunpack.c.l.b16 %v472
        %v758 = vunpack.c.h.b16 %v472
        %v759 = vunpack.c.l.b16 %v473
        %v760 = vunpack.c.h.b16 %v473
        %v761 = vunpack.c.l.b16 %v474
        %v762 = vunpack.c.h.b16 %v474
        %v763 = vunpack.c.l.b16 %v475
        %v764 = vunpack.c.h.b16 %v475
        %v765 = vunpack.c.l.b16 %v476
        %v766 = vunpack.c.h.b16 %v476
        %v767 = vunpack.c.l.b16 %v477
        %v768 = vunpack.c.h.b16 %v477
        %v769 = vunpack.c.l.b16 %v478
        %v770 = vunpack.c.h.b16 %v478
        %v771 = vunpack.c.l.b16 %v479
        %v772 = vunpack.c.h.b16 %v479
        %v773 = vunpack.c.l.b16 %v480
        %v774 = vunpack.c.h.b16 %v480
        %v775 = vpack.c.b16 %v615, %v583
        %v776 = vpack.c.b16 %v616, %v584
        %v777 = vpack.c.b16 %v617, %v585
        %v778 = vpack.c.b16 %v618, %v586
        %v779 = vpack.c.b16 %v619, %v587
        %v780 = vpack.c.b16 %v620, %v588
        %v781 = vpack.c.b16 %v621, %v589
        %v782 = vpack.c.b16 %v622, %v590
        %v783 = vpack.c.b16 %v623, %v591
        %v784 = vpack.c.b16 %v624, %v592
        %v785 = vpack.c.b16 %v625, %v593
        %v786 = vpack.c.b16 %v626, %v594
        %v787 = vpack.c.b16 %v627, %v595
        %v788 = vpack.c.b16 %v628, %v596
        %v789 = vpack.c.b16 %v629, %v597
        %v790 = vpack.c.b16 %v630, %v598
        %v791 = vpack.c.b16 %v631, %v599
        %v792 = vpack.c.b16 %v632, %v600
        %v793 = vpack.c.b16 %v633, %v601
        %v794 = vpack.c.b16 %v634, %v602
        %v795 = vpack.c.b16 %v635, %v603
        %v796 = vpack.c.b16 %v636, %v604
        %v797 = vpack.c.b16 %v637, %v605
        %v798 = vpack.c.b16 %v638, %v606
        %v799 = vpack.c.b16 %v639, %v607
        %v800 = vpack.c.b16 %v640, %v608
        %v801 = vpack.c.b16 %v641, %v609
        %v802 = vpack.c.b16 %v642, %v610
        %v803 = vpack.c.b16 %v643, %v611
        %v804 = vpack.c.b16 %v644, %v612
        %v805 = vpack.c.b16 %v645, %v613
        %v806 = vpack.c.b16 %v646, %v614
        %v807 = vpack.c.b16 %v679, %v647
        %v808 = vpack.c.b16 %v680, %v648
        %v809 = vpack.c.b16 %v681, %v649
        %v810 = vpack.c.b16 %v682, %v650
        %v811 = vpack.c.b16 %v683, %v651
        %v812 = vpack.c.b16 %v684, %v652
        %v813 = vpack.c.b16 %v685, %v653
        %v814 = vpack.c.b16 %v686, %v654
        %v815 = vpack.c.b16 %v687, %v655
        %v816 = vpack.c.b16 %v688, %v656
        %v817 = vpack.c.b16 %v689, %v657
        %v818 = vpack.c.b16 %v690, %v658
        %v819 = vpack.c.b16 %v691, %v659
        %v820 = vpack.c.b16 %v692, %v660
        %v821 = vpack.c.b16 %v693, %v661
        %v822 = vpack.c.b16 %v694, %v662
        %v823 = vpack.c.b16 %v695, %v663
        %v824 = vpack.c.b16 %v696, %v664
        %v825 = vpack.c.b16 %v697, %v665
        %v826 = vpack.c.b16 %v698, %v666
        %v827 = vpack.c.b16 %v699, %v667
        %v828 = vpack.c.b16 %v700, %v668
        %v829 = vpack.c.b16 %v701, %v669
        %v830 = vpack.c.b16 %v702, %v670
        %v831 = vpack.c.b16 %v703, %v671
        %v832 = vpack.c.b16 %v704, %v672
        %v833 = vpack.c.b16 %v705, %v673
        %v834 = vpack.c.b16 %v706, %v674
        %v835 = vpack.c.b16 %v707, %v675
        %v836 = vpack.c.b16 %v708, %v676
        %v837 = vpack.c.b16 %v709, %v677
        %v838 = vpack.c.b16 %v710, %v678
        %v839 = vpack.c.b16 %v743, %v711
        %v840 = vpack.c.b16 %v744, %v712
        %v841 = vpack.c.b16 %v745, %v713
        %v842 = vpack.c.b16 %v746, %v714
        %v843 = vpack.c.b16 %v747, %v715
        %v844 = vpack.c.b16 %v748, %v716
        %v845 = vpack.c.b16 %v749, %v717
        %v846 = vpack.c.b16 %v750, %v718
        %v847 = vpack.c.b16 %v751, %v719
        %v848 = vpack.c.b16 %v752, %v720
        %v849 = vpack.c.b16 %v753, %v721
        %v850 = vpack.c.b16 %v754, %v722
        %v851 = vpack.c.b16 %v755, %v723
        %v852 = vpack.c.b16 %v756, %v724
        %v853 = vpack.c.b16 %v757, %v725
        %v854 = vpack.c.b16 %v758, %v726
        %v855 = vpack.c.b16 %v759, %v727
        %v856 = vpack.c.b16 %v760, %v728
        %v857 = vpack.c.b16 %v761, %v729
        %v858 = vpack.c.b16 %v762, %v730
        %v859 = vpack.c.b16 %v763, %v731
        %v860 = vpack.c.b16 %v764, %v732
        %v861 = vpack.c.b16 %v765, %v733
        %v862 = vpack.c.b16 %v766, %v734
        %v863 = vpack.c.b16 %v767, %v735
        %v864 = vpack.c.b16 %v768, %v736
        %v865 = vpack.c.b16 %v769, %v737
        %v866 = vpack.c.b16 %v770, %v738
        %v867 = vpack.c.b16 %v771, %v739
        %v868 = vpack.c.b16 %v772, %v740
        %v869 = vpack.c.b16 %v773, %v741
        %v870 = vpack.c.b16 %v774, %v742
        %vm967 = vcmask 392192
        %v969 = vsel %vm967, %v384, 0
        %971 = vmatprep.subr.bf16.mxu0 %v776
        %972 = vmatpush1.bf16.msra.mxu0 %v775
        %973 = vmatprep.subr.bf16.mxu0 %v808
        %974 = vmatpush1.bf16.msra.mxu0 %v807
        %975 = vmatprep.subr.bf16.mxu0 %v840
        %976 = vmatpush1.bf16.msra.mxu0 %v839
        %977 = vmatprep.subr.bf16.mxu0 0
        %978 = vmatpush1.bf16.msra.mxu0 0
        %979 = vmatprep.subr.bf16.mxu0 0
        %980 = vmatpush1.bf16.msra.mxu0 0
        %981 = vmatprep.subr.bf16.mxu0 0
        %982 = vmatpush1.bf16.msra.mxu0 0
        %983 = vmatprep.subr.bf16.mxu0 0
        %984 = vmatpush1.bf16.msra.mxu0 0
        %985 = vmatprep.subr.bf16.mxu0 0
        %986 = vmatpush1.bf16.msra.mxu0 0
        %987 = vmatprep.subr.bf16.mxu0 0
        %988 = vmatpush1.bf16.msra.mxu0 0
        %989 = vmatprep.subr.bf16.mxu0 0
        %990 = vmatpush1.bf16.msra.mxu0 0
        %991 = vmatprep.subr.bf16.mxu0 0
        %992 = vmatpush1.bf16.msra.mxu0 0
        %993 = vmatprep.subr.bf16.mxu0 0
        %994 = vmatpush1.bf16.msra.mxu0 0
        %995 = vmatprep.subr.bf16.mxu0 0
        %996 = vmatpush1.bf16.msra.mxu0 0
        %997 = vmatprep.subr.bf16.mxu0 0
        %998 = vmatpush1.bf16.msra.mxu0 0
        %999 = vmatprep.subr.bf16.mxu0 0
        %1000 = vmatpush1.bf16.msra.mxu0 0
        %1001 = vmatprep.subr.bf16.mxu0 0
        %1002 = vmatpush1.bf16.msra.mxu0 0
        %1003 = vmatprep.mubr.bf16.mxu0 0
        %1004 = vmatmul.mubr.bf16.gmra.mrb[0].mxu0 %v969
        %v1005 = vpop.f32.mrb[0].mxu0
        %v1006 = vadd.f32 %v485, %v1005
        %v1007 = vpop.f32.mrb[0].mxu0
        %v1008 = vadd.f32 %v485, %v1007
        %v1009 = vpop.f32.mrb[0].mxu0
        %v1010 = vpop.f32.mrb[0].mxu0
        %1011 = vdwg.mxu0
        %1012 = vmatprep.subr.bf16.mxu0 %v778
        %1013 = vmatpush1.bf16.msra.mxu0 %v777
        %1014 = vmatprep.subr.bf16.mxu0 %v810
        %1015 = vmatpush1.bf16.msra.mxu0 %v809
        %1016 = vmatprep.subr.bf16.mxu0 %v842
        %1017 = vmatpush1.bf16.msra.mxu0 %v841
        %1018 = vmatprep.subr.bf16.mxu0 0
        %1019 = vmatpush1.bf16.msra.mxu0 0
        %1020 = vmatprep.subr.bf16.mxu0 0
        %1021 = vmatpush1.bf16.msra.mxu0 0
        %1022 = vmatprep.subr.bf16.mxu0 0
        %1023 = vmatpush1.bf16.msra.mxu0 0
        %1024 = vmatprep.subr.bf16.mxu0 0
        %1025 = vmatpush1.bf16.msra.mxu0 0
        %1026 = vmatprep.subr.bf16.mxu0 0
        %1027 = vmatpush1.bf16.msra.mxu0 0
        %1028 = vmatprep.subr.bf16.mxu0 0
        %1029 = vmatpush1.bf16.msra.mxu0 0
        %1030 = vmatprep.subr.bf16.mxu0 0
        %1031 = vmatpush1.bf16.msra.mxu0 0
        %1032 = vmatprep.subr.bf16.mxu0 0
        %1033 = vmatpush1.bf16.msra.mxu0 0
        %1034 = vmatprep.subr.bf16.mxu0 0
        %1035 = vmatpush1.bf16.msra.mxu0 0
        %1036 = vmatprep.subr.bf16.mxu0 0
        %1037 = vmatpush1.bf16.msra.mxu0 0
        %1038 = vmatprep.subr.bf16.mxu0 0
        %1039 = vmatpush1.bf16.msra.mxu0 0
        %1040 = vmatprep.subr.bf16.mxu0 0
        %1041 = vmatpush1.bf16.msra.mxu0 0
        %1042 = vmatprep.subr.bf16.mxu0 0
        %1043 = vmatpush1.bf16.msra.mxu0 0
        %1044 = vmatprep.mubr.bf16.mxu0 0
        %1045 = vmatmul.mubr.bf16.gmra.mrb[0].mxu0 %v969
        %v1046 = vpop.f32.mrb[0].mxu0
        %v1047 = vadd.f32 %v485, %v1046
        %v1048 = vpop.f32.mrb[0].mxu0
        %v1049 = vadd.f32 %v485, %v1048
        %v1050 = vpop.f32.mrb[0].mxu0
        %v1051 = vpop.f32.mrb[0].mxu0
        %1052 = vdwg.mxu0
        %1053 = vmatprep.subr.bf16.mxu0 %v780
        %1054 = vmatpush1.bf16.msra.mxu0 %v779
        %1055 = vmatprep.subr.bf16.mxu0 %v812
        %1056 = vmatpush1.bf16.msra.mxu0 %v811
        %1057 = vmatprep.subr.bf16.mxu0 %v844
        %1058 = vmatpush1.bf16.msra.mxu0 %v843
        %1059 = vmatprep.subr.bf16.mxu0 0
        %1060 = vmatpush1.bf16.msra.mxu0 0
        %1061 = vmatprep.subr.bf16.mxu0 0
        %1062 = vmatpush1.bf16.msra.mxu0 0
        %1063 = vmatprep.subr.bf16.mxu0 0
        %1064 = vmatpush1.bf16.msra.mxu0 0
        %1065 = vmatprep.subr.bf16.mxu0 0
        %1066 = vmatpush1.bf16.msra.mxu0 0
        %1067 = vmatprep.subr.bf16.mxu0 0
        %1068 = vmatpush1.bf16.msra.mxu0 0
        %1069 = vmatprep.subr.bf16.mxu0 0
        %1070 = vmatpush1.bf16.msra.mxu0 0
        %1071 = vmatprep.subr.bf16.mxu0 0
        %1072 = vmatpush1.bf16.msra.mxu0 0
        %1073 = vmatprep.subr.bf16.mxu0 0
        %1074 = vmatpush1.bf16.msra.mxu0 0
        %1075 = vmatprep.subr.bf16.mxu0 0
        %1076 = vmatpush1.bf16.msra.mxu0 0
        %1077 = vmatprep.subr.bf16.mxu0 0
        %1078 = vmatpush1.bf16.msra.mxu0 0
        %1079 = vmatprep.subr.bf16.mxu0 0
        %1080 = vmatpush1.bf16.msra.mxu0 0
        %1081 = vmatprep.subr.bf16.mxu0 0
        %1082 = vmatpush1.bf16.msra.mxu0 0
        %1083 = vmatprep.subr.bf16.mxu0 0
        %1084 = vmatpush1.bf16.msra.mxu0 0
        %1085 = vmatprep.mubr.bf16.mxu0 0
        %1086 = vmatmul.mubr.bf16.gmra.mrb[0].mxu0 %v969
        %v1087 = vpop.f32.mrb[0].mxu0
        %v1088 = vadd.f32 %v485, %v1087
        %v1089 = vpop.f32.mrb[0].mxu0
        %v1090 = vadd.f32 %v485, %v1089
        %v1091 = vpop.f32.mrb[0].mxu0
        %v1092 = vpop.f32.mrb[0].mxu0
        %1093 = vdwg.mxu0
        %1094 = vmatprep.subr.bf16.mxu0 %v782
        %1095 = vmatpush1.bf16.msra.mxu0 %v781
        %1096 = vmatprep.subr.bf16.mxu0 %v814
        %1097 = vmatpush1.bf16.msra.mxu0 %v813
        %1098 = vmatprep.subr.bf16.mxu0 %v846
        %1099 = vmatpush1.bf16.msra.mxu0 %v845
        %1100 = vmatprep.subr.bf16.mxu0 0
        %1101 = vmatpush1.bf16.msra.mxu0 0
        %1102 = vmatprep.subr.bf16.mxu0 0
        %1103 = vmatpush1.bf16.msra.mxu0 0
        %1104 = vmatprep.subr.bf16.mxu0 0
        %1105 = vmatpush1.bf16.msra.mxu0 0
        %1106 = vmatprep.subr.bf16.mxu0 0
        %1107 = vmatpush1.bf16.msra.mxu0 0
        %1108 = vmatprep.subr.bf16.mxu0 0
        %1109 = vmatpush1.bf16.msra.mxu0 0
        %1110 = vmatprep.subr.bf16.mxu0 0
        %1111 = vmatpush1.bf16.msra.mxu0 0
        %1112 = vmatprep.subr.bf16.mxu0 0
        %1113 = vmatpush1.bf16.msra.mxu0 0
        %1114 = vmatprep.subr.bf16.mxu0 0
        %1115 = vmatpush1.bf16.msra.mxu0 0
        %1116 = vmatprep.subr.bf16.mxu0 0
        %1117 = vmatpush1.bf16.msra.mxu0 0
        %1118 = vmatprep.subr.bf16.mxu0 0
        %1119 = vmatpush1.bf16.msra.mxu0 0
        %1120 = vmatprep.subr.bf16.mxu0 0
        %1121 = vmatpush1.bf16.msra.mxu0 0
        %1122 = vmatprep.subr.bf16.mxu0 0
        %1123 = vmatpush1.bf16.msra.mxu0 0
        %1124 = vmatprep.subr.bf16.mxu0 0
        %1125 = vmatpush1.bf16.msra.mxu0 0
        %1126 = vmatprep.mubr.bf16.mxu0 0
        %1127 = vmatmul.mubr.bf16.gmra.mrb[0].mxu0 %v969
        %v1128 = vpop.f32.mrb[0].mxu0
        %v1129 = vadd.f32 %v485, %v1128
        %v1130 = vpop.f32.mrb[0].mxu0
        %v1131 = vadd.f32 %v485, %v1130
        %v1132 = vpop.f32.mrb[0].mxu0
        %v1133 = vpop.f32.mrb[0].mxu0
        %1134 = vdwg.mxu0
        %1135 = vmatprep.subr.bf16.mxu0 %v784
        %1136 = vmatpush1.bf16.msra.mxu0 %v783
        %1137 = vmatprep.subr.bf16.mxu0 %v816
        %1138 = vmatpush1.bf16.msra.mxu0 %v815
        %1139 = vmatprep.subr.bf16.mxu0 %v848
        %1140 = vmatpush1.bf16.msra.mxu0 %v847
        %1141 = vmatprep.subr.bf16.mxu0 0
        %1142 = vmatpush1.bf16.msra.mxu0 0
        %1143 = vmatprep.subr.bf16.mxu0 0
        %1144 = vmatpush1.bf16.msra.mxu0 0
        %1145 = vmatprep.subr.bf16.mxu0 0
        %1146 = vmatpush1.bf16.msra.mxu0 0
        %1147 = vmatprep.subr.bf16.mxu0 0
        %1148 = vmatpush1.bf16.msra.mxu0 0
        %1149 = vmatprep.subr.bf16.mxu0 0
        %1150 = vmatpush1.bf16.msra.mxu0 0
        %1151 = vmatprep.subr.bf16.mxu0 0
        %1152 = vmatpush1.bf16.msra.mxu0 0
        %1153 = vmatprep.subr.bf16.mxu0 0
        %1154 = vmatpush1.bf16.msra.mxu0 0
        %1155 = vmatprep.subr.bf16.mxu0 0
        %1156 = vmatpush1.bf16.msra.mxu0 0
        %1157 = vmatprep.subr.bf16.mxu0 0
        %1158 = vmatpush1.bf16.msra.mxu0 0
        %1159 = vmatprep.subr.bf16.mxu0 0
        %1160 = vmatpush1.bf16.msra.mxu0 0
        %1161 = vmatprep.subr.bf16.mxu0 0
        %1162 = vmatpush1.bf16.msra.mxu0 0
        %1163 = vmatprep.subr.bf16.mxu0 0
        %1164 = vmatpush1.bf16.msra.mxu0 0
        %1165 = vmatprep.subr.bf16.mxu0 0
        %1166 = vmatpush1.bf16.msra.mxu0 0
        %1167 = vmatprep.mubr.bf16.mxu0 0
        %1168 = vmatmul.mubr.bf16.gmra.mrb[0].mxu0 %v969
        %v1169 = vpop.f32.mrb[0].mxu0
        %v1170 = vadd.f32 %v485, %v1169
        %v1171 = vpop.f32.mrb[0].mxu0
        %v1172 = vadd.f32 %v485, %v1171
        %v1173 = vpop.f32.mrb[0].mxu0
        %v1174 = vpop.f32.mrb[0].mxu0
        %1175 = vdwg.mxu0
        %1176 = vmatprep.subr.bf16.mxu0 %v786
        %1177 = vmatpush1.bf16.msra.mxu0 %v785
        %1178 = vmatprep.subr.bf16.mxu0 %v818
        %1179 = vmatpush1.bf16.msra.mxu0 %v817
        %1180 = vmatprep.subr.bf16.mxu0 %v850
        %1181 = vmatpush1.bf16.msra.mxu0 %v849
        %1182 = vmatprep.subr.bf16.mxu0 0
        %1183 = vmatpush1.bf16.msra.mxu0 0
        %1184 = vmatprep.subr.bf16.mxu0 0
        %1185 = vmatpush1.bf16.msra.mxu0 0
        %1186 = vmatprep.subr.bf16.mxu0 0
        %1187 = vmatpush1.bf16.msra.mxu0 0
        %1188 = vmatprep.subr.bf16.mxu0 0
        %1189 = vmatpush1.bf16.msra.mxu0 0
        %1190 = vmatprep.subr.bf16.mxu0 0
        %1191 = vmatpush1.bf16.msra.mxu0 0
        %1192 = vmatprep.subr.bf16.mxu0 0
        %1193 = vmatpush1.bf16.msra.mxu0 0
        %1194 = vmatprep.subr.bf16.mxu0 0
        %1195 = vmatpush1.bf16.msra.mxu0 0
        %1196 = vmatprep.subr.bf16.mxu0 0
        %1197 = vmatpush1.bf16.msra.mxu0 0
        %1198 = vmatprep.subr.bf16.mxu0 0
        %1199 = vmatpush1.bf16.msra.mxu0 0
        %1200 = vmatprep.subr.bf16.mxu0 0
        %1201 = vmatpush1.bf16.msra.mxu0 0
        %1202 = vmatprep.subr.bf16.mxu0 0
        %1203 = vmatpush1.bf16.msra.mxu0 0
        %1204 = vmatprep.subr.bf16.mxu0 0
        %1205 = vmatpush1.bf16.msra.mxu0 0
        %1206 = vmatprep.subr.bf16.mxu0 0
        %1207 = vmatpush1.bf16.msra.mxu0 0
        %1208 = vmatprep.mubr.bf16.mxu0 0
        %1209 = vmatmul.mubr.bf16.gmra.mrb[0].mxu0 %v969
        %v1210 = vpop.f32.mrb[0].mxu0
        %v1211 = vadd.f32 %v485, %v1210
        %v1212 = vpop.f32.mrb[0].mxu0
        %v1213 = vadd.f32 %v485, %v1212
        %v1214 = vpop.f32.mrb[0].mxu0
        %v1215 = vpop.f32.mrb[0].mxu0
        %1216 = vdwg.mxu0
        %1217 = vmatprep.subr.bf16.mxu0 %v788
        %1218 = vmatpush1.bf16.msra.mxu0 %v787
        %1219 = vmatprep.subr.bf16.mxu0 %v820
        %1220 = vmatpush1.bf16.msra.mxu0 %v819
        %1221 = vmatprep.subr.bf16.mxu0 %v852
        %1222 = vmatpush1.bf16.msra.mxu0 %v851
        %1223 = vmatprep.subr.bf16.mxu0 0
        %1224 = vmatpush1.bf16.msra.mxu0 0
        %1225 = vmatprep.subr.bf16.mxu0 0
        %1226 = vmatpush1.bf16.msra.mxu0 0
        %1227 = vmatprep.subr.bf16.mxu0 0
        %1228 = vmatpush1.bf16.msra.mxu0 0
        %1229 = vmatprep.subr.bf16.mxu0 0
        %1230 = vmatpush1.bf16.msra.mxu0 0
        %1231 = vmatprep.subr.bf16.mxu0 0
        %1232 = vmatpush1.bf16.msra.mxu0 0
        %1233 = vmatprep.subr.bf16.mxu0 0
        %1234 = vmatpush1.bf16.msra.mxu0 0
        %1235 = vmatprep.subr.bf16.mxu0 0
        %1236 = vmatpush1.bf16.msra.mxu0 0
        %1237 = vmatprep.subr.bf16.mxu0 0
        %1238 = vmatpush1.bf16.msra.mxu0 0
        %1239 = vmatprep.subr.bf16.mxu0 0
        %1240 = vmatpush1.bf16.msra.mxu0 0
        %1241 = vmatprep.subr.bf16.mxu0 0
        %1242 = vmatpush1.bf16.msra.mxu0 0
        %1243 = vmatprep.subr.bf16.mxu0 0
        %1244 = vmatpush1.bf16.msra.mxu0 0
        %1245 = vmatprep.subr.bf16.mxu0 0
        %1246 = vmatpush1.bf16.msra.mxu0 0
        %1247 = vmatprep.subr.bf16.mxu0 0
        %1248 = vmatpush1.bf16.msra.mxu0 0
        %1249 = vmatprep.mubr.bf16.mxu0 0
        %1250 = vmatmul.mubr.bf16.gmra.mrb[0].mxu0 %v969
        %v1251 = vpop.f32.mrb[0].mxu0
        %v1252 = vadd.f32 %v485, %v1251
        %v1253 = vpop.f32.mrb[0].mxu0
        %v1254 = vadd.f32 %v485, %v1253
        %v1255 = vpop.f32.mrb[0].mxu0
        %v1256 = vpop.f32.mrb[0].mxu0
        %1257 = vdwg.mxu0
        %1258 = vmatprep.subr.bf16.mxu0 %v790
        %1259 = vmatpush1.bf16.msra.mxu0 %v789
        %1260 = vmatprep.subr.bf16.mxu0 %v822
        %1261 = vmatpush1.bf16.msra.mxu0 %v821
        %1262 = vmatprep.subr.bf16.mxu0 %v854
        %1263 = vmatpush1.bf16.msra.mxu0 %v853
        %1264 = vmatprep.subr.bf16.mxu0 0
        %1265 = vmatpush1.bf16.msra.mxu0 0
        %1266 = vmatprep.subr.bf16.mxu0 0
        %1267 = vmatpush1.bf16.msra.mxu0 0
        %1268 = vmatprep.subr.bf16.mxu0 0
        %1269 = vmatpush1.bf16.msra.mxu0 0
        %1270 = vmatprep.subr.bf16.mxu0 0
        %1271 = vmatpush1.bf16.msra.mxu0 0
        %1272 = vmatprep.subr.bf16.mxu0 0
        %1273 = vmatpush1.bf16.msra.mxu0 0
        %1274 = vmatprep.subr.bf16.mxu0 0
        %1275 = vmatpush1.bf16.msra.mxu0 0
        %1276 = vmatprep.subr.bf16.mxu0 0
        %1277 = vmatpush1.bf16.msra.mxu0 0
        %1278 = vmatprep.subr.bf16.mxu0 0
        %1279 = vmatpush1.bf16.msra.mxu0 0
        %1280 = vmatprep.subr.bf16.mxu0 0
        %1281 = vmatpush1.bf16.msra.mxu0 0
        %1282 = vmatprep.subr.bf16.mxu0 0
        %1283 = vmatpush1.bf16.msra.mxu0 0
        %1284 = vmatprep.subr.bf16.mxu0 0
        %1285 = vmatpush1.bf16.msra.mxu0 0
        %1286 = vmatprep.subr.bf16.mxu0 0
        %1287 = vmatpush1.bf16.msra.mxu0 0
        %1288 = vmatprep.subr.bf16.mxu0 0
        %1289 = vmatpush1.bf16.msra.mxu0 0
        %1290 = vmatprep.mubr.bf16.mxu0 0
        %1291 = vmatmul.mubr.bf16.gmra.mrb[0].mxu0 %v969
        %v1292 = vpop.f32.mrb[0].mxu0
        %v1293 = vadd.f32 %v485, %v1292
        %v1294 = vpop.f32.mrb[0].mxu0
        %v1295 = vadd.f32 %v485, %v1294
        %v1296 = vpop.f32.mrb[0].mxu0
        %v1297 = vpop.f32.mrb[0].mxu0
        %1298 = vdwg.mxu0
        %1299 = vmatprep.subr.bf16.mxu0 %v792
        %1300 = vmatpush1.bf16.msra.mxu0 %v791
        %1301 = vmatprep.subr.bf16.mxu0 %v824
        %1302 = vmatpush1.bf16.msra.mxu0 %v823
        %1303 = vmatprep.subr.bf16.mxu0 %v856
        %1304 = vmatpush1.bf16.msra.mxu0 %v855
        %1305 = vmatprep.subr.bf16.mxu0 0
        %1306 = vmatpush1.bf16.msra.mxu0 0
        %1307 = vmatprep.subr.bf16.mxu0 0
        %1308 = vmatpush1.bf16.msra.mxu0 0
        %1309 = vmatprep.subr.bf16.mxu0 0
        %1310 = vmatpush1.bf16.msra.mxu0 0
        %1311 = vmatprep.subr.bf16.mxu0 0
        %1312 = vmatpush1.bf16.msra.mxu0 0
        %1313 = vmatprep.subr.bf16.mxu0 0
        %1314 = vmatpush1.bf16.msra.mxu0 0
        %1315 = vmatprep.subr.bf16.mxu0 0
        %1316 = vmatpush1.bf16.msra.mxu0 0
        %1317 = vmatprep.subr.bf16.mxu0 0
        %1318 = vmatpush1.bf16.msra.mxu0 0
        %1319 = vmatprep.subr.bf16.mxu0 0
        %1320 = vmatpush1.bf16.msra.mxu0 0
        %1321 = vmatprep.subr.bf16.mxu0 0
        %1322 = vmatpush1.bf16.msra.mxu0 0
        %1323 = vmatprep.subr.bf16.mxu0 0
        %1324 = vmatpush1.bf16.msra.mxu0 0
        %1325 = vmatprep.subr.bf16.mxu0 0
        %1326 = vmatpush1.bf16.msra.mxu0 0
        %1327 = vmatprep.subr.bf16.mxu0 0
        %1328 = vmatpush1.bf16.msra.mxu0 0
        %1329 = vmatprep.subr.bf16.mxu0 0
        %1330 = vmatpush1.bf16.msra.mxu0 0
        %1331 = vmatprep.mubr.bf16.mxu0 0
        %1332 = vmatmul.mubr.bf16.gmra.mrb[0].mxu0 %v969
        %v1333 = vpop.f32.mrb[0].mxu0
        %v1334 = vadd.f32 %v485, %v1333
        %v1335 = vpop.f32.mrb[0].mxu0
        %v1336 = vadd.f32 %v485, %v1335
        %v1337 = vpop.f32.mrb[0].mxu0
        %v1338 = vpop.f32.mrb[0].mxu0
        %1339 = vdwg.mxu0
        %1340 = vmatprep.subr.bf16.mxu0 %v794
        %1341 = vmatpush1.bf16.msra.mxu0 %v793
        %1342 = vmatprep.subr.bf16.mxu0 %v826
        %1343 = vmatpush1.bf16.msra.mxu0 %v825
        %1344 = vmatprep.subr.bf16.mxu0 %v858
        %1345 = vmatpush1.bf16.msra.mxu0 %v857
        %1346 = vmatprep.subr.bf16.mxu0 0
        %1347 = vmatpush1.bf16.msra.mxu0 0
        %1348 = vmatprep.subr.bf16.mxu0 0
        %1349 = vmatpush1.bf16.msra.mxu0 0
        %1350 = vmatprep.subr.bf16.mxu0 0
        %1351 = vmatpush1.bf16.msra.mxu0 0
        %1352 = vmatprep.subr.bf16.mxu0 0
        %1353 = vmatpush1.bf16.msra.mxu0 0
        %1354 = vmatprep.subr.bf16.mxu0 0
        %1355 = vmatpush1.bf16.msra.mxu0 0
        %1356 = vmatprep.subr.bf16.mxu0 0
        %1357 = vmatpush1.bf16.msra.mxu0 0
        %1358 = vmatprep.subr.bf16.mxu0 0
        %1359 = vmatpush1.bf16.msra.mxu0 0
        %1360 = vmatprep.subr.bf16.mxu0 0
        %1361 = vmatpush1.bf16.msra.mxu0 0
        %1362 = vmatprep.subr.bf16.mxu0 0
        %1363 = vmatpush1.bf16.msra.mxu0 0
        %1364 = vmatprep.subr.bf16.mxu0 0
        %1365 = vmatpush1.bf16.msra.mxu0 0
        %1366 = vmatprep.subr.bf16.mxu0 0
        %1367 = vmatpush1.bf16.msra.mxu0 0
        %1368 = vmatprep.subr.bf16.mxu0 0
        %1369 = vmatpush1.bf16.msra.mxu0 0
        %1370 = vmatprep.subr.bf16.mxu0 0
        %1371 = vmatpush1.bf16.msra.mxu0 0
        %1372 = vmatprep.mubr.bf16.mxu0 0
        %1373 = vmatmul.mubr.bf16.gmra.mrb[0].mxu0 %v969
        %v1374 = vpop.f32.mrb[0].mxu0
        %v1375 = vadd.f32 %v485, %v1374
        %v1376 = vpop.f32.mrb[0].mxu0
        %v1377 = vadd.f32 %v485, %v1376
        %v1378 = vpop.f32.mrb[0].mxu0
        %v1379 = vpop.f32.mrb[0].mxu0
        %1380 = vdwg.mxu0
        %1381 = vmatprep.subr.bf16.mxu0 %v796
        %1382 = vmatpush1.bf16.msra.mxu0 %v795
        %1383 = vmatprep.subr.bf16.mxu0 %v828
        %1384 = vmatpush1.bf16.msra.mxu0 %v827
        %1385 = vmatprep.subr.bf16.mxu0 %v860
        %1386 = vmatpush1.bf16.msra.mxu0 %v859
        %1387 = vmatprep.subr.bf16.mxu0 0
        %1388 = vmatpush1.bf16.msra.mxu0 0
        %1389 = vmatprep.subr.bf16.mxu0 0
        %1390 = vmatpush1.bf16.msra.mxu0 0
        %1391 = vmatprep.subr.bf16.mxu0 0
        %1392 = vmatpush1.bf16.msra.mxu0 0
        %1393 = vmatprep.subr.bf16.mxu0 0
        %1394 = vmatpush1.bf16.msra.mxu0 0
        %1395 = vmatprep.subr.bf16.mxu0 0
        %1396 = vmatpush1.bf16.msra.mxu0 0
        %1397 = vmatprep.subr.bf16.mxu0 0
        %1398 = vmatpush1.bf16.msra.mxu0 0
        %1399 = vmatprep.subr.bf16.mxu0 0
        %1400 = vmatpush1.bf16.msra.mxu0 0
        %1401 = vmatprep.subr.bf16.mxu0 0
        %1402 = vmatpush1.bf16.msra.mxu0 0
        %1403 = vmatprep.subr.bf16.mxu0 0
        %1404 = vmatpush1.bf16.msra.mxu0 0
        %1405 = vmatprep.subr.bf16.mxu0 0
        %1406 = vmatpush1.bf16.msra.mxu0 0
        %1407 = vmatprep.subr.bf16.mxu0 0
        %1408 = vmatpush1.bf16.msra.mxu0 0
        %1409 = vmatprep.subr.bf16.mxu0 0
        %1410 = vmatpush1.bf16.msra.mxu0 0
        %1411 = vmatprep.subr.bf16.mxu0 0
        %1412 = vmatpush1.bf16.msra.mxu0 0
        %1413 = vmatprep.mubr.bf16.mxu0 0
        %1414 = vmatmul.mubr.bf16.gmra.mrb[0].mxu0 %v969
        %v1415 = vpop.f32.mrb[0].mxu0
        %v1416 = vadd.f32 %v485, %v1415
        %v1417 = vpop.f32.mrb[0].mxu0
        %v1418 = vadd.f32 %v485, %v1417
        %v1419 = vpop.f32.mrb[0].mxu0
        %v1420 = vpop.f32.mrb[0].mxu0
        %1421 = vdwg.mxu0
        %1422 = vmatprep.subr.bf16.mxu0 %v798
        %1423 = vmatpush1.bf16.msra.mxu0 %v797
        %1424 = vmatprep.subr.bf16.mxu0 %v830
        %1425 = vmatpush1.bf16.msra.mxu0 %v829
        %1426 = vmatprep.subr.bf16.mxu0 %v862
        %1427 = vmatpush1.bf16.msra.mxu0 %v861
        %1428 = vmatprep.subr.bf16.mxu0 0
        %1429 = vmatpush1.bf16.msra.mxu0 0
        %1430 = vmatprep.subr.bf16.mxu0 0
        %1431 = vmatpush1.bf16.msra.mxu0 0
        %1432 = vmatprep.subr.bf16.mxu0 0
        %1433 = vmatpush1.bf16.msra.mxu0 0
        %1434 = vmatprep.subr.bf16.mxu0 0
        %1435 = vmatpush1.bf16.msra.mxu0 0
        %1436 = vmatprep.subr.bf16.mxu0 0
        %1437 = vmatpush1.bf16.msra.mxu0 0
        %1438 = vmatprep.subr.bf16.mxu0 0
        %1439 = vmatpush1.bf16.msra.mxu0 0
        %1440 = vmatprep.subr.bf16.mxu0 0
        %1441 = vmatpush1.bf16.msra.mxu0 0
        %1442 = vmatprep.subr.bf16.mxu0 0
        %1443 = vmatpush1.bf16.msra.mxu0 0
        %1444 = vmatprep.subr.bf16.mxu0 0
        %1445 = vmatpush1.bf16.msra.mxu0 0
        %1446 = vmatprep.subr.bf16.mxu0 0
        %1447 = vmatpush1.bf16.msra.mxu0 0
        %1448 = vmatprep.subr.bf16.mxu0 0
        %1449 = vmatpush1.bf16.msra.mxu0 0
        %1450 = vmatprep.subr.bf16.mxu0 0
        %1451 = vmatpush1.bf16.msra.mxu0 0
        %1452 = vmatprep.subr.bf16.mxu0 0
        %1453 = vmatpush1.bf16.msra.mxu0 0
        %1454 = vmatprep.mubr.bf16.mxu0 0
        %1455 = vmatmul.mubr.bf16.gmra.mrb[0].mxu0 %v969
        %v1456 = vpop.f32.mrb[0].mxu0
        %v1457 = vadd.f32 %v485, %v1456
        %v1458 = vpop.f32.mrb[0].mxu0
        %v1459 = vadd.f32 %v485, %v1458
        %v1460 = vpop.f32.mrb[0].mxu0
        %v1461 = vpop.f32.mrb[0].mxu0
        %1462 = vdwg.mxu0
        %1463 = vmatprep.subr.bf16.mxu0 %v800
        %1464 = vmatpush1.bf16.msra.mxu0 %v799
        %1465 = vmatprep.subr.bf16.mxu0 %v832
        %1466 = vmatpush1.bf16.msra.mxu0 %v831
        %1467 = vmatprep.subr.bf16.mxu0 %v864
        %1468 = vmatpush1.bf16.msra.mxu0 %v863
        %1469 = vmatprep.subr.bf16.mxu0 0
        %1470 = vmatpush1.bf16.msra.mxu0 0
        %1471 = vmatprep.subr.bf16.mxu0 0
        %1472 = vmatpush1.bf16.msra.mxu0 0
        %1473 = vmatprep.subr.bf16.mxu0 0
        %1474 = vmatpush1.bf16.msra.mxu0 0
        %1475 = vmatprep.subr.bf16.mxu0 0
        %1476 = vmatpush1.bf16.msra.mxu0 0
        %1477 = vmatprep.subr.bf16.mxu0 0
        %1478 = vmatpush1.bf16.msra.mxu0 0
        %1479 = vmatprep.subr.bf16.mxu0 0
        %1480 = vmatpush1.bf16.msra.mxu0 0
        %1481 = vmatprep.subr.bf16.mxu0 0
        %1482 = vmatpush1.bf16.msra.mxu0 0
        %1483 = vmatprep.subr.bf16.mxu0 0
        %1484 = vmatpush1.bf16.msra.mxu0 0
        %1485 = vmatprep.subr.bf16.mxu0 0
        %1486 = vmatpush1.bf16.msra.mxu0 0
        %1487 = vmatprep.subr.bf16.mxu0 0
        %1488 = vmatpush1.bf16.msra.mxu0 0
        %1489 = vmatprep.subr.bf16.mxu0 0
        %1490 = vmatpush1.bf16.msra.mxu0 0
        %1491 = vmatprep.subr.bf16.mxu0 0
        %1492 = vmatpush1.bf16.msra.mxu0 0
        %1493 = vmatprep.subr.bf16.mxu0 0
        %1494 = vmatpush1.bf16.msra.mxu0 0
        %1495 = vmatprep.mubr.bf16.mxu0 0
        %1496 = vmatmul.mubr.bf16.gmra.mrb[0].mxu0 %v969
        %v1497 = vpop.f32.mrb[0].mxu0
        %v1498 = vadd.f32 %v485, %v1497
        %v1499 = vpop.f32.mrb[0].mxu0
        %v1500 = vadd.f32 %v485, %v1499
        %v1501 = vpop.f32.mrb[0].mxu0
        %v1502 = vpop.f32.mrb[0].mxu0
        %1503 = vdwg.mxu0
        %1504 = vmatprep.subr.bf16.mxu0 %v802
        %1505 = vmatpush1.bf16.msra.mxu0 %v801
        %1506 = vmatprep.subr.bf16.mxu0 %v834
        %1507 = vmatpush1.bf16.msra.mxu0 %v833
        %1508 = vmatprep.subr.bf16.mxu0 %v866
        %1509 = vmatpush1.bf16.msra.mxu0 %v865
        %1510 = vmatprep.subr.bf16.mxu0 0
        %1511 = vmatpush1.bf16.msra.mxu0 0
        %1512 = vmatprep.subr.bf16.mxu0 0
        %1513 = vmatpush1.bf16.msra.mxu0 0
        %1514 = vmatprep.subr.bf16.mxu0 0
        %1515 = vmatpush1.bf16.msra.mxu0 0
        %1516 = vmatprep.subr.bf16.mxu0 0
        %1517 = vmatpush1.bf16.msra.mxu0 0
        %1518 = vmatprep.subr.bf16.mxu0 0
        %1519 = vmatpush1.bf16.msra.mxu0 0
        %1520 = vmatprep.subr.bf16.mxu0 0
        %1521 = vmatpush1.bf16.msra.mxu0 0
        %1522 = vmatprep.subr.bf16.mxu0 0
        %1523 = vmatpush1.bf16.msra.mxu0 0
        %1524 = vmatprep.subr.bf16.mxu0 0
        %1525 = vmatpush1.bf16.msra.mxu0 0
        %1526 = vmatprep.subr.bf16.mxu0 0
        %1527 = vmatpush1.bf16.msra.mxu0 0
        %1528 = vmatprep.subr.bf16.mxu0 0
        %1529 = vmatpush1.bf16.msra.mxu0 0
        %1530 = vmatprep.subr.bf16.mxu0 0
        %1531 = vmatpush1.bf16.msra.mxu0 0
        %1532 = vmatprep.subr.bf16.mxu0 0
        %1533 = vmatpush1.bf16.msra.mxu0 0
        %1534 = vmatprep.subr.bf16.mxu0 0
        %1535 = vmatpush1.bf16.msra.mxu0 0
        %1536 = vmatprep.mubr.bf16.mxu0 0
        %1537 = vmatmul.mubr.bf16.gmra.mrb[0].mxu0 %v969
        %v1538 = vpop.f32.mrb[0].mxu0
        %v1539 = vadd.f32 %v485, %v1538
        %v1540 = vpop.f32.mrb[0].mxu0
        %v1541 = vadd.f32 %v485, %v1540
        %v1542 = vpop.f32.mrb[0].mxu0
        %v1543 = vpop.f32.mrb[0].mxu0
        %1544 = vdwg.mxu0
        %1545 = vmatprep.subr.bf16.mxu0 %v804
        %1546 = vmatpush1.bf16.msra.mxu0 %v803
        %1547 = vmatprep.subr.bf16.mxu0 %v836
        %1548 = vmatpush1.bf16.msra.mxu0 %v835
        %1549 = vmatprep.subr.bf16.mxu0 %v868
        %1550 = vmatpush1.bf16.msra.mxu0 %v867
        %1551 = vmatprep.subr.bf16.mxu0 0
        %1552 = vmatpush1.bf16.msra.mxu0 0
        %1553 = vmatprep.subr.bf16.mxu0 0
        %1554 = vmatpush1.bf16.msra.mxu0 0
        %1555 = vmatprep.subr.bf16.mxu0 0
        %1556 = vmatpush1.bf16.msra.mxu0 0
        %1557 = vmatprep.subr.bf16.mxu0 0
        %1558 = vmatpush1.bf16.msra.mxu0 0
        %1559 = vmatprep.subr.bf16.mxu0 0
        %1560 = vmatpush1.bf16.msra.mxu0 0
        %1561 = vmatprep.subr.bf16.mxu0 0
        %1562 = vmatpush1.bf16.msra.mxu0 0
        %1563 = vmatprep.subr.bf16.mxu0 0
        %1564 = vmatpush1.bf16.msra.mxu0 0
        %1565 = vmatprep.subr.bf16.mxu0 0
        %1566 = vmatpush1.bf16.msra.mxu0 0
        %1567 = vmatprep.subr.bf16.mxu0 0
        %1568 = vmatpush1.bf16.msra.mxu0 0
        %1569 = vmatprep.subr.bf16.mxu0 0
        %1570 = vmatpush1.bf16.msra.mxu0 0
        %1571 = vmatprep.subr.bf16.mxu0 0
        %1572 = vmatpush1.bf16.msra.mxu0 0
        %1573 = vmatprep.subr.bf16.mxu0 0
        %1574 = vmatpush1.bf16.msra.mxu0 0
        %1575 = vmatprep.subr.bf16.mxu0 0
        %1576 = vmatpush1.bf16.msra.mxu0 0
        %1577 = vmatprep.mubr.bf16.mxu0 0
        %1578 = vmatmul.mubr.bf16.gmra.mrb[0].mxu0 %v969
        %v1579 = vpop.f32.mrb[0].mxu0
        %v1580 = vadd.f32 %v485, %v1579
        %v1581 = vpop.f32.mrb[0].mxu0
        %v1582 = vadd.f32 %v485, %v1581
        %v1583 = vpop.f32.mrb[0].mxu0
        %v1584 = vpop.f32.mrb[0].mxu0
        %1585 = vdwg.mxu0
        %1586 = vmatprep.subr.bf16.mxu0 %v806
        %1587 = vmatpush1.bf16.msra.mxu0 %v805
        %1588 = vmatprep.subr.bf16.mxu0 %v838
        %1589 = vmatpush1.bf16.msra.mxu0 %v837
        %1590 = vmatprep.subr.bf16.mxu0 %v870
        %1591 = vmatpush1.bf16.msra.mxu0 %v869
        %1592 = vmatprep.subr.bf16.mxu0 0
        %1593 = vmatpush1.bf16.msra.mxu0 0
        %1594 = vmatprep.subr.bf16.mxu0 0
        %1595 = vmatpush1.bf16.msra.mxu0 0
        %1596 = vmatprep.subr.bf16.mxu0 0
        %1597 = vmatpush1.bf16.msra.mxu0 0
        %1598 = vmatprep.subr.bf16.mxu0 0
        %1599 = vmatpush1.bf16.msra.mxu0 0
        %1600 = vmatprep.subr.bf16.mxu0 0
        %1601 = vmatpush1.bf16.msra.mxu0 0
        %1602 = vmatprep.subr.bf16.mxu0 0
        %1603 = vmatpush1.bf16.msra.mxu0 0
        %1604 = vmatprep.subr.bf16.mxu0 0
        %1605 = vmatpush1.bf16.msra.mxu0 0
        %1606 = vmatprep.subr.bf16.mxu0 0
        %1607 = vmatpush1.bf16.msra.mxu0 0
        %1608 = vmatprep.subr.bf16.mxu0 0
        %1609 = vmatpush1.bf16.msra.mxu0 0
        %1610 = vmatprep.subr.bf16.mxu0 0
        %1611 = vmatpush1.bf16.msra.mxu0 0
        %1612 = vmatprep.subr.bf16.mxu0 0
        %1613 = vmatpush1.bf16.msra.mxu0 0
        %1614 = vmatprep.subr.bf16.mxu0 0
        %1615 = vmatpush1.bf16.msra.mxu0 0
        %1616 = vmatprep.subr.bf16.mxu0 0
        %1617 = vmatpush1.bf16.msra.mxu0 0
        %1618 = vmatprep.mubr.bf16.mxu0 0
        %1619 = vmatmul.mubr.bf16.gmra.mrb[0].mxu0 %v969
        %v1620 = vpop.f32.mrb[0].mxu0
        %v1621 = vadd.f32 %v485, %v1620
        %v1622 = vpop.f32.mrb[0].mxu0
        %v1623 = vadd.f32 %v485, %v1622
        %v1624 = vpop.f32.mrb[0].mxu0
        %v1625 = vpop.f32.mrb[0].mxu0
        %1626 = vdwg.mxu0
        %vm1627 = vcmp.gt.f32.partialorder %v1006, 0.0
        %vm1628 = vcmp.gt.f32.partialorder %v1008, 0.0
        %vm1629 = vcmp.gt.f32.partialorder %v1047, 0.0
        %vm1630 = vcmp.gt.f32.partialorder %v1049, 0.0
        %vm1631 = vcmp.gt.f32.partialorder %v1088, 0.0
        %vm1632 = vcmp.gt.f32.partialorder %v1090, 0.0
        %vm1633 = vcmp.gt.f32.partialorder %v1129, 0.0
        %vm1634 = vcmp.gt.f32.partialorder %v1131, 0.0
        %vm1635 = vcmp.gt.f32.partialorder %v1170, 0.0
        %vm1636 = vcmp.gt.f32.partialorder %v1172, 0.0
        %vm1637 = vcmp.gt.f32.partialorder %v1211, 0.0
        %vm1638 = vcmp.gt.f32.partialorder %v1213, 0.0
        %vm1639 = vcmp.gt.f32.partialorder %v1252, 0.0
        %vm1640 = vcmp.gt.f32.partialorder %v1254, 0.0
        %vm1641 = vcmp.gt.f32.partialorder %v1293, 0.0
        %vm1642 = vcmp.gt.f32.partialorder %v1295, 0.0
        %vm1643 = vcmp.gt.f32.partialorder %v1334, 0.0
        %vm1644 = vcmp.gt.f32.partialorder %v1336, 0.0
        %vm1645 = vcmp.gt.f32.partialorder %v1375, 0.0
        %vm1646 = vcmp.gt.f32.partialorder %v1377, 0.0
        %vm1647 = vcmp.gt.f32.partialorder %v1416, 0.0
        %vm1648 = vcmp.gt.f32.partialorder %v1418, 0.0
        %vm1649 = vcmp.gt.f32.partialorder %v1457, 0.0
        %vm1650 = vcmp.gt.f32.partialorder %v1459, 0.0
        %vm1651 = vcmp.gt.f32.partialorder %v1498, 0.0
        %vm1652 = vcmp.gt.f32.partialorder %v1500, 0.0
        %vm1653 = vcmp.gt.f32.partialorder %v1539, 0.0
        %vm1654 = vcmp.gt.f32.partialorder %v1541, 0.0
        %vm1655 = vcmp.gt.f32.partialorder %v1580, 0.0
        %vm1656 = vcmp.gt.f32.partialorder %v1582, 0.0
        %vm1657 = vcmp.gt.f32.partialorder %v1621, 0.0
        %vm1658 = vcmp.gt.f32.partialorder %v1623, 0.0
        %v1659 = vmul.f32 %v1006, 0.01
        %v1660 = vmul.f32 %v1008, 0.01
        %v1661 = vmul.f32 %v1047, 0.01
        %v1662 = vmul.f32 %v1049, 0.01
        %v1663 = vmul.f32 %v1088, 0.01
        %v1664 = vmul.f32 %v1090, 0.01
        %v1665 = vmul.f32 %v1129, 0.01
        %v1666 = vmul.f32 %v1131, 0.01
        %v1667 = vmul.f32 %v1170, 0.01
        %v1668 = vmul.f32 %v1172, 0.01
        %v1669 = vmul.f32 %v1211, 0.01
        %v1670 = vmul.f32 %v1213, 0.01
        %v1671 = vmul.f32 %v1252, 0.01
        %v1672 = vmul.f32 %v1254, 0.01
        %v1673 = vmul.f32 %v1293, 0.01
        %v1674 = vmul.f32 %v1295, 0.01
        %v1675 = vmul.f32 %v1334, 0.01
        %v1676 = vmul.f32 %v1336, 0.01
        %v1677 = vmul.f32 %v1375, 0.01
        %v1678 = vmul.f32 %v1377, 0.01
        %v1679 = vmul.f32 %v1416, 0.01
        %v1680 = vmul.f32 %v1418, 0.01
        %v1681 = vmul.f32 %v1457, 0.01
        %v1682 = vmul.f32 %v1459, 0.01
        %v1683 = vmul.f32 %v1498, 0.01
        %v1684 = vmul.f32 %v1500, 0.01
        %v1685 = vmul.f32 %v1539, 0.01
        %v1686 = vmul.f32 %v1541, 0.01
        %v1687 = vmul.f32 %v1580, 0.01
        %v1688 = vmul.f32 %v1582, 0.01
        %v1689 = vmul.f32 %v1621, 0.01
        %v1690 = vmul.f32 %v1623, 0.01
        %v1691 = vsel %vm1627, %v1006, %v1659
        %v1692 = vsel %vm1628, %v1008, %v1660
        %v1693 = vsel %vm1629, %v1047, %v1661
        %v1694 = vsel %vm1630, %v1049, %v1662
        %v1695 = vsel %vm1631, %v1088, %v1663
        %v1696 = vsel %vm1632, %v1090, %v1664
        %v1697 = vsel %vm1633, %v1129, %v1665
        %v1698 = vsel %vm1634, %v1131, %v1666
        %v1699 = vsel %vm1635, %v1170, %v1667
        %v1700 = vsel %vm1636, %v1172, %v1668
        %v1701 = vsel %vm1637, %v1211, %v1669
        %v1702 = vsel %vm1638, %v1213, %v1670
        %v1703 = vsel %vm1639, %v1252, %v1671
        %v1704 = vsel %vm1640, %v1254, %v1672
        %v1705 = vsel %vm1641, %v1293, %v1673
        %v1706 = vsel %vm1642, %v1295, %v1674
        %v1707 = vsel %vm1643, %v1334, %v1675
        %v1708 = vsel %vm1644, %v1336, %v1676
        %v1709 = vsel %vm1645, %v1375, %v1677
        %v1710 = vsel %vm1646, %v1377, %v1678
        %v1711 = vsel %vm1647, %v1416, %v1679
        %v1712 = vsel %vm1648, %v1418, %v1680
        %v1713 = vsel %vm1649, %v1457, %v1681
        %v1714 = vsel %vm1650, %v1459, %v1682
        %v1715 = vsel %vm1651, %v1498, %v1683
        %v1716 = vsel %vm1652, %v1500, %v1684
        %v1717 = vsel %vm1653, %v1539, %v1685
        %v1718 = vsel %vm1654, %v1541, %v1686
        %v1719 = vsel %vm1655, %v1580, %v1687
        %v1720 = vsel %vm1656, %v1582, %v1688
        %v1721 = vsel %vm1657, %v1621, %v1689
        %v1722 = vsel %vm1658, %v1623, %v1690
        %v1723 = vpack.c.bf16 %v1691, %v1691
        %v1724 = vpack.c.bf16 %v1692, %v1692
        %v1725 = vpack.c.bf16 %v1693, %v1693
        %v1726 = vpack.c.bf16 %v1694, %v1694
        %v1727 = vpack.c.bf16 %v1695, %v1695
        %v1728 = vpack.c.bf16 %v1696, %v1696
        %v1729 = vpack.c.bf16 %v1697, %v1697
        %v1730 = vpack.c.bf16 %v1698, %v1698
        %v1731 = vpack.c.bf16 %v1699, %v1699
        %v1732 = vpack.c.bf16 %v1700, %v1700
        %v1733 = vpack.c.bf16 %v1701, %v1701
        %v1734 = vpack.c.bf16 %v1702, %v1702
        %v1735 = vpack.c.bf16 %v1703, %v1703
        %v1736 = vpack.c.bf16 %v1704, %v1704
        %v1737 = vpack.c.bf16 %v1705, %v1705
        %v1738 = vpack.c.bf16 %v1706, %v1706
        %v1739 = vpack.c.bf16 %v1707, %v1707
        %v1740 = vpack.c.bf16 %v1708, %v1708
        %v1741 = vpack.c.bf16 %v1709, %v1709
        %v1742 = vpack.c.bf16 %v1710, %v1710
        %v1743 = vpack.c.bf16 %v1711, %v1711
        %v1744 = vpack.c.bf16 %v1712, %v1712
        %v1745 = vpack.c.bf16 %v1713, %v1713
        %v1746 = vpack.c.bf16 %v1714, %v1714
        %v1747 = vpack.c.bf16 %v1715, %v1715
        %v1748 = vpack.c.bf16 %v1716, %v1716
        %v1749 = vpack.c.bf16 %v1717, %v1717
        %v1750 = vpack.c.bf16 %v1718, %v1718
        %v1751 = vpack.c.bf16 %v1719, %v1719
        %v1752 = vpack.c.bf16 %v1720, %v1720
        %v1753 = vpack.c.bf16 %v1721, %v1721
        %v1754 = vpack.c.bf16 %v1722, %v1722
        %v1787 = vcombine.low %v1723, %v1724
        %v1788 = vcombine.low %v1725, %v1726
        %v1790 = vunpack.c.l.s4 1983009808
        %v1791 = vunpack.c.0.s8 %v1790
        %v1792 = vlaneseq
        %v1793 = vshrl.u32 %v1792, 7
        %v1794 = vsub.s32 %v1791, %v1793
        %v1795 = vrot.slane %v1787, %v1794
        %v1797 = vunpack.c.l.s4 1983009808
        %v1798 = vunpack.c.0.s8 %v1797
        %v1799 = vlaneseq
        %v1800 = vshrl.u32 %v1799, 7
        %v1801 = vsub.s32 %v1798, %v1800
        %v1802 = vrot.slane %v1788, %v1801
        %v1803 = vcombine.low %v1795, %v1802
        %v1804 = vcombine.low %v1727, %v1728
        %v1805 = vcombine.low %v1729, %v1730
        %v1807 = vunpack.c.l.s4 1983009808
        %v1808 = vunpack.c.0.s8 %v1807
        %v1809 = vlaneseq
        %v1810 = vshrl.u32 %v1809, 7
        %v1811 = vsub.s32 %v1808, %v1810
        %v1812 = vrot.slane %v1804, %v1811
        %v1814 = vunpack.c.l.s4 1983009808
        %v1815 = vunpack.c.0.s8 %v1814
        %v1816 = vlaneseq
        %v1817 = vshrl.u32 %v1816, 7
        %v1818 = vsub.s32 %v1815, %v1817
        %v1819 = vrot.slane %v1805, %v1818
        %v1820 = vcombine.low %v1812, %v1819
        %v1821 = vcombine.low %v1731, %v1732
        %v1822 = vcombine.low %v1733, %v1734
        %v1824 = vunpack.c.l.s4 1983009808
        %v1825 = vunpack.c.0.s8 %v1824
        %v1826 = vlaneseq
        %v1827 = vshrl.u32 %v1826, 7
        %v1828 = vsub.s32 %v1825, %v1827
        %v1829 = vrot.slane %v1821, %v1828
        %v1831 = vunpack.c.l.s4 1983009808
        %v1832 = vunpack.c.0.s8 %v1831
        %v1833 = vlaneseq
        %v1834 = vshrl.u32 %v1833, 7
        %v1835 = vsub.s32 %v1832, %v1834
        %v1836 = vrot.slane %v1822, %v1835
        %v1837 = vcombine.low %v1829, %v1836
        %v1838 = vcombine.low %v1735, %v1736
        %v1839 = vcombine.low %v1737, %v1738
        %v1841 = vunpack.c.l.s4 1983009808
        %v1842 = vunpack.c.0.s8 %v1841
        %v1843 = vlaneseq
        %v1844 = vshrl.u32 %v1843, 7
        %v1845 = vsub.s32 %v1842, %v1844
        %v1846 = vrot.slane %v1838, %v1845
        %v1848 = vunpack.c.l.s4 1983009808
        %v1849 = vunpack.c.0.s8 %v1848
        %v1850 = vlaneseq
        %v1851 = vshrl.u32 %v1850, 7
        %v1852 = vsub.s32 %v1849, %v1851
        %v1853 = vrot.slane %v1839, %v1852
        %v1854 = vcombine.low %v1846, %v1853
        %v1855 = vcombine.low %v1739, %v1740
        %v1856 = vcombine.low %v1741, %v1742
        %v1858 = vunpack.c.l.s4 1983009808
        %v1859 = vunpack.c.0.s8 %v1858
        %v1860 = vlaneseq
        %v1861 = vshrl.u32 %v1860, 7
        %v1862 = vsub.s32 %v1859, %v1861
        %v1863 = vrot.slane %v1855, %v1862
        %v1865 = vunpack.c.l.s4 1983009808
        %v1866 = vunpack.c.0.s8 %v1865
        %v1867 = vlaneseq
        %v1868 = vshrl.u32 %v1867, 7
        %v1869 = vsub.s32 %v1866, %v1868
        %v1870 = vrot.slane %v1856, %v1869
        %v1871 = vcombine.low %v1863, %v1870
        %v1872 = vcombine.low %v1743, %v1744
        %v1873 = vcombine.low %v1745, %v1746
        %v1875 = vunpack.c.l.s4 1983009808
        %v1876 = vunpack.c.0.s8 %v1875
        %v1877 = vlaneseq
        %v1878 = vshrl.u32 %v1877, 7
        %v1879 = vsub.s32 %v1876, %v1878
        %v1880 = vrot.slane %v1872, %v1879
        %v1882 = vunpack.c.l.s4 1983009808
        %v1883 = vunpack.c.0.s8 %v1882
        %v1884 = vlaneseq
        %v1885 = vshrl.u32 %v1884, 7
        %v1886 = vsub.s32 %v1883, %v1885
        %v1887 = vrot.slane %v1873, %v1886
        %v1888 = vcombine.low %v1880, %v1887
        %v1889 = vcombine.low %v1747, %v1748
        %v1890 = vcombine.low %v1749, %v1750
        %v1892 = vunpack.c.l.s4 1983009808
        %v1893 = vunpack.c.0.s8 %v1892
        %v1894 = vlaneseq
        %v1895 = vshrl.u32 %v1894, 7
        %v1896 = vsub.s32 %v1893, %v1895
        %v1897 = vrot.slane %v1889, %v1896
        %v1899 = vunpack.c.l.s4 1983009808
        %v1900 = vunpack.c.0.s8 %v1899
        %v1901 = vlaneseq
        %v1902 = vshrl.u32 %v1901, 7
        %v1903 = vsub.s32 %v1900, %v1902
        %v1904 = vrot.slane %v1890, %v1903
        %v1905 = vcombine.low %v1897, %v1904
        %v1906 = vcombine.low %v1751, %v1752
        %v1907 = vcombine.low %v1753, %v1754
        %v1909 = vunpack.c.l.s4 1983009808
        %v1910 = vunpack.c.0.s8 %v1909
        %v1911 = vlaneseq
        %v1912 = vshrl.u32 %v1911, 7
        %v1913 = vsub.s32 %v1910, %v1912
        %v1914 = vrot.slane %v1906, %v1913
        %v1916 = vunpack.c.l.s4 1983009808
        %v1917 = vunpack.c.0.s8 %v1916
        %v1918 = vlaneseq
        %v1919 = vshrl.u32 %v1918, 7
        %v1920 = vsub.s32 %v1917, %v1919
        %v1921 = vrot.slane %v1907, %v1920
        %v1922 = vcombine.low %v1914, %v1921
        %1931 = vst [vmem:[%s381] sm:$0xff] %v1803
        %1932 = vst [vmem:[%s381 + $0x8] sm:$0xff] %v1820
        %1933 = vst [vmem:[%s381 + $0x10] sm:$0xff] %v1837
        %1934 = vst [vmem:[%s381 + $0x18] sm:$0xff] %v1854
        %1935 = vst [vmem:[%s381 + $0x20] sm:$0xff] %v1871
        %1936 = vst [vmem:[%s381 + $0x28] sm:$0xff] %v1888
        %1937 = vst [vmem:[%s381 + $0x30] sm:$0xff] %v1905
        %1938 = vst [vmem:[%s381 + $0x38] sm:$0xff] %v1922
        %s1939 = smul.u32 32, %s14
        %p1940 = scmp.lt.s32.totalorder %s1939, 255
        %s1941 = scalar_select %p1940, %s1939, 255
        %s1942 = smul.addr %s1941, 2
        %s1943 = scalar_lea.vmem %s3, %s1942
        // Predicated region
        $region56: #{forward.6} parent=50 // pred_check
          %p1944 = pneg %p100
        $region57: #{forward.6} parent=50 // pred_check_branch
          %1946 = sbr.rel (%p1944) target = $region59
        $region58: #{forward.6} parent=50 // pred_region
          %s1947 = smul.u32 32, %s14
        $region59: #{forward.6} parent=50 // pred_fallthru
          _
      $region51: #{forward.6} parent=5 // pred_fallthru
        _
      %p1948 = scmp.le.s32.totalorder 2, %s9
      // Predicated region
      $region60: #{forward.6} parent=5 // pred_check
        %p1949 = pneg %p1948
      $region61: #{forward.6} parent=5 // pred_check_branch
        %1951 = sbr.rel (%p1949) target = $region63
      $region62: #{forward.6} parent=5 // pred_region
        %s1952 = ssub.s32 %s9, 2
        // Predicated region
        $region64: #{forward.6} parent=62 // pred_check
          %p1953 = pneg %p106
        $region65: #{forward.6} parent=62 // pred_check_branch
          %1955 = sbr.rel (%p1953) target = $region67
        $region66: #{forward.6} parent=62 // pred_region
          %s1956 = smul.u32 32, %s15
          %p1957 = scmp.lt.s32.totalorder %s1956, 255
          %s1958 = scalar_select %p1957, %s1956, 255
          %s1959 = smul.addr %s1958, 2
          %s1960 = scalar_lea.vmem %s3, %s1959
        $region67: #{forward.6} parent=62 // pred_fallthru
          _
      $region63: #{forward.6} parent=5 // pred_fallthru
        _
    $region6: #{forward.6} parent=1 // loop_footer
      %s13 = sadd.s32 1, %s9
    $region7: #{forward.6} parent=1 // loop_footer_branch
      %8 = sbr.rel target = $region3
    $region8: #{forward.6} parent=1 // loop_exit
      _

// kernel: forward.7
$region0: #{forward.7}
  #allocation0 [shape = 'u32[]', space=smem, size = 0x4, offset = 0x4, fixed_abs, tag = 'smem constant byte address 0x4 - core index']
  #allocation1 [shape = 'u32[144,128]{1,0:T(1,128)}', space=vmem, size = 0x12000, scoped, tag = 'internal scratch']
  %s0 = inlined_call_operand.vmem [shape: bf16[64,8192], index: 0, kind: input, shape index: {}]
  %s1 = inlined_call_operand.vmem [shape: bf16[8,64], index: 1, kind: input, shape index: {}]
  %s2 = inlined_call_operand.vmem [shape: f32[8,1], index: 2, kind: input, shape index: {}]
  %s3 = inlined_call_operand.vmem [shape: bf16[8,8192], index: 3, kind: output, shape index: {}]
  %s4 = sld [smem:[#allocation0]]
  $region68: #{forward.7} parent=0
    _
  %s6 = ssub.s32 1, %s4
  %s7 = scalar_select 0, %s6, %s4
  $region1: #{forward.7} parent=0
    #allocation2 [shape = 'u8[1048576]{0}', space=vmem, size = 0x100000, scoped, tag = 'input window, operand 0']
    loop: start=0, step=1, limit=4
    $region2: #{forward.7} parent=1 // loop_pre_header
      _
    $region3: #{forward.7} parent=1 // loop_header
      %s9 = sphi 0, %s13
      %p10 = scmp.ge.s32.totalorder %s9, 4
      %s19 = sphi 0, %s21
      %s22 = sphi 0, %s19
      %s23 = sphi 0, %s22
      %s39 = sphi 0, %s23
      %s43 = sphi 0, %s43
      %s45 = sphi 0, %s43
      %s46 = sphi 0, %s45
      %s60 = sphi 0, %s46
      %s64 = sphi 0, %s64
      %s66 = sphi 0, %s64
      %s67 = sphi 0, %s66
      %s81 = sphi 0, %s67
      %s87 = sphi 0, %s89
      %s90 = sphi 0, %s87
      %s91 = sphi 0, %s90
      %s107 = sphi 0, %s91
    $region4: #{forward.7} parent=1 // loop_header_branch
      %12 = sbr.rel (%p10) target = $region8
    $region5: #{forward.7} parent=1 // loop_body
      %s14 = ssub.s32 %s9, 1
      %s15 = ssub.s32 %s9, 2
      %s16 = sadd.s32 %s9, 1
      %s17 = ssub.s32 %s9, %s16
      %p18 = scmp.eq.s32.totalorder %s17, 0
      %s20 = sadd.s32 %s19, 1
      %s21 = scalar_select %p18, %s19, %s20
      %p24 = pneg %p18
      %p25 = scmp.eq.s32.totalorder %s9, 1
      %p26 = por %p24, %p25
      %p27 = scmp.ne.s32.totalorder %s19, %s22
      %p28 = scmp.eq.s32.totalorder %s9, 0
      %p29 = por %p27, %p28
      %p30 = scmp.ne.s32.totalorder %s19, %s22
      %p31 = scmp.eq.s32.totalorder %s14, 1
      %p32 = por %p30, %p31
      %p33 = scmp.ne.s32.totalorder %s22, %s23
      %p34 = scmp.eq.s32.totalorder %s14, 0
      %p35 = por %p33, %p34
      %p36 = scmp.ne.s32.totalorder %s22, %s23
      %p37 = scmp.eq.s32.totalorder %s15, 1
      %p38 = por %p36, %p37
      %p40 = scmp.ne.s32.totalorder %s23, %s39
      %p41 = scmp.eq.s32.totalorder %s15, 0
      %p42 = por %p40, %p41
      %s44 = sadd.s32 %s43, 1
      %p47 = scmp.eq.s32.totalorder %s9, 1
      %p48 = scmp.ne.s32.totalorder %s43, %s45
      %p49 = scmp.eq.s32.totalorder %s9, 0
      %p50 = por %p48, %p49
      %p51 = scmp.ne.s32.totalorder %s43, %s45
      %p52 = scmp.eq.s32.totalorder %s14, 1
      %p53 = por %p51, %p52
      %p54 = scmp.ne.s32.totalorder %s45, %s46
      %p55 = scmp.eq.s32.totalorder %s14, 0
      %p56 = por %p54, %p55
      %p57 = scmp.ne.s32.totalorder %s45, %s46
      %p58 = scmp.eq.s32.totalorder %s15, 1
      %p59 = por %p57, %p58
      %p61 = scmp.ne.s32.totalorder %s46, %s60
      %p62 = scmp.eq.s32.totalorder %s15, 0
      %p63 = por %p61, %p62
      %s65 = sadd.s32 %s64, 1
      %p68 = scmp.eq.s32.totalorder %s9, 1
      %p69 = scmp.ne.s32.totalorder %s64, %s66
      %p70 = scmp.eq.s32.totalorder %s9, 0
      %p71 = por %p69, %p70
      %p72 = scmp.ne.s32.totalorder %s64, %s66
      %p73 = scmp.eq.s32.totalorder %s14, 1
      %p74 = por %p72, %p73
      %p75 = scmp.ne.s32.totalorder %s66, %s67
      %p76 = scmp.eq.s32.totalorder %s14, 0
      %p77 = por %p75, %p76
      %p78 = scmp.ne.s32.totalorder %s66, %s67
      %p79 = scmp.eq.s32.totalorder %s15, 1
      %p80 = por %p78, %p79
      %p82 = scmp.ne.s32.totalorder %s67, %s81
      %p83 = scmp.eq.s32.totalorder %s15, 0
      %p84 = por %p82, %p83
      %s85 = ssub.s32 %s9, %s16
      %p86 = scmp.eq.s32.totalorder %s85, 0
      %s88 = sadd.s32 %s87, 1
      %s89 = scalar_select %p86, %s87, %s88
      %p92 = pneg %p86
      %p93 = scmp.eq.s32.totalorder %s9, 1
      %p94 = por %p92, %p93
      %p95 = scmp.ne.s32.totalorder %s87, %s90
      %p96 = scmp.eq.s32.totalorder %s9, 0
      %p97 = por %p95, %p96
      %p98 = scmp.ne.s32.totalorder %s87, %s90
      %p99 = scmp.eq.s32.totalorder %s14, 1
      %p100 = por %p98, %p99
      %p101 = scmp.ne.s32.totalorder %s90, %s91
      %p102 = scmp.eq.s32.totalorder %s14, 0
      %p103 = por %p101, %p102
      %p104 = scmp.ne.s32.totalorder %s90, %s91
      %p105 = scmp.eq.s32.totalorder %s15, 1
      %p106 = por %p104, %p105
      %p108 = scmp.ne.s32.totalorder %s91, %s107
      %p109 = scmp.eq.s32.totalorder %s15, 0
      %p110 = por %p108, %p109
      %p111 = scmp.le.s32.totalorder 1, %s9
      %p112 = scmp.lt.s32.totalorder %s9, 3
      %p113 = pnand %p111, %p112
      %p114 = pneg %p113
      // Predicated region
      $region9: #{forward.7} parent=5 // pred_check
        _
      $region10: #{forward.7} parent=5 // pred_check_branch
        %116 = sbr.rel (%p113) target = $region12
      $region11: #{forward.7} parent=5 // pred_region
        %s117 = ssub.s32 %s9, 1
        // Predicated region
        $region13: #{forward.7} parent=11 // pred_check
          %p118 = pneg %p56
        $region14: #{forward.7} parent=11 // pred_check_branch
          %120 = sbr.rel (%p118) target = $region16
        $region15: #{forward.7} parent=11 // pred_region
          _
        $region16: #{forward.7} parent=11 // pred_fallthru
          _
        // Predicated region
        $region17: #{forward.7} parent=11 // pred_check
          %p121 = pneg %p77
        $region18: #{forward.7} parent=11 // pred_check_branch
          %123 = sbr.rel (%p121) target = $region20
        $region19: #{forward.7} parent=11 // pred_region
          _
        $region20: #{forward.7} parent=11 // pred_fallthru
          _
      $region12: #{forward.7} parent=5 // pred_fallthru
        _
      %p124 = scmp.lt.s32.totalorder %s9, 2
      // Predicated region
      $region21: #{forward.7} parent=5 // pred_check
        %p125 = pneg %p124
      $region22: #{forward.7} parent=5 // pred_check_branch
        %127 = sbr.rel (%p125) target = $region24
      $region23: #{forward.7} parent=5 // pred_region
        // Predicated region
        $region25: #{forward.7} parent=23 // pred_check
          %p128 = pneg %p29
        $region26: #{forward.7} parent=23 // pred_check_branch
          %130 = sbr.rel (%p128) target = $region28
        $region27: #{forward.7} parent=23 // pred_region
          %s131 = sand.u32 %s19, 1
          %s132 = sand.u32 %s19, 1
          %s133 = smul.addr %s132, 1024
          %s134 = scalar_lea.vmem [#allocation2], %s133
          %s135 = smul.u32 32, %s9
          %s136 = smul.addr %s135, 4
          %s137 = scalar_lea.vmem %s0, %s136
          // Predicated region
          $region29: #{forward.7} parent=27 // pred_check
            _
          $region30: #{forward.7} parent=27 // pred_check_branch
            %139 = sbr.rel (0) target = $region32
          $region31: #{forward.7} parent=27 // pred_region
            // Predicated region
            $region33: #{forward.7} parent=31 // pred_check
              _
            $region34: #{forward.7} parent=31 // pred_check_branch
              %141 = sbr.rel (0) target = $region36
            $region35: #{forward.7} parent=31 // pred_region
              loop: start=0, step=1, limit=1
              $region37: #{forward.7} parent=35 // loop_pre_header
                _
              $region38: #{forward.7} parent=35 // loop_header
                %s143 = sphi 0, %s147
                %p144 = scmp.ge.s32.totalorder %s143, 1
                %s148 = sphi %s137, %s137
                %s149 = sphi %s134, %s134
              $region39: #{forward.7} parent=35 // loop_header_branch
                %146 = sbr.rel (%p144) target = $region43
              $region40: #{forward.7} parent=35 // loop_body
                %v150 = vld [vmem:[%s148] sm:$0xff]
                %151 = vst [vmem:[%s149] sm:$0xff] %v150
                %v152 = vld [vmem:[%s148 + $0x8] sm:$0xff]
                %153 = vst [vmem:[%s149 + $0x8] sm:$0xff] %v152
                %v154 = vld [vmem:[%s148 + $0x10] sm:$0xff]
                %155 = vst [vmem:[%s149 + $0x10] sm:$0xff] %v154
                %v156 = vld [vmem:[%s148 + $0x18] sm:$0xff]
                %157 = vst [vmem:[%s149 + $0x18] sm:$0xff] %v156
                %v158 = vld [vmem:[%s148 + $0x20] sm:$0xff]
                %159 = vst [vmem:[%s149 + $0x20] sm:$0xff] %v158
                %v160 = vld [vmem:[%s148 + $0x28] sm:$0xff]
                %161 = vst [vmem:[%s149 + $0x28] sm:$0xff] %v160
                %v162 = vld [vmem:[%s148 + $0x30] sm:$0xff]
                %163 = vst [vmem:[%s149 + $0x30] sm:$0xff] %v162
                %v164 = vld [vmem:[%s148 + $0x38] sm:$0xff]
                %165 = vst [vmem:[%s149 + $0x38] sm:$0xff] %v164
                %v166 = vld [vmem:[%s148 + $0x40] sm:$0xff]
                %167 = vst [vmem:[%s149 + $0x40] sm:$0xff] %v166
                %v168 = vld [vmem:[%s148 + $0x48] sm:$0xff]
                %169 = vst [vmem:[%s149 + $0x48] sm:$0xff] %v168
                %v170 = vld [vmem:[%s148 + $0x50] sm:$0xff]
                %171 = vst [vmem:[%s149 + $0x50] sm:$0xff] %v170
                %v172 = vld [vmem:[%s148 + $0x58] sm:$0xff]
                %173 = vst [vmem:[%s149 + $0x58] sm:$0xff] %v172
                %v174 = vld [vmem:[%s148 + $0x60] sm:$0xff]
                %175 = vst [vmem:[%s149 + $0x60] sm:$0xff] %v174
                %v176 = vld [vmem:[%s148 + $0x68] sm:$0xff]
                %177 = vst [vmem:[%s149 + $0x68] sm:$0xff] %v176
                %v178 = vld [vmem:[%s148 + $0x70] sm:$0xff]
                %179 = vst [vmem:[%s149 + $0x70] sm:$0xff] %v178
                %v180 = vld [vmem:[%s148 + $0x78] sm:$0xff]
                %181 = vst [vmem:[%s149 + $0x78] sm:$0xff] %v180
                %v182 = vld [vmem:[%s148 + $0x100] sm:$0xff]
                %183 = vst [vmem:[%s149 + $0x80] sm:$0xff] %v182
                %v184 = vld [vmem:[%s148 + $0x108] sm:$0xff]
                %185 = vst [vmem:[%s149 + $0x88] sm:$0xff] %v184
                %v186 = vld [vmem:[%s148 + $0x110] sm:$0xff]
                %187 = vst [vmem:[%s149 + $0x90] sm:$0xff] %v186
                %v188 = vld [vmem:[%s148 + $0x118] sm:$0xff]
                %189 = vst [vmem:[%s149 + $0x98] sm:$0xff] %v188
                %v190 = vld [vmem:[%s148 + $0x120] sm:$0xff]
                %191 = vst [vmem:[%s149 + $0xa0] sm:$0xff] %v190
                %v192 = vld [vmem:[%s148 + $0x128] sm:$0xff]
                %193 = vst [vmem:[%s149 + $0xa8] sm:$0xff] %v192
                %v194 = vld [vmem:[%s148 + $0x130] sm:$0xff]
                %195 = vst [vmem:[%s149 + $0xb0] sm:$0xff] %v194
                %v196 = vld [vmem:[%s148 + $0x138] sm:$0xff]
                %197 = vst [vmem:[%s149 + $0xb8] sm:$0xff] %v196
                %v198 = vld [vmem:[%s148 + $0x140] sm:$0xff]
                %199 = vst [vmem:[%s149 + $0xc0] sm:$0xff] %v198
                %v200 = vld [vmem:[%s148 + $0x148] sm:$0xff]
                %201 = vst [vmem:[%s149 + $0xc8] sm:$0xff] %v200
                %v202 = vld [vmem:[%s148 + $0x150] sm:$0xff]
                %203 = vst [vmem:[%s149 + $0xd0] sm:$0xff] %v202
                %v204 = vld [vmem:[%s148 + $0x158] sm:$0xff]
                %205 = vst [vmem:[%s149 + $0xd8] sm:$0xff] %v204
                %v206 = vld [vmem:[%s148 + $0x160] sm:$0xff]
                %207 = vst [vmem:[%s149 + $0xe0] sm:$0xff] %v206
                %v208 = vld [vmem:[%s148 + $0x168] sm:$0xff]
                %209 = vst [vmem:[%s149 + $0xe8] sm:$0xff] %v208
                %v210 = vld [vmem:[%s148 + $0x170] sm:$0xff]
                %211 = vst [vmem:[%s149 + $0xf0] sm:$0xff] %v210
                %v212 = vld [vmem:[%s148 + $0x178] sm:$0xff]
                %213 = vst [vmem:[%s149 + $0xf8] sm:$0xff] %v212
                %v214 = vld [vmem:[%s148 + $0x200] sm:$0xff]
                %215 = vst [vmem:[%s149 + $0x100] sm:$0xff] %v214
                %v216 = vld [vmem:[%s148 + $0x208] sm:$0xff]
                %217 = vst [vmem:[%s149 + $0x108] sm:$0xff] %v216
                %v218 = vld [vmem:[%s148 + $0x210] sm:$0xff]
                %219 = vst [vmem:[%s149 + $0x110] sm:$0xff] %v218
                %v220 = vld [vmem:[%s148 + $0x218] sm:$0xff]
                %221 = vst [vmem:[%s149 + $0x118] sm:$0xff] %v220
                %v222 = vld [vmem:[%s148 + $0x220] sm:$0xff]
                %223 = vst [vmem:[%s149 + $0x120] sm:$0xff] %v222
                %v224 = vld [vmem:[%s148 + $0x228] sm:$0xff]
                %225 = vst [vmem:[%s149 + $0x128] sm:$0xff] %v224
                %v226 = vld [vmem:[%s148 + $0x230] sm:$0xff]
                %227 = vst [vmem:[%s149 + $0x130] sm:$0xff] %v226
                %v228 = vld [vmem:[%s148 + $0x238] sm:$0xff]
                %229 = vst [vmem:[%s149 + $0x138] sm:$0xff] %v228
                %v230 = vld [vmem:[%s148 + $0x240] sm:$0xff]
                %231 = vst [vmem:[%s149 + $0x140] sm:$0xff] %v230
                %v232 = vld [vmem:[%s148 + $0x248] sm:$0xff]
                %233 = vst [vmem:[%s149 + $0x148] sm:$0xff] %v232
                %v234 = vld [vmem:[%s148 + $0x250] sm:$0xff]
                %235 = vst [vmem:[%s149 + $0x150] sm:$0xff] %v234
                %v236 = vld [vmem:[%s148 + $0x258] sm:$0xff]
                %237 = vst [vmem:[%s149 + $0x158] sm:$0xff] %v236
                %v238 = vld [vmem:[%s148 + $0x260] sm:$0xff]
                %239 = vst [vmem:[%s149 + $0x160] sm:$0xff] %v238
                %v240 = vld [vmem:[%s148 + $0x268] sm:$0xff]
                %241 = vst [vmem:[%s149 + $0x168] sm:$0xff] %v240
                %v242 = vld [vmem:[%s148 + $0x270] sm:$0xff]
                %243 = vst [vmem:[%s149 + $0x170] sm:$0xff] %v242
                %v244 = vld [vmem:[%s148 + $0x278] sm:$0xff]
                %245 = vst [vmem:[%s149 + $0x178] sm:$0xff] %v244
                %v246 = vld [vmem:[%s148 + $0x300] sm:$0xff]
                %247 = vst [vmem:[%s149 + $0x180] sm:$0xff] %v246
                %v248 = vld [vmem:[%s148 + $0x308] sm:$0xff]
                %249 = vst [vmem:[%s149 + $0x188] sm:$0xff] %v248
                %v250 = vld [vmem:[%s148 + $0x310] sm:$0xff]
                %251 = vst [vmem:[%s149 + $0x190] sm:$0xff] %v250
                %v252 = vld [vmem:[%s148 + $0x318] sm:$0xff]
                %253 = vst [vmem:[%s149 + $0x198] sm:$0xff] %v252
                %v254 = vld [vmem:[%s148 + $0x320] sm:$0xff]
                %255 = vst [vmem:[%s149 + $0x1a0] sm:$0xff] %v254
                %v256 = vld [vmem:[%s148 + $0x328] sm:$0xff]
                %257 = vst [vmem:[%s149 + $0x1a8] sm:$0xff] %v256
                %v258 = vld [vmem:[%s148 + $0x330] sm:$0xff]
                %259 = vst [vmem:[%s149 + $0x1b0] sm:$0xff] %v258
                %v260 = vld [vmem:[%s148 + $0x338] sm:$0xff]
                %261 = vst [vmem:[%s149 + $0x1b8] sm:$0xff] %v260
                %v262 = vld [vmem:[%s148 + $0x340] sm:$0xff]
                %263 = vst [vmem:[%s149 + $0x1c0] sm:$0xff] %v262
                %v264 = vld [vmem:[%s148 + $0x348] sm:$0xff]
                %265 = vst [vmem:[%s149 + $0x1c8] sm:$0xff] %v264
                %v266 = vld [vmem:[%s148 + $0x350] sm:$0xff]
                %267 = vst [vmem:[%s149 + $0x1d0] sm:$0xff] %v266
                %v268 = vld [vmem:[%s148 + $0x358] sm:$0xff]
                %269 = vst [vmem:[%s149 + $0x1d8] sm:$0xff] %v268
                %v270 = vld [vmem:[%s148 + $0x360] sm:$0xff]
                %271 = vst [vmem:[%s149 + $0x1e0] sm:$0xff] %v270
                %v272 = vld [vmem:[%s148 + $0x368] sm:$0xff]
                %273 = vst [vmem:[%s149 + $0x1e8] sm:$0xff] %v272
                %v274 = vld [vmem:[%s148 + $0x370] sm:$0xff]
                %275 = vst [vmem:[%s149 + $0x1f0] sm:$0xff] %v274
                %v276 = vld [vmem:[%s148 + $0x378] sm:$0xff]
                %277 = vst [vmem:[%s149 + $0x1f8] sm:$0xff] %v276
                %v278 = vld [vmem:[%s148 + $0x400] sm:$0xff]
                %279 = vst [vmem:[%s149 + $0x200] sm:$0xff] %v278
                %v280 = vld [vmem:[%s148 + $0x408] sm:$0xff]
                %281 = vst [vmem:[%s149 + $0x208] sm:$0xff] %v280
                %v282 = vld [vmem:[%s148 + $0x410] sm:$0xff]
                %283 = vst [vmem:[%s149 + $0x210] sm:$0xff] %v282
                %v284 = vld [vmem:[%s148 + $0x418] sm:$0xff]
                %285 = vst [vmem:[%s149 + $0x218] sm:$0xff] %v284
                %v286 = vld [vmem:[%s148 + $0x420] sm:$0xff]
                %287 = vst [vmem:[%s149 + $0x220] sm:$0xff] %v286
                %v288 = vld [vmem:[%s148 + $0x428] sm:$0xff]
                %289 = vst [vmem:[%s149 + $0x228] sm:$0xff] %v288
                %v290 = vld [vmem:[%s148 + $0x430] sm:$0xff]
                %291 = vst [vmem:[%s149 + $0x230] sm:$0xff] %v290
                %v292 = vld [vmem:[%s148 + $0x438] sm:$0xff]
                %293 = vst [vmem:[%s149 + $0x238] sm:$0xff] %v292
                %v294 = vld [vmem:[%s148 + $0x440] sm:$0xff]
                %295 = vst [vmem:[%s149 + $0x240] sm:$0xff] %v294
                %v296 = vld [vmem:[%s148 + $0x448] sm:$0xff]
                %297 = vst [vmem:[%s149 + $0x248] sm:$0xff] %v296
                %v298 = vld [vmem:[%s148 + $0x450] sm:$0xff]
                %299 = vst [vmem:[%s149 + $0x250] sm:$0xff] %v298
                %v300 = vld [vmem:[%s148 + $0x458] sm:$0xff]
                %301 = vst [vmem:[%s149 + $0x258] sm:$0xff] %v300
                %v302 = vld [vmem:[%s148 + $0x460] sm:$0xff]
                %303 = vst [vmem:[%s149 + $0x260] sm:$0xff] %v302
                %v304 = vld [vmem:[%s148 + $0x468] sm:$0xff]
                %305 = vst [vmem:[%s149 + $0x268] sm:$0xff] %v304
                %v306 = vld [vmem:[%s148 + $0x470] sm:$0xff]
                %307 = vst [vmem:[%s149 + $0x270] sm:$0xff] %v306
                %v308 = vld [vmem:[%s148 + $0x478] sm:$0xff]
                %309 = vst [vmem:[%s149 + $0x278] sm:$0xff] %v308
                %v310 = vld [vmem:[%s148 + $0x500] sm:$0xff]
                %311 = vst [vmem:[%s149 + $0x280] sm:$0xff] %v310
                %v312 = vld [vmem:[%s148 + $0x508] sm:$0xff]
                %313 = vst [vmem:[%s149 + $0x288] sm:$0xff] %v312
                %v314 = vld [vmem:[%s148 + $0x510] sm:$0xff]
                %315 = vst [vmem:[%s149 + $0x290] sm:$0xff] %v314
                %v316 = vld [vmem:[%s148 + $0x518] sm:$0xff]
                %317 = vst [vmem:[%s149 + $0x298] sm:$0xff] %v316
                %v318 = vld [vmem:[%s148 + $0x520] sm:$0xff]
                %319 = vst [vmem:[%s149 + $0x2a0] sm:$0xff] %v318
                %v320 = vld [vmem:[%s148 + $0x528] sm:$0xff]
                %321 = vst [vmem:[%s149 + $0x2a8] sm:$0xff] %v320
                %v322 = vld [vmem:[%s148 + $0x530] sm:$0xff]
                %323 = vst [vmem:[%s149 + $0x2b0] sm:$0xff] %v322
                %v324 = vld [vmem:[%s148 + $0x538] sm:$0xff]
                %325 = vst [vmem:[%s149 + $0x2b8] sm:$0xff] %v324
                %v326 = vld [vmem:[%s148 + $0x540] sm:$0xff]
                %327 = vst [vmem:[%s149 + $0x2c0] sm:$0xff] %v326
                %v328 = vld [vmem:[%s148 + $0x548] sm:$0xff]
                %329 = vst [vmem:[%s149 + $0x2c8] sm:$0xff] %v328
                %v330 = vld [vmem:[%s148 + $0x550] sm:$0xff]
                %331 = vst [vmem:[%s149 + $0x2d0] sm:$0xff] %v330
                %v332 = vld [vmem:[%s148 + $0x558] sm:$0xff]
                %333 = vst [vmem:[%s149 + $0x2d8] sm:$0xff] %v332
                %v334 = vld [vmem:[%s148 + $0x560] sm:$0xff]
                %335 = vst [vmem:[%s149 + $0x2e0] sm:$0xff] %v334
                %v336 = vld [vmem:[%s148 + $0x568] sm:$0xff]
                %337 = vst [vmem:[%s149 + $0x2e8] sm:$0xff] %v336
                %v338 = vld [vmem:[%s148 + $0x570] sm:$0xff]
                %339 = vst [vmem:[%s149 + $0x2f0] sm:$0xff] %v338
                %v340 = vld [vmem:[%s148 + $0x578] sm:$0xff]
                %341 = vst [vmem:[%s149 + $0x2f8] sm:$0xff] %v340
                %v342 = vld [vmem:[%s148 + $0x600] sm:$0xff]
                %343 = vst [vmem:[%s149 + $0x300] sm:$0xff] %v342
                %v344 = vld [vmem:[%s148 + $0x608] sm:$0xff]
                %345 = vst [vmem:[%s149 + $0x308] sm:$0xff] %v344
                %v346 = vld [vmem:[%s148 + $0x610] sm:$0xff]
                %347 = vst [vmem:[%s149 + $0x310] sm:$0xff] %v346
                %v348 = vld [vmem:[%s148 + $0x618] sm:$0xff]
                %349 = vst [vmem:[%s149 + $0x318] sm:$0xff] %v348
                %v350 = vld [vmem:[%s148 + $0x620] sm:$0xff]
                %351 = vst [vmem:[%s149 + $0x320] sm:$0xff] %v350
                %v352 = vld [vmem:[%s148 + $0x628] sm:$0xff]
                %353 = vst [vmem:[%s149 + $0x328] sm:$0xff] %v352
                %v354 = vld [vmem:[%s148 + $0x630] sm:$0xff]
                %355 = vst [vmem:[%s149 + $0x330] sm:$0xff] %v354
                %v356 = vld [vmem:[%s148 + $0x638] sm:$0xff]
                %357 = vst [vmem:[%s149 + $0x338] sm:$0xff] %v356
                %v358 = vld [vmem:[%s148 + $0x640] sm:$0xff]
                %359 = vst [vmem:[%s149 + $0x340] sm:$0xff] %v358
                %v360 = vld [vmem:[%s148 + $0x648] sm:$0xff]
                %361 = vst [vmem:[%s149 + $0x348] sm:$0xff] %v360
                %v362 = vld [vmem:[%s148 + $0x650] sm:$0xff]
                %363 = vst [vmem:[%s149 + $0x350] sm:$0xff] %v362
                %v364 = vld [vmem:[%s148 + $0x658] sm:$0xff]
                %365 = vst [vmem:[%s149 + $0x358] sm:$0xff] %v364
                %v366 = vld [vmem:[%s148 + $0x660] sm:$0xff]
                %367 = vst [vmem:[%s149 + $0x360] sm:$0xff] %v366
                %v368 = vld [vmem:[%s148 + $0x668] sm:$0xff]
                %369 = vst [vmem:[%s149 + $0x368] sm:$0xff] %v368
                %v370 = vld [vmem:[%s148 + $0x670] sm:$0xff]
                %371 = vst [vmem:[%s149 + $0x370] sm:$0xff] %v370
                %v372 = vld [vmem:[%s148 + $0x678] sm:$0xff]
                %373 = vst [vmem:[%s149 + $0x378] sm:$0xff] %v372
                %v374 = vld [vmem:[%s148 + $0x700] sm:$0xff]
                %375 = vst [vmem:[%s149 + $0x380] sm:$0xff] %v374
                %v376 = vld [vmem:[%s148 + $0x708] sm:$0xff]
                %377 = vst [vmem:[%s149 + $0x388] sm:$0xff] %v376
                %v378 = vld [vmem:[%s148 + $0x710] sm:$0xff]
                %379 = vst [vmem:[%s149 + $0x390] sm:$0xff] %v378
                %v380 = vld [vmem:[%s148 + $0x718] sm:$0xff]
                %381 = vst [vmem:[%s149 + $0x398] sm:$0xff] %v380
                %v382 = vld [vmem:[%s148 + $0x720] sm:$0xff]
                %383 = vst [vmem:[%s149 + $0x3a0] sm:$0xff] %v382
                %v384 = vld [vmem:[%s148 + $0x728] sm:$0xff]
                %385 = vst [vmem:[%s149 + $0x3a8] sm:$0xff] %v384
                %v386 = vld [vmem:[%s148 + $0x730] sm:$0xff]
                %387 = vst [vmem:[%s149 + $0x3b0] sm:$0xff] %v386
                %v388 = vld [vmem:[%s148 + $0x738] sm:$0xff]
                %389 = vst [vmem:[%s149 + $0x3b8] sm:$0xff] %v388
                %v390 = vld [vmem:[%s148 + $0x740] sm:$0xff]
                %391 = vst [vmem:[%s149 + $0x3c0] sm:$0xff] %v390
                %v392 = vld [vmem:[%s148 + $0x748] sm:$0xff]
                %393 = vst [vmem:[%s149 + $0x3c8] sm:$0xff] %v392
                %v394 = vld [vmem:[%s148 + $0x750] sm:$0xff]
                %395 = vst [vmem:[%s149 + $0x3d0] sm:$0xff] %v394
                %v396 = vld [vmem:[%s148 + $0x758] sm:$0xff]
                %397 = vst [vmem:[%s149 + $0x3d8] sm:$0xff] %v396
                %v398 = vld [vmem:[%s148 + $0x760] sm:$0xff]
                %399 = vst [vmem:[%s149 + $0x3e0] sm:$0xff] %v398
                %v400 = vld [vmem:[%s148 + $0x768] sm:$0xff]
                %401 = vst [vmem:[%s149 + $0x3e8] sm:$0xff] %v400
                %v402 = vld [vmem:[%s148 + $0x770] sm:$0xff]
                %403 = vst [vmem:[%s149 + $0x3f0] sm:$0xff] %v402
                %v404 = vld [vmem:[%s148 + $0x778] sm:$0xff]
                %405 = vst [vmem:[%s149 + $0x3f8] sm:$0xff] %v404
              $region41: #{forward.7} parent=35 // loop_footer
                %s147 = sadd.s32 1, %s143
              $region42: #{forward.7} parent=35 // loop_footer_branch
                %142 = sbr.rel target = $region38
              $region43: #{forward.7} parent=35 // loop_exit
                _
            $region36: #{forward.7} parent=31 // pred_fallthru
              _
            // Predicated region
            $region44: #{forward.7} parent=31 // pred_check
              _
            $region45: #{forward.7} parent=31 // pred_check_branch
              %407 = sbr.rel target = $region47
            $region46: #{forward.7} parent=31 // pred_region
              _
            $region47: #{forward.7} parent=31 // pred_fallthru
              _
          $region32: #{forward.7} parent=27 // pred_fallthru
            _
          %408 = vnop
        $region28: #{forward.7} parent=23 // pred_fallthru
          _
      $region24: #{forward.7} parent=5 // pred_fallthru
        _
      %p409 = scmp.le.s32.totalorder 1, %s9
      %p410 = scmp.lt.s32.totalorder %s9, 3
      %p411 = pnand %p409, %p410
      %p412 = pneg %p411
      // Predicated region
      $region48: #{forward.7} parent=5 // pred_check
        _
      $region49: #{forward.7} parent=5 // pred_check_branch
        %414 = sbr.rel (%p411) target = $region51
      $region50: #{forward.7} parent=5 // pred_region
        %s415 = ssub.s32 %s9, 1
        %s416 = sand.u32 %s22, 1
        %s417 = sand.u32 %s22, 1
        %s418 = smul.addr %s417, 1024
        %s419 = scalar_lea.vmem [#allocation2], %s418
        // Predicated region
        $region52: #{forward.7} parent=50 // pred_check
          %p420 = pneg %p35
        $region53: #{forward.7} parent=50 // pred_check_branch
          %422 = sbr.rel (%p420) target = $region55
        $region54: #{forward.7} parent=50 // pred_region
          _
        $region55: #{forward.7} parent=50 // pred_fallthru
          _
        %s423 = sand.u32 %s22, 1
        %s424 = sand.u32 %s22, 1
        %s425 = smul.addr %s424, 1024
        %s426 = scalar_lea.vmem [#allocation2], %s425
        %p427 = pneg %p35
        %p428 = pneg %p32
        %p429 = pneg %p56
        %p430 = pneg %p53
        %p431 = pneg %p77
        %p432 = pneg %p74
        %p433 = pneg %p103
        %p434 = pneg %p100
        %s435 = smul.u32 32, %s14
        %p436 = scmp.lt.s32.totalorder %s435, 63
        %s437 = scalar_select %p436, %s435, 63
        %s438 = smul.addr %s437, 4
        %s439 = scalar_lea.vmem %s3, %s438
        %s440 = smul.u32 32, %s14
        %s441 = smul.u32 32, %s14
        %p442 = scmp.lt.s32.totalorder %s441, 63
        %s443 = scalar_select %p442, %s441, 63
        %s444 = smul.addr %s443, 4
        %s445 = scalar_lea.vmem %s3, %s444
        %s446 = smul.u32 32, %s14
        %v448 = vld [vmem:[%s1] sm:$0xf]
        %v449 = vld [vmem:[%s419] sm:$0xff]
        %v450 = vld [vmem:[%s419 + $0x8] sm:$0xff]
        %v451 = vld [vmem:[%s419 + $0x10] sm:$0xff]
        %v452 = vld [vmem:[%s419 + $0x18] sm:$0xff]
        %v453 = vld [vmem:[%s419 + $0x20] sm:$0xff]
        %v454 = vld [vmem:[%s419 + $0x28] sm:$0xff]
        %v455 = vld [vmem:[%s419 + $0x30] sm:$0xff]
        %v456 = vld [vmem:[%s419 + $0x38] sm:$0xff]
        %v457 = vld [vmem:[%s419 + $0x40] sm:$0xff]
        %v458 = vld [vmem:[%s419 + $0x48] sm:$0xff]
        %v459 = vld [vmem:[%s419 + $0x50] sm:$0xff]
        %v460 = vld [vmem:[%s419 + $0x58] sm:$0xff]
        %v461 = vld [vmem:[%s419 + $0x60] sm:$0xff]
        %v462 = vld [vmem:[%s419 + $0x68] sm:$0xff]
        %v463 = vld [vmem:[%s419 + $0x70] sm:$0xff]
        %v464 = vld [vmem:[%s419 + $0x78] sm:$0xff]
        %v465 = vld [vmem:[%s419 + $0x80] sm:$0xff]
        %v466 = vld [vmem:[%s419 + $0x88] sm:$0xff]
        %v467 = vld [vmem:[%s419 + $0x90] sm:$0xff]
        %v468 = vld [vmem:[%s419 + $0x98] sm:$0xff]
        %v469 = vld [vmem:[%s419 + $0xa0] sm:$0xff]
        %v470 = vld [vmem:[%s419 + $0xa8] sm:$0xff]
        %v471 = vld [vmem:[%s419 + $0xb0] sm:$0xff]
        %v472 = vld [vmem:[%s419 + $0xb8] sm:$0xff]
        %v473 = vld [vmem:[%s419 + $0xc0] sm:$0xff]
        %v474 = vld [vmem:[%s419 + $0xc8] sm:$0xff]
        %v475 = vld [vmem:[%s419 + $0xd0] sm:$0xff]
        %v476 = vld [vmem:[%s419 + $0xd8] sm:$0xff]
        %v477 = vld [vmem:[%s419 + $0xe0] sm:$0xff]
        %v478 = vld [vmem:[%s419 + $0xe8] sm:$0xff]
        %v479 = vld [vmem:[%s419 + $0xf0] sm:$0xff]
        %v480 = vld [vmem:[%s419 + $0xf8] sm:$0xff]
        %v481 = vld [vmem:[%s419 + $0x100] sm:$0xff]
        %v482 = vld [vmem:[%s419 + $0x108] sm:$0xff]
        %v483 = vld [vmem:[%s419 + $0x110] sm:$0xff]
        %v484 = vld [vmem:[%s419 + $0x118] sm:$0xff]
        %v485 = vld [vmem:[%s419 + $0x120] sm:$0xff]
        %v486 = vld [vmem:[%s419 + $0x128] sm:$0xff]
        %v487 = vld [vmem:[%s419 + $0x130] sm:$0xff]
        %v488 = vld [vmem:[%s419 + $0x138] sm:$0xff]
        %v489 = vld [vmem:[%s419 + $0x140] sm:$0xff]
        %v490 = vld [vmem:[%s419 + $0x148] sm:$0xff]
        %v491 = vld [vmem:[%s419 + $0x150] sm:$0xff]
        %v492 = vld [vmem:[%s419 + $0x158] sm:$0xff]
        %v493 = vld [vmem:[%s419 + $0x160] sm:$0xff]
        %v494 = vld [vmem:[%s419 + $0x168] sm:$0xff]
        %v495 = vld [vmem:[%s419 + $0x170] sm:$0xff]
        %v496 = vld [vmem:[%s419 + $0x178] sm:$0xff]
        %v497 = vld [vmem:[%s419 + $0x180] sm:$0xff]
        %v498 = vld [vmem:[%s419 + $0x188] sm:$0xff]
        %v499 = vld [vmem:[%s419 + $0x190] sm:$0xff]
        %v500 = vld [vmem:[%s419 + $0x198] sm:$0xff]
        %v501 = vld [vmem:[%s419 + $0x1a0] sm:$0xff]
        %v502 = vld [vmem:[%s419 + $0x1a8] sm:$0xff]
        %v503 = vld [vmem:[%s419 + $0x1b0] sm:$0xff]
        %v504 = vld [vmem:[%s419 + $0x1b8] sm:$0xff]
        %v505 = vld [vmem:[%s419 + $0x1c0] sm:$0xff]
        %v506 = vld [vmem:[%s419 + $0x1c8] sm:$0xff]
        %v507 = vld [vmem:[%s419 + $0x1d0] sm:$0xff]
        %v508 = vld [vmem:[%s419 + $0x1d8] sm:$0xff]
        %v509 = vld [vmem:[%s419 + $0x1e0] sm:$0xff]
        %v510 = vld [vmem:[%s419 + $0x1e8] sm:$0xff]
        %v511 = vld [vmem:[%s419 + $0x1f0] sm:$0xff]
        %v512 = vld [vmem:[%s419 + $0x1f8] sm:$0xff]
        %v513 = vld [vmem:[%s419 + $0x200] sm:$0xff]
        %v514 = vld [vmem:[%s419 + $0x208] sm:$0xff]
        %v515 = vld [vmem:[%s419 + $0x210] sm:$0xff]
        %v516 = vld [vmem:[%s419 + $0x218] sm:$0xff]
        %v517 = vld [vmem:[%s419 + $0x220] sm:$0xff]
        %v518 = vld [vmem:[%s419 + $0x228] sm:$0xff]
        %v519 = vld [vmem:[%s419 + $0x230] sm:$0xff]
        %v520 = vld [vmem:[%s419 + $0x238] sm:$0xff]
        %v521 = vld [vmem:[%s419 + $0x240] sm:$0xff]
        %v522 = vld [vmem:[%s419 + $0x248] sm:$0xff]
        %v523 = vld [vmem:[%s419 + $0x250] sm:$0xff]
        %v524 = vld [vmem:[%s419 + $0x258] sm:$0xff]
        %v525 = vld [vmem:[%s419 + $0x260] sm:$0xff]
        %v526 = vld [vmem:[%s419 + $0x268] sm:$0xff]
        %v527 = vld [vmem:[%s419 + $0x270] sm:$0xff]
        %v528 = vld [vmem:[%s419 + $0x278] sm:$0xff]
        %v529 = vld [vmem:[%s419 + $0x280] sm:$0xff]
        %v530 = vld [vmem:[%s419 + $0x288] sm:$0xff]
        %v531 = vld [vmem:[%s419 + $0x290] sm:$0xff]
        %v532 = vld [vmem:[%s419 + $0x298] sm:$0xff]
        %v533 = vld [vmem:[%s419 + $0x2a0] sm:$0xff]
        %v534 = vld [vmem:[%s419 + $0x2a8] sm:$0xff]
        %v535 = vld [vmem:[%s419 + $0x2b0] sm:$0xff]
        %v536 = vld [vmem:[%s419 + $0x2b8] sm:$0xff]
        %v537 = vld [vmem:[%s419 + $0x2c0] sm:$0xff]
        %v538 = vld [vmem:[%s419 + $0x2c8] sm:$0xff]
        %v539 = vld [vmem:[%s419 + $0x2d0] sm:$0xff]
        %v540 = vld [vmem:[%s419 + $0x2d8] sm:$0xff]
        %v541 = vld [vmem:[%s419 + $0x2e0] sm:$0xff]
        %v542 = vld [vmem:[%s419 + $0x2e8] sm:$0xff]
        %v543 = vld [vmem:[%s419 + $0x2f0] sm:$0xff]
        %v544 = vld [vmem:[%s419 + $0x2f8] sm:$0xff]
        %v545 = vld [vmem:[%s419 + $0x300] sm:$0xff]
        %v546 = vld [vmem:[%s419 + $0x308] sm:$0xff]
        %v547 = vld [vmem:[%s419 + $0x310] sm:$0xff]
        %v548 = vld [vmem:[%s419 + $0x318] sm:$0xff]
        %v549 = vld [vmem:[%s419 + $0x320] sm:$0xff]
        %v550 = vld [vmem:[%s419 + $0x328] sm:$0xff]
        %v551 = vld [vmem:[%s419 + $0x330] sm:$0xff]
        %v552 = vld [vmem:[%s419 + $0x338] sm:$0xff]
        %v553 = vld [vmem:[%s419 + $0x340] sm:$0xff]
        %v554 = vld [vmem:[%s419 + $0x348] sm:$0xff]
        %v555 = vld [vmem:[%s419 + $0x350] sm:$0xff]
        %v556 = vld [vmem:[%s419 + $0x358] sm:$0xff]
        %v557 = vld [vmem:[%s419 + $0x360] sm:$0xff]
        %v558 = vld [vmem:[%s419 + $0x368] sm:$0xff]
        %v559 = vld [vmem:[%s419 + $0x370] sm:$0xff]
        %v560 = vld [vmem:[%s419 + $0x378] sm:$0xff]
        %v561 = vld [vmem:[%s419 + $0x380] sm:$0xff]
        %v562 = vld [vmem:[%s419 + $0x388] sm:$0xff]
        %v563 = vld [vmem:[%s419 + $0x390] sm:$0xff]
        %v564 = vld [vmem:[%s419 + $0x398] sm:$0xff]
        %v565 = vld [vmem:[%s419 + $0x3a0] sm:$0xff]
        %v566 = vld [vmem:[%s419 + $0x3a8] sm:$0xff]
        %v567 = vld [vmem:[%s419 + $0x3b0] sm:$0xff]
        %v568 = vld [vmem:[%s419 + $0x3b8] sm:$0xff]
        %v569 = vld [vmem:[%s419 + $0x3c0] sm:$0xff]
        %v570 = vld [vmem:[%s419 + $0x3c8] sm:$0xff]
        %v571 = vld [vmem:[%s419 + $0x3d0] sm:$0xff]
        %v572 = vld [vmem:[%s419 + $0x3d8] sm:$0xff]
        %v573 = vld [vmem:[%s419 + $0x3e0] sm:$0xff]
        %v574 = vld [vmem:[%s419 + $0x3e8] sm:$0xff]
        %v575 = vld [vmem:[%s419 + $0x3f0] sm:$0xff]
        %v576 = vld [vmem:[%s419 + $0x3f8] sm:$0xff]
        %v577 = vld [vmem:[%s2] sm:$0xff]
        %579 = vset.pattern.permute.xlu0 0
        %580 = vperm.xlu0 %579, %v577
        %v581 = vpop.permute.xlu0 %580
        %v711 = vunpack.c.l.b16 %v449
        %v712 = vunpack.c.h.b16 %v449
        %v713 = vunpack.c.l.b16 %v450
        %v714 = vunpack.c.h.b16 %v450
        %v715 = vunpack.c.l.b16 %v451
        %v716 = vunpack.c.h.b16 %v451
        %v717 = vunpack.c.l.b16 %v452
        %v718 = vunpack.c.h.b16 %v452
        %v719 = vunpack.c.l.b16 %v453
        %v720 = vunpack.c.h.b16 %v453
        %v721 = vunpack.c.l.b16 %v454
        %v722 = vunpack.c.h.b16 %v454
        %v723 = vunpack.c.l.b16 %v455
        %v724 = vunpack.c.h.b16 %v455
        %v725 = vunpack.c.l.b16 %v456
        %v726 = vunpack.c.h.b16 %v456
        %v727 = vunpack.c.l.b16 %v457
        %v728 = vunpack.c.h.b16 %v457
        %v729 = vunpack.c.l.b16 %v458
        %v730 = vunpack.c.h.b16 %v458
        %v731 = vunpack.c.l.b16 %v459
        %v732 = vunpack.c.h.b16 %v459
        %v733 = vunpack.c.l.b16 %v460
        %v734 = vunpack.c.h.b16 %v460
        %v735 = vunpack.c.l.b16 %v461
        %v736 = vunpack.c.h.b16 %v461
        %v737 = vunpack.c.l.b16 %v462
        %v738 = vunpack.c.h.b16 %v462
        %v739 = vunpack.c.l.b16 %v463
        %v740 = vunpack.c.h.b16 %v463
        %v741 = vunpack.c.l.b16 %v464
        %v742 = vunpack.c.h.b16 %v464
        %v743 = vunpack.c.l.b16 %v465
        %v744 = vunpack.c.h.b16 %v465
        %v745 = vunpack.c.l.b16 %v466
        %v746 = vunpack.c.h.b16 %v466
        %v747 = vunpack.c.l.b16 %v467
        %v748 = vunpack.c.h.b16 %v467
        %v749 = vunpack.c.l.b16 %v468
        %v750 = vunpack.c.h.b16 %v468
        %v751 = vunpack.c.l.b16 %v469
        %v752 = vunpack.c.h.b16 %v469
        %v753 = vunpack.c.l.b16 %v470
        %v754 = vunpack.c.h.b16 %v470
        %v755 = vunpack.c.l.b16 %v471
        %v756 = vunpack.c.h.b16 %v471
        %v757 = vunpack.c.l.b16 %v472
        %v758 = vunpack.c.h.b16 %v472
        %v759 = vunpack.c.l.b16 %v473
        %v760 = vunpack.c.h.b16 %v473
        %v761 = vunpack.c.l.b16 %v474
        %v762 = vunpack.c.h.b16 %v474
        %v763 = vunpack.c.l.b16 %v475
        %v764 = vunpack.c.h.b16 %v475
        %v765 = vunpack.c.l.b16 %v476
        %v766 = vunpack.c.h.b16 %v476
        %v767 = vunpack.c.l.b16 %v477
        %v768 = vunpack.c.h.b16 %v477
        %v769 = vunpack.c.l.b16 %v478
        %v770 = vunpack.c.h.b16 %v478
        %v771 = vunpack.c.l.b16 %v479
        %v772 = vunpack.c.h.b16 %v479
        %v773 = vunpack.c.l.b16 %v480
        %v774 = vunpack.c.h.b16 %v480
        %v775 = vunpack.c.l.b16 %v481
        %v776 = vunpack.c.h.b16 %v481
        %v777 = vunpack.c.l.b16 %v482
        %v778 = vunpack.c.h.b16 %v482
        %v779 = vunpack.c.l.b16 %v483
        %v780 = vunpack.c.h.b16 %v483
        %v781 = vunpack.c.l.b16 %v484
        %v782 = vunpack.c.h.b16 %v484
        %v783 = vunpack.c.l.b16 %v485
        %v784 = vunpack.c.h.b16 %v485
        %v785 = vunpack.c.l.b16 %v486
        %v786 = vunpack.c.h.b16 %v486
        %v787 = vunpack.c.l.b16 %v487
        %v788 = vunpack.c.h.b16 %v487
        %v789 = vunpack.c.l.b16 %v488
        %v790 = vunpack.c.h.b16 %v488
        %v791 = vunpack.c.l.b16 %v489
        %v792 = vunpack.c.h.b16 %v489
        %v793 = vunpack.c.l.b16 %v490
        %v794 = vunpack.c.h.b16 %v490
        %v795 = vunpack.c.l.b16 %v491
        %v796 = vunpack.c.h.b16 %v491
        %v797 = vunpack.c.l.b16 %v492
        %v798 = vunpack.c.h.b16 %v492
        %v799 = vunpack.c.l.b16 %v493
        %v800 = vunpack.c.h.b16 %v493
        %v801 = vunpack.c.l.b16 %v494
        %v802 = vunpack.c.h.b16 %v494
        %v803 = vunpack.c.l.b16 %v495
        %v804 = vunpack.c.h.b16 %v495
        %v805 = vunpack.c.l.b16 %v496
        %v806 = vunpack.c.h.b16 %v496
        %v807 = vunpack.c.l.b16 %v497
        %v808 = vunpack.c.h.b16 %v497
        %v809 = vunpack.c.l.b16 %v498
        %v810 = vunpack.c.h.b16 %v498
        %v811 = vunpack.c.l.b16 %v499
        %v812 = vunpack.c.h.b16 %v499
        %v813 = vunpack.c.l.b16 %v500
        %v814 = vunpack.c.h.b16 %v500
        %v815 = vunpack.c.l.b16 %v501
        %v816 = vunpack.c.h.b16 %v501
        %v817 = vunpack.c.l.b16 %v502
        %v818 = vunpack.c.h.b16 %v502
        %v819 = vunpack.c.l.b16 %v503
        %v820 = vunpack.c.h.b16 %v503
        %v821 = vunpack.c.l.b16 %v504
        %v822 = vunpack.c.h.b16 %v504
        %v823 = vunpack.c.l.b16 %v505
        %v824 = vunpack.c.h.b16 %v505
        %v825 = vunpack.c.l.b16 %v506
        %v826 = vunpack.c.h.b16 %v506
        %v827 = vunpack.c.l.b16 %v507
        %v828 = vunpack.c.h.b16 %v507
        %v829 = vunpack.c.l.b16 %v508
        %v830 = vunpack.c.h.b16 %v508
        %v831 = vunpack.c.l.b16 %v509
        %v832 = vunpack.c.h.b16 %v509
        %v833 = vunpack.c.l.b16 %v510
        %v834 = vunpack.c.h.b16 %v510
        %v835 = vunpack.c.l.b16 %v511
        %v836 = vunpack.c.h.b16 %v511
        %v837 = vunpack.c.l.b16 %v512
        %v838 = vunpack.c.h.b16 %v512
        %v839 = vunpack.c.l.b16 %v513
        %v840 = vunpack.c.h.b16 %v513
        %v841 = vunpack.c.l.b16 %v514
        %v842 = vunpack.c.h.b16 %v514
        %v843 = vunpack.c.l.b16 %v515
        %v844 = vunpack.c.h.b16 %v515
        %v845 = vunpack.c.l.b16 %v516
        %v846 = vunpack.c.h.b16 %v516
        %v847 = vunpack.c.l.b16 %v517
        %v848 = vunpack.c.h.b16 %v517
        %v849 = vunpack.c.l.b16 %v518
        %v850 = vunpack.c.h.b16 %v518
        %v851 = vunpack.c.l.b16 %v519
        %v852 = vunpack.c.h.b16 %v519
        %v853 = vunpack.c.l.b16 %v520
        %v854 = vunpack.c.h.b16 %v520
        %v855 = vunpack.c.l.b16 %v521
        %v856 = vunpack.c.h.b16 %v521
        %v857 = vunpack.c.l.b16 %v522
        %v858 = vunpack.c.h.b16 %v522
        %v859 = vunpack.c.l.b16 %v523
        %v860 = vunpack.c.h.b16 %v523
        %v861 = vunpack.c.l.b16 %v524
        %v862 = vunpack.c.h.b16 %v524
        %v863 = vunpack.c.l.b16 %v525
        %v864 = vunpack.c.h.b16 %v525
        %v865 = vunpack.c.l.b16 %v526
        %v866 = vunpack.c.h.b16 %v526
        %v867 = vunpack.c.l.b16 %v527
        %v868 = vunpack.c.h.b16 %v527
        %v869 = vunpack.c.l.b16 %v528
        %v870 = vunpack.c.h.b16 %v528
        %v871 = vunpack.c.l.b16 %v529
        %v872 = vunpack.c.h.b16 %v529
        %v873 = vunpack.c.l.b16 %v530
        %v874 = vunpack.c.h.b16 %v530
        %v875 = vunpack.c.l.b16 %v531
        %v876 = vunpack.c.h.b16 %v531
        %v877 = vunpack.c.l.b16 %v532
        %v878 = vunpack.c.h.b16 %v532
        %v879 = vunpack.c.l.b16 %v533
        %v880 = vunpack.c.h.b16 %v533
        %v881 = vunpack.c.l.b16 %v534
        %v882 = vunpack.c.h.b16 %v534
        %v883 = vunpack.c.l.b16 %v535
        %v884 = vunpack.c.h.b16 %v535
        %v885 = vunpack.c.l.b16 %v536
        %v886 = vunpack.c.h.b16 %v536
        %v887 = vunpack.c.l.b16 %v537
        %v888 = vunpack.c.h.b16 %v537
        %v889 = vunpack.c.l.b16 %v538
        %v890 = vunpack.c.h.b16 %v538
        %v891 = vunpack.c.l.b16 %v539
        %v892 = vunpack.c.h.b16 %v539
        %v893 = vunpack.c.l.b16 %v540
        %v894 = vunpack.c.h.b16 %v540
        %v895 = vunpack.c.l.b16 %v541
        %v896 = vunpack.c.h.b16 %v541
        %v897 = vunpack.c.l.b16 %v542
        %v898 = vunpack.c.h.b16 %v542
        %v899 = vunpack.c.l.b16 %v543
        %v900 = vunpack.c.h.b16 %v543
        %v901 = vunpack.c.l.b16 %v544
        %v902 = vunpack.c.h.b16 %v544
        %v903 = vunpack.c.l.b16 %v545
        %v904 = vunpack.c.h.b16 %v545
        %v905 = vunpack.c.l.b16 %v546
        %v906 = vunpack.c.h.b16 %v546
        %v907 = vunpack.c.l.b16 %v547
        %v908 = vunpack.c.h.b16 %v547
        %v909 = vunpack.c.l.b16 %v548
        %v910 = vunpack.c.h.b16 %v548
        %v911 = vunpack.c.l.b16 %v549
        %v912 = vunpack.c.h.b16 %v549
        %v913 = vunpack.c.l.b16 %v550
        %v914 = vunpack.c.h.b16 %v550
        %v915 = vunpack.c.l.b16 %v551
        %v916 = vunpack.c.h.b16 %v551
        %v917 = vunpack.c.l.b16 %v552
        %v918 = vunpack.c.h.b16 %v552
        %v919 = vunpack.c.l.b16 %v553
        %v920 = vunpack.c.h.b16 %v553
        %v921 = vunpack.c.l.b16 %v554
        %v922 = vunpack.c.h.b16 %v554
        %v923 = vunpack.c.l.b16 %v555
        %v924 = vunpack.c.h.b16 %v555
        %v925 = vunpack.c.l.b16 %v556
        %v926 = vunpack.c.h.b16 %v556
        %v927 = vunpack.c.l.b16 %v557
        %v928 = vunpack.c.h.b16 %v557
        %v929 = vunpack.c.l.b16 %v558
        %v930 = vunpack.c.h.b16 %v558
        %v931 = vunpack.c.l.b16 %v559
        %v932 = vunpack.c.h.b16 %v559
        %v933 = vunpack.c.l.b16 %v560
        %v934 = vunpack.c.h.b16 %v560
        %v935 = vunpack.c.l.b16 %v561
        %v936 = vunpack.c.h.b16 %v561
        %v937 = vunpack.c.l.b16 %v562
        %v938 = vunpack.c.h.b16 %v562
        %v939 = vunpack.c.l.b16 %v563
        %v940 = vunpack.c.h.b16 %v563
        %v941 = vunpack.c.l.b16 %v564
        %v942 = vunpack.c.h.b16 %v564
        %v943 = vunpack.c.l.b16 %v565
        %v944 = vunpack.c.h.b16 %v565
        %v945 = vunpack.c.l.b16 %v566
        %v946 = vunpack.c.h.b16 %v566
        %v947 = vunpack.c.l.b16 %v567
        %v948 = vunpack.c.h.b16 %v567
        %v949 = vunpack.c.l.b16 %v568
        %v950 = vunpack.c.h.b16 %v568
        %v951 = vunpack.c.l.b16 %v569
        %v952 = vunpack.c.h.b16 %v569
        %v953 = vunpack.c.l.b16 %v570
        %v954 = vunpack.c.h.b16 %v570
        %v955 = vunpack.c.l.b16 %v571
        %v956 = vunpack.c.h.b16 %v571
        %v957 = vunpack.c.l.b16 %v572
        %v958 = vunpack.c.h.b16 %v572
        %v959 = vunpack.c.l.b16 %v573
        %v960 = vunpack.c.h.b16 %v573
        %v961 = vunpack.c.l.b16 %v574
        %v962 = vunpack.c.h.b16 %v574
        %v963 = vunpack.c.l.b16 %v575
        %v964 = vunpack.c.h.b16 %v575
        %v965 = vunpack.c.l.b16 %v576
        %v966 = vunpack.c.h.b16 %v576
        %v967 = vpack.c.b16 %v743, %v711
        %v968 = vpack.c.b16 %v744, %v712
        %v969 = vpack.c.b16 %v745, %v713
        %v970 = vpack.c.b16 %v746, %v714
        %v971 = vpack.c.b16 %v747, %v715
        %v972 = vpack.c.b16 %v748, %v716
        %v973 = vpack.c.b16 %v749, %v717
        %v974 = vpack.c.b16 %v750, %v718
        %v975 = vpack.c.b16 %v751, %v719
        %v976 = vpack.c.b16 %v752, %v720
        %v977 = vpack.c.b16 %v753, %v721
        %v978 = vpack.c.b16 %v754, %v722
        %v979 = vpack.c.b16 %v755, %v723
        %v980 = vpack.c.b16 %v756, %v724
        %v981 = vpack.c.b16 %v757, %v725
        %v982 = vpack.c.b16 %v758, %v726
        %v983 = vpack.c.b16 %v759, %v727
        %v984 = vpack.c.b16 %v760, %v728
        %v985 = vpack.c.b16 %v761, %v729
        %v986 = vpack.c.b16 %v762, %v730
        %v987 = vpack.c.b16 %v763, %v731
        %v988 = vpack.c.b16 %v764, %v732
        %v989 = vpack.c.b16 %v765, %v733
        %v990 = vpack.c.b16 %v766, %v734
        %v991 = vpack.c.b16 %v767, %v735
        %v992 = vpack.c.b16 %v768, %v736
        %v993 = vpack.c.b16 %v769, %v737
        %v994 = vpack.c.b16 %v770, %v738
        %v995 = vpack.c.b16 %v771, %v739
        %v996 = vpack.c.b16 %v772, %v740
        %v997 = vpack.c.b16 %v773, %v741
        %v998 = vpack.c.b16 %v774, %v742
        %v999 = vpack.c.b16 %v807, %v775
        %v1000 = vpack.c.b16 %v808, %v776
        %v1001 = vpack.c.b16 %v809, %v777
        %v1002 = vpack.c.b16 %v810, %v778
        %v1003 = vpack.c.b16 %v811, %v779
        %v1004 = vpack.c.b16 %v812, %v780
        %v1005 = vpack.c.b16 %v813, %v781
        %v1006 = vpack.c.b16 %v814, %v782
        %v1007 = vpack.c.b16 %v815, %v783
        %v1008 = vpack.c.b16 %v816, %v784
        %v1009 = vpack.c.b16 %v817, %v785
        %v1010 = vpack.c.b16 %v818, %v786
        %v1011 = vpack.c.b16 %v819, %v787
        %v1012 = vpack.c.b16 %v820, %v788
        %v1013 = vpack.c.b16 %v821, %v789
        %v1014 = vpack.c.b16 %v822, %v790
        %v1015 = vpack.c.b16 %v823, %v791
        %v1016 = vpack.c.b16 %v824, %v792
        %v1017 = vpack.c.b16 %v825, %v793
        %v1018 = vpack.c.b16 %v826, %v794
        %v1019 = vpack.c.b16 %v827, %v795
        %v1020 = vpack.c.b16 %v828, %v796
        %v1021 = vpack.c.b16 %v829, %v797
        %v1022 = vpack.c.b16 %v830, %v798
        %v1023 = vpack.c.b16 %v831, %v799
        %v1024 = vpack.c.b16 %v832, %v800
        %v1025 = vpack.c.b16 %v833, %v801
        %v1026 = vpack.c.b16 %v834, %v802
        %v1027 = vpack.c.b16 %v835, %v803
        %v1028 = vpack.c.b16 %v836, %v804
        %v1029 = vpack.c.b16 %v837, %v805
        %v1030 = vpack.c.b16 %v838, %v806
        %v1031 = vpack.c.b16 %v871, %v839
        %v1032 = vpack.c.b16 %v872, %v840
        %v1033 = vpack.c.b16 %v873, %v841
        %v1034 = vpack.c.b16 %v874, %v842
        %v1035 = vpack.c.b16 %v875, %v843
        %v1036 = vpack.c.b16 %v876, %v844
        %v1037 = vpack.c.b16 %v877, %v845
        %v1038 = vpack.c.b16 %v878, %v846
        %v1039 = vpack.c.b16 %v879, %v847
        %v1040 = vpack.c.b16 %v880, %v848
        %v1041 = vpack.c.b16 %v881, %v849
        %v1042 = vpack.c.b16 %v882, %v850
        %v1043 = vpack.c.b16 %v883, %v851
        %v1044 = vpack.c.b16 %v884, %v852
        %v1045 = vpack.c.b16 %v885, %v853
        %v1046 = vpack.c.b16 %v886, %v854
        %v1047 = vpack.c.b16 %v887, %v855
        %v1048 = vpack.c.b16 %v888, %v856
        %v1049 = vpack.c.b16 %v889, %v857
        %v1050 = vpack.c.b16 %v890, %v858
        %v1051 = vpack.c.b16 %v891, %v859
        %v1052 = vpack.c.b16 %v892, %v860
        %v1053 = vpack.c.b16 %v893, %v861
        %v1054 = vpack.c.b16 %v894, %v862
        %v1055 = vpack.c.b16 %v895, %v863
        %v1056 = vpack.c.b16 %v896, %v864
        %v1057 = vpack.c.b16 %v897, %v865
        %v1058 = vpack.c.b16 %v898, %v866
        %v1059 = vpack.c.b16 %v899, %v867
        %v1060 = vpack.c.b16 %v900, %v868
        %v1061 = vpack.c.b16 %v901, %v869
        %v1062 = vpack.c.b16 %v902, %v870
        %v1063 = vpack.c.b16 %v935, %v903
        %v1064 = vpack.c.b16 %v936, %v904
        %v1065 = vpack.c.b16 %v937, %v905
        %v1066 = vpack.c.b16 %v938, %v906
        %v1067 = vpack.c.b16 %v939, %v907
        %v1068 = vpack.c.b16 %v940, %v908
        %v1069 = vpack.c.b16 %v941, %v909
        %v1070 = vpack.c.b16 %v942, %v910
        %v1071 = vpack.c.b16 %v943, %v911
        %v1072 = vpack.c.b16 %v944, %v912
        %v1073 = vpack.c.b16 %v945, %v913
        %v1074 = vpack.c.b16 %v946, %v914
        %v1075 = vpack.c.b16 %v947, %v915
        %v1076 = vpack.c.b16 %v948, %v916
        %v1077 = vpack.c.b16 %v949, %v917
        %v1078 = vpack.c.b16 %v950, %v918
        %v1079 = vpack.c.b16 %v951, %v919
        %v1080 = vpack.c.b16 %v952, %v920
        %v1081 = vpack.c.b16 %v953, %v921
        %v1082 = vpack.c.b16 %v954, %v922
        %v1083 = vpack.c.b16 %v955, %v923
        %v1084 = vpack.c.b16 %v956, %v924
        %v1085 = vpack.c.b16 %v957, %v925
        %v1086 = vpack.c.b16 %v958, %v926
        %v1087 = vpack.c.b16 %v959, %v927
        %v1088 = vpack.c.b16 %v960, %v928
        %v1089 = vpack.c.b16 %v961, %v929
        %v1090 = vpack.c.b16 %v962, %v930
        %v1091 = vpack.c.b16 %v963, %v931
        %v1092 = vpack.c.b16 %v964, %v932
        %v1093 = vpack.c.b16 %v965, %v933
        %v1094 = vpack.c.b16 %v966, %v934
        %vm1223 = vcmask 523264
        %v1225 = vsel %vm1223, %v448, 0
        %1227 = vmatprep.subr.bf16.mxu0 %v968
        %1228 = vmatpush1.bf16.msra.mxu0 %v967
        %1229 = vmatprep.subr.bf16.mxu0 %v1000
        %1230 = vmatpush1.bf16.msra.mxu0 %v999
        %1231 = vmatprep.subr.bf16.mxu0 %v1032
        %1232 = vmatpush1.bf16.msra.mxu0 %v1031
        %1233 = vmatprep.subr.bf16.mxu0 %v1064
        %1234 = vmatpush1.bf16.msra.mxu0 %v1063
        %1235 = vmatprep.subr.bf16.mxu0 0
        %1236 = vmatpush1.bf16.msra.mxu0 0
        %1237 = vmatprep.subr.bf16.mxu0 0
        %1238 = vmatpush1.bf16.msra.mxu0 0
        %1239 = vmatprep.subr.bf16.mxu0 0
        %1240 = vmatpush1.bf16.msra.mxu0 0
        %1241 = vmatprep.subr.bf16.mxu0 0
        %1242 = vmatpush1.bf16.msra.mxu0 0
        %1243 = vmatprep.subr.bf16.mxu0 0
        %1244 = vmatpush1.bf16.msra.mxu0 0
        %1245 = vmatprep.subr.bf16.mxu0 0
        %1246 = vmatpush1.bf16.msra.mxu0 0
        %1247 = vmatprep.subr.bf16.mxu0 0
        %1248 = vmatpush1.bf16.msra.mxu0 0
        %1249 = vmatprep.subr.bf16.mxu0 0
        %1250 = vmatpush1.bf16.msra.mxu0 0
        %1251 = vmatprep.subr.bf16.mxu0 0
        %1252 = vmatpush1.bf16.msra.mxu0 0
        %1253 = vmatprep.subr.bf16.mxu0 0
        %1254 = vmatpush1.bf16.msra.mxu0 0
        %1255 = vmatprep.subr.bf16.mxu0 0
        %1256 = vmatpush1.bf16.msra.mxu0 0
        %1257 = vmatprep.subr.bf16.mxu0 0
        %1258 = vmatpush1.bf16.msra.mxu0 0
        %1259 = vmatprep.mubr.bf16.mxu0 0
        %1260 = vmatmul.mubr.bf16.gmra.mrb[0].mxu0 %v1225
        %v1261 = vpop.f32.mrb[0].mxu0
        %v1262 = vadd.f32 %v581, %v1261
        %v1263 = vpop.f32.mrb[0].mxu0
        %v1264 = vadd.f32 %v581, %v1263
        %v1265 = vpop.f32.mrb[0].mxu0
        %v1266 = vpop.f32.mrb[0].mxu0
        %1267 = vdwg.mxu0
        %1268 = vmatprep.subr.bf16.mxu0 %v970
        %1269 = vmatpush1.bf16.msra.mxu0 %v969
        %1270 = vmatprep.subr.bf16.mxu0 %v1002
        %1271 = vmatpush1.bf16.msra.mxu0 %v1001
        %1272 = vmatprep.subr.bf16.mxu0 %v1034
        %1273 = vmatpush1.bf16.msra.mxu0 %v1033
        %1274 = vmatprep.subr.bf16.mxu0 %v1066
        %1275 = vmatpush1.bf16.msra.mxu0 %v1065
        %1276 = vmatprep.subr.bf16.mxu0 0
        %1277 = vmatpush1.bf16.msra.mxu0 0
        %1278 = vmatprep.subr.bf16.mxu0 0
        %1279 = vmatpush1.bf16.msra.mxu0 0
        %1280 = vmatprep.subr.bf16.mxu0 0
        %1281 = vmatpush1.bf16.msra.mxu0 0
        %1282 = vmatprep.subr.bf16.mxu0 0
        %1283 = vmatpush1.bf16.msra.mxu0 0
        %1284 = vmatprep.subr.bf16.mxu0 0
        %1285 = vmatpush1.bf16.msra.mxu0 0
        %1286 = vmatprep.subr.bf16.mxu0 0
        %1287 = vmatpush1.bf16.msra.mxu0 0
        %1288 = vmatprep.subr.bf16.mxu0 0
        %1289 = vmatpush1.bf16.msra.mxu0 0
        %1290 = vmatprep.subr.bf16.mxu0 0
        %1291 = vmatpush1.bf16.msra.mxu0 0
        %1292 = vmatprep.subr.bf16.mxu0 0
        %1293 = vmatpush1.bf16.msra.mxu0 0
        %1294 = vmatprep.subr.bf16.mxu0 0
        %1295 = vmatpush1.bf16.msra.mxu0 0
        %1296 = vmatprep.subr.bf16.mxu0 0
        %1297 = vmatpush1.bf16.msra.mxu0 0
        %1298 = vmatprep.subr.bf16.mxu0 0
        %1299 = vmatpush1.bf16.msra.mxu0 0
        %1300 = vmatprep.mubr.bf16.mxu0 0
        %1301 = vmatmul.mubr.bf16.gmra.mrb[0].mxu0 %v1225
        %v1302 = vpop.f32.mrb[0].mxu0
        %v1303 = vadd.f32 %v581, %v1302
        %v1304 = vpop.f32.mrb[0].mxu0
        %v1305 = vadd.f32 %v581, %v1304
        %v1306 = vpop.f32.mrb[0].mxu0
        %v1307 = vpop.f32.mrb[0].mxu0
        %1308 = vdwg.mxu0
        %1309 = vmatprep.subr.bf16.mxu0 %v972
        %1310 = vmatpush1.bf16.msra.mxu0 %v971
        %1311 = vmatprep.subr.bf16.mxu0 %v1004
        %1312 = vmatpush1.bf16.msra.mxu0 %v1003
        %1313 = vmatprep.subr.bf16.mxu0 %v1036
        %1314 = vmatpush1.bf16.msra.mxu0 %v1035
        %1315 = vmatprep.subr.bf16.mxu0 %v1068
        %1316 = vmatpush1.bf16.msra.mxu0 %v1067
        %1317 = vmatprep.subr.bf16.mxu0 0
        %1318 = vmatpush1.bf16.msra.mxu0 0
        %1319 = vmatprep.subr.bf16.mxu0 0
        %1320 = vmatpush1.bf16.msra.mxu0 0
        %1321 = vmatprep.subr.bf16.mxu0 0
        %1322 = vmatpush1.bf16.msra.mxu0 0
        %1323 = vmatprep.subr.bf16.mxu0 0
        %1324 = vmatpush1.bf16.msra.mxu0 0
        %1325 = vmatprep.subr.bf16.mxu0 0
        %1326 = vmatpush1.bf16.msra.mxu0 0
        %1327 = vmatprep.subr.bf16.mxu0 0
        %1328 = vmatpush1.bf16.msra.mxu0 0
        %1329 = vmatprep.subr.bf16.mxu0 0
        %1330 = vmatpush1.bf16.msra.mxu0 0
        %1331 = vmatprep.subr.bf16.mxu0 0
        %1332 = vmatpush1.bf16.msra.mxu0 0
        %1333 = vmatprep.subr.bf16.mxu0 0
        %1334 = vmatpush1.bf16.msra.mxu0 0
        %1335 = vmatprep.subr.bf16.mxu0 0
        %1336 = vmatpush1.bf16.msra.mxu0 0
        %1337 = vmatprep.subr.bf16.mxu0 0
        %1338 = vmatpush1.bf16.msra.mxu0 0
        %1339 = vmatprep.subr.bf16.mxu0 0
        %1340 = vmatpush1.bf16.msra.mxu0 0
        %1341 = vmatprep.mubr.bf16.mxu0 0
        %1342 = vmatmul.mubr.bf16.gmra.mrb[0].mxu0 %v1225
        %v1343 = vpop.f32.mrb[0].mxu0
        %v1344 = vadd.f32 %v581, %v1343
        %v1345 = vpop.f32.mrb[0].mxu0
        %v1346 = vadd.f32 %v581, %v1345
        %v1347 = vpop.f32.mrb[0].mxu0
        %v1348 = vpop.f32.mrb[0].mxu0
        %1349 = vdwg.mxu0
        %1350 = vmatprep.subr.bf16.mxu0 %v974
        %1351 = vmatpush1.bf16.msra.mxu0 %v973
        %1352 = vmatprep.subr.bf16.mxu0 %v1006
        %1353 = vmatpush1.bf16.msra.mxu0 %v1005
        %1354 = vmatprep.subr.bf16.mxu0 %v1038
        %1355 = vmatpush1.bf16.msra.mxu0 %v1037
        %1356 = vmatprep.subr.bf16.mxu0 %v1070
        %1357 = vmatpush1.bf16.msra.mxu0 %v1069
        %1358 = vmatprep.subr.bf16.mxu0 0
        %1359 = vmatpush1.bf16.msra.mxu0 0
        %1360 = vmatprep.subr.bf16.mxu0 0
        %1361 = vmatpush1.bf16.msra.mxu0 0
        %1362 = vmatprep.subr.bf16.mxu0 0
        %1363 = vmatpush1.bf16.msra.mxu0 0
        %1364 = vmatprep.subr.bf16.mxu0 0
        %1365 = vmatpush1.bf16.msra.mxu0 0
        %1366 = vmatprep.subr.bf16.mxu0 0
        %1367 = vmatpush1.bf16.msra.mxu0 0
        %1368 = vmatprep.subr.bf16.mxu0 0
        %1369 = vmatpush1.bf16.msra.mxu0 0
        %1370 = vmatprep.subr.bf16.mxu0 0
        %1371 = vmatpush1.bf16.msra.mxu0 0
        %1372 = vmatprep.subr.bf16.mxu0 0
        %1373 = vmatpush1.bf16.msra.mxu0 0
        %1374 = vmatprep.subr.bf16.mxu0 0
        %1375 = vmatpush1.bf16.msra.mxu0 0
        %1376 = vmatprep.subr.bf16.mxu0 0
        %1377 = vmatpush1.bf16.msra.mxu0 0
        %1378 = vmatprep.subr.bf16.mxu0 0
        %1379 = vmatpush1.bf16.msra.mxu0 0
        %1380 = vmatprep.subr.bf16.mxu0 0
        %1381 = vmatpush1.bf16.msra.mxu0 0
        %1382 = vmatprep.mubr.bf16.mxu0 0
        %1383 = vmatmul.mubr.bf16.gmra.mrb[0].mxu0 %v1225
        %v1384 = vpop.f32.mrb[0].mxu0
        %v1385 = vadd.f32 %v581, %v1384
        %v1386 = vpop.f32.mrb[0].mxu0
        %v1387 = vadd.f32 %v581, %v1386
        %v1388 = vpop.f32.mrb[0].mxu0
        %v1389 = vpop.f32.mrb[0].mxu0
        %1390 = vdwg.mxu0
        %1391 = vmatprep.subr.bf16.mxu0 %v976
        %1392 = vmatpush1.bf16.msra.mxu0 %v975
        %1393 = vmatprep.subr.bf16.mxu0 %v1008
        %1394 = vmatpush1.bf16.msra.mxu0 %v1007
        %1395 = vmatprep.subr.bf16.mxu0 %v1040
        %1396 = vmatpush1.bf16.msra.mxu0 %v1039
        %1397 = vmatprep.subr.bf16.mxu0 %v1072
        %1398 = vmatpush1.bf16.msra.mxu0 %v1071
        %1399 = vmatprep.subr.bf16.mxu0 0
        %1400 = vmatpush1.bf16.msra.mxu0 0
        %1401 = vmatprep.subr.bf16.mxu0 0
        %1402 = vmatpush1.bf16.msra.mxu0 0
        %1403 = vmatprep.subr.bf16.mxu0 0
        %1404 = vmatpush1.bf16.msra.mxu0 0
        %1405 = vmatprep.subr.bf16.mxu0 0
        %1406 = vmatpush1.bf16.msra.mxu0 0
        %1407 = vmatprep.subr.bf16.mxu0 0
        %1408 = vmatpush1.bf16.msra.mxu0 0
        %1409 = vmatprep.subr.bf16.mxu0 0
        %1410 = vmatpush1.bf16.msra.mxu0 0
        %1411 = vmatprep.subr.bf16.mxu0 0
        %1412 = vmatpush1.bf16.msra.mxu0 0
        %1413 = vmatprep.subr.bf16.mxu0 0
        %1414 = vmatpush1.bf16.msra.mxu0 0
        %1415 = vmatprep.subr.bf16.mxu0 0
        %1416 = vmatpush1.bf16.msra.mxu0 0
        %1417 = vmatprep.subr.bf16.mxu0 0
        %1418 = vmatpush1.bf16.msra.mxu0 0
        %1419 = vmatprep.subr.bf16.mxu0 0
        %1420 = vmatpush1.bf16.msra.mxu0 0
        %1421 = vmatprep.subr.bf16.mxu0 0
        %1422 = vmatpush1.bf16.msra.mxu0 0
        %1423 = vmatprep.mubr.bf16.mxu0 0
        %1424 = vmatmul.mubr.bf16.gmra.mrb[0].mxu0 %v1225
        %v1425 = vpop.f32.mrb[0].mxu0
        %v1426 = vadd.f32 %v581, %v1425
        %v1427 = vpop.f32.mrb[0].mxu0
        %v1428 = vadd.f32 %v581, %v1427
        %v1429 = vpop.f32.mrb[0].mxu0
        %v1430 = vpop.f32.mrb[0].mxu0
        %1431 = vdwg.mxu0
        %1432 = vmatprep.subr.bf16.mxu0 %v978
        %1433 = vmatpush1.bf16.msra.mxu0 %v977
        %1434 = vmatprep.subr.bf16.mxu0 %v1010
        %1435 = vmatpush1.bf16.msra.mxu0 %v1009
        %1436 = vmatprep.subr.bf16.mxu0 %v1042
        %1437 = vmatpush1.bf16.msra.mxu0 %v1041
        %1438 = vmatprep.subr.bf16.mxu0 %v1074
        %1439 = vmatpush1.bf16.msra.mxu0 %v1073
        %1440 = vmatprep.subr.bf16.mxu0 0
        %1441 = vmatpush1.bf16.msra.mxu0 0
        %1442 = vmatprep.subr.bf16.mxu0 0
        %1443 = vmatpush1.bf16.msra.mxu0 0
        %1444 = vmatprep.subr.bf16.mxu0 0
        %1445 = vmatpush1.bf16.msra.mxu0 0
        %1446 = vmatprep.subr.bf16.mxu0 0
        %1447 = vmatpush1.bf16.msra.mxu0 0
        %1448 = vmatprep.subr.bf16.mxu0 0
        %1449 = vmatpush1.bf16.msra.mxu0 0
        %1450 = vmatprep.subr.bf16.mxu0 0
        %1451 = vmatpush1.bf16.msra.mxu0 0
        %1452 = vmatprep.subr.bf16.mxu0 0
        %1453 = vmatpush1.bf16.msra.mxu0 0
        %1454 = vmatprep.subr.bf16.mxu0 0
        %1455 = vmatpush1.bf16.msra.mxu0 0
        %1456 = vmatprep.subr.bf16.mxu0 0
        %1457 = vmatpush1.bf16.msra.mxu0 0
        %1458 = vmatprep.subr.bf16.mxu0 0
        %1459 = vmatpush1.bf16.msra.mxu0 0
        %1460 = vmatprep.subr.bf16.mxu0 0
        %1461 = vmatpush1.bf16.msra.mxu0 0
        %1462 = vmatprep.subr.bf16.mxu0 0
        %1463 = vmatpush1.bf16.msra.mxu0 0
        %1464 = vmatprep.mubr.bf16.mxu0 0
        %1465 = vmatmul.mubr.bf16.gmra.mrb[0].mxu0 %v1225
        %v1466 = vpop.f32.mrb[0].mxu0
        %v1467 = vadd.f32 %v581, %v1466
        %v1468 = vpop.f32.mrb[0].mxu0
        %v1469 = vadd.f32 %v581, %v1468
        %v1470 = vpop.f32.mrb[0].mxu0
        %v1471 = vpop.f32.mrb[0].mxu0
        %1472 = vdwg.mxu0
        %1473 = vmatprep.subr.bf16.mxu0 %v980
        %1474 = vmatpush1.bf16.msra.mxu0 %v979
        %1475 = vmatprep.subr.bf16.mxu0 %v1012
        %1476 = vmatpush1.bf16.msra.mxu0 %v1011
        %1477 = vmatprep.subr.bf16.mxu0 %v1044
        %1478 = vmatpush1.bf16.msra.mxu0 %v1043
        %1479 = vmatprep.subr.bf16.mxu0 %v1076
        %1480 = vmatpush1.bf16.msra.mxu0 %v1075
        %1481 = vmatprep.subr.bf16.mxu0 0
        %1482 = vmatpush1.bf16.msra.mxu0 0
        %1483 = vmatprep.subr.bf16.mxu0 0
        %1484 = vmatpush1.bf16.msra.mxu0 0
        %1485 = vmatprep.subr.bf16.mxu0 0
        %1486 = vmatpush1.bf16.msra.mxu0 0
        %1487 = vmatprep.subr.bf16.mxu0 0
        %1488 = vmatpush1.bf16.msra.mxu0 0
        %1489 = vmatprep.subr.bf16.mxu0 0
        %1490 = vmatpush1.bf16.msra.mxu0 0
        %1491 = vmatprep.subr.bf16.mxu0 0
        %1492 = vmatpush1.bf16.msra.mxu0 0
        %1493 = vmatprep.subr.bf16.mxu0 0
        %1494 = vmatpush1.bf16.msra.mxu0 0
        %1495 = vmatprep.subr.bf16.mxu0 0
        %1496 = vmatpush1.bf16.msra.mxu0 0
        %1497 = vmatprep.subr.bf16.mxu0 0
        %1498 = vmatpush1.bf16.msra.mxu0 0
        %1499 = vmatprep.subr.bf16.mxu0 0
        %1500 = vmatpush1.bf16.msra.mxu0 0
        %1501 = vmatprep.subr.bf16.mxu0 0
        %1502 = vmatpush1.bf16.msra.mxu0 0
        %1503 = vmatprep.subr.bf16.mxu0 0
        %1504 = vmatpush1.bf16.msra.mxu0 0
        %1505 = vmatprep.mubr.bf16.mxu0 0
        %1506 = vmatmul.mubr.bf16.gmra.mrb[0].mxu0 %v1225
        %v1507 = vpop.f32.mrb[0].mxu0
        %v1508 = vadd.f32 %v581, %v1507
        %v1509 = vpop.f32.mrb[0].mxu0
        %v1510 = vadd.f32 %v581, %v1509
        %v1511 = vpop.f32.mrb[0].mxu0
        %v1512 = vpop.f32.mrb[0].mxu0
        %1513 = vdwg.mxu0
        %1514 = vmatprep.subr.bf16.mxu0 %v982
        %1515 = vmatpush1.bf16.msra.mxu0 %v981
        %1516 = vmatprep.subr.bf16.mxu0 %v1014
        %1517 = vmatpush1.bf16.msra.mxu0 %v1013
        %1518 = vmatprep.subr.bf16.mxu0 %v1046
        %1519 = vmatpush1.bf16.msra.mxu0 %v1045
        %1520 = vmatprep.subr.bf16.mxu0 %v1078
        %1521 = vmatpush1.bf16.msra.mxu0 %v1077
        %1522 = vmatprep.subr.bf16.mxu0 0
        %1523 = vmatpush1.bf16.msra.mxu0 0
        %1524 = vmatprep.subr.bf16.mxu0 0
        %1525 = vmatpush1.bf16.msra.mxu0 0
        %1526 = vmatprep.subr.bf16.mxu0 0
        %1527 = vmatpush1.bf16.msra.mxu0 0
        %1528 = vmatprep.subr.bf16.mxu0 0
        %1529 = vmatpush1.bf16.msra.mxu0 0
        %1530 = vmatprep.subr.bf16.mxu0 0
        %1531 = vmatpush1.bf16.msra.mxu0 0
        %1532 = vmatprep.subr.bf16.mxu0 0
        %1533 = vmatpush1.bf16.msra.mxu0 0
        %1534 = vmatprep.subr.bf16.mxu0 0
        %1535 = vmatpush1.bf16.msra.mxu0 0
        %1536 = vmatprep.subr.bf16.mxu0 0
        %1537 = vmatpush1.bf16.msra.mxu0 0
        %1538 = vmatprep.subr.bf16.mxu0 0
        %1539 = vmatpush1.bf16.msra.mxu0 0
        %1540 = vmatprep.subr.bf16.mxu0 0
        %1541 = vmatpush1.bf16.msra.mxu0 0
        %1542 = vmatprep.subr.bf16.mxu0 0
        %1543 = vmatpush1.bf16.msra.mxu0 0
        %1544 = vmatprep.subr.bf16.mxu0 0
        %1545 = vmatpush1.bf16.msra.mxu0 0
        %1546 = vmatprep.mubr.bf16.mxu0 0
        %1547 = vmatmul.mubr.bf16.gmra.mrb[0].mxu0 %v1225
        %v1548 = vpop.f32.mrb[0].mxu0
        %v1549 = vadd.f32 %v581, %v1548
        %v1550 = vpop.f32.mrb[0].mxu0
        %v1551 = vadd.f32 %v581, %v1550
        %v1552 = vpop.f32.mrb[0].mxu0
        %v1553 = vpop.f32.mrb[0].mxu0
        %1554 = vdwg.mxu0
        %1555 = vmatprep.subr.bf16.mxu0 %v984
        %1556 = vmatpush1.bf16.msra.mxu0 %v983
        %1557 = vmatprep.subr.bf16.mxu0 %v1016
        %1558 = vmatpush1.bf16.msra.mxu0 %v1015
        %1559 = vmatprep.subr.bf16.mxu0 %v1048
        %1560 = vmatpush1.bf16.msra.mxu0 %v1047
        %1561 = vmatprep.subr.bf16.mxu0 %v1080
        %1562 = vmatpush1.bf16.msra.mxu0 %v1079
        %1563 = vmatprep.subr.bf16.mxu0 0
        %1564 = vmatpush1.bf16.msra.mxu0 0
        %1565 = vmatprep.subr.bf16.mxu0 0
        %1566 = vmatpush1.bf16.msra.mxu0 0
        %1567 = vmatprep.subr.bf16.mxu0 0
        %1568 = vmatpush1.bf16.msra.mxu0 0
        %1569 = vmatprep.subr.bf16.mxu0 0
        %1570 = vmatpush1.bf16.msra.mxu0 0
        %1571 = vmatprep.subr.bf16.mxu0 0
        %1572 = vmatpush1.bf16.msra.mxu0 0
        %1573 = vmatprep.subr.bf16.mxu0 0
        %1574 = vmatpush1.bf16.msra.mxu0 0
        %1575 = vmatprep.subr.bf16.mxu0 0
        %1576 = vmatpush1.bf16.msra.mxu0 0
        %1577 = vmatprep.subr.bf16.mxu0 0
        %1578 = vmatpush1.bf16.msra.mxu0 0
        %1579 = vmatprep.subr.bf16.mxu0 0
        %1580 = vmatpush1.bf16.msra.mxu0 0
        %1581 = vmatprep.subr.bf16.mxu0 0
        %1582 = vmatpush1.bf16.msra.mxu0 0
        %1583 = vmatprep.subr.bf16.mxu0 0
        %1584 = vmatpush1.bf16.msra.mxu0 0
        %1585 = vmatprep.subr.bf16.mxu0 0
        %1586 = vmatpush1.bf16.msra.mxu0 0
        %1587 = vmatprep.mubr.bf16.mxu0 0
        %1588 = vmatmul.mubr.bf16.gmra.mrb[0].mxu0 %v1225
        %v1589 = vpop.f32.mrb[0].mxu0
        %v1590 = vadd.f32 %v581, %v1589
        %v1591 = vpop.f32.mrb[0].mxu0
        %v1592 = vadd.f32 %v581, %v1591
        %v1593 = vpop.f32.mrb[0].mxu0
        %v1594 = vpop.f32.mrb[0].mxu0
        %1595 = vdwg.mxu0
        %1596 = vmatprep.subr.bf16.mxu0 %v986
        %1597 = vmatpush1.bf16.msra.mxu0 %v985
        %1598 = vmatprep.subr.bf16.mxu0 %v1018
        %1599 = vmatpush1.bf16.msra.mxu0 %v1017
        %1600 = vmatprep.subr.bf16.mxu0 %v1050
        %1601 = vmatpush1.bf16.msra.mxu0 %v1049
        %1602 = vmatprep.subr.bf16.mxu0 %v1082
        %1603 = vmatpush1.bf16.msra.mxu0 %v1081
        %1604 = vmatprep.subr.bf16.mxu0 0
        %1605 = vmatpush1.bf16.msra.mxu0 0
        %1606 = vmatprep.subr.bf16.mxu0 0
        %1607 = vmatpush1.bf16.msra.mxu0 0
        %1608 = vmatprep.subr.bf16.mxu0 0
        %1609 = vmatpush1.bf16.msra.mxu0 0
        %1610 = vmatprep.subr.bf16.mxu0 0
        %1611 = vmatpush1.bf16.msra.mxu0 0
        %1612 = vmatprep.subr.bf16.mxu0 0
        %1613 = vmatpush1.bf16.msra.mxu0 0
        %1614 = vmatprep.subr.bf16.mxu0 0
        %1615 = vmatpush1.bf16.msra.mxu0 0
        %1616 = vmatprep.subr.bf16.mxu0 0
        %1617 = vmatpush1.bf16.msra.mxu0 0
        %1618 = vmatprep.subr.bf16.mxu0 0
        %1619 = vmatpush1.bf16.msra.mxu0 0
        %1620 = vmatprep.subr.bf16.mxu0 0
        %1621 = vmatpush1.bf16.msra.mxu0 0
        %1622 = vmatprep.subr.bf16.mxu0 0
        %1623 = vmatpush1.bf16.msra.mxu0 0
        %1624 = vmatprep.subr.bf16.mxu0 0
        %1625 = vmatpush1.bf16.msra.mxu0 0
        %1626 = vmatprep.subr.bf16.mxu0 0
        %1627 = vmatpush1.bf16.msra.mxu0 0
        %1628 = vmatprep.mubr.bf16.mxu0 0
        %1629 = vmatmul.mubr.bf16.gmra.mrb[0].mxu0 %v1225
        %v1630 = vpop.f32.mrb[0].mxu0
        %v1631 = vadd.f32 %v581, %v1630
        %v1632 = vpop.f32.mrb[0].mxu0
        %v1633 = vadd.f32 %v581, %v1632
        %v1634 = vpop.f32.mrb[0].mxu0
        %v1635 = vpop.f32.mrb[0].mxu0
        %1636 = vdwg.mxu0
        %1637 = vmatprep.subr.bf16.mxu0 %v988
        %1638 = vmatpush1.bf16.msra.mxu0 %v987
        %1639 = vmatprep.subr.bf16.mxu0 %v1020
        %1640 = vmatpush1.bf16.msra.mxu0 %v1019
        %1641 = vmatprep.subr.bf16.mxu0 %v1052
        %1642 = vmatpush1.bf16.msra.mxu0 %v1051
        %1643 = vmatprep.subr.bf16.mxu0 %v1084
        %1644 = vmatpush1.bf16.msra.mxu0 %v1083
        %1645 = vmatprep.subr.bf16.mxu0 0
        %1646 = vmatpush1.bf16.msra.mxu0 0
        %1647 = vmatprep.subr.bf16.mxu0 0
        %1648 = vmatpush1.bf16.msra.mxu0 0
        %1649 = vmatprep.subr.bf16.mxu0 0
        %1650 = vmatpush1.bf16.msra.mxu0 0
        %1651 = vmatprep.subr.bf16.mxu0 0
        %1652 = vmatpush1.bf16.msra.mxu0 0
        %1653 = vmatprep.subr.bf16.mxu0 0
        %1654 = vmatpush1.bf16.msra.mxu0 0
        %1655 = vmatprep.subr.bf16.mxu0 0
        %1656 = vmatpush1.bf16.msra.mxu0 0
        %1657 = vmatprep.subr.bf16.mxu0 0
        %1658 = vmatpush1.bf16.msra.mxu0 0
        %1659 = vmatprep.subr.bf16.mxu0 0
        %1660 = vmatpush1.bf16.msra.mxu0 0
        %1661 = vmatprep.subr.bf16.mxu0 0
        %1662 = vmatpush1.bf16.msra.mxu0 0
        %1663 = vmatprep.subr.bf16.mxu0 0
        %1664 = vmatpush1.bf16.msra.mxu0 0
        %1665 = vmatprep.subr.bf16.mxu0 0
        %1666 = vmatpush1.bf16.msra.mxu0 0
        %1667 = vmatprep.subr.bf16.mxu0 0
        %1668 = vmatpush1.bf16.msra.mxu0 0
        %1669 = vmatprep.mubr.bf16.mxu0 0
        %1670 = vmatmul.mubr.bf16.gmra.mrb[0].mxu0 %v1225
        %v1671 = vpop.f32.mrb[0].mxu0
        %v1672 = vadd.f32 %v581, %v1671
        %v1673 = vpop.f32.mrb[0].mxu0
        %v1674 = vadd.f32 %v581, %v1673
        %v1675 = vpop.f32.mrb[0].mxu0
        %v1676 = vpop.f32.mrb[0].mxu0
        %1677 = vdwg.mxu0
        %1678 = vmatprep.subr.bf16.mxu0 %v990
        %1679 = vmatpush1.bf16.msra.mxu0 %v989
        %1680 = vmatprep.subr.bf16.mxu0 %v1022
        %1681 = vmatpush1.bf16.msra.mxu0 %v1021
        %1682 = vmatprep.subr.bf16.mxu0 %v1054
        %1683 = vmatpush1.bf16.msra.mxu0 %v1053
        %1684 = vmatprep.subr.bf16.mxu0 %v1086
        %1685 = vmatpush1.bf16.msra.mxu0 %v1085
        %1686 = vmatprep.subr.bf16.mxu0 0
        %1687 = vmatpush1.bf16.msra.mxu0 0
        %1688 = vmatprep.subr.bf16.mxu0 0
        %1689 = vmatpush1.bf16.msra.mxu0 0
        %1690 = vmatprep.subr.bf16.mxu0 0
        %1691 = vmatpush1.bf16.msra.mxu0 0
        %1692 = vmatprep.subr.bf16.mxu0 0
        %1693 = vmatpush1.bf16.msra.mxu0 0
        %1694 = vmatprep.subr.bf16.mxu0 0
        %1695 = vmatpush1.bf16.msra.mxu0 0
        %1696 = vmatprep.subr.bf16.mxu0 0
        %1697 = vmatpush1.bf16.msra.mxu0 0
        %1698 = vmatprep.subr.bf16.mxu0 0
        %1699 = vmatpush1.bf16.msra.mxu0 0
        %1700 = vmatprep.subr.bf16.mxu0 0
        %1701 = vmatpush1.bf16.msra.mxu0 0
        %1702 = vmatprep.subr.bf16.mxu0 0
        %1703 = vmatpush1.bf16.msra.mxu0 0
        %1704 = vmatprep.subr.bf16.mxu0 0
        %1705 = vmatpush1.bf16.msra.mxu0 0
        %1706 = vmatprep.subr.bf16.mxu0 0
        %1707 = vmatpush1.bf16.msra.mxu0 0
        %1708 = vmatprep.subr.bf16.mxu0 0
        %1709 = vmatpush1.bf16.msra.mxu0 0
        %1710 = vmatprep.mubr.bf16.mxu0 0
        %1711 = vmatmul.mubr.bf16.gmra.mrb[0].mxu0 %v1225
        %v1712 = vpop.f32.mrb[0].mxu0
        %v1713 = vadd.f32 %v581, %v1712
        %v1714 = vpop.f32.mrb[0].mxu0
        %v1715 = vadd.f32 %v581, %v1714
        %v1716 = vpop.f32.mrb[0].mxu0
        %v1717 = vpop.f32.mrb[0].mxu0
        %1718 = vdwg.mxu0
        %1719 = vmatprep.subr.bf16.mxu0 %v992
        %1720 = vmatpush1.bf16.msra.mxu0 %v991
        %1721 = vmatprep.subr.bf16.mxu0 %v1024
        %1722 = vmatpush1.bf16.msra.mxu0 %v1023
        %1723 = vmatprep.subr.bf16.mxu0 %v1056
        %1724 = vmatpush1.bf16.msra.mxu0 %v1055
        %1725 = vmatprep.subr.bf16.mxu0 %v1088
        %1726 = vmatpush1.bf16.msra.mxu0 %v1087
        %1727 = vmatprep.subr.bf16.mxu0 0
        %1728 = vmatpush1.bf16.msra.mxu0 0
        %1729 = vmatprep.subr.bf16.mxu0 0
        %1730 = vmatpush1.bf16.msra.mxu0 0
        %1731 = vmatprep.subr.bf16.mxu0 0
        %1732 = vmatpush1.bf16.msra.mxu0 0
        %1733 = vmatprep.subr.bf16.mxu0 0
        %1734 = vmatpush1.bf16.msra.mxu0 0
        %1735 = vmatprep.subr.bf16.mxu0 0
        %1736 = vmatpush1.bf16.msra.mxu0 0
        %1737 = vmatprep.subr.bf16.mxu0 0
        %1738 = vmatpush1.bf16.msra.mxu0 0
        %1739 = vmatprep.subr.bf16.mxu0 0
        %1740 = vmatpush1.bf16.msra.mxu0 0
        %1741 = vmatprep.subr.bf16.mxu0 0
        %1742 = vmatpush1.bf16.msra.mxu0 0
        %1743 = vmatprep.subr.bf16.mxu0 0
        %1744 = vmatpush1.bf16.msra.mxu0 0
        %1745 = vmatprep.subr.bf16.mxu0 0
        %1746 = vmatpush1.bf16.msra.mxu0 0
        %1747 = vmatprep.subr.bf16.mxu0 0
        %1748 = vmatpush1.bf16.msra.mxu0 0
        %1749 = vmatprep.subr.bf16.mxu0 0
        %1750 = vmatpush1.bf16.msra.mxu0 0
        %1751 = vmatprep.mubr.bf16.mxu0 0
        %1752 = vmatmul.mubr.bf16.gmra.mrb[0].mxu0 %v1225
        %v1753 = vpop.f32.mrb[0].mxu0
        %v1754 = vadd.f32 %v581, %v1753
        %v1755 = vpop.f32.mrb[0].mxu0
        %v1756 = vadd.f32 %v581, %v1755
        %v1757 = vpop.f32.mrb[0].mxu0
        %v1758 = vpop.f32.mrb[0].mxu0
        %1759 = vdwg.mxu0
        %1760 = vmatprep.subr.bf16.mxu0 %v994
        %1761 = vmatpush1.bf16.msra.mxu0 %v993
        %1762 = vmatprep.subr.bf16.mxu0 %v1026
        %1763 = vmatpush1.bf16.msra.mxu0 %v1025
        %1764 = vmatprep.subr.bf16.mxu0 %v1058
        %1765 = vmatpush1.bf16.msra.mxu0 %v1057
        %1766 = vmatprep.subr.bf16.mxu0 %v1090
        %1767 = vmatpush1.bf16.msra.mxu0 %v1089
        %1768 = vmatprep.subr.bf16.mxu0 0
        %1769 = vmatpush1.bf16.msra.mxu0 0
        %1770 = vmatprep.subr.bf16.mxu0 0
        %1771 = vmatpush1.bf16.msra.mxu0 0
        %1772 = vmatprep.subr.bf16.mxu0 0
        %1773 = vmatpush1.bf16.msra.mxu0 0
        %1774 = vmatprep.subr.bf16.mxu0 0
        %1775 = vmatpush1.bf16.msra.mxu0 0
        %1776 = vmatprep.subr.bf16.mxu0 0
        %1777 = vmatpush1.bf16.msra.mxu0 0
        %1778 = vmatprep.subr.bf16.mxu0 0
        %1779 = vmatpush1.bf16.msra.mxu0 0
        %1780 = vmatprep.subr.bf16.mxu0 0
        %1781 = vmatpush1.bf16.msra.mxu0 0
        %1782 = vmatprep.subr.bf16.mxu0 0
        %1783 = vmatpush1.bf16.msra.mxu0 0
        %1784 = vmatprep.subr.bf16.mxu0 0
        %1785 = vmatpush1.bf16.msra.mxu0 0
        %1786 = vmatprep.subr.bf16.mxu0 0
        %1787 = vmatpush1.bf16.msra.mxu0 0
        %1788 = vmatprep.subr.bf16.mxu0 0
        %1789 = vmatpush1.bf16.msra.mxu0 0
        %1790 = vmatprep.subr.bf16.mxu0 0
        %1791 = vmatpush1.bf16.msra.mxu0 0
        %1792 = vmatprep.mubr.bf16.mxu0 0
        %1793 = vmatmul.mubr.bf16.gmra.mrb[0].mxu0 %v1225
        %v1794 = vpop.f32.mrb[0].mxu0
        %v1795 = vadd.f32 %v581, %v1794
        %v1796 = vpop.f32.mrb[0].mxu0
        %v1797 = vadd.f32 %v581, %v1796
        %v1798 = vpop.f32.mrb[0].mxu0
        %v1799 = vpop.f32.mrb[0].mxu0
        %1800 = vdwg.mxu0
        %1801 = vmatprep.subr.bf16.mxu0 %v996
        %1802 = vmatpush1.bf16.msra.mxu0 %v995
        %1803 = vmatprep.subr.bf16.mxu0 %v1028
        %1804 = vmatpush1.bf16.msra.mxu0 %v1027
        %1805 = vmatprep.subr.bf16.mxu0 %v1060
        %1806 = vmatpush1.bf16.msra.mxu0 %v1059
        %1807 = vmatprep.subr.bf16.mxu0 %v1092
        %1808 = vmatpush1.bf16.msra.mxu0 %v1091
        %1809 = vmatprep.subr.bf16.mxu0 0
        %1810 = vmatpush1.bf16.msra.mxu0 0
        %1811 = vmatprep.subr.bf16.mxu0 0
        %1812 = vmatpush1.bf16.msra.mxu0 0
        %1813 = vmatprep.subr.bf16.mxu0 0
        %1814 = vmatpush1.bf16.msra.mxu0 0
        %1815 = vmatprep.subr.bf16.mxu0 0
        %1816 = vmatpush1.bf16.msra.mxu0 0
        %1817 = vmatprep.subr.bf16.mxu0 0
        %1818 = vmatpush1.bf16.msra.mxu0 0
        %1819 = vmatprep.subr.bf16.mxu0 0
        %1820 = vmatpush1.bf16.msra.mxu0 0
        %1821 = vmatprep.subr.bf16.mxu0 0
        %1822 = vmatpush1.bf16.msra.mxu0 0
        %1823 = vmatprep.subr.bf16.mxu0 0
        %1824 = vmatpush1.bf16.msra.mxu0 0
        %1825 = vmatprep.subr.bf16.mxu0 0
        %1826 = vmatpush1.bf16.msra.mxu0 0
        %1827 = vmatprep.subr.bf16.mxu0 0
        %1828 = vmatpush1.bf16.msra.mxu0 0
        %1829 = vmatprep.subr.bf16.mxu0 0
        %1830 = vmatpush1.bf16.msra.mxu0 0
        %1831 = vmatprep.subr.bf16.mxu0 0
        %1832 = vmatpush1.bf16.msra.mxu0 0
        %1833 = vmatprep.mubr.bf16.mxu0 0
        %1834 = vmatmul.mubr.bf16.gmra.mrb[0].mxu0 %v1225
        %v1835 = vpop.f32.mrb[0].mxu0
        %v1836 = vadd.f32 %v581, %v1835
        %v1837 = vpop.f32.mrb[0].mxu0
        %v1838 = vadd.f32 %v581, %v1837
        %v1839 = vpop.f32.mrb[0].mxu0
        %v1840 = vpop.f32.mrb[0].mxu0
        %1841 = vdwg.mxu0
        %1842 = vmatprep.subr.bf16.mxu0 %v998
        %1843 = vmatpush1.bf16.msra.mxu0 %v997
        %1844 = vmatprep.subr.bf16.mxu0 %v1030
        %1845 = vmatpush1.bf16.msra.mxu0 %v1029
        %1846 = vmatprep.subr.bf16.mxu0 %v1062
        %1847 = vmatpush1.bf16.msra.mxu0 %v1061
        %1848 = vmatprep.subr.bf16.mxu0 %v1094
        %1849 = vmatpush1.bf16.msra.mxu0 %v1093
        %1850 = vmatprep.subr.bf16.mxu0 0
        %1851 = vmatpush1.bf16.msra.mxu0 0
        %1852 = vmatprep.subr.bf16.mxu0 0
        %1853 = vmatpush1.bf16.msra.mxu0 0
        %1854 = vmatprep.subr.bf16.mxu0 0
        %1855 = vmatpush1.bf16.msra.mxu0 0
        %1856 = vmatprep.subr.bf16.mxu0 0
        %1857 = vmatpush1.bf16.msra.mxu0 0
        %1858 = vmatprep.subr.bf16.mxu0 0
        %1859 = vmatpush1.bf16.msra.mxu0 0
        %1860 = vmatprep.subr.bf16.mxu0 0
        %1861 = vmatpush1.bf16.msra.mxu0 0
        %1862 = vmatprep.subr.bf16.mxu0 0
        %1863 = vmatpush1.bf16.msra.mxu0 0
        %1864 = vmatprep.subr.bf16.mxu0 0
        %1865 = vmatpush1.bf16.msra.mxu0 0
        %1866 = vmatprep.subr.bf16.mxu0 0
        %1867 = vmatpush1.bf16.msra.mxu0 0
        %1868 = vmatprep.subr.bf16.mxu0 0
        %1869 = vmatpush1.bf16.msra.mxu0 0
        %1870 = vmatprep.subr.bf16.mxu0 0
        %1871 = vmatpush1.bf16.msra.mxu0 0
        %1872 = vmatprep.subr.bf16.mxu0 0
        %1873 = vmatpush1.bf16.msra.mxu0 0
        %1874 = vmatprep.mubr.bf16.mxu0 0
        %1875 = vmatmul.mubr.bf16.gmra.mrb[0].mxu0 %v1225
        %v1876 = vpop.f32.mrb[0].mxu0
        %v1877 = vadd.f32 %v581, %v1876
        %v1878 = vpop.f32.mrb[0].mxu0
        %v1879 = vadd.f32 %v581, %v1878
        %v1880 = vpop.f32.mrb[0].mxu0
        %v1881 = vpop.f32.mrb[0].mxu0
        %1882 = vdwg.mxu0
        %vm1883 = vcmp.gt.f32.partialorder %v1262, 0.0
        %vm1884 = vcmp.gt.f32.partialorder %v1264, 0.0
        %vm1885 = vcmp.gt.f32.partialorder %v1303, 0.0
        %vm1886 = vcmp.gt.f32.partialorder %v1305, 0.0
        %vm1887 = vcmp.gt.f32.partialorder %v1344, 0.0
        %vm1888 = vcmp.gt.f32.partialorder %v1346, 0.0
        %vm1889 = vcmp.gt.f32.partialorder %v1385, 0.0
        %vm1890 = vcmp.gt.f32.partialorder %v1387, 0.0
        %vm1891 = vcmp.gt.f32.partialorder %v1426, 0.0
        %vm1892 = vcmp.gt.f32.partialorder %v1428, 0.0
        %vm1893 = vcmp.gt.f32.partialorder %v1467, 0.0
        %vm1894 = vcmp.gt.f32.partialorder %v1469, 0.0
        %vm1895 = vcmp.gt.f32.partialorder %v1508, 0.0
        %vm1896 = vcmp.gt.f32.partialorder %v1510, 0.0
        %vm1897 = vcmp.gt.f32.partialorder %v1549, 0.0
        %vm1898 = vcmp.gt.f32.partialorder %v1551, 0.0
        %vm1899 = vcmp.gt.f32.partialorder %v1590, 0.0
        %vm1900 = vcmp.gt.f32.partialorder %v1592, 0.0
        %vm1901 = vcmp.gt.f32.partialorder %v1631, 0.0
        %vm1902 = vcmp.gt.f32.partialorder %v1633, 0.0
        %vm1903 = vcmp.gt.f32.partialorder %v1672, 0.0
        %vm1904 = vcmp.gt.f32.partialorder %v1674, 0.0
        %vm1905 = vcmp.gt.f32.partialorder %v1713, 0.0
        %vm1906 = vcmp.gt.f32.partialorder %v1715, 0.0
        %vm1907 = vcmp.gt.f32.partialorder %v1754, 0.0
        %vm1908 = vcmp.gt.f32.partialorder %v1756, 0.0
        %vm1909 = vcmp.gt.f32.partialorder %v1795, 0.0
        %vm1910 = vcmp.gt.f32.partialorder %v1797, 0.0
        %vm1911 = vcmp.gt.f32.partialorder %v1836, 0.0
        %vm1912 = vcmp.gt.f32.partialorder %v1838, 0.0
        %vm1913 = vcmp.gt.f32.partialorder %v1877, 0.0
        %vm1914 = vcmp.gt.f32.partialorder %v1879, 0.0
        %v1915 = vmul.f32 %v1262, 0.01
        %v1916 = vmul.f32 %v1264, 0.01
        %v1917 = vmul.f32 %v1303, 0.01
        %v1918 = vmul.f32 %v1305, 0.01
        %v1919 = vmul.f32 %v1344, 0.01
        %v1920 = vmul.f32 %v1346, 0.01
        %v1921 = vmul.f32 %v1385, 0.01
        %v1922 = vmul.f32 %v1387, 0.01
        %v1923 = vmul.f32 %v1426, 0.01
        %v1924 = vmul.f32 %v1428, 0.01
        %v1925 = vmul.f32 %v1467, 0.01
        %v1926 = vmul.f32 %v1469, 0.01
        %v1927 = vmul.f32 %v1508, 0.01
        %v1928 = vmul.f32 %v1510, 0.01
        %v1929 = vmul.f32 %v1549, 0.01
        %v1930 = vmul.f32 %v1551, 0.01
        %v1931 = vmul.f32 %v1590, 0.01
        %v1932 = vmul.f32 %v1592, 0.01
        %v1933 = vmul.f32 %v1631, 0.01
        %v1934 = vmul.f32 %v1633, 0.01
        %v1935 = vmul.f32 %v1672, 0.01
        %v1936 = vmul.f32 %v1674, 0.01
        %v1937 = vmul.f32 %v1713, 0.01
        %v1938 = vmul.f32 %v1715, 0.01
        %v1939 = vmul.f32 %v1754, 0.01
        %v1940 = vmul.f32 %v1756, 0.01
        %v1941 = vmul.f32 %v1795, 0.01
        %v1942 = vmul.f32 %v1797, 0.01
        %v1943 = vmul.f32 %v1836, 0.01
        %v1944 = vmul.f32 %v1838, 0.01
        %v1945 = vmul.f32 %v1877, 0.01
        %v1946 = vmul.f32 %v1879, 0.01
        %v1947 = vsel %vm1883, %v1262, %v1915
        %v1948 = vsel %vm1884, %v1264, %v1916
        %v1949 = vsel %vm1885, %v1303, %v1917
        %v1950 = vsel %vm1886, %v1305, %v1918
        %v1951 = vsel %vm1887, %v1344, %v1919
        %v1952 = vsel %vm1888, %v1346, %v1920
        %v1953 = vsel %vm1889, %v1385, %v1921
        %v1954 = vsel %vm1890, %v1387, %v1922
        %v1955 = vsel %vm1891, %v1426, %v1923
        %v1956 = vsel %vm1892, %v1428, %v1924
        %v1957 = vsel %vm1893, %v1467, %v1925
        %v1958 = vsel %vm1894, %v1469, %v1926
        %v1959 = vsel %vm1895, %v1508, %v1927
        %v1960 = vsel %vm1896, %v1510, %v1928
        %v1961 = vsel %vm1897, %v1549, %v1929
        %v1962 = vsel %vm1898, %v1551, %v1930
        %v1963 = vsel %vm1899, %v1590, %v1931
        %v1964 = vsel %vm1900, %v1592, %v1932
        %v1965 = vsel %vm1901, %v1631, %v1933
        %v1966 = vsel %vm1902, %v1633, %v1934
        %v1967 = vsel %vm1903, %v1672, %v1935
        %v1968 = vsel %vm1904, %v1674, %v1936
        %v1969 = vsel %vm1905, %v1713, %v1937
        %v1970 = vsel %vm1906, %v1715, %v1938
        %v1971 = vsel %vm1907, %v1754, %v1939
        %v1972 = vsel %vm1908, %v1756, %v1940
        %v1973 = vsel %vm1909, %v1795, %v1941
        %v1974 = vsel %vm1910, %v1797, %v1942
        %v1975 = vsel %vm1911, %v1836, %v1943
        %v1976 = vsel %vm1912, %v1838, %v1944
        %v1977 = vsel %vm1913, %v1877, %v1945
        %v1978 = vsel %vm1914, %v1879, %v1946
        %v1979 = vpack.c.bf16 %v1947, %v1947
        %v1980 = vpack.c.bf16 %v1948, %v1948
        %v1981 = vpack.c.bf16 %v1949, %v1949
        %v1982 = vpack.c.bf16 %v1950, %v1950
        %v1983 = vpack.c.bf16 %v1951, %v1951
        %v1984 = vpack.c.bf16 %v1952, %v1952
        %v1985 = vpack.c.bf16 %v1953, %v1953
        %v1986 = vpack.c.bf16 %v1954, %v1954
        %v1987 = vpack.c.bf16 %v1955, %v1955
        %v1988 = vpack.c.bf16 %v1956, %v1956
        %v1989 = vpack.c.bf16 %v1957, %v1957
        %v1990 = vpack.c.bf16 %v1958, %v1958
        %v1991 = vpack.c.bf16 %v1959, %v1959
        %v1992 = vpack.c.bf16 %v1960, %v1960
        %v1993 = vpack.c.bf16 %v1961, %v1961
        %v1994 = vpack.c.bf16 %v1962, %v1962
        %v1995 = vpack.c.bf16 %v1963, %v1963
        %v1996 = vpack.c.bf16 %v1964, %v1964
        %v1997 = vpack.c.bf16 %v1965, %v1965
        %v1998 = vpack.c.bf16 %v1966, %v1966
        %v1999 = vpack.c.bf16 %v1967, %v1967
        %v2000 = vpack.c.bf16 %v1968, %v1968
        %v2001 = vpack.c.bf16 %v1969, %v1969
        %v2002 = vpack.c.bf16 %v1970, %v1970
        %v2003 = vpack.c.bf16 %v1971, %v1971
        %v2004 = vpack.c.bf16 %v1972, %v1972
        %v2005 = vpack.c.bf16 %v1973, %v1973
        %v2006 = vpack.c.bf16 %v1974, %v1974
        %v2007 = vpack.c.bf16 %v1975, %v1975
        %v2008 = vpack.c.bf16 %v1976, %v1976
        %v2009 = vpack.c.bf16 %v1977, %v1977
        %v2010 = vpack.c.bf16 %v1978, %v1978
        %v2043 = vunpack.c.l.b16 %v1979
        %v2044 = vunpack.c.l.b16 %v1980
        %v2045 = vunpack.c.l.b16 %v1981
        %v2046 = vunpack.c.l.b16 %v1982
        %v2047 = vunpack.c.l.b16 %v1983
        %v2048 = vunpack.c.l.b16 %v1984
        %v2049 = vunpack.c.l.b16 %v1985
        %v2050 = vunpack.c.l.b16 %v1986
        %v2051 = vunpack.c.l.b16 %v1987
        %v2052 = vunpack.c.l.b16 %v1988
        %v2053 = vunpack.c.l.b16 %v1989
        %v2054 = vunpack.c.l.b16 %v1990
        %v2055 = vunpack.c.l.b16 %v1991
        %v2056 = vunpack.c.l.b16 %v1992
        %v2057 = vunpack.c.l.b16 %v1993
        %v2058 = vunpack.c.l.b16 %v1994
        %v2059 = vunpack.c.l.b16 %v1995
        %v2060 = vunpack.c.l.b16 %v1996
        %v2061 = vunpack.c.l.b16 %v1997
        %v2062 = vunpack.c.l.b16 %v1998
        %v2063 = vunpack.c.l.b16 %v1999
        %v2064 = vunpack.c.l.b16 %v2000
        %v2065 = vunpack.c.l.b16 %v2001
        %v2066 = vunpack.c.l.b16 %v2002
        %v2067 = vunpack.c.l.b16 %v2003
        %v2068 = vunpack.c.l.b16 %v2004
        %v2069 = vunpack.c.l.b16 %v2005
        %v2070 = vunpack.c.l.b16 %v2006
        %v2071 = vunpack.c.l.b16 %v2007
        %v2072 = vunpack.c.l.b16 %v2008
        %v2073 = vunpack.c.l.b16 %v2009
        %v2074 = vunpack.c.l.b16 %v2010
        %v2075 = vpack.c.b16 %v2044, %v2043
        %v2076 = vpack.c.b16 %v2046, %v2045
        %v2077 = vpack.c.b16 %v2048, %v2047
        %v2078 = vpack.c.b16 %v2050, %v2049
        %v2079 = vpack.c.b16 %v2052, %v2051
        %v2080 = vpack.c.b16 %v2054, %v2053
        %v2081 = vpack.c.b16 %v2056, %v2055
        %v2082 = vpack.c.b16 %v2058, %v2057
        %v2083 = vpack.c.b16 %v2060, %v2059
        %v2084 = vpack.c.b16 %v2062, %v2061
        %v2085 = vpack.c.b16 %v2064, %v2063
        %v2086 = vpack.c.b16 %v2066, %v2065
        %v2087 = vpack.c.b16 %v2068, %v2067
        %v2088 = vpack.c.b16 %v2070, %v2069
        %v2089 = vpack.c.b16 %v2072, %v2071
        %v2090 = vpack.c.b16 %v2074, %v2073
        %2107 = vst [vmem:[%s445] sm:$0xff] %v2075
        %2108 = vst [vmem:[%s445 + $0x8] sm:$0xff] %v2076
        %2109 = vst [vmem:[%s445 + $0x10] sm:$0xff] %v2077
        %2110 = vst [vmem:[%s445 + $0x18] sm:$0xff] %v2078
        %2111 = vst [vmem:[%s445 + $0x20] sm:$0xff] %v2079
        %2112 = vst [vmem:[%s445 + $0x28] sm:$0xff] %v2080
        %2113 = vst [vmem:[%s445 + $0x30] sm:$0xff] %v2081
        %2114 = vst [vmem:[%s445 + $0x38] sm:$0xff] %v2082
        %2115 = vst [vmem:[%s445 + $0x40] sm:$0xff] %v2083
        %2116 = vst [vmem:[%s445 + $0x48] sm:$0xff] %v2084
        %2117 = vst [vmem:[%s445 + $0x50] sm:$0xff] %v2085
        %2118 = vst [vmem:[%s445 + $0x58] sm:$0xff] %v2086
        %2119 = vst [vmem:[%s445 + $0x60] sm:$0xff] %v2087
        %2120 = vst [vmem:[%s445 + $0x68] sm:$0xff] %v2088
        %2121 = vst [vmem:[%s445 + $0x70] sm:$0xff] %v2089
        %2122 = vst [vmem:[%s445 + $0x78] sm:$0xff] %v2090
        %s2123 = smul.u32 32, %s14
        %p2124 = scmp.lt.s32.totalorder %s2123, 63
        %s2125 = scalar_select %p2124, %s2123, 63
        %s2126 = smul.addr %s2125, 4
        %s2127 = scalar_lea.vmem %s3, %s2126
        // Predicated region
        $region56: #{forward.7} parent=50 // pred_check
          %p2128 = pneg %p100
        $region57: #{forward.7} parent=50 // pred_check_branch
          %2130 = sbr.rel (%p2128) target = $region59
        $region58: #{forward.7} parent=50 // pred_region
          %s2131 = smul.u32 32, %s14
        $region59: #{forward.7} parent=50 // pred_fallthru
          _
      $region51: #{forward.7} parent=5 // pred_fallthru
        _
      %p2132 = scmp.le.s32.totalorder 2, %s9
      // Predicated region
      $region60: #{forward.7} parent=5 // pred_check
        %p2133 = pneg %p2132
      $region61: #{forward.7} parent=5 // pred_check_branch
        %2135 = sbr.rel (%p2133) target = $region63
      $region62: #{forward.7} parent=5 // pred_region
        %s2136 = ssub.s32 %s9, 2
        // Predicated region
        $region64: #{forward.7} parent=62 // pred_check
          %p2137 = pneg %p106
        $region65: #{forward.7} parent=62 // pred_check_branch
          %2139 = sbr.rel (%p2137) target = $region67
        $region66: #{forward.7} parent=62 // pred_region
          %s2140 = smul.u32 32, %s15
          %p2141 = scmp.lt.s32.totalorder %s2140, 63
          %s2142 = scalar_select %p2141, %s2140, 63
          %s2143 = smul.addr %s2142, 4
          %s2144 = scalar_lea.vmem %s3, %s2143
        $region67: #{forward.7} parent=62 // pred_fallthru
          _
      $region63: #{forward.7} parent=5 // pred_fallthru
        _
    $region6: #{forward.7} parent=1 // loop_footer
      %s13 = sadd.s32 1, %s9
    $region7: #{forward.7} parent=1 // loop_footer_branch
      %8 = sbr.rel target = $region3
    $region8: #{forward.7} parent=1 // loop_exit
      _

// kernel: forward.8
$region0: #{forward.8}
  #allocation0 [shape = 'u32[]', space=smem, size = 0x4, offset = 0x4, fixed_abs, tag = 'smem constant byte address 0x4 - core index']
  #allocation1 [shape = 'u32[144,128]{1,0:T(1,128)}', space=vmem, size = 0x12000, scoped, tag = 'internal scratch']
  %s0 = inlined_call_operand.vmem [shape: bf16[128,2048], index: 0, kind: input, shape index: {}]
  %s1 = inlined_call_operand.vmem [shape: bf16[16,128], index: 1, kind: input, shape index: {}]
  %s2 = inlined_call_operand.vmem [shape: f32[16,1], index: 2, kind: input, shape index: {}]
  %s3 = inlined_call_operand.vmem [shape: bf16[16,2048], index: 3, kind: output, shape index: {}]
  %s4 = sld [smem:[#allocation0]]
  $region87: #{forward.8} parent=0
    _
  %s6 = ssub.s32 1, %s4
  %s7 = scalar_select 0, %s6, %s4
  $region1: #{forward.8} parent=0
    #allocation2 [shape = 'u8[524288]{0}', space=vmem, size = 0x80000, scoped, tag = 'input window, operand 0']
    #allocation3 [shape = 'u8[65536]{0}', space=vmem, size = 0x10000, scoped, tag = 'output window, operand 0']
    loop: start=0, step=1, limit=4
    $region2: #{forward.8} parent=1 // loop_pre_header
      _
    $region3: #{forward.8} parent=1 // loop_header
      %s9 = sphi 0, %s13
      %p10 = scmp.ge.s32.totalorder %s9, 4
      %s19 = sphi 0, %s21
      %s22 = sphi 0, %s19
      %s23 = sphi 0, %s22
      %s39 = sphi 0, %s23
      %s43 = sphi 0, %s43
      %s45 = sphi 0, %s43
      %s46 = sphi 0, %s45
      %s60 = sphi 0, %s46
      %s64 = sphi 0, %s64
      %s66 = sphi 0, %s64
      %s67 = sphi 0, %s66
      %s81 = sphi 0, %s67
      %s87 = sphi 0, %s89
      %s90 = sphi 0, %s87
      %s91 = sphi 0, %s90
      %s107 = sphi 0, %s91
    $region4: #{forward.8} parent=1 // loop_header_branch
      %12 = sbr.rel (%p10) target = $region8
    $region5: #{forward.8} parent=1 // loop_body
      %s14 = ssub.s32 %s9, 1
      %s15 = ssub.s32 %s9, 2
      %s16 = sadd.s32 %s9, 1
      %s17 = ssub.s32 %s9, %s16
      %p18 = scmp.eq.s32.totalorder %s17, 0
      %s20 = sadd.s32 %s19, 1
      %s21 = scalar_select %p18, %s19, %s20
      %p24 = pneg %p18
      %p25 = scmp.eq.s32.totalorder %s9, 1
      %p26 = por %p24, %p25
      %p27 = scmp.ne.s32.totalorder %s19, %s22
      %p28 = scmp.eq.s32.totalorder %s9, 0
      %p29 = por %p27, %p28
      %p30 = scmp.ne.s32.totalorder %s19, %s22
      %p31 = scmp.eq.s32.totalorder %s14, 1
      %p32 = por %p30, %p31
      %p33 = scmp.ne.s32.totalorder %s22, %s23
      %p34 = scmp.eq.s32.totalorder %s14, 0
      %p35 = por %p33, %p34
      %p36 = scmp.ne.s32.totalorder %s22, %s23
      %p37 = scmp.eq.s32.totalorder %s15, 1
      %p38 = por %p36, %p37
      %p40 = scmp.ne.s32.totalorder %s23, %s39
      %p41 = scmp.eq.s32.totalorder %s15, 0
      %p42 = por %p40, %p41
      %s44 = sadd.s32 %s43, 1
      %p47 = scmp.eq.s32.totalorder %s9, 1
      %p48 = scmp.ne.s32.totalorder %s43, %s45
      %p49 = scmp.eq.s32.totalorder %s9, 0
      %p50 = por %p48, %p49
      %p51 = scmp.ne.s32.totalorder %s43, %s45
      %p52 = scmp.eq.s32.totalorder %s14, 1
      %p53 = por %p51, %p52
      %p54 = scmp.ne.s32.totalorder %s45, %s46
      %p55 = scmp.eq.s32.totalorder %s14, 0
      %p56 = por %p54, %p55
      %p57 = scmp.ne.s32.totalorder %s45, %s46
      %p58 = scmp.eq.s32.totalorder %s15, 1
      %p59 = por %p57, %p58
      %p61 = scmp.ne.s32.totalorder %s46, %s60
      %p62 = scmp.eq.s32.totalorder %s15, 0
      %p63 = por %p61, %p62
      %s65 = sadd.s32 %s64, 1
      %p68 = scmp.eq.s32.totalorder %s9, 1
      %p69 = scmp.ne.s32.totalorder %s64, %s66
      %p70 = scmp.eq.s32.totalorder %s9, 0
      %p71 = por %p69, %p70
      %p72 = scmp.ne.s32.totalorder %s64, %s66
      %p73 = scmp.eq.s32.totalorder %s14, 1
      %p74 = por %p72, %p73
      %p75 = scmp.ne.s32.totalorder %s66, %s67
      %p76 = scmp.eq.s32.totalorder %s14, 0
      %p77 = por %p75, %p76
      %p78 = scmp.ne.s32.totalorder %s66, %s67
      %p79 = scmp.eq.s32.totalorder %s15, 1
      %p80 = por %p78, %p79
      %p82 = scmp.ne.s32.totalorder %s67, %s81
      %p83 = scmp.eq.s32.totalorder %s15, 0
      %p84 = por %p82, %p83
      %s85 = ssub.s32 %s9, %s16
      %p86 = scmp.eq.s32.totalorder %s85, 0
      %s88 = sadd.s32 %s87, 1
      %s89 = scalar_select %p86, %s87, %s88
      %p92 = pneg %p86
      %p93 = scmp.eq.s32.totalorder %s9, 1
      %p94 = por %p92, %p93
      %p95 = scmp.ne.s32.totalorder %s87, %s90
      %p96 = scmp.eq.s32.totalorder %s9, 0
      %p97 = por %p95, %p96
      %p98 = scmp.ne.s32.totalorder %s87, %s90
      %p99 = scmp.eq.s32.totalorder %s14, 1
      %p100 = por %p98, %p99
      %p101 = scmp.ne.s32.totalorder %s90, %s91
      %p102 = scmp.eq.s32.totalorder %s14, 0
      %p103 = por %p101, %p102
      %p104 = scmp.ne.s32.totalorder %s90, %s91
      %p105 = scmp.eq.s32.totalorder %s15, 1
      %p106 = por %p104, %p105
      %p108 = scmp.ne.s32.totalorder %s91, %s107
      %p109 = scmp.eq.s32.totalorder %s15, 0
      %p110 = por %p108, %p109
      %p111 = scmp.le.s32.totalorder 1, %s9
      %p112 = scmp.lt.s32.totalorder %s9, 3
      %p113 = pnand %p111, %p112
      %p114 = pneg %p113
      // Predicated region
      $region9: #{forward.8} parent=5 // pred_check
        _
      $region10: #{forward.8} parent=5 // pred_check_branch
        %116 = sbr.rel (%p113) target = $region12
      $region11: #{forward.8} parent=5 // pred_region
        %s117 = ssub.s32 %s9, 1
        // Predicated region
        $region13: #{forward.8} parent=11 // pred_check
          %p118 = pneg %p56
        $region14: #{forward.8} parent=11 // pred_check_branch
          %120 = sbr.rel (%p118) target = $region16
        $region15: #{forward.8} parent=11 // pred_region
          _
        $region16: #{forward.8} parent=11 // pred_fallthru
          _
        // Predicated region
        $region17: #{forward.8} parent=11 // pred_check
          %p121 = pneg %p77
        $region18: #{forward.8} parent=11 // pred_check_branch
          %123 = sbr.rel (%p121) target = $region20
        $region19: #{forward.8} parent=11 // pred_region
          _
        $region20: #{forward.8} parent=11 // pred_fallthru
          _
      $region12: #{forward.8} parent=5 // pred_fallthru
        _
      %p124 = scmp.lt.s32.totalorder %s9, 2
      // Predicated region
      $region21: #{forward.8} parent=5 // pred_check
        %p125 = pneg %p124
      $region22: #{forward.8} parent=5 // pred_check_branch
        %127 = sbr.rel (%p125) target = $region24
      $region23: #{forward.8} parent=5 // pred_region
        // Predicated region
        $region25: #{forward.8} parent=23 // pred_check
          %p128 = pneg %p29
        $region26: #{forward.8} parent=23 // pred_check_branch
          %130 = sbr.rel (%p128) target = $region28
        $region27: #{forward.8} parent=23 // pred_region
          %s131 = sand.u32 %s19, 1
          %s132 = sand.u32 %s19, 1
          %s133 = smul.addr %s132, 512
          %s134 = scalar_lea.vmem [#allocation2], %s133
          %s135 = smul.u32 8, %s9
          %s136 = smul.addr %s135, 4
          %s137 = scalar_lea.vmem %s0, %s136
          // Predicated region
          $region29: #{forward.8} parent=27 // pred_check
            _
          $region30: #{forward.8} parent=27 // pred_check_branch
            %139 = sbr.rel (0) target = $region32
          $region31: #{forward.8} parent=27 // pred_region
            // Predicated region
            $region33: #{forward.8} parent=31 // pred_check
              _
            $region34: #{forward.8} parent=31 // pred_check_branch
              %141 = sbr.rel (0) target = $region36
            $region35: #{forward.8} parent=31 // pred_region
              loop: start=0, step=1, limit=1
              $region37: #{forward.8} parent=35 // loop_pre_header
                _
              $region38: #{forward.8} parent=35 // loop_header
                %s143 = sphi 0, %s147
                %p144 = scmp.ge.s32.totalorder %s143, 1
                %s148 = sphi %s137, %s137
                %s149 = sphi %s134, %s134
              $region39: #{forward.8} parent=35 // loop_header_branch
                %146 = sbr.rel (%p144) target = $region43
              $region40: #{forward.8} parent=35 // loop_body
                %v150 = vld [vmem:[%s148] sm:$0xff]
                %151 = vst [vmem:[%s149] sm:$0xff] %v150
                %v152 = vld [vmem:[%s148 + $0x8] sm:$0xff]
                %153 = vst [vmem:[%s149 + $0x8] sm:$0xff] %v152
                %v154 = vld [vmem:[%s148 + $0x10] sm:$0xff]
                %155 = vst [vmem:[%s149 + $0x10] sm:$0xff] %v154
                %v156 = vld [vmem:[%s148 + $0x18] sm:$0xff]
                %157 = vst [vmem:[%s149 + $0x18] sm:$0xff] %v156
                %v158 = vld [vmem:[%s148 + $0x40] sm:$0xff]
                %159 = vst [vmem:[%s149 + $0x20] sm:$0xff] %v158
                %v160 = vld [vmem:[%s148 + $0x48] sm:$0xff]
                %161 = vst [vmem:[%s149 + $0x28] sm:$0xff] %v160
                %v162 = vld [vmem:[%s148 + $0x50] sm:$0xff]
                %163 = vst [vmem:[%s149 + $0x30] sm:$0xff] %v162
                %v164 = vld [vmem:[%s148 + $0x58] sm:$0xff]
                %165 = vst [vmem:[%s149 + $0x38] sm:$0xff] %v164
                %v166 = vld [vmem:[%s148 + $0x80] sm:$0xff]
                %167 = vst [vmem:[%s149 + $0x40] sm:$0xff] %v166
                %v168 = vld [vmem:[%s148 + $0x88] sm:$0xff]
                %169 = vst [vmem:[%s149 + $0x48] sm:$0xff] %v168
                %v170 = vld [vmem:[%s148 + $0x90] sm:$0xff]
                %171 = vst [vmem:[%s149 + $0x50] sm:$0xff] %v170
                %v172 = vld [vmem:[%s148 + $0x98] sm:$0xff]
                %173 = vst [vmem:[%s149 + $0x58] sm:$0xff] %v172
                %v174 = vld [vmem:[%s148 + $0xc0] sm:$0xff]
                %175 = vst [vmem:[%s149 + $0x60] sm:$0xff] %v174
                %v176 = vld [vmem:[%s148 + $0xc8] sm:$0xff]
                %177 = vst [vmem:[%s149 + $0x68] sm:$0xff] %v176
                %v178 = vld [vmem:[%s148 + $0xd0] sm:$0xff]
                %179 = vst [vmem:[%s149 + $0x70] sm:$0xff] %v178
                %v180 = vld [vmem:[%s148 + $0xd8] sm:$0xff]
                %181 = vst [vmem:[%s149 + $0x78] sm:$0xff] %v180
                %v182 = vld [vmem:[%s148 + $0x100] sm:$0xff]
                %183 = vst [vmem:[%s149 + $0x80] sm:$0xff] %v182
                %v184 = vld [vmem:[%s148 + $0x108] sm:$0xff]
                %185 = vst [vmem:[%s149 + $0x88] sm:$0xff] %v184
                %v186 = vld [vmem:[%s148 + $0x110] sm:$0xff]
                %187 = vst [vmem:[%s149 + $0x90] sm:$0xff] %v186
                %v188 = vld [vmem:[%s148 + $0x118] sm:$0xff]
                %189 = vst [vmem:[%s149 + $0x98] sm:$0xff] %v188
                %v190 = vld [vmem:[%s148 + $0x140] sm:$0xff]
                %191 = vst [vmem:[%s149 + $0xa0] sm:$0xff] %v190
                %v192 = vld [vmem:[%s148 + $0x148] sm:$0xff]
                %193 = vst [vmem:[%s149 + $0xa8] sm:$0xff] %v192
                %v194 = vld [vmem:[%s148 + $0x150] sm:$0xff]
                %195 = vst [vmem:[%s149 + $0xb0] sm:$0xff] %v194
                %v196 = vld [vmem:[%s148 + $0x158] sm:$0xff]
                %197 = vst [vmem:[%s149 + $0xb8] sm:$0xff] %v196
                %v198 = vld [vmem:[%s148 + $0x180] sm:$0xff]
                %199 = vst [vmem:[%s149 + $0xc0] sm:$0xff] %v198
                %v200 = vld [vmem:[%s148 + $0x188] sm:$0xff]
                %201 = vst [vmem:[%s149 + $0xc8] sm:$0xff] %v200
                %v202 = vld [vmem:[%s148 + $0x190] sm:$0xff]
                %203 = vst [vmem:[%s149 + $0xd0] sm:$0xff] %v202
                %v204 = vld [vmem:[%s148 + $0x198] sm:$0xff]
                %205 = vst [vmem:[%s149 + $0xd8] sm:$0xff] %v204
                %v206 = vld [vmem:[%s148 + $0x1c0] sm:$0xff]
                %207 = vst [vmem:[%s149 + $0xe0] sm:$0xff] %v206
                %v208 = vld [vmem:[%s148 + $0x1c8] sm:$0xff]
                %209 = vst [vmem:[%s149 + $0xe8] sm:$0xff] %v208
                %v210 = vld [vmem:[%s148 + $0x1d0] sm:$0xff]
                %211 = vst [vmem:[%s149 + $0xf0] sm:$0xff] %v210
                %v212 = vld [vmem:[%s148 + $0x1d8] sm:$0xff]
                %213 = vst [vmem:[%s149 + $0xf8] sm:$0xff] %v212
                %v214 = vld [vmem:[%s148 + $0x200] sm:$0xff]
                %215 = vst [vmem:[%s149 + $0x100] sm:$0xff] %v214
                %v216 = vld [vmem:[%s148 + $0x208] sm:$0xff]
                %217 = vst [vmem:[%s149 + $0x108] sm:$0xff] %v216
                %v218 = vld [vmem:[%s148 + $0x210] sm:$0xff]
                %219 = vst [vmem:[%s149 + $0x110] sm:$0xff] %v218
                %v220 = vld [vmem:[%s148 + $0x218] sm:$0xff]
                %221 = vst [vmem:[%s149 + $0x118] sm:$0xff] %v220
                %v222 = vld [vmem:[%s148 + $0x240] sm:$0xff]
                %223 = vst [vmem:[%s149 + $0x120] sm:$0xff] %v222
                %v224 = vld [vmem:[%s148 + $0x248] sm:$0xff]
                %225 = vst [vmem:[%s149 + $0x128] sm:$0xff] %v224
                %v226 = vld [vmem:[%s148 + $0x250] sm:$0xff]
                %227 = vst [vmem:[%s149 + $0x130] sm:$0xff] %v226
                %v228 = vld [vmem:[%s148 + $0x258] sm:$0xff]
                %229 = vst [vmem:[%s149 + $0x138] sm:$0xff] %v228
                %v230 = vld [vmem:[%s148 + $0x280] sm:$0xff]
                %231 = vst [vmem:[%s149 + $0x140] sm:$0xff] %v230
                %v232 = vld [vmem:[%s148 + $0x288] sm:$0xff]
                %233 = vst [vmem:[%s149 + $0x148] sm:$0xff] %v232
                %v234 = vld [vmem:[%s148 + $0x290] sm:$0xff]
                %235 = vst [vmem:[%s149 + $0x150] sm:$0xff] %v234
                %v236 = vld [vmem:[%s148 + $0x298] sm:$0xff]
                %237 = vst [vmem:[%s149 + $0x158] sm:$0xff] %v236
                %v238 = vld [vmem:[%s148 + $0x2c0] sm:$0xff]
                %239 = vst [vmem:[%s149 + $0x160] sm:$0xff] %v238
                %v240 = vld [vmem:[%s148 + $0x2c8] sm:$0xff]
                %241 = vst [vmem:[%s149 + $0x168] sm:$0xff] %v240
                %v242 = vld [vmem:[%s148 + $0x2d0] sm:$0xff]
                %243 = vst [vmem:[%s149 + $0x170] sm:$0xff] %v242
                %v244 = vld [vmem:[%s148 + $0x2d8] sm:$0xff]
                %245 = vst [vmem:[%s149 + $0x178] sm:$0xff] %v244
                %v246 = vld [vmem:[%s148 + $0x300] sm:$0xff]
                %247 = vst [vmem:[%s149 + $0x180] sm:$0xff] %v246
                %v248 = vld [vmem:[%s148 + $0x308] sm:$0xff]
                %249 = vst [vmem:[%s149 + $0x188] sm:$0xff] %v248
                %v250 = vld [vmem:[%s148 + $0x310] sm:$0xff]
                %251 = vst [vmem:[%s149 + $0x190] sm:$0xff] %v250
                %v252 = vld [vmem:[%s148 + $0x318] sm:$0xff]
                %253 = vst [vmem:[%s149 + $0x198] sm:$0xff] %v252
                %v254 = vld [vmem:[%s148 + $0x340] sm:$0xff]
                %255 = vst [vmem:[%s149 + $0x1a0] sm:$0xff] %v254
                %v256 = vld [vmem:[%s148 + $0x348] sm:$0xff]
                %257 = vst [vmem:[%s149 + $0x1a8] sm:$0xff] %v256
                %v258 = vld [vmem:[%s148 + $0x350] sm:$0xff]
                %259 = vst [vmem:[%s149 + $0x1b0] sm:$0xff] %v258
                %v260 = vld [vmem:[%s148 + $0x358] sm:$0xff]
                %261 = vst [vmem:[%s149 + $0x1b8] sm:$0xff] %v260
                %v262 = vld [vmem:[%s148 + $0x380] sm:$0xff]
                %263 = vst [vmem:[%s149 + $0x1c0] sm:$0xff] %v262
                %v264 = vld [vmem:[%s148 + $0x388] sm:$0xff]
                %265 = vst [vmem:[%s149 + $0x1c8] sm:$0xff] %v264
                %v266 = vld [vmem:[%s148 + $0x390] sm:$0xff]
                %267 = vst [vmem:[%s149 + $0x1d0] sm:$0xff] %v266
                %v268 = vld [vmem:[%s148 + $0x398] sm:$0xff]
                %269 = vst [vmem:[%s149 + $0x1d8] sm:$0xff] %v268
                %v270 = vld [vmem:[%s148 + $0x3c0] sm:$0xff]
                %271 = vst [vmem:[%s149 + $0x1e0] sm:$0xff] %v270
                %v272 = vld [vmem:[%s148 + $0x3c8] sm:$0xff]
                %273 = vst [vmem:[%s149 + $0x1e8] sm:$0xff] %v272
                %v274 = vld [vmem:[%s148 + $0x3d0] sm:$0xff]
                %275 = vst [vmem:[%s149 + $0x1f0] sm:$0xff] %v274
                %v276 = vld [vmem:[%s148 + $0x3d8] sm:$0xff]
                %277 = vst [vmem:[%s149 + $0x1f8] sm:$0xff] %v276
              $region41: #{forward.8} parent=35 // loop_footer
                %s147 = sadd.s32 1, %s143
              $region42: #{forward.8} parent=35 // loop_footer_branch
                %142 = sbr.rel target = $region38
              $region43: #{forward.8} parent=35 // loop_exit
                _
            $region36: #{forward.8} parent=31 // pred_fallthru
              _
            // Predicated region
            $region44: #{forward.8} parent=31 // pred_check
              _
            $region45: #{forward.8} parent=31 // pred_check_branch
              %279 = sbr.rel target = $region47
            $region46: #{forward.8} parent=31 // pred_region
              _
            $region47: #{forward.8} parent=31 // pred_fallthru
              _
          $region32: #{forward.8} parent=27 // pred_fallthru
            _
          %280 = vnop
        $region28: #{forward.8} parent=23 // pred_fallthru
          _
      $region24: #{forward.8} parent=5 // pred_fallthru
        _
      %p281 = scmp.le.s32.totalorder 1, %s9
      %p282 = scmp.lt.s32.totalorder %s9, 3
      %p283 = pnand %p281, %p282
      %p284 = pneg %p283
      // Predicated region
      $region48: #{forward.8} parent=5 // pred_check
        _
      $region49: #{forward.8} parent=5 // pred_check_branch
        %286 = sbr.rel (%p283) target = $region51
      $region50: #{forward.8} parent=5 // pred_region
        %s287 = ssub.s32 %s9, 1
        %s288 = sand.u32 %s22, 1
        %s289 = sand.u32 %s22, 1
        %s290 = smul.addr %s289, 512
        %s291 = scalar_lea.vmem [#allocation2], %s290
        // Predicated region
        $region52: #{forward.8} parent=50 // pred_check
          %p292 = pneg %p35
        $region53: #{forward.8} parent=50 // pred_check_branch
          %294 = sbr.rel (%p292) target = $region55
        $region54: #{forward.8} parent=50 // pred_region
          _
        $region55: #{forward.8} parent=50 // pred_fallthru
          _
        %s295 = sand.u32 %s22, 1
        %s296 = sand.u32 %s22, 1
        %s297 = smul.addr %s296, 512
        %s298 = scalar_lea.vmem [#allocation2], %s297
        %p299 = pneg %p35
        %p300 = pneg %p32
        %p301 = pneg %p56
        %p302 = pneg %p53
        %p303 = pneg %p77
        %p304 = pneg %p74
        %p305 = pneg %p103
        %p306 = pneg %p100
        %s307 = sand.u32 %s90, 1
        %s308 = sand.u32 %s90, 1
        %s309 = smul.addr %s308, 64
        %s310 = scalar_lea.vmem [#allocation3], %s309
        %s311 = smul.u32 8, %s14
        %s312 = smul.u32 8, %s14
        %v314 = vld [vmem:[%s1] sm:$0xf]
        %v315 = vld [vmem:[%s1 + $0x4] sm:$0xf]
        %v316 = vld [vmem:[%s291] sm:$0xff]
        %v317 = vld [vmem:[%s291 + $0x8] sm:$0xff]
        %v318 = vld [vmem:[%s291 + $0x10] sm:$0xff]
        %v319 = vld [vmem:[%s291 + $0x18] sm:$0xff]
        %v320 = vld [vmem:[%s291 + $0x20] sm:$0xff]
        %v321 = vld [vmem:[%s291 + $0x28] sm:$0xff]
        %v322 = vld [vmem:[%s291 + $0x30] sm:$0xff]
        %v323 = vld [vmem:[%s291 + $0x38] sm:$0xff]
        %v324 = vld [vmem:[%s291 + $0x40] sm:$0xff]
        %v325 = vld [vmem:[%s291 + $0x48] sm:$0xff]
        %v326 = vld [vmem:[%s291 + $0x50] sm:$0xff]
        %v327 = vld [vmem:[%s291 + $0x58] sm:$0xff]
        %v328 = vld [vmem:[%s291 + $0x60] sm:$0xff]
        %v329 = vld [vmem:[%s291 + $0x68] sm:$0xff]
        %v330 = vld [vmem:[%s291 + $0x70] sm:$0xff]
        %v331 = vld [vmem:[%s291 + $0x78] sm:$0xff]
        %v332 = vld [vmem:[%s291 + $0x80] sm:$0xff]
        %v333 = vld [vmem:[%s291 + $0x88] sm:$0xff]
        %v334 = vld [vmem:[%s291 + $0x90] sm:$0xff]
        %v335 = vld [vmem:[%s291 + $0x98] sm:$0xff]
        %v336 = vld [vmem:[%s291 + $0xa0] sm:$0xff]
        %v337 = vld [vmem:[%s291 + $0xa8] sm:$0xff]
        %v338 = vld [vmem:[%s291 + $0xb0] sm:$0xff]
        %v339 = vld [vmem:[%s291 + $0xb8] sm:$0xff]
        %v340 = vld [vmem:[%s291 + $0xc0] sm:$0xff]
        %v341 = vld [vmem:[%s291 + $0xc8] sm:$0xff]
        %v342 = vld [vmem:[%s291 + $0xd0] sm:$0xff]
        %v343 = vld [vmem:[%s291 + $0xd8] sm:$0xff]
        %v344 = vld [vmem:[%s291 + $0xe0] sm:$0xff]
        %v345 = vld [vmem:[%s291 + $0xe8] sm:$0xff]
        %v346 = vld [vmem:[%s291 + $0xf0] sm:$0xff]
        %v347 = vld [vmem:[%s291 + $0xf8] sm:$0xff]
        %v348 = vld [vmem:[%s291 + $0x100] sm:$0xff]
        %v349 = vld [vmem:[%s291 + $0x108] sm:$0xff]
        %v350 = vld [vmem:[%s291 + $0x110] sm:$0xff]
        %v351 = vld [vmem:[%s291 + $0x118] sm:$0xff]
        %v352 = vld [vmem:[%s291 + $0x120] sm:$0xff]
        %v353 = vld [vmem:[%s291 + $0x128] sm:$0xff]
        %v354 = vld [vmem:[%s291 + $0x130] sm:$0xff]
        %v355 = vld [vmem:[%s291 + $0x138] sm:$0xff]
        %v356 = vld [vmem:[%s291 + $0x140] sm:$0xff]
        %v357 = vld [vmem:[%s291 + $0x148] sm:$0xff]
        %v358 = vld [vmem:[%s291 + $0x150] sm:$0xff]
        %v359 = vld [vmem:[%s291 + $0x158] sm:$0xff]
        %v360 = vld [vmem:[%s291 + $0x160] sm:$0xff]
        %v361 = vld [vmem:[%s291 + $0x168] sm:$0xff]
        %v362 = vld [vmem:[%s291 + $0x170] sm:$0xff]
        %v363 = vld [vmem:[%s291 + $0x178] sm:$0xff]
        %v364 = vld [vmem:[%s291 + $0x180] sm:$0xff]
        %v365 = vld [vmem:[%s291 + $0x188] sm:$0xff]
        %v366 = vld [vmem:[%s291 + $0x190] sm:$0xff]
        %v367 = vld [vmem:[%s291 + $0x198] sm:$0xff]
        %v368 = vld [vmem:[%s291 + $0x1a0] sm:$0xff]
        %v369 = vld [vmem:[%s291 + $0x1a8] sm:$0xff]
        %v370 = vld [vmem:[%s291 + $0x1b0] sm:$0xff]
        %v371 = vld [vmem:[%s291 + $0x1b8] sm:$0xff]
        %v372 = vld [vmem:[%s291 + $0x1c0] sm:$0xff]
        %v373 = vld [vmem:[%s291 + $0x1c8] sm:$0xff]
        %v374 = vld [vmem:[%s291 + $0x1d0] sm:$0xff]
        %v375 = vld [vmem:[%s291 + $0x1d8] sm:$0xff]
        %v376 = vld [vmem:[%s291 + $0x1e0] sm:$0xff]
        %v377 = vld [vmem:[%s291 + $0x1e8] sm:$0xff]
        %v378 = vld [vmem:[%s291 + $0x1f0] sm:$0xff]
        %v379 = vld [vmem:[%s291 + $0x1f8] sm:$0xff]
        %v380 = vld [vmem:[%s2] sm:$0xff]
        %v381 = vld [vmem:[%s2 + $0x8] sm:$0xff]
        %383 = vset.pattern.permute.xlu0 0
        %384 = vperm.xlu0 %383, %v380
        %v385 = vpop.permute.xlu0 %384
        %388 = vset.pattern.permute.xlu0 0
        %389 = vperm.xlu0 %388, %v381
        %v390 = vpop.permute.xlu0 %389
        %v394 = vunpack.c.l.b16 %v314
        %v395 = vunpack.c.l.b16 %v315
        %v396 = vpack.c.b16 %v395, %v394
        %v462 = vunpack.c.l.b16 %v316
        %v463 = vunpack.c.h.b16 %v316
        %v464 = vunpack.c.l.b16 %v317
        %v465 = vunpack.c.h.b16 %v317
        %v466 = vunpack.c.l.b16 %v318
        %v467 = vunpack.c.h.b16 %v318
        %v468 = vunpack.c.l.b16 %v319
        %v469 = vunpack.c.h.b16 %v319
        %v470 = vunpack.c.l.b16 %v320
        %v471 = vunpack.c.h.b16 %v320
        %v472 = vunpack.c.l.b16 %v321
        %v473 = vunpack.c.h.b16 %v321
        %v474 = vunpack.c.l.b16 %v322
        %v475 = vunpack.c.h.b16 %v322
        %v476 = vunpack.c.l.b16 %v323
        %v477 = vunpack.c.h.b16 %v323
        %v478 = vunpack.c.l.b16 %v324
        %v479 = vunpack.c.h.b16 %v324
        %v480 = vunpack.c.l.b16 %v325
        %v481 = vunpack.c.h.b16 %v325
        %v482 = vunpack.c.l.b16 %v326
        %v483 = vunpack.c.h.b16 %v326
        %v484 = vunpack.c.l.b16 %v327
        %v485 = vunpack.c.h.b16 %v327
        %v486 = vunpack.c.l.b16 %v328
        %v487 = vunpack.c.h.b16 %v328
        %v488 = vunpack.c.l.b16 %v329
        %v489 = vunpack.c.h.b16 %v329
        %v490 = vunpack.c.l.b16 %v330
        %v491 = vunpack.c.h.b16 %v330
        %v492 = vunpack.c.l.b16 %v331
        %v493 = vunpack.c.h.b16 %v331
        %v494 = vunpack.c.l.b16 %v332
        %v495 = vunpack.c.h.b16 %v332
        %v496 = vunpack.c.l.b16 %v333
        %v497 = vunpack.c.h.b16 %v333
        %v498 = vunpack.c.l.b16 %v334
        %v499 = vunpack.c.h.b16 %v334
        %v500 = vunpack.c.l.b16 %v335
        %v501 = vunpack.c.h.b16 %v335
        %v502 = vunpack.c.l.b16 %v336
        %v503 = vunpack.c.h.b16 %v336
        %v504 = vunpack.c.l.b16 %v337
        %v505 = vunpack.c.h.b16 %v337
        %v506 = vunpack.c.l.b16 %v338
        %v507 = vunpack.c.h.b16 %v338
        %v508 = vunpack.c.l.b16 %v339
        %v509 = vunpack.c.h.b16 %v339
        %v510 = vunpack.c.l.b16 %v340
        %v511 = vunpack.c.h.b16 %v340
        %v512 = vunpack.c.l.b16 %v341
        %v513 = vunpack.c.h.b16 %v341
        %v514 = vunpack.c.l.b16 %v342
        %v515 = vunpack.c.h.b16 %v342
        %v516 = vunpack.c.l.b16 %v343
        %v517 = vunpack.c.h.b16 %v343
        %v518 = vunpack.c.l.b16 %v344
        %v519 = vunpack.c.h.b16 %v344
        %v520 = vunpack.c.l.b16 %v345
        %v521 = vunpack.c.h.b16 %v345
        %v522 = vunpack.c.l.b16 %v346
        %v523 = vunpack.c.h.b16 %v346
        %v524 = vunpack.c.l.b16 %v347
        %v525 = vunpack.c.h.b16 %v347
        %v526 = vunpack.c.l.b16 %v348
        %v527 = vunpack.c.h.b16 %v348
        %v528 = vunpack.c.l.b16 %v349
        %v529 = vunpack.c.h.b16 %v349
        %v530 = vunpack.c.l.b16 %v350
        %v531 = vunpack.c.h.b16 %v350
        %v532 = vunpack.c.l.b16 %v351
        %v533 = vunpack.c.h.b16 %v351
        %v534 = vunpack.c.l.b16 %v352
        %v535 = vunpack.c.h.b16 %v352
        %v536 = vunpack.c.l.b16 %v353
        %v537 = vunpack.c.h.b16 %v353
        %v538 = vunpack.c.l.b16 %v354
        %v539 = vunpack.c.h.b16 %v354
        %v540 = vunpack.c.l.b16 %v355
        %v541 = vunpack.c.h.b16 %v355
        %v542 = vunpack.c.l.b16 %v356
        %v543 = vunpack.c.h.b16 %v356
        %v544 = vunpack.c.l.b16 %v357
        %v545 = vunpack.c.h.b16 %v357
        %v546 = vunpack.c.l.b16 %v358
        %v547 = vunpack.c.h.b16 %v358
        %v548 = vunpack.c.l.b16 %v359
        %v549 = vunpack.c.h.b16 %v359
        %v550 = vunpack.c.l.b16 %v360
        %v551 = vunpack.c.h.b16 %v360
        %v552 = vunpack.c.l.b16 %v361
        %v553 = vunpack.c.h.b16 %v361
        %v554 = vunpack.c.l.b16 %v362
        %v555 = vunpack.c.h.b16 %v362
        %v556 = vunpack.c.l.b16 %v363
        %v557 = vunpack.c.h.b16 %v363
        %v558 = vunpack.c.l.b16 %v364
        %v559 = vunpack.c.h.b16 %v364
        %v560 = vunpack.c.l.b16 %v365
        %v561 = vunpack.c.h.b16 %v365
        %v562 = vunpack.c.l.b16 %v366
        %v563 = vunpack.c.h.b16 %v366
        %v564 = vunpack.c.l.b16 %v367
        %v565 = vunpack.c.h.b16 %v367
        %v566 = vunpack.c.l.b16 %v368
        %v567 = vunpack.c.h.b16 %v368
        %v568 = vunpack.c.l.b16 %v369
        %v569 = vunpack.c.h.b16 %v369
        %v570 = vunpack.c.l.b16 %v370
        %v571 = vunpack.c.h.b16 %v370
        %v572 = vunpack.c.l.b16 %v371
        %v573 = vunpack.c.h.b16 %v371
        %v574 = vunpack.c.l.b16 %v372
        %v575 = vunpack.c.h.b16 %v372
        %v576 = vunpack.c.l.b16 %v373
        %v577 = vunpack.c.h.b16 %v373
        %v578 = vunpack.c.l.b16 %v374
        %v579 = vunpack.c.h.b16 %v374
        %v580 = vunpack.c.l.b16 %v375
        %v581 = vunpack.c.h.b16 %v375
        %v582 = vunpack.c.l.b16 %v376
        %v583 = vunpack.c.h.b16 %v376
        %v584 = vunpack.c.l.b16 %v377
        %v585 = vunpack.c.h.b16 %v377
        %v586 = vunpack.c.l.b16 %v378
        %v587 = vunpack.c.h.b16 %v378
        %v588 = vunpack.c.l.b16 %v379
        %v589 = vunpack.c.h.b16 %v379
        %v590 = vpack.c.b16 %v470, %v462
        %v591 = vpack.c.b16 %v471, %v463
        %v592 = vpack.c.b16 %v472, %v464
        %v593 = vpack.c.b16 %v473, %v465
        %v594 = vpack.c.b16 %v474, %v466
        %v595 = vpack.c.b16 %v475, %v467
        %v596 = vpack.c.b16 %v476, %v468
        %v597 = vpack.c.b16 %v477, %v469
        %v598 = vpack.c.b16 %v486, %v478
        %v599 = vpack.c.b16 %v487, %v479
        %v600 = vpack.c.b16 %v488, %v480
        %v601 = vpack.c.b16 %v489, %v481
        %v602 = vpack.c.b16 %v490, %v482
        %v603 = vpack.c.b16 %v491, %v483
        %v604 = vpack.c.b16 %v492, %v484
        %v605 = vpack.c.b16 %v493, %v485
        %v606 = vpack.c.b16 %v502, %v494
        %v607 = vpack.c.b16 %v503, %v495
        %v608 = vpack.c.b16 %v504, %v496
        %v609 = vpack.c.b16 %v505, %v497
        %v610 = vpack.c.b16 %v506, %v498
        %v611 = vpack.c.b16 %v507, %v499
        %v612 = vpack.c.b16 %v508, %v500
        %v613 = vpack.c.b16 %v509, %v501
        %v614 = vpack.c.b16 %v518, %v510
        %v615 = vpack.c.b16 %v519, %v511
        %v616 = vpack.c.b16 %v520, %v512
        %v617 = vpack.c.b16 %v521, %v513
        %v618 = vpack.c.b16 %v522, %v514
        %v619 = vpack.c.b16 %v523, %v515
        %v620 = vpack.c.b16 %v524, %v516
        %v621 = vpack.c.b16 %v525, %v517
        %v622 = vpack.c.b16 %v534, %v526
        %v623 = vpack.c.b16 %v535, %v527
        %v624 = vpack.c.b16 %v536, %v528
        %v625 = vpack.c.b16 %v537, %v529
        %v626 = vpack.c.b16 %v538, %v530
        %v627 = vpack.c.b16 %v539, %v531
        %v628 = vpack.c.b16 %v540, %v532
        %v629 = vpack.c.b16 %v541, %v533
        %v630 = vpack.c.b16 %v550, %v542
        %v631 = vpack.c.b16 %v551, %v543
        %v632 = vpack.c.b16 %v552, %v544
        %v633 = vpack.c.b16 %v553, %v545
        %v634 = vpack.c.b16 %v554, %v546
        %v635 = vpack.c.b16 %v555, %v547
        %v636 = vpack.c.b16 %v556, %v548
        %v637 = vpack.c.b16 %v557, %v549
        %v638 = vpack.c.b16 %v566, %v558
        %v639 = vpack.c.b16 %v567, %v559
        %v640 = vpack.c.b16 %v568, %v560
        %v641 = vpack.c.b16 %v569, %v561
        %v642 = vpack.c.b16 %v570, %v562
        %v643 = vpack.c.b16 %v571, %v563
        %v644 = vpack.c.b16 %v572, %v564
        %v645 = vpack.c.b16 %v573, %v565
        %v646 = vpack.c.b16 %v582, %v574
        %v647 = vpack.c.b16 %v583, %v575
        %v648 = vpack.c.b16 %v584, %v576
        %v649 = vpack.c.b16 %v585, %v577
        %v650 = vpack.c.b16 %v586, %v578
        %v651 = vpack.c.b16 %v587, %v579
        %v652 = vpack.c.b16 %v588, %v580
        %v653 = vpack.c.b16 %v589, %v581
        %718 = vmatprep.subr.bf16.mxu0 %v591
        %719 = vmatpush1.bf16.msra.mxu0 %v590
        %720 = vmatprep.subr.bf16.mxu0 %v599
        %721 = vmatpush1.bf16.msra.mxu0 %v598
        %722 = vmatprep.subr.bf16.mxu0 %v607
        %723 = vmatpush1.bf16.msra.mxu0 %v606
        %724 = vmatprep.subr.bf16.mxu0 %v615
        %725 = vmatpush1.bf16.msra.mxu0 %v614
        %726 = vmatprep.subr.bf16.mxu0 %v623
        %727 = vmatpush1.bf16.msra.mxu0 %v622
        %728 = vmatprep.subr.bf16.mxu0 %v631
        %729 = vmatpush1.bf16.msra.mxu0 %v630
        %730 = vmatprep.subr.bf16.mxu0 %v639
        %731 = vmatpush1.bf16.msra.mxu0 %v638
        %732 = vmatprep.subr.bf16.mxu0 %v647
        %733 = vmatpush1.bf16.msra.mxu0 %v646
        %734 = vmatprep.subr.bf16.mxu0 0
        %735 = vmatpush1.bf16.msra.mxu0 0
        %736 = vmatprep.subr.bf16.mxu0 0
        %737 = vmatpush1.bf16.msra.mxu0 0
        %738 = vmatprep.subr.bf16.mxu0 0
        %739 = vmatpush1.bf16.msra.mxu0 0
        %740 = vmatprep.subr.bf16.mxu0 0
        %741 = vmatpush1.bf16.msra.mxu0 0
        %742 = vmatprep.subr.bf16.mxu0 0
        %743 = vmatpush1.bf16.msra.mxu0 0
        %744 = vmatprep.subr.bf16.mxu0 0
        %745 = vmatpush1.bf16.msra.mxu0 0
        %746 = vmatprep.subr.bf16.mxu0 0
        %747 = vmatpush1.bf16.msra.mxu0 0
        %748 = vmatprep.subr.bf16.mxu0 0
        %749 = vmatpush1.bf16.msra.mxu0 0
        %750 = vmatprep.mubr.bf16.mxu0 0
        %751 = vmatmul.mubr.bf16.gmra.mrb[0].mxu0 %v396
        %v752 = vpop.f32.mrb[0].mxu0
        %v753 = vadd.f32 %v385, %v752
        %v754 = vpop.f32.mrb[0].mxu0
        %v755 = vadd.f32 %v385, %v754
        %v756 = vpop.f32.mrb[0].mxu0
        %v757 = vadd.f32 %v390, %v756
        %v758 = vpop.f32.mrb[0].mxu0
        %v759 = vadd.f32 %v390, %v758
        %760 = vdwg.mxu0
        %761 = vmatprep.subr.bf16.mxu0 %v593
        %762 = vmatpush1.bf16.msra.mxu0 %v592
        %763 = vmatprep.subr.bf16.mxu0 %v601
        %764 = vmatpush1.bf16.msra.mxu0 %v600
        %765 = vmatprep.subr.bf16.mxu0 %v609
        %766 = vmatpush1.bf16.msra.mxu0 %v608
        %767 = vmatprep.subr.bf16.mxu0 %v617
        %768 = vmatpush1.bf16.msra.mxu0 %v616
        %769 = vmatprep.subr.bf16.mxu0 %v625
        %770 = vmatpush1.bf16.msra.mxu0 %v624
        %771 = vmatprep.subr.bf16.mxu0 %v633
        %772 = vmatpush1.bf16.msra.mxu0 %v632
        %773 = vmatprep.subr.bf16.mxu0 %v641
        %774 = vmatpush1.bf16.msra.mxu0 %v640
        %775 = vmatprep.subr.bf16.mxu0 %v649
        %776 = vmatpush1.bf16.msra.mxu0 %v648
        %777 = vmatprep.subr.bf16.mxu0 0
        %778 = vmatpush1.bf16.msra.mxu0 0
        %779 = vmatprep.subr.bf16.mxu0 0
        %780 = vmatpush1.bf16.msra.mxu0 0
        %781 = vmatprep.subr.bf16.mxu0 0
        %782 = vmatpush1.bf16.msra.mxu0 0
        %783 = vmatprep.subr.bf16.mxu0 0
        %784 = vmatpush1.bf16.msra.mxu0 0
        %785 = vmatprep.subr.bf16.mxu0 0
        %786 = vmatpush1.bf16.msra.mxu0 0
        %787 = vmatprep.subr.bf16.mxu0 0
        %788 = vmatpush1.bf16.msra.mxu0 0
        %789 = vmatprep.subr.bf16.mxu0 0
        %790 = vmatpush1.bf16.msra.mxu0 0
        %791 = vmatprep.subr.bf16.mxu0 0
        %792 = vmatpush1.bf16.msra.mxu0 0
        %793 = vmatprep.mubr.bf16.mxu0 0
        %794 = vmatmul.mubr.bf16.gmra.mrb[0].mxu0 %v396
        %v795 = vpop.f32.mrb[0].mxu0
        %v796 = vadd.f32 %v385, %v795
        %v797 = vpop.f32.mrb[0].mxu0
        %v798 = vadd.f32 %v385, %v797
        %v799 = vpop.f32.mrb[0].mxu0
        %v800 = vadd.f32 %v390, %v799
        %v801 = vpop.f32.mrb[0].mxu0
        %v802 = vadd.f32 %v390, %v801
        %803 = vdwg.mxu0
        %804 = vmatprep.subr.bf16.mxu0 %v595
        %805 = vmatpush1.bf16.msra.mxu0 %v594
        %806 = vmatprep.subr.bf16.mxu0 %v603
        %807 = vmatpush1.bf16.msra.mxu0 %v602
        %808 = vmatprep.subr.bf16.mxu0 %v611
        %809 = vmatpush1.bf16.msra.mxu0 %v610
        %810 = vmatprep.subr.bf16.mxu0 %v619
        %811 = vmatpush1.bf16.msra.mxu0 %v618
        %812 = vmatprep.subr.bf16.mxu0 %v627
        %813 = vmatpush1.bf16.msra.mxu0 %v626
        %814 = vmatprep.subr.bf16.mxu0 %v635
        %815 = vmatpush1.bf16.msra.mxu0 %v634
        %816 = vmatprep.subr.bf16.mxu0 %v643
        %817 = vmatpush1.bf16.msra.mxu0 %v642
        %818 = vmatprep.subr.bf16.mxu0 %v651
        %819 = vmatpush1.bf16.msra.mxu0 %v650
        %820 = vmatprep.subr.bf16.mxu0 0
        %821 = vmatpush1.bf16.msra.mxu0 0
        %822 = vmatprep.subr.bf16.mxu0 0
        %823 = vmatpush1.bf16.msra.mxu0 0
        %824 = vmatprep.subr.bf16.mxu0 0
        %825 = vmatpush1.bf16.msra.mxu0 0
        %826 = vmatprep.subr.bf16.mxu0 0
        %827 = vmatpush1.bf16.msra.mxu0 0
        %828 = vmatprep.subr.bf16.mxu0 0
        %829 = vmatpush1.bf16.msra.mxu0 0
        %830 = vmatprep.subr.bf16.mxu0 0
        %831 = vmatpush1.bf16.msra.mxu0 0
        %832 = vmatprep.subr.bf16.mxu0 0
        %833 = vmatpush1.bf16.msra.mxu0 0
        %834 = vmatprep.subr.bf16.mxu0 0
        %835 = vmatpush1.bf16.msra.mxu0 0
        %836 = vmatprep.mubr.bf16.mxu0 0
        %837 = vmatmul.mubr.bf16.gmra.mrb[0].mxu0 %v396
        %v838 = vpop.f32.mrb[0].mxu0
        %v839 = vadd.f32 %v385, %v838
        %v840 = vpop.f32.mrb[0].mxu0
        %v841 = vadd.f32 %v385, %v840
        %v842 = vpop.f32.mrb[0].mxu0
        %v843 = vadd.f32 %v390, %v842
        %v844 = vpop.f32.mrb[0].mxu0
        %v845 = vadd.f32 %v390, %v844
        %846 = vdwg.mxu0
        %847 = vmatprep.subr.bf16.mxu0 %v597
        %848 = vmatpush1.bf16.msra.mxu0 %v596
        %849 = vmatprep.subr.bf16.mxu0 %v605
        %850 = vmatpush1.bf16.msra.mxu0 %v604
        %851 = vmatprep.subr.bf16.mxu0 %v613
        %852 = vmatpush1.bf16.msra.mxu0 %v612
        %853 = vmatprep.subr.bf16.mxu0 %v621
        %854 = vmatpush1.bf16.msra.mxu0 %v620
        %855 = vmatprep.subr.bf16.mxu0 %v629
        %856 = vmatpush1.bf16.msra.mxu0 %v628
        %857 = vmatprep.subr.bf16.mxu0 %v637
        %858 = vmatpush1.bf16.msra.mxu0 %v636
        %859 = vmatprep.subr.bf16.mxu0 %v645
        %860 = vmatpush1.bf16.msra.mxu0 %v644
        %861 = vmatprep.subr.bf16.mxu0 %v653
        %862 = vmatpush1.bf16.msra.mxu0 %v652
        %863 = vmatprep.subr.bf16.mxu0 0
        %864 = vmatpush1.bf16.msra.mxu0 0
        %865 = vmatprep.subr.bf16.mxu0 0
        %866 = vmatpush1.bf16.msra.mxu0 0
        %867 = vmatprep.subr.bf16.mxu0 0
        %868 = vmatpush1.bf16.msra.mxu0 0
        %869 = vmatprep.subr.bf16.mxu0 0
        %870 = vmatpush1.bf16.msra.mxu0 0
        %871 = vmatprep.subr.bf16.mxu0 0
        %872 = vmatpush1.bf16.msra.mxu0 0
        %873 = vmatprep.subr.bf16.mxu0 0
        %874 = vmatpush1.bf16.msra.mxu0 0
        %875 = vmatprep.subr.bf16.mxu0 0
        %876 = vmatpush1.bf16.msra.mxu0 0
        %877 = vmatprep.subr.bf16.mxu0 0
        %878 = vmatpush1.bf16.msra.mxu0 0
        %879 = vmatprep.mubr.bf16.mxu0 0
        %880 = vmatmul.mubr.bf16.gmra.mrb[0].mxu0 %v396
        %v881 = vpop.f32.mrb[0].mxu0
        %v882 = vadd.f32 %v385, %v881
        %v883 = vpop.f32.mrb[0].mxu0
        %v884 = vadd.f32 %v385, %v883
        %v885 = vpop.f32.mrb[0].mxu0
        %v886 = vadd.f32 %v390, %v885
        %v887 = vpop.f32.mrb[0].mxu0
        %v888 = vadd.f32 %v390, %v887
        %889 = vdwg.mxu0
        %vm890 = vcmp.gt.f32.partialorder %v753, 0.0
        %vm891 = vcmp.gt.f32.partialorder %v755, 0.0
        %vm892 = vcmp.gt.f32.partialorder %v796, 0.0
        %vm893 = vcmp.gt.f32.partialorder %v798, 0.0
        %vm894 = vcmp.gt.f32.partialorder %v839, 0.0
        %vm895 = vcmp.gt.f32.partialorder %v841, 0.0
        %vm896 = vcmp.gt.f32.partialorder %v882, 0.0
        %vm897 = vcmp.gt.f32.partialorder %v884, 0.0
        %vm898 = vcmp.gt.f32.partialorder %v757, 0.0
        %vm899 = vcmp.gt.f32.partialorder %v759, 0.0
        %vm900 = vcmp.gt.f32.partialorder %v800, 0.0
        %vm901 = vcmp.gt.f32.partialorder %v802, 0.0
        %vm902 = vcmp.gt.f32.partialorder %v843, 0.0
        %vm903 = vcmp.gt.f32.partialorder %v845, 0.0
        %vm904 = vcmp.gt.f32.partialorder %v886, 0.0
        %vm905 = vcmp.gt.f32.partialorder %v888, 0.0
        %v906 = vmul.f32 %v753, 0.01
        %v907 = vmul.f32 %v755, 0.01
        %v908 = vmul.f32 %v796, 0.01
        %v909 = vmul.f32 %v798, 0.01
        %v910 = vmul.f32 %v839, 0.01
        %v911 = vmul.f32 %v841, 0.01
        %v912 = vmul.f32 %v882, 0.01
        %v913 = vmul.f32 %v884, 0.01
        %v914 = vmul.f32 %v757, 0.01
        %v915 = vmul.f32 %v759, 0.01
        %v916 = vmul.f32 %v800, 0.01
        %v917 = vmul.f32 %v802, 0.01
        %v918 = vmul.f32 %v843, 0.01
        %v919 = vmul.f32 %v845, 0.01
        %v920 = vmul.f32 %v886, 0.01
        %v921 = vmul.f32 %v888, 0.01
        %v922 = vsel %vm890, %v753, %v906
        %v923 = vsel %vm891, %v755, %v907
        %v924 = vsel %vm892, %v796, %v908
        %v925 = vsel %vm893, %v798, %v909
        %v926 = vsel %vm894, %v839, %v910
        %v927 = vsel %vm895, %v841, %v911
        %v928 = vsel %vm896, %v882, %v912
        %v929 = vsel %vm897, %v884, %v913
        %v930 = vsel %vm898, %v757, %v914
        %v931 = vsel %vm899, %v759, %v915
        %v932 = vsel %vm900, %v800, %v916
        %v933 = vsel %vm901, %v802, %v917
        %v934 = vsel %vm902, %v843, %v918
        %v935 = vsel %vm903, %v845, %v919
        %v936 = vsel %vm904, %v886, %v920
        %v937 = vsel %vm905, %v888, %v921
        %v938 = vpack.c.bf16 %v930, %v922
        %v939 = vpack.c.bf16 %v931, %v923
        %v940 = vpack.c.bf16 %v932, %v924
        %v941 = vpack.c.bf16 %v933, %v925
        %v942 = vpack.c.bf16 %v934, %v926
        %v943 = vpack.c.bf16 %v935, %v927
        %v944 = vpack.c.bf16 %v936, %v928
        %v945 = vpack.c.bf16 %v937, %v929
        %v954 = vunpack.c.l.b16 %v938
        %v955 = vunpack.c.l.b16 %v939
        %v956 = vunpack.c.l.b16 %v940
        %v957 = vunpack.c.l.b16 %v941
        %v958 = vunpack.c.l.b16 %v942
        %v959 = vunpack.c.l.b16 %v943
        %v960 = vunpack.c.l.b16 %v944
        %v961 = vunpack.c.l.b16 %v945
        %v962 = vunpack.c.h.b16 %v938
        %v963 = vunpack.c.h.b16 %v939
        %v964 = vunpack.c.h.b16 %v940
        %v965 = vunpack.c.h.b16 %v941
        %v966 = vunpack.c.h.b16 %v942
        %v967 = vunpack.c.h.b16 %v943
        %v968 = vunpack.c.h.b16 %v944
        %v969 = vunpack.c.h.b16 %v945
        %v970 = vpack.c.b16 %v955, %v954
        %v971 = vpack.c.b16 %v957, %v956
        %v972 = vpack.c.b16 %v959, %v958
        %v973 = vpack.c.b16 %v961, %v960
        %v974 = vpack.c.b16 %v963, %v962
        %v975 = vpack.c.b16 %v965, %v964
        %v976 = vpack.c.b16 %v967, %v966
        %v977 = vpack.c.b16 %v969, %v968
        %986 = vst [vmem:[%s310] sm:$0xff] %v970
        %987 = vst [vmem:[%s310 + $0x8] sm:$0xff] %v971
        %988 = vst [vmem:[%s310 + $0x10] sm:$0xff] %v972
        %989 = vst [vmem:[%s310 + $0x18] sm:$0xff] %v973
        %990 = vst [vmem:[%s310 + $0x20] sm:$0xff] %v974
        %991 = vst [vmem:[%s310 + $0x28] sm:$0xff] %v975
        %992 = vst [vmem:[%s310 + $0x30] sm:$0xff] %v976
        %993 = vst [vmem:[%s310 + $0x38] sm:$0xff] %v977
        %s994 = sand.u32 %s90, 1
        %s995 = sand.u32 %s90, 1
        %s996 = smul.addr %s995, 64
        %s997 = scalar_lea.vmem [#allocation3], %s996
        // Predicated region
        $region56: #{forward.8} parent=50 // pred_check
          %p998 = pneg %p100
        $region57: #{forward.8} parent=50 // pred_check_branch
          %1000 = sbr.rel (%p998) target = $region59
        $region58: #{forward.8} parent=50 // pred_region
          %s1001 = smul.u32 8, %s14
          %s1002 = smul.addr %s1001, 4
          %s1003 = scalar_lea.vmem %s3, %s1002
          // Predicated region
          $region60: #{forward.8} parent=58 // pred_check
            _
          $region61: #{forward.8} parent=58 // pred_check_branch
            %1005 = sbr.rel (0) target = $region63
          $region62: #{forward.8} parent=58 // pred_region
            // Predicated region
            $region64: #{forward.8} parent=62 // pred_check
              _
            $region65: #{forward.8} parent=62 // pred_check_branch
              %1007 = sbr.rel (0) target = $region67
            $region66: #{forward.8} parent=62 // pred_region
              loop: start=0, step=1, limit=1
              $region68: #{forward.8} parent=66 // loop_pre_header
                _
              $region69: #{forward.8} parent=66 // loop_header
                %s1009 = sphi 0, %s1013
                %p1010 = scmp.ge.s32.totalorder %s1009, 1
                %s1014 = sphi %s997, %s997
                %s1015 = sphi %s1003, %s1003
              $region70: #{forward.8} parent=66 // loop_header_branch
                %1012 = sbr.rel (%p1010) target = $region74
              $region71: #{forward.8} parent=66 // loop_body
                %v1016 = vld [vmem:[%s1014] sm:$0xff]
                %1017 = vst [vmem:[%s1015] sm:$0xff] %v1016
                %v1018 = vld [vmem:[%s1014 + $0x8] sm:$0xff]
                %1019 = vst [vmem:[%s1015 + $0x8] sm:$0xff] %v1018
                %v1020 = vld [vmem:[%s1014 + $0x10] sm:$0xff]
                %1021 = vst [vmem:[%s1015 + $0x10] sm:$0xff] %v1020
                %v1022 = vld [vmem:[%s1014 + $0x18] sm:$0xff]
                %1023 = vst [vmem:[%s1015 + $0x18] sm:$0xff] %v1022
                %v1024 = vld [vmem:[%s1014 + $0x20] sm:$0xff]
                %1025 = vst [vmem:[%s1015 + $0x40] sm:$0xff] %v1024
                %v1026 = vld [vmem:[%s1014 + $0x28] sm:$0xff]
                %1027 = vst [vmem:[%s1015 + $0x48] sm:$0xff] %v1026
                %v1028 = vld [vmem:[%s1014 + $0x30] sm:$0xff]
                %1029 = vst [vmem:[%s1015 + $0x50] sm:$0xff] %v1028
                %v1030 = vld [vmem:[%s1014 + $0x38] sm:$0xff]
                %1031 = vst [vmem:[%s1015 + $0x58] sm:$0xff] %v1030
              $region72: #{forward.8} parent=66 // loop_footer
                %s1013 = sadd.s32 1, %s1009
              $region73: #{forward.8} parent=66 // loop_footer_branch
                %1008 = sbr.rel target = $region69
              $region74: #{forward.8} parent=66 // loop_exit
                _
            $region67: #{forward.8} parent=62 // pred_fallthru
              _
            // Predicated region
            $region75: #{forward.8} parent=62 // pred_check
              _
            $region76: #{forward.8} parent=62 // pred_check_branch
              %1033 = sbr.rel target = $region78
            $region77: #{forward.8} parent=62 // pred_region
              _
            $region78: #{forward.8} parent=62 // pred_fallthru
              _
          $region63: #{forward.8} parent=58 // pred_fallthru
            _
          %1034 = vnop
        $region59: #{forward.8} parent=50 // pred_fallthru
          _
      $region51: #{forward.8} parent=5 // pred_fallthru
        _
      %p1035 = scmp.le.s32.totalorder 2, %s9
      // Predicated region
      $region79: #{forward.8} parent=5 // pred_check
        %p1036 = pneg %p1035
      $region80: #{forward.8} parent=5 // pred_check_branch
        %1038 = sbr.rel (%p1036) target = $region82
      $region81: #{forward.8} parent=5 // pred_region
        %s1039 = ssub.s32 %s9, 2
        // Predicated region
        $region83: #{forward.8} parent=81 // pred_check
          %p1040 = pneg %p106
        $region84: #{forward.8} parent=81 // pred_check_branch
          %1042 = sbr.rel (%p1040) target = $region86
        $region85: #{forward.8} parent=81 // pred_region
          %s1043 = sand.u32 %s91, 1
          %s1044 = sand.u32 %s91, 1
          %s1045 = smul.addr %s1044, 64
          %s1046 = scalar_lea.vmem [#allocation3], %s1045
        $region86: #{forward.8} parent=81 // pred_fallthru
          _
      $region82: #{forward.8} parent=5 // pred_fallthru
        _
    $region6: #{forward.8} parent=1 // loop_footer
      %s13 = sadd.s32 1, %s9
    $region7: #{forward.8} parent=1 // loop_footer_branch
      %8 = sbr.rel target = $region3
    $region8: #{forward.8} parent=1 // loop_exit
      _

// kernel: forward.9
$region0: #{forward.9}
  #allocation0 [shape = 'u32[]', space=smem, size = 0x4, offset = 0x4, fixed_abs, tag = 'smem constant byte address 0x4 - core index']
  #allocation1 [shape = 'u32[144,128]{1,0:T(1,128)}', space=vmem, size = 0x12000, scoped, tag = 'internal scratch']
  %s0 = inlined_call_operand.vmem [shape: bf16[256,512], index: 0, kind: input, shape index: {}]
  %s1 = inlined_call_operand.vmem [shape: bf16[32,256], index: 1, kind: input, shape index: {}]
  %s2 = inlined_call_operand.vmem [shape: f32[32,1], index: 2, kind: input, shape index: {}]
  %s3 = inlined_call_operand.vmem [shape: bf16[32,512], index: 3, kind: output, shape index: {}]
  %s4 = sld [smem:[#allocation0]]
  $region117: #{forward.9} parent=0
    _
  %s6 = ssub.s32 1, %s4
  %s7 = scalar_select 0, %s6, %s4
  $region1: #{forward.9} parent=0
    #allocation2 [shape = 'u8[262144]{0}', space=vmem, size = 0x40000, scoped, tag = 'input window, operand 0']
    #allocation3 [shape = 'u8[32768]{0}', space=vmem, size = 0x8000, scoped, tag = 'output window, operand 0']
    loop: start=0, step=1, limit=4
    $region2: #{forward.9} parent=1 // loop_pre_header
      _
    $region3: #{forward.9} parent=1 // loop_header
      %s9 = sphi 0, %s13
      %p10 = scmp.ge.s32.totalorder %s9, 4
      %s19 = sphi 0, %s21
      %s22 = sphi 0, %s19
      %s23 = sphi 0, %s22
      %s39 = sphi 0, %s23
      %s43 = sphi 0, %s43
      %s45 = sphi 0, %s43
      %s46 = sphi 0, %s45
      %s60 = sphi 0, %s46
      %s64 = sphi 0, %s64
      %s66 = sphi 0, %s64
      %s67 = sphi 0, %s66
      %s81 = sphi 0, %s67
      %s87 = sphi 0, %s89
      %s90 = sphi 0, %s87
      %s91 = sphi 0, %s90
      %s107 = sphi 0, %s91
    $region4: #{forward.9} parent=1 // loop_header_branch
      %12 = sbr.rel (%p10) target = $region8
    $region5: #{forward.9} parent=1 // loop_body
      %s14 = ssub.s32 %s9, 1
      %s15 = ssub.s32 %s9, 2
      %s16 = sadd.s32 %s9, 1
      %s17 = ssub.s32 %s9, %s16
      %p18 = scmp.eq.s32.totalorder %s17, 0
      %s20 = sadd.s32 %s19, 1
      %s21 = scalar_select %p18, %s19, %s20
      %p24 = pneg %p18
      %p25 = scmp.eq.s32.totalorder %s9, 1
      %p26 = por %p24, %p25
      %p27 = scmp.ne.s32.totalorder %s19, %s22
      %p28 = scmp.eq.s32.totalorder %s9, 0
      %p29 = por %p27, %p28
      %p30 = scmp.ne.s32.totalorder %s19, %s22
      %p31 = scmp.eq.s32.totalorder %s14, 1
      %p32 = por %p30, %p31
      %p33 = scmp.ne.s32.totalorder %s22, %s23
      %p34 = scmp.eq.s32.totalorder %s14, 0
      %p35 = por %p33, %p34
      %p36 = scmp.ne.s32.totalorder %s22, %s23
      %p37 = scmp.eq.s32.totalorder %s15, 1
      %p38 = por %p36, %p37
      %p40 = scmp.ne.s32.totalorder %s23, %s39
      %p41 = scmp.eq.s32.totalorder %s15, 0
      %p42 = por %p40, %p41
      %s44 = sadd.s32 %s43, 1
      %p47 = scmp.eq.s32.totalorder %s9, 1
      %p48 = scmp.ne.s32.totalorder %s43, %s45
      %p49 = scmp.eq.s32.totalorder %s9, 0
      %p50 = por %p48, %p49
      %p51 = scmp.ne.s32.totalorder %s43, %s45
      %p52 = scmp.eq.s32.totalorder %s14, 1
      %p53 = por %p51, %p52
      %p54 = scmp.ne.s32.totalorder %s45, %s46
      %p55 = scmp.eq.s32.totalorder %s14, 0
      %p56 = por %p54, %p55
      %p57 = scmp.ne.s32.totalorder %s45, %s46
      %p58 = scmp.eq.s32.totalorder %s15, 1
      %p59 = por %p57, %p58
      %p61 = scmp.ne.s32.totalorder %s46, %s60
      %p62 = scmp.eq.s32.totalorder %s15, 0
      %p63 = por %p61, %p62
      %s65 = sadd.s32 %s64, 1
      %p68 = scmp.eq.s32.totalorder %s9, 1
      %p69 = scmp.ne.s32.totalorder %s64, %s66
      %p70 = scmp.eq.s32.totalorder %s9, 0
      %p71 = por %p69, %p70
      %p72 = scmp.ne.s32.totalorder %s64, %s66
      %p73 = scmp.eq.s32.totalorder %s14, 1
      %p74 = por %p72, %p73
      %p75 = scmp.ne.s32.totalorder %s66, %s67
      %p76 = scmp.eq.s32.totalorder %s14, 0
      %p77 = por %p75, %p76
      %p78 = scmp.ne.s32.totalorder %s66, %s67
      %p79 = scmp.eq.s32.totalorder %s15, 1
      %p80 = por %p78, %p79
      %p82 = scmp.ne.s32.totalorder %s67, %s81
      %p83 = scmp.eq.s32.totalorder %s15, 0
      %p84 = por %p82, %p83
      %s85 = ssub.s32 %s9, %s16
      %p86 = scmp.eq.s32.totalorder %s85, 0
      %s88 = sadd.s32 %s87, 1
      %s89 = scalar_select %p86, %s87, %s88
      %p92 = pneg %p86
      %p93 = scmp.eq.s32.totalorder %s9, 1
      %p94 = por %p92, %p93
      %p95 = scmp.ne.s32.totalorder %s87, %s90
      %p96 = scmp.eq.s32.totalorder %s9, 0
      %p97 = por %p95, %p96
      %p98 = scmp.ne.s32.totalorder %s87, %s90
      %p99 = scmp.eq.s32.totalorder %s14, 1
      %p100 = por %p98, %p99
      %p101 = scmp.ne.s32.totalorder %s90, %s91
      %p102 = scmp.eq.s32.totalorder %s14, 0
      %p103 = por %p101, %p102
      %p104 = scmp.ne.s32.totalorder %s90, %s91
      %p105 = scmp.eq.s32.totalorder %s15, 1
      %p106 = por %p104, %p105
      %p108 = scmp.ne.s32.totalorder %s91, %s107
      %p109 = scmp.eq.s32.totalorder %s15, 0
      %p110 = por %p108, %p109
      %p111 = scmp.le.s32.totalorder 1, %s9
      %p112 = scmp.lt.s32.totalorder %s9, 3
      %p113 = pnand %p111, %p112
      %p114 = pneg %p113
      // Predicated region
      $region9: #{forward.9} parent=5 // pred_check
        _
      $region10: #{forward.9} parent=5 // pred_check_branch
        %116 = sbr.rel (%p113) target = $region12
      $region11: #{forward.9} parent=5 // pred_region
        %s117 = ssub.s32 %s9, 1
        // Predicated region
        $region13: #{forward.9} parent=11 // pred_check
          %p118 = pneg %p56
        $region14: #{forward.9} parent=11 // pred_check_branch
          %120 = sbr.rel (%p118) target = $region16
        $region15: #{forward.9} parent=11 // pred_region
          _
        $region16: #{forward.9} parent=11 // pred_fallthru
          _
        // Predicated region
        $region17: #{forward.9} parent=11 // pred_check
          %p121 = pneg %p77
        $region18: #{forward.9} parent=11 // pred_check_branch
          %123 = sbr.rel (%p121) target = $region20
        $region19: #{forward.9} parent=11 // pred_region
          _
        $region20: #{forward.9} parent=11 // pred_fallthru
          _
      $region12: #{forward.9} parent=5 // pred_fallthru
        _
      %p124 = scmp.lt.s32.totalorder %s9, 2
      // Predicated region
      $region21: #{forward.9} parent=5 // pred_check
        %p125 = pneg %p124
      $region22: #{forward.9} parent=5 // pred_check_branch
        %127 = sbr.rel (%p125) target = $region24
      $region23: #{forward.9} parent=5 // pred_region
        // Predicated region
        $region25: #{forward.9} parent=23 // pred_check
          %p128 = pneg %p29
        $region26: #{forward.9} parent=23 // pred_check_branch
          %130 = sbr.rel (%p128) target = $region28
        $region27: #{forward.9} parent=23 // pred_region
          %s131 = sand.u32 %s19, 1
          %s132 = sand.u32 %s19, 1
          %s133 = smul.addr %s132, 256
          %s134 = scalar_lea.vmem [#allocation2], %s133
          %s135 = smul.u32 2, %s9
          %s136 = smul.addr %s135, 4
          %s137 = scalar_lea.vmem %s0, %s136
          // Predicated region
          $region29: #{forward.9} parent=27 // pred_check
            _
          $region30: #{forward.9} parent=27 // pred_check_branch
            %139 = sbr.rel (0) target = $region32
          $region31: #{forward.9} parent=27 // pred_region
            // Predicated region
            $region33: #{forward.9} parent=31 // pred_check
              _
            $region34: #{forward.9} parent=31 // pred_check_branch
              %141 = sbr.rel (0) target = $region36
            $region35: #{forward.9} parent=31 // pred_region
              // Predicated region
              $region48: #{forward.9} parent=35 // pred_check
                _
              $region49: #{forward.9} parent=35 // pred_check_branch
                %218 = sbr.rel (0) target = $region51
              $region50: #{forward.9} parent=35 // pred_region
                loop: start=0, step=1, limit=1
                $region52: #{forward.9} parent=50 // loop_pre_header
                  _
                $region53: #{forward.9} parent=50 // loop_header
                  %s220 = sphi 0, %s224
                  %p221 = scmp.ge.s32.totalorder %s220, 1
                  %s225 = sphi %s137, %s137
                  %s226 = sphi %s134, %s134
                $region54: #{forward.9} parent=50 // loop_header_branch
                  %223 = sbr.rel (%p221) target = $region58
                $region55: #{forward.9} parent=50 // loop_body
                  %v227 = vld [vmem:[%s225] sm:$0xff]
                  %228 = vst [vmem:[%s226] sm:$0xff] %v227
                  %v229 = vld [vmem:[%s225 + $0x10] sm:$0xff]
                  %230 = vst [vmem:[%s226 + $0x8] sm:$0xff] %v229
                  %v231 = vld [vmem:[%s225 + $0x20] sm:$0xff]
                  %232 = vst [vmem:[%s226 + $0x10] sm:$0xff] %v231
                  %v233 = vld [vmem:[%s225 + $0x30] sm:$0xff]
                  %234 = vst [vmem:[%s226 + $0x18] sm:$0xff] %v233
                  %v235 = vld [vmem:[%s225 + $0x40] sm:$0xff]
                  %236 = vst [vmem:[%s226 + $0x20] sm:$0xff] %v235
                  %v237 = vld [vmem:[%s225 + $0x50] sm:$0xff]
                  %238 = vst [vmem:[%s226 + $0x28] sm:$0xff] %v237
                  %v239 = vld [vmem:[%s225 + $0x60] sm:$0xff]
                  %240 = vst [vmem:[%s226 + $0x30] sm:$0xff] %v239
                  %v241 = vld [vmem:[%s225 + $0x70] sm:$0xff]
                  %242 = vst [vmem:[%s226 + $0x38] sm:$0xff] %v241
                  %v243 = vld [vmem:[%s225 + $0x80] sm:$0xff]
                  %244 = vst [vmem:[%s226 + $0x40] sm:$0xff] %v243
                  %v245 = vld [vmem:[%s225 + $0x90] sm:$0xff]
                  %246 = vst [vmem:[%s226 + $0x48] sm:$0xff] %v245
                  %v247 = vld [vmem:[%s225 + $0xa0] sm:$0xff]
                  %248 = vst [vmem:[%s226 + $0x50] sm:$0xff] %v247
                  %v249 = vld [vmem:[%s225 + $0xb0] sm:$0xff]
                  %250 = vst [vmem:[%s226 + $0x58] sm:$0xff] %v249
                  %v251 = vld [vmem:[%s225 + $0xc0] sm:$0xff]
                  %252 = vst [vmem:[%s226 + $0x60] sm:$0xff] %v251
                  %v253 = vld [vmem:[%s225 + $0xd0] sm:$0xff]
                  %254 = vst [vmem:[%s226 + $0x68] sm:$0xff] %v253
                  %v255 = vld [vmem:[%s225 + $0xe0] sm:$0xff]
                  %256 = vst [vmem:[%s226 + $0x70] sm:$0xff] %v255
                  %v257 = vld [vmem:[%s225 + $0xf0] sm:$0xff]
                  %258 = vst [vmem:[%s226 + $0x78] sm:$0xff] %v257
                  %v259 = vld [vmem:[%s225 + $0x100] sm:$0xff]
                  %260 = vst [vmem:[%s226 + $0x80] sm:$0xff] %v259
                  %v261 = vld [vmem:[%s225 + $0x110] sm:$0xff]
                  %262 = vst [vmem:[%s226 + $0x88] sm:$0xff] %v261
                  %v263 = vld [vmem:[%s225 + $0x120] sm:$0xff]
                  %264 = vst [vmem:[%s226 + $0x90] sm:$0xff] %v263
                  %v265 = vld [vmem:[%s225 + $0x130] sm:$0xff]
                  %266 = vst [vmem:[%s226 + $0x98] sm:$0xff] %v265
                  %v267 = vld [vmem:[%s225 + $0x140] sm:$0xff]
                  %268 = vst [vmem:[%s226 + $0xa0] sm:$0xff] %v267
                  %v269 = vld [vmem:[%s225 + $0x150] sm:$0xff]
                  %270 = vst [vmem:[%s226 + $0xa8] sm:$0xff] %v269
                  %v271 = vld [vmem:[%s225 + $0x160] sm:$0xff]
                  %272 = vst [vmem:[%s226 + $0xb0] sm:$0xff] %v271
                  %v273 = vld [vmem:[%s225 + $0x170] sm:$0xff]
                  %274 = vst [vmem:[%s226 + $0xb8] sm:$0xff] %v273
                  %v275 = vld [vmem:[%s225 + $0x180] sm:$0xff]
                  %276 = vst [vmem:[%s226 + $0xc0] sm:$0xff] %v275
                  %v277 = vld [vmem:[%s225 + $0x190] sm:$0xff]
                  %278 = vst [vmem:[%s226 + $0xc8] sm:$0xff] %v277
                  %v279 = vld [vmem:[%s225 + $0x1a0] sm:$0xff]
                  %280 = vst [vmem:[%s226 + $0xd0] sm:$0xff] %v279
                  %v281 = vld [vmem:[%s225 + $0x1b0] sm:$0xff]
                  %282 = vst [vmem:[%s226 + $0xd8] sm:$0xff] %v281
                  %v283 = vld [vmem:[%s225 + $0x1c0] sm:$0xff]
                  %284 = vst [vmem:[%s226 + $0xe0] sm:$0xff] %v283
                  %v285 = vld [vmem:[%s225 + $0x1d0] sm:$0xff]
                  %286 = vst [vmem:[%s226 + $0xe8] sm:$0xff] %v285
                  %v287 = vld [vmem:[%s225 + $0x1e0] sm:$0xff]
                  %288 = vst [vmem:[%s226 + $0xf0] sm:$0xff] %v287
                  %v289 = vld [vmem:[%s225 + $0x1f0] sm:$0xff]
                  %290 = vst [vmem:[%s226 + $0xf8] sm:$0xff] %v289
                $region56: #{forward.9} parent=50 // loop_footer
                  %s224 = sadd.s32 1, %s220
                $region57: #{forward.9} parent=50 // loop_footer_branch
                  %219 = sbr.rel target = $region53
                $region58: #{forward.9} parent=50 // loop_exit
                  _
              $region51: #{forward.9} parent=35 // pred_fallthru
                _
              // Predicated region
              $region59: #{forward.9} parent=35 // pred_check
                _
              $region60: #{forward.9} parent=35 // pred_check_branch
                %292 = sbr.rel target = $region62
              $region61: #{forward.9} parent=35 // pred_region
                _
              $region62: #{forward.9} parent=35 // pred_fallthru
                _
            $region36: #{forward.9} parent=31 // pred_fallthru
              _
            // Predicated region
            $region37: #{forward.9} parent=31 // pred_check
              _
            $region38: #{forward.9} parent=31 // pred_check_branch
              %143 = sbr.rel target = $region40
            $region39: #{forward.9} parent=31 // pred_region
              loop: start=0, step=1, limit=1
              $region41: #{forward.9} parent=39 // loop_pre_header
                _
              $region42: #{forward.9} parent=39 // loop_header
                %s146 = sphi 0, %s150
                %p147 = scmp.ge.s32.totalorder %s146, 1
                %s151 = sphi %s137, %s137
                %s152 = sphi %s134, %s134
              $region43: #{forward.9} parent=39 // loop_header_branch
                %149 = sbr.rel (%p147) target = $region47
              $region44: #{forward.9} parent=39 // loop_body
                %v153 = vld [vmem:[%s151] sm:$0xff]
                %154 = vst [vmem:[%s152] sm:$0xff] %v153
                %v155 = vld [vmem:[%s151 + $0x10] sm:$0xff]
                %156 = vst [vmem:[%s152 + $0x8] sm:$0xff] %v155
                %v157 = vld [vmem:[%s151 + $0x20] sm:$0xff]
                %158 = vst [vmem:[%s152 + $0x10] sm:$0xff] %v157
                %v159 = vld [vmem:[%s151 + $0x30] sm:$0xff]
                %160 = vst [vmem:[%s152 + $0x18] sm:$0xff] %v159
                %v161 = vld [vmem:[%s151 + $0x40] sm:$0xff]
                %162 = vst [vmem:[%s152 + $0x20] sm:$0xff] %v161
                %v163 = vld [vmem:[%s151 + $0x50] sm:$0xff]
                %164 = vst [vmem:[%s152 + $0x28] sm:$0xff] %v163
                %v165 = vld [vmem:[%s151 + $0x60] sm:$0xff]
                %166 = vst [vmem:[%s152 + $0x30] sm:$0xff] %v165
                %v167 = vld [vmem:[%s151 + $0x70] sm:$0xff]
                %168 = vst [vmem:[%s152 + $0x38] sm:$0xff] %v167
                %v169 = vld [vmem:[%s151 + $0x80] sm:$0xff]
                %170 = vst [vmem:[%s152 + $0x40] sm:$0xff] %v169
                %v171 = vld [vmem:[%s151 + $0x90] sm:$0xff]
                %172 = vst [vmem:[%s152 + $0x48] sm:$0xff] %v171
                %v173 = vld [vmem:[%s151 + $0xa0] sm:$0xff]
                %174 = vst [vmem:[%s152 + $0x50] sm:$0xff] %v173
                %v175 = vld [vmem:[%s151 + $0xb0] sm:$0xff]
                %176 = vst [vmem:[%s152 + $0x58] sm:$0xff] %v175
                %v177 = vld [vmem:[%s151 + $0xc0] sm:$0xff]
                %178 = vst [vmem:[%s152 + $0x60] sm:$0xff] %v177
                %v179 = vld [vmem:[%s151 + $0xd0] sm:$0xff]
                %180 = vst [vmem:[%s152 + $0x68] sm:$0xff] %v179
                %v181 = vld [vmem:[%s151 + $0xe0] sm:$0xff]
                %182 = vst [vmem:[%s152 + $0x70] sm:$0xff] %v181
                %v183 = vld [vmem:[%s151 + $0xf0] sm:$0xff]
                %184 = vst [vmem:[%s152 + $0x78] sm:$0xff] %v183
                %v185 = vld [vmem:[%s151 + $0x100] sm:$0xff]
                %186 = vst [vmem:[%s152 + $0x80] sm:$0xff] %v185
                %v187 = vld [vmem:[%s151 + $0x110] sm:$0xff]
                %188 = vst [vmem:[%s152 + $0x88] sm:$0xff] %v187
                %v189 = vld [vmem:[%s151 + $0x120] sm:$0xff]
                %190 = vst [vmem:[%s152 + $0x90] sm:$0xff] %v189
                %v191 = vld [vmem:[%s151 + $0x130] sm:$0xff]
                %192 = vst [vmem:[%s152 + $0x98] sm:$0xff] %v191
                %v193 = vld [vmem:[%s151 + $0x140] sm:$0xff]
                %194 = vst [vmem:[%s152 + $0xa0] sm:$0xff] %v193
                %v195 = vld [vmem:[%s151 + $0x150] sm:$0xff]
                %196 = vst [vmem:[%s152 + $0xa8] sm:$0xff] %v195
                %v197 = vld [vmem:[%s151 + $0x160] sm:$0xff]
                %198 = vst [vmem:[%s152 + $0xb0] sm:$0xff] %v197
                %v199 = vld [vmem:[%s151 + $0x170] sm:$0xff]
                %200 = vst [vmem:[%s152 + $0xb8] sm:$0xff] %v199
                %v201 = vld [vmem:[%s151 + $0x180] sm:$0xff]
                %202 = vst [vmem:[%s152 + $0xc0] sm:$0xff] %v201
                %v203 = vld [vmem:[%s151 + $0x190] sm:$0xff]
                %204 = vst [vmem:[%s152 + $0xc8] sm:$0xff] %v203
                %v205 = vld [vmem:[%s151 + $0x1a0] sm:$0xff]
                %206 = vst [vmem:[%s152 + $0xd0] sm:$0xff] %v205
                %v207 = vld [vmem:[%s151 + $0x1b0] sm:$0xff]
                %208 = vst [vmem:[%s152 + $0xd8] sm:$0xff] %v207
                %v209 = vld [vmem:[%s151 + $0x1c0] sm:$0xff]
                %210 = vst [vmem:[%s152 + $0xe0] sm:$0xff] %v209
                %v211 = vld [vmem:[%s151 + $0x1d0] sm:$0xff]
                %212 = vst [vmem:[%s152 + $0xe8] sm:$0xff] %v211
                %v213 = vld [vmem:[%s151 + $0x1e0] sm:$0xff]
                %214 = vst [vmem:[%s152 + $0xf0] sm:$0xff] %v213
                %v215 = vld [vmem:[%s151 + $0x1f0] sm:$0xff]
                %216 = vst [vmem:[%s152 + $0xf8] sm:$0xff] %v215
              $region45: #{forward.9} parent=39 // loop_footer
                %s150 = sadd.s32 1, %s146
              $region46: #{forward.9} parent=39 // loop_footer_branch
                %145 = sbr.rel target = $region42
              $region47: #{forward.9} parent=39 // loop_exit
                _
            $region40: #{forward.9} parent=31 // pred_fallthru
              _
          $region32: #{forward.9} parent=27 // pred_fallthru
            _
          %293 = vnop
        $region28: #{forward.9} parent=23 // pred_fallthru
          _
      $region24: #{forward.9} parent=5 // pred_fallthru
        _
      %p294 = scmp.le.s32.totalorder 1, %s9
      %p295 = scmp.lt.s32.totalorder %s9, 3
      %p296 = pnand %p294, %p295
      %p297 = pneg %p296
      // Predicated region
      $region63: #{forward.9} parent=5 // pred_check
        _
      $region64: #{forward.9} parent=5 // pred_check_branch
        %299 = sbr.rel (%p296) target = $region66
      $region65: #{forward.9} parent=5 // pred_region
        %s300 = ssub.s32 %s9, 1
        %s301 = sand.u32 %s22, 1
        %s302 = sand.u32 %s22, 1
        %s303 = smul.addr %s302, 256
        %s304 = scalar_lea.vmem [#allocation2], %s303
        // Predicated region
        $region67: #{forward.9} parent=65 // pred_check
          %p305 = pneg %p35
        $region68: #{forward.9} parent=65 // pred_check_branch
          %307 = sbr.rel (%p305) target = $region70
        $region69: #{forward.9} parent=65 // pred_region
          _
        $region70: #{forward.9} parent=65 // pred_fallthru
          _
        %s308 = sand.u32 %s22, 1
        %s309 = sand.u32 %s22, 1
        %s310 = smul.addr %s309, 256
        %s311 = scalar_lea.vmem [#allocation2], %s310
        %p312 = pneg %p35
        %p313 = pneg %p32
        %p314 = pneg %p56
        %p315 = pneg %p53
        %p316 = pneg %p77
        %p317 = pneg %p74
        %p318 = pneg %p103
        %p319 = pneg %p100
        %s320 = sand.u32 %s90, 1
        %s321 = sand.u32 %s90, 1
        %s322 = smul.addr %s321, 32
        %s323 = scalar_lea.vmem [#allocation3], %s322
        %s324 = smul.u32 2, %s14
        %s325 = smul.u32 2, %s14
        %v326 = vld [vmem:[%s1] sm:$0xff]
        %v327 = vld [vmem:[%s1 + $0x8] sm:$0xff]
        %v328 = vld [vmem:[%s1 + $0x10] sm:$0xff]
        %v329 = vld [vmem:[%s1 + $0x18] sm:$0xff]
        %v330 = vld [vmem:[%s304] sm:$0xff]
        %v331 = vld [vmem:[%s304 + $0x8] sm:$0xff]
        %v332 = vld [vmem:[%s304 + $0x10] sm:$0xff]
        %v333 = vld [vmem:[%s304 + $0x18] sm:$0xff]
        %v334 = vld [vmem:[%s304 + $0x20] sm:$0xff]
        %v335 = vld [vmem:[%s304 + $0x28] sm:$0xff]
        %v336 = vld [vmem:[%s304 + $0x30] sm:$0xff]
        %v337 = vld [vmem:[%s304 + $0x38] sm:$0xff]
        %v338 = vld [vmem:[%s304 + $0x40] sm:$0xff]
        %v339 = vld [vmem:[%s304 + $0x48] sm:$0xff]
        %v340 = vld [vmem:[%s304 + $0x50] sm:$0xff]
        %v341 = vld [vmem:[%s304 + $0x58] sm:$0xff]
        %v342 = vld [vmem:[%s304 + $0x60] sm:$0xff]
        %v343 = vld [vmem:[%s304 + $0x68] sm:$0xff]
        %v344 = vld [vmem:[%s304 + $0x70] sm:$0xff]
        %v345 = vld [vmem:[%s304 + $0x78] sm:$0xff]
        %v346 = vld [vmem:[%s304 + $0x80] sm:$0xff]
        %v347 = vld [vmem:[%s304 + $0x88] sm:$0xff]
        %v348 = vld [vmem:[%s304 + $0x90] sm:$0xff]
        %v349 = vld [vmem:[%s304 + $0x98] sm:$0xff]
        %v350 = vld [vmem:[%s304 + $0xa0] sm:$0xff]
        %v351 = vld [vmem:[%s304 + $0xa8] sm:$0xff]
        %v352 = vld [vmem:[%s304 + $0xb0] sm:$0xff]
        %v353 = vld [vmem:[%s304 + $0xb8] sm:$0xff]
        %v354 = vld [vmem:[%s304 + $0xc0] sm:$0xff]
        %v355 = vld [vmem:[%s304 + $0xc8] sm:$0xff]
        %v356 = vld [vmem:[%s304 + $0xd0] sm:$0xff]
        %v357 = vld [vmem:[%s304 + $0xd8] sm:$0xff]
        %v358 = vld [vmem:[%s304 + $0xe0] sm:$0xff]
        %v359 = vld [vmem:[%s304 + $0xe8] sm:$0xff]
        %v360 = vld [vmem:[%s304 + $0xf0] sm:$0xff]
        %v361 = vld [vmem:[%s304 + $0xf8] sm:$0xff]
        %v362 = vld [vmem:[%s2] sm:$0xff]
        %v363 = vld [vmem:[%s2 + $0x8] sm:$0xff]
        %v364 = vld [vmem:[%s2 + $0x10] sm:$0xff]
        %v365 = vld [vmem:[%s2 + $0x18] sm:$0xff]
        %367 = vset.pattern.permute.xlu0 0
        %368 = vperm.xlu0 %367, %v362
        %v369 = vpop.permute.xlu0 %368
        %372 = vset.pattern.permute.xlu0 0
        %373 = vperm.xlu0 %372, %v363
        %v374 = vpop.permute.xlu0 %373
        %377 = vset.pattern.permute.xlu0 0
        %378 = vperm.xlu0 %377, %v364
        %v379 = vpop.permute.xlu0 %378
        %382 = vset.pattern.permute.xlu0 0
        %383 = vperm.xlu0 %382, %v365
        %v384 = vpop.permute.xlu0 %383
        %v390 = vunpack.c.l.b16 %v326
        %v391 = vunpack.c.h.b16 %v326
        %v392 = vunpack.c.l.b16 %v327
        %v393 = vunpack.c.h.b16 %v327
        %v394 = vunpack.c.l.b16 %v328
        %v395 = vunpack.c.h.b16 %v328
        %v396 = vunpack.c.l.b16 %v329
        %v397 = vunpack.c.h.b16 %v329
        %v398 = vpack.c.b16 %v392, %v390
        %v399 = vpack.c.b16 %v393, %v391
        %v400 = vpack.c.b16 %v396, %v394
        %v401 = vpack.c.b16 %v397, %v395
        %v438 = vunpack.c.l.b16 %v330
        %v439 = vunpack.c.h.b16 %v330
        %v440 = vunpack.c.l.b16 %v331
        %v441 = vunpack.c.h.b16 %v331
        %v442 = vunpack.c.l.b16 %v332
        %v443 = vunpack.c.h.b16 %v332
        %v444 = vunpack.c.l.b16 %v333
        %v445 = vunpack.c.h.b16 %v333
        %v446 = vunpack.c.l.b16 %v334
        %v447 = vunpack.c.h.b16 %v334
        %v448 = vunpack.c.l.b16 %v335
        %v449 = vunpack.c.h.b16 %v335
        %v450 = vunpack.c.l.b16 %v336
        %v451 = vunpack.c.h.b16 %v336
        %v452 = vunpack.c.l.b16 %v337
        %v453 = vunpack.c.h.b16 %v337
        %v454 = vunpack.c.l.b16 %v338
        %v455 = vunpack.c.h.b16 %v338
        %v456 = vunpack.c.l.b16 %v339
        %v457 = vunpack.c.h.b16 %v339
        %v458 = vunpack.c.l.b16 %v340
        %v459 = vunpack.c.h.b16 %v340
        %v460 = vunpack.c.l.b16 %v341
        %v461 = vunpack.c.h.b16 %v341
        %v462 = vunpack.c.l.b16 %v342
        %v463 = vunpack.c.h.b16 %v342
        %v464 = vunpack.c.l.b16 %v343
        %v465 = vunpack.c.h.b16 %v343
        %v466 = vunpack.c.l.b16 %v344
        %v467 = vunpack.c.h.b16 %v344
        %v468 = vunpack.c.l.b16 %v345
        %v469 = vunpack.c.h.b16 %v345
        %v470 = vunpack.c.l.b16 %v346
        %v471 = vunpack.c.h.b16 %v346
        %v472 = vunpack.c.l.b16 %v347
        %v473 = vunpack.c.h.b16 %v347
        %v474 = vunpack.c.l.b16 %v348
        %v475 = vunpack.c.h.b16 %v348
        %v476 = vunpack.c.l.b16 %v349
        %v477 = vunpack.c.h.b16 %v349
        %v478 = vunpack.c.l.b16 %v350
        %v479 = vunpack.c.h.b16 %v350
        %v480 = vunpack.c.l.b16 %v351
        %v481 = vunpack.c.h.b16 %v351
        %v482 = vunpack.c.l.b16 %v352
        %v483 = vunpack.c.h.b16 %v352
        %v484 = vunpack.c.l.b16 %v353
        %v485 = vunpack.c.h.b16 %v353
        %v486 = vunpack.c.l.b16 %v354
        %v487 = vunpack.c.h.b16 %v354
        %v488 = vunpack.c.l.b16 %v355
        %v489 = vunpack.c.h.b16 %v355
        %v490 = vunpack.c.l.b16 %v356
        %v491 = vunpack.c.h.b16 %v356
        %v492 = vunpack.c.l.b16 %v357
        %v493 = vunpack.c.h.b16 %v357
        %v494 = vunpack.c.l.b16 %v358
        %v495 = vunpack.c.h.b16 %v358
        %v496 = vunpack.c.l.b16 %v359
        %v497 = vunpack.c.h.b16 %v359
        %v498 = vunpack.c.l.b16 %v360
        %v499 = vunpack.c.h.b16 %v360
        %v500 = vunpack.c.l.b16 %v361
        %v501 = vunpack.c.h.b16 %v361
        %v502 = vpack.c.b16 %v440, %v438
        %v503 = vpack.c.b16 %v441, %v439
        %v504 = vpack.c.b16 %v444, %v442
        %v505 = vpack.c.b16 %v445, %v443
        %v506 = vpack.c.b16 %v448, %v446
        %v507 = vpack.c.b16 %v449, %v447
        %v508 = vpack.c.b16 %v452, %v450
        %v509 = vpack.c.b16 %v453, %v451
        %v510 = vpack.c.b16 %v456, %v454
        %v511 = vpack.c.b16 %v457, %v455
        %v512 = vpack.c.b16 %v460, %v458
        %v513 = vpack.c.b16 %v461, %v459
        %v514 = vpack.c.b16 %v464, %v462
        %v515 = vpack.c.b16 %v465, %v463
        %v516 = vpack.c.b16 %v468, %v466
        %v517 = vpack.c.b16 %v469, %v467
        %v518 = vpack.c.b16 %v472, %v470
        %v519 = vpack.c.b16 %v473, %v471
        %v520 = vpack.c.b16 %v476, %v474
        %v521 = vpack.c.b16 %v477, %v475
        %v522 = vpack.c.b16 %v480, %v478
        %v523 = vpack.c.b16 %v481, %v479
        %v524 = vpack.c.b16 %v484, %v482
        %v525 = vpack.c.b16 %v485, %v483
        %v526 = vpack.c.b16 %v488, %v486
        %v527 = vpack.c.b16 %v489, %v487
        %v528 = vpack.c.b16 %v492, %v490
        %v529 = vpack.c.b16 %v493, %v491
        %v530 = vpack.c.b16 %v496, %v494
        %v531 = vpack.c.b16 %v497, %v495
        %v532 = vpack.c.b16 %v500, %v498
        %v533 = vpack.c.b16 %v501, %v499
        %566 = vmatprep.subr.bf16.mxu0 %v503
        %567 = vmatpush1.bf16.msra.mxu0 %v502
        %568 = vmatprep.subr.bf16.mxu0 %v505
        %569 = vmatpush1.bf16.msra.mxu0 %v504
        %570 = vmatprep.subr.bf16.mxu0 %v507
        %571 = vmatpush1.bf16.msra.mxu0 %v506
        %572 = vmatprep.subr.bf16.mxu0 %v509
        %573 = vmatpush1.bf16.msra.mxu0 %v508
        %574 = vmatprep.subr.bf16.mxu0 %v511
        %575 = vmatpush1.bf16.msra.mxu0 %v510
        %576 = vmatprep.subr.bf16.mxu0 %v513
        %577 = vmatpush1.bf16.msra.mxu0 %v512
        %578 = vmatprep.subr.bf16.mxu0 %v515
        %579 = vmatpush1.bf16.msra.mxu0 %v514
        %580 = vmatprep.subr.bf16.mxu0 %v517
        %581 = vmatpush1.bf16.msra.mxu0 %v516
        %582 = vmatprep.subr.bf16.mxu0 %v519
        %583 = vmatpush1.bf16.msra.mxu0 %v518
        %584 = vmatprep.subr.bf16.mxu0 %v521
        %585 = vmatpush1.bf16.msra.mxu0 %v520
        %586 = vmatprep.subr.bf16.mxu0 %v523
        %587 = vmatpush1.bf16.msra.mxu0 %v522
        %588 = vmatprep.subr.bf16.mxu0 %v525
        %589 = vmatpush1.bf16.msra.mxu0 %v524
        %590 = vmatprep.subr.bf16.mxu0 %v527
        %591 = vmatpush1.bf16.msra.mxu0 %v526
        %592 = vmatprep.subr.bf16.mxu0 %v529
        %593 = vmatpush1.bf16.msra.mxu0 %v528
        %594 = vmatprep.subr.bf16.mxu0 %v531
        %595 = vmatpush1.bf16.msra.mxu0 %v530
        %596 = vmatprep.subr.bf16.mxu0 %v533
        %597 = vmatpush1.bf16.msra.mxu0 %v532
        %598 = vmatprep.mubr.bf16.mxu0 %v399
        %599 = vmatmul.mubr.bf16.gmra.mrb[0].mxu0 %v398
        %v600 = vpop.f32.mrb[0].mxu0
        %v601 = vadd.f32 %v369, %v600
        %v602 = vpop.f32.mrb[0].mxu0
        %v603 = vadd.f32 %v369, %v602
        %v604 = vpop.f32.mrb[0].mxu0
        %v605 = vadd.f32 %v374, %v604
        %v606 = vpop.f32.mrb[0].mxu0
        %v607 = vadd.f32 %v374, %v606
        %608 = vmatprep.mubr.bf16.mxu0 %v401
        %609 = vmatmul.mubr.bf16.gmra.mrb[0].mxu0 %v400
        %v610 = vpop.f32.mrb[0].mxu0
        %v611 = vadd.f32 %v379, %v610
        %v612 = vpop.f32.mrb[0].mxu0
        %v613 = vadd.f32 %v379, %v612
        %v614 = vpop.f32.mrb[0].mxu0
        %v615 = vadd.f32 %v384, %v614
        %v616 = vpop.f32.mrb[0].mxu0
        %v617 = vadd.f32 %v384, %v616
        %618 = vdwg.mxu0
        %vm619 = vcmp.gt.f32.partialorder %v601, 0.0
        %vm620 = vcmp.gt.f32.partialorder %v603, 0.0
        %vm621 = vcmp.gt.f32.partialorder %v605, 0.0
        %vm622 = vcmp.gt.f32.partialorder %v607, 0.0
        %vm623 = vcmp.gt.f32.partialorder %v611, 0.0
        %vm624 = vcmp.gt.f32.partialorder %v613, 0.0
        %vm625 = vcmp.gt.f32.partialorder %v615, 0.0
        %vm626 = vcmp.gt.f32.partialorder %v617, 0.0
        %v627 = vmul.f32 %v601, 0.01
        %v628 = vmul.f32 %v603, 0.01
        %v629 = vmul.f32 %v605, 0.01
        %v630 = vmul.f32 %v607, 0.01
        %v631 = vmul.f32 %v611, 0.01
        %v632 = vmul.f32 %v613, 0.01
        %v633 = vmul.f32 %v615, 0.01
        %v634 = vmul.f32 %v617, 0.01
        %v635 = vsel %vm619, %v601, %v627
        %v636 = vsel %vm620, %v603, %v628
        %v637 = vsel %vm621, %v605, %v629
        %v638 = vsel %vm622, %v607, %v630
        %v639 = vsel %vm623, %v611, %v631
        %v640 = vsel %vm624, %v613, %v632
        %v641 = vsel %vm625, %v615, %v633
        %v642 = vsel %vm626, %v617, %v634
        %v643 = vpack.c.bf16 %v637, %v635
        %v644 = vpack.c.bf16 %v638, %v636
        %v645 = vpack.c.bf16 %v641, %v639
        %v646 = vpack.c.bf16 %v642, %v640
        %v651 = vunpack.c.l.b16 %v643
        %v652 = vunpack.c.l.b16 %v644
        %v653 = vunpack.c.h.b16 %v643
        %v654 = vunpack.c.h.b16 %v644
        %v655 = vunpack.c.l.b16 %v645
        %v656 = vunpack.c.l.b16 %v646
        %v657 = vunpack.c.h.b16 %v645
        %v658 = vunpack.c.h.b16 %v646
        %v659 = vpack.c.b16 %v652, %v651
        %v660 = vpack.c.b16 %v654, %v653
        %v661 = vpack.c.b16 %v656, %v655
        %v662 = vpack.c.b16 %v658, %v657
        %667 = vst [vmem:[%s323] sm:$0xff] %v659
        %668 = vst [vmem:[%s323 + $0x8] sm:$0xff] %v660
        %669 = vst [vmem:[%s323 + $0x10] sm:$0xff] %v661
        %670 = vst [vmem:[%s323 + $0x18] sm:$0xff] %v662
        %s671 = sand.u32 %s90, 1
        %s672 = sand.u32 %s90, 1
        %s673 = smul.addr %s672, 32
        %s674 = scalar_lea.vmem [#allocation3], %s673
        // Predicated region
        $region71: #{forward.9} parent=65 // pred_check
          %p675 = pneg %p100
        $region72: #{forward.9} parent=65 // pred_check_branch
          %677 = sbr.rel (%p675) target = $region74
        $region73: #{forward.9} parent=65 // pred_region
          %s678 = smul.u32 2, %s14
          %s679 = smul.addr %s678, 4
          %s680 = scalar_lea.vmem %s3, %s679
          // Predicated region
          $region75: #{forward.9} parent=73 // pred_check
            _
          $region76: #{forward.9} parent=73 // pred_check_branch
            %682 = sbr.rel (0) target = $region78
          $region77: #{forward.9} parent=73 // pred_region
            // Predicated region
            $region79: #{forward.9} parent=77 // pred_check
              _
            $region80: #{forward.9} parent=77 // pred_check_branch
              %684 = sbr.rel (0) target = $region82
            $region81: #{forward.9} parent=77 // pred_region
              // Predicated region
              $region94: #{forward.9} parent=81 // pred_check
                _
              $region95: #{forward.9} parent=81 // pred_check_branch
                %705 = sbr.rel (0) target = $region97
              $region96: #{forward.9} parent=81 // pred_region
                loop: start=0, step=1, limit=1
                $region98: #{forward.9} parent=96 // loop_pre_header
                  _
                $region99: #{forward.9} parent=96 // loop_header
                  %s707 = sphi 0, %s711
                  %p708 = scmp.ge.s32.totalorder %s707, 1
                  %s712 = sphi %s674, %s674
                  %s713 = sphi %s680, %s680
                $region100: #{forward.9} parent=96 // loop_header_branch
                  %710 = sbr.rel (%p708) target = $region104
                $region101: #{forward.9} parent=96 // loop_body
                  %v714 = vld [vmem:[%s712] sm:$0xff]
                  %715 = vst [vmem:[%s713] sm:$0xff] %v714
                  %v716 = vld [vmem:[%s712 + $0x8] sm:$0xff]
                  %717 = vst [vmem:[%s713 + $0x10] sm:$0xff] %v716
                  %v718 = vld [vmem:[%s712 + $0x10] sm:$0xff]
                  %719 = vst [vmem:[%s713 + $0x20] sm:$0xff] %v718
                  %v720 = vld [vmem:[%s712 + $0x18] sm:$0xff]
                  %721 = vst [vmem:[%s713 + $0x30] sm:$0xff] %v720
                $region102: #{forward.9} parent=96 // loop_footer
                  %s711 = sadd.s32 1, %s707
                $region103: #{forward.9} parent=96 // loop_footer_branch
                  %706 = sbr.rel target = $region99
                $region104: #{forward.9} parent=96 // loop_exit
                  _
              $region97: #{forward.9} parent=81 // pred_fallthru
                _
              // Predicated region
              $region105: #{forward.9} parent=81 // pred_check
                _
              $region106: #{forward.9} parent=81 // pred_check_branch
                %723 = sbr.rel target = $region108
              $region107: #{forward.9} parent=81 // pred_region
                _
              $region108: #{forward.9} parent=81 // pred_fallthru
                _
            $region82: #{forward.9} parent=77 // pred_fallthru
              _
            // Predicated region
            $region83: #{forward.9} parent=77 // pred_check
              _
            $region84: #{forward.9} parent=77 // pred_check_branch
              %686 = sbr.rel target = $region86
            $region85: #{forward.9} parent=77 // pred_region
              loop: start=0, step=1, limit=1
              $region87: #{forward.9} parent=85 // loop_pre_header
                _
              $region88: #{forward.9} parent=85 // loop_header
                %s689 = sphi 0, %s693
                %p690 = scmp.ge.s32.totalorder %s689, 1
                %s694 = sphi %s674, %s674
                %s695 = sphi %s680, %s680
              $region89: #{forward.9} parent=85 // loop_header_branch
                %692 = sbr.rel (%p690) target = $region93
              $region90: #{forward.9} parent=85 // loop_body
                %v696 = vld [vmem:[%s694] sm:$0xff]
                %697 = vst [vmem:[%s695] sm:$0xff] %v696
                %v698 = vld [vmem:[%s694 + $0x8] sm:$0xff]
                %699 = vst [vmem:[%s695 + $0x10] sm:$0xff] %v698
                %v700 = vld [vmem:[%s694 + $0x10] sm:$0xff]
                %701 = vst [vmem:[%s695 + $0x20] sm:$0xff] %v700
                %v702 = vld [vmem:[%s694 + $0x18] sm:$0xff]
                %703 = vst [vmem:[%s695 + $0x30] sm:$0xff] %v702
              $region91: #{forward.9} parent=85 // loop_footer
                %s693 = sadd.s32 1, %s689
              $region92: #{forward.9} parent=85 // loop_footer_branch
                %688 = sbr.rel target = $region88
              $region93: #{forward.9} parent=85 // loop_exit
                _
            $region86: #{forward.9} parent=77 // pred_fallthru
              _
          $region78: #{forward.9} parent=73 // pred_fallthru
            _
          %724 = vnop
        $region74: #{forward.9} parent=65 // pred_fallthru
          _
      $region66: #{forward.9} parent=5 // pred_fallthru
        _
      %p725 = scmp.le.s32.totalorder 2, %s9
      // Predicated region
      $region109: #{forward.9} parent=5 // pred_check
        %p726 = pneg %p725
      $region110: #{forward.9} parent=5 // pred_check_branch
        %728 = sbr.rel (%p726) target = $region112
      $region111: #{forward.9} parent=5 // pred_region
        %s729 = ssub.s32 %s9, 2
        // Predicated region
        $region113: #{forward.9} parent=111 // pred_check
          %p730 = pneg %p106
        $region114: #{forward.9} parent=111 // pred_check_branch
          %732 = sbr.rel (%p730) target = $region116
        $region115: #{forward.9} parent=111 // pred_region
          %s733 = sand.u32 %s91, 1
          %s734 = sand.u32 %s91, 1
          %s735 = smul.addr %s734, 32
          %s736 = scalar_lea.vmem [#allocation3], %s735
        $region116: #{forward.9} parent=111 // pred_fallthru
          _
      $region112: #{forward.9} parent=5 // pred_fallthru
        _
    $region6: #{forward.9} parent=1 // loop_footer
      %s13 = sadd.s32 1, %s9
    $region7: #{forward.9} parent=1 // loop_footer_branch
      %8 = sbr.rel target = $region3
    $region8: #{forward.9} parent=1 // loop_exit
      _

// kernel: forward.10
$region0: #{forward.10}
  #allocation0 [shape = 'u32[]', space=smem, size = 0x4, offset = 0x4, fixed_abs, tag = 'smem constant byte address 0x4 - core index']
  #allocation1 [shape = 'u32[144,128]{1,0:T(1,128)}', space=vmem, size = 0x12000, scoped, tag = 'internal scratch']
  %s0 = inlined_call_operand.vmem [shape: bf16[512,128], index: 0, kind: input, shape index: {}]
  %s1 = inlined_call_operand.vmem [shape: bf16[32,512], index: 1, kind: input, shape index: {}]
  %s2 = inlined_call_operand.vmem [shape: f32[32,1], index: 2, kind: input, shape index: {}]
  %s3 = inlined_call_operand.vmem [shape: bf16[32,128], index: 3, kind: output, shape index: {}]
  %s4 = sld [smem:[#allocation0]]
  $region22: #{forward.10} parent=0
    _
  %s6 = ssub.s32 1, %s4
  %s7 = scalar_select 0, %s6, %s4
  // Predicated region
  $region2: #{forward.10} parent=0 // pred_check
    _
  $region3: #{forward.10} parent=0 // pred_check_branch
    %9 = sbr.rel (0) target = $region5
  $region4: #{forward.10} parent=0 // pred_region
    _
  $region5: #{forward.10} parent=0 // pred_fallthru
    _
  // Predicated region
  $region6: #{forward.10} parent=0 // pred_check
    _
  $region7: #{forward.10} parent=0 // pred_check_branch
    %11 = sbr.rel (0) target = $region9
  $region8: #{forward.10} parent=0 // pred_region
    _
  $region9: #{forward.10} parent=0 // pred_fallthru
    _
  // Predicated region
  $region10: #{forward.10} parent=0 // pred_check
    _
  $region11: #{forward.10} parent=0 // pred_check_branch
    %13 = sbr.rel (0) target = $region13
  $region12: #{forward.10} parent=0 // pred_region
    _
  $region13: #{forward.10} parent=0 // pred_fallthru
    _
  %v15 = vld [vmem:[%s1] sm:$0xff]
  %v16 = vld [vmem:[%s1 + $0x8] sm:$0xff]
  %v17 = vld [vmem:[%s1 + $0x10] sm:$0xff]
  %v18 = vld [vmem:[%s1 + $0x18] sm:$0xff]
  %v19 = vld [vmem:[%s1 + $0x20] sm:$0xff]
  %v20 = vld [vmem:[%s1 + $0x28] sm:$0xff]
  %v21 = vld [vmem:[%s1 + $0x30] sm:$0xff]
  %v22 = vld [vmem:[%s1 + $0x38] sm:$0xff]
  %v23 = vld [vmem:[%s0] sm:$0xf]
  %v24 = vld [vmem:[%s0 + $0x4] sm:$0xf]
  %v25 = vld [vmem:[%s0 + $0x8] sm:$0xf]
  %v26 = vld [vmem:[%s0 + $0xc] sm:$0xf]
  %v27 = vld [vmem:[%s0 + $0x10] sm:$0xf]
  %v28 = vld [vmem:[%s0 + $0x14] sm:$0xf]
  %v29 = vld [vmem:[%s0 + $0x18] sm:$0xf]
  %v30 = vld [vmem:[%s0 + $0x1c] sm:$0xf]
  %v31 = vld [vmem:[%s0 + $0x20] sm:$0xf]
  %v32 = vld [vmem:[%s0 + $0x24] sm:$0xf]
  %v33 = vld [vmem:[%s0 + $0x28] sm:$0xf]
  %v34 = vld [vmem:[%s0 + $0x2c] sm:$0xf]
  %v35 = vld [vmem:[%s0 + $0x30] sm:$0xf]
  %v36 = vld [vmem:[%s0 + $0x34] sm:$0xf]
  %v37 = vld [vmem:[%s0 + $0x38] sm:$0xf]
  %v38 = vld [vmem:[%s0 + $0x3c] sm:$0xf]
  %v39 = vld [vmem:[%s0 + $0x40] sm:$0xf]
  %v40 = vld [vmem:[%s0 + $0x44] sm:$0xf]
  %v41 = vld [vmem:[%s0 + $0x48] sm:$0xf]
  %v42 = vld [vmem:[%s0 + $0x4c] sm:$0xf]
  %v43 = vld [vmem:[%s0 + $0x50] sm:$0xf]
  %v44 = vld [vmem:[%s0 + $0x54] sm:$0xf]
  %v45 = vld [vmem:[%s0 + $0x58] sm:$0xf]
  %v46 = vld [vmem:[%s0 + $0x5c] sm:$0xf]
  %v47 = vld [vmem:[%s0 + $0x60] sm:$0xf]
  %v48 = vld [vmem:[%s0 + $0x64] sm:$0xf]
  %v49 = vld [vmem:[%s0 + $0x68] sm:$0xf]
  %v50 = vld [vmem:[%s0 + $0x6c] sm:$0xf]
  %v51 = vld [vmem:[%s0 + $0x70] sm:$0xf]
  %v52 = vld [vmem:[%s0 + $0x74] sm:$0xf]
  %v53 = vld [vmem:[%s0 + $0x78] sm:$0xf]
  %v54 = vld [vmem:[%s0 + $0x7c] sm:$0xf]
  %v55 = vld [vmem:[%s0 + $0x80] sm:$0xf]
  %v56 = vld [vmem:[%s0 + $0x84] sm:$0xf]
  %v57 = vld [vmem:[%s0 + $0x88] sm:$0xf]
  %v58 = vld [vmem:[%s0 + $0x8c] sm:$0xf]
  %v59 = vld [vmem:[%s0 + $0x90] sm:$0xf]
  %v60 = vld [vmem:[%s0 + $0x94] sm:$0xf]
  %v61 = vld [vmem:[%s0 + $0x98] sm:$0xf]
  %v62 = vld [vmem:[%s0 + $0x9c] sm:$0xf]
  %v63 = vld [vmem:[%s0 + $0xa0] sm:$0xf]
  %v64 = vld [vmem:[%s0 + $0xa4] sm:$0xf]
  %v65 = vld [vmem:[%s0 + $0xa8] sm:$0xf]
  %v66 = vld [vmem:[%s0 + $0xac] sm:$0xf]
  %v67 = vld [vmem:[%s0 + $0xb0] sm:$0xf]
  %v68 = vld [vmem:[%s0 + $0xb4] sm:$0xf]
  %v69 = vld [vmem:[%s0 + $0xb8] sm:$0xf]
  %v70 = vld [vmem:[%s0 + $0xbc] sm:$0xf]
  %v71 = vld [vmem:[%s0 + $0xc0] sm:$0xf]
  %v72 = vld [vmem:[%s0 + $0xc4] sm:$0xf]
  %v73 = vld [vmem:[%s0 + $0xc8] sm:$0xf]
  %v74 = vld [vmem:[%s0 + $0xcc] sm:$0xf]
  %v75 = vld [vmem:[%s0 + $0xd0] sm:$0xf]
  %v76 = vld [vmem:[%s0 + $0xd4] sm:$0xf]
  %v77 = vld [vmem:[%s0 + $0xd8] sm:$0xf]
  %v78 = vld [vmem:[%s0 + $0xdc] sm:$0xf]
  %v79 = vld [vmem:[%s0 + $0xe0] sm:$0xf]
  %v80 = vld [vmem:[%s0 + $0xe4] sm:$0xf]
  %v81 = vld [vmem:[%s0 + $0xe8] sm:$0xf]
  %v82 = vld [vmem:[%s0 + $0xec] sm:$0xf]
  %v83 = vld [vmem:[%s0 + $0xf0] sm:$0xf]
  %v84 = vld [vmem:[%s0 + $0xf4] sm:$0xf]
  %v85 = vld [vmem:[%s0 + $0xf8] sm:$0xf]
  %v86 = vld [vmem:[%s0 + $0xfc] sm:$0xf]
  %v87 = vld [vmem:[%s2] sm:$0xff]
  %v88 = vld [vmem:[%s2 + $0x8] sm:$0xff]
  %v89 = vld [vmem:[%s2 + $0x10] sm:$0xff]
  %v90 = vld [vmem:[%s2 + $0x18] sm:$0xff]
  %92 = vset.pattern.permute.xlu0 0
  %93 = vperm.xlu0 %92, %v87
  %v94 = vpop.permute.xlu0 %93
  %97 = vset.pattern.permute.xlu0 0
  %98 = vperm.xlu0 %97, %v88
  %v99 = vpop.permute.xlu0 %98
  %102 = vset.pattern.permute.xlu0 0
  %103 = vperm.xlu0 %102, %v89
  %v104 = vpop.permute.xlu0 %103
  %107 = vset.pattern.permute.xlu0 0
  %108 = vperm.xlu0 %107, %v90
  %v109 = vpop.permute.xlu0 %108
  %v119 = vunpack.c.l.b16 %v15
  %v120 = vunpack.c.h.b16 %v15
  %v121 = vunpack.c.l.b16 %v16
  %v122 = vunpack.c.h.b16 %v16
  %v123 = vunpack.c.l.b16 %v17
  %v124 = vunpack.c.h.b16 %v17
  %v125 = vunpack.c.l.b16 %v18
  %v126 = vunpack.c.h.b16 %v18
  %v127 = vunpack.c.l.b16 %v19
  %v128 = vunpack.c.h.b16 %v19
  %v129 = vunpack.c.l.b16 %v20
  %v130 = vunpack.c.h.b16 %v20
  %v131 = vunpack.c.l.b16 %v21
  %v132 = vunpack.c.h.b16 %v21
  %v133 = vunpack.c.l.b16 %v22
  %v134 = vunpack.c.h.b16 %v22
  %v135 = vpack.c.b16 %v123, %v119
  %v136 = vpack.c.b16 %v124, %v120
  %v137 = vpack.c.b16 %v125, %v121
  %v138 = vpack.c.b16 %v126, %v122
  %v139 = vpack.c.b16 %v131, %v127
  %v140 = vpack.c.b16 %v132, %v128
  %v141 = vpack.c.b16 %v133, %v129
  %v142 = vpack.c.b16 %v134, %v130
  %v215 = vunpack.c.l.b16 %v23
  %v216 = vunpack.c.l.b16 %v24
  %v217 = vunpack.c.l.b16 %v25
  %v218 = vunpack.c.l.b16 %v26
  %v219 = vunpack.c.l.b16 %v27
  %v220 = vunpack.c.l.b16 %v28
  %v221 = vunpack.c.l.b16 %v29
  %v222 = vunpack.c.l.b16 %v30
  %v223 = vunpack.c.l.b16 %v31
  %v224 = vunpack.c.l.b16 %v32
  %v225 = vunpack.c.l.b16 %v33
  %v226 = vunpack.c.l.b16 %v34
  %v227 = vunpack.c.l.b16 %v35
  %v228 = vunpack.c.l.b16 %v36
  %v229 = vunpack.c.l.b16 %v37
  %v230 = vunpack.c.l.b16 %v38
  %v231 = vunpack.c.l.b16 %v39
  %v232 = vunpack.c.l.b16 %v40
  %v233 = vunpack.c.l.b16 %v41
  %v234 = vunpack.c.l.b16 %v42
  %v235 = vunpack.c.l.b16 %v43
  %v236 = vunpack.c.l.b16 %v44
  %v237 = vunpack.c.l.b16 %v45
  %v238 = vunpack.c.l.b16 %v46
  %v239 = vunpack.c.l.b16 %v47
  %v240 = vunpack.c.l.b16 %v48
  %v241 = vunpack.c.l.b16 %v49
  %v242 = vunpack.c.l.b16 %v50
  %v243 = vunpack.c.l.b16 %v51
  %v244 = vunpack.c.l.b16 %v52
  %v245 = vunpack.c.l.b16 %v53
  %v246 = vunpack.c.l.b16 %v54
  %v247 = vunpack.c.l.b16 %v55
  %v248 = vunpack.c.l.b16 %v56
  %v249 = vunpack.c.l.b16 %v57
  %v250 = vunpack.c.l.b16 %v58
  %v251 = vunpack.c.l.b16 %v59
  %v252 = vunpack.c.l.b16 %v60
  %v253 = vunpack.c.l.b16 %v61
  %v254 = vunpack.c.l.b16 %v62
  %v255 = vunpack.c.l.b16 %v63
  %v256 = vunpack.c.l.b16 %v64
  %v257 = vunpack.c.l.b16 %v65
  %v258 = vunpack.c.l.b16 %v66
  %v259 = vunpack.c.l.b16 %v67
  %v260 = vunpack.c.l.b16 %v68
  %v261 = vunpack.c.l.b16 %v69
  %v262 = vunpack.c.l.b16 %v70
  %v263 = vunpack.c.l.b16 %v71
  %v264 = vunpack.c.l.b16 %v72
  %v265 = vunpack.c.l.b16 %v73
  %v266 = vunpack.c.l.b16 %v74
  %v267 = vunpack.c.l.b16 %v75
  %v268 = vunpack.c.l.b16 %v76
  %v269 = vunpack.c.l.b16 %v77
  %v270 = vunpack.c.l.b16 %v78
  %v271 = vunpack.c.l.b16 %v79
  %v272 = vunpack.c.l.b16 %v80
  %v273 = vunpack.c.l.b16 %v81
  %v274 = vunpack.c.l.b16 %v82
  %v275 = vunpack.c.l.b16 %v83
  %v276 = vunpack.c.l.b16 %v84
  %v277 = vunpack.c.l.b16 %v85
  %v278 = vunpack.c.l.b16 %v86
  %v279 = vpack.c.b16 %v216, %v215
  %v280 = vpack.c.b16 %v218, %v217
  %v281 = vpack.c.b16 %v220, %v219
  %v282 = vpack.c.b16 %v222, %v221
  %v283 = vpack.c.b16 %v224, %v223
  %v284 = vpack.c.b16 %v226, %v225
  %v285 = vpack.c.b16 %v228, %v227
  %v286 = vpack.c.b16 %v230, %v229
  %v287 = vpack.c.b16 %v232, %v231
  %v288 = vpack.c.b16 %v234, %v233
  %v289 = vpack.c.b16 %v236, %v235
  %v290 = vpack.c.b16 %v238, %v237
  %v291 = vpack.c.b16 %v240, %v239
  %v292 = vpack.c.b16 %v242, %v241
  %v293 = vpack.c.b16 %v244, %v243
  %v294 = vpack.c.b16 %v246, %v245
  %v295 = vpack.c.b16 %v248, %v247
  %v296 = vpack.c.b16 %v250, %v249
  %v297 = vpack.c.b16 %v252, %v251
  %v298 = vpack.c.b16 %v254, %v253
  %v299 = vpack.c.b16 %v256, %v255
  %v300 = vpack.c.b16 %v258, %v257
  %v301 = vpack.c.b16 %v260, %v259
  %v302 = vpack.c.b16 %v262, %v261
  %v303 = vpack.c.b16 %v264, %v263
  %v304 = vpack.c.b16 %v266, %v265
  %v305 = vpack.c.b16 %v268, %v267
  %v306 = vpack.c.b16 %v270, %v269
  %v307 = vpack.c.b16 %v272, %v271
  %v308 = vpack.c.b16 %v274, %v273
  %v309 = vpack.c.b16 %v276, %v275
  %v310 = vpack.c.b16 %v278, %v277
  %343 = vmatprep.subr.bf16.mxu0 0
  %344 = vmatpush1.bf16.msra.mxu0 %v279
  %345 = vmatprep.subr.bf16.mxu0 0
  %346 = vmatpush1.bf16.msra.mxu0 %v280
  %347 = vmatprep.subr.bf16.mxu0 0
  %348 = vmatpush1.bf16.msra.mxu0 %v281
  %349 = vmatprep.subr.bf16.mxu0 0
  %350 = vmatpush1.bf16.msra.mxu0 %v282
  %351 = vmatprep.subr.bf16.mxu0 0
  %352 = vmatpush1.bf16.msra.mxu0 %v283
  %353 = vmatprep.subr.bf16.mxu0 0
  %354 = vmatpush1.bf16.msra.mxu0 %v284
  %355 = vmatprep.subr.bf16.mxu0 0
  %356 = vmatpush1.bf16.msra.mxu0 %v285
  %357 = vmatprep.subr.bf16.mxu0 0
  %358 = vmatpush1.bf16.msra.mxu0 %v286
  %359 = vmatprep.subr.bf16.mxu0 0
  %360 = vmatpush1.bf16.msra.mxu0 %v287
  %361 = vmatprep.subr.bf16.mxu0 0
  %362 = vmatpush1.bf16.msra.mxu0 %v288
  %363 = vmatprep.subr.bf16.mxu0 0
  %364 = vmatpush1.bf16.msra.mxu0 %v289
  %365 = vmatprep.subr.bf16.mxu0 0
  %366 = vmatpush1.bf16.msra.mxu0 %v290
  %367 = vmatprep.subr.bf16.mxu0 0
  %368 = vmatpush1.bf16.msra.mxu0 %v291
  %369 = vmatprep.subr.bf16.mxu0 0
  %370 = vmatpush1.bf16.msra.mxu0 %v292
  %371 = vmatprep.subr.bf16.mxu0 0
  %372 = vmatpush1.bf16.msra.mxu0 %v293
  %373 = vmatprep.subr.bf16.mxu0 0
  %374 = vmatpush1.bf16.msra.mxu0 %v294
  %375 = vmatprep.mubr.bf16.mxu0 %v136
  %376 = vmatmul.mubr.bf16.gmra.mrb[0].mxu0 %v135
  %v377 = vpop.f32.mrb[0].mxu0
  %v378 = vadd.f32 %v94, %v377
  %v379 = vpop.f32.mrb[0].mxu0
  %v380 = vpop.f32.mrb[0].mxu0
  %v381 = vadd.f32 %v99, %v380
  %v382 = vpop.f32.mrb[0].mxu0
  %383 = vmatprep.mubr.bf16.mxu0 %v140
  %384 = vmatmul.mubr.bf16.gmra.mrb[0].mxu0 %v139
  %v385 = vpop.f32.mrb[0].mxu0
  %v386 = vadd.f32 %v104, %v385
  %v387 = vpop.f32.mrb[0].mxu0
  %v388 = vpop.f32.mrb[0].mxu0
  %v389 = vadd.f32 %v109, %v388
  %v390 = vpop.f32.mrb[0].mxu0
  %391 = vdwg.mxu0
  %392 = vmatprep.subr.bf16.mxu0 0
  %393 = vmatpush1.bf16.msra.mxu0 %v295
  %394 = vmatprep.subr.bf16.mxu0 0
  %395 = vmatpush1.bf16.msra.mxu0 %v296
  %396 = vmatprep.subr.bf16.mxu0 0
  %397 = vmatpush1.bf16.msra.mxu0 %v297
  %398 = vmatprep.subr.bf16.mxu0 0
  %399 = vmatpush1.bf16.msra.mxu0 %v298
  %400 = vmatprep.subr.bf16.mxu0 0
  %401 = vmatpush1.bf16.msra.mxu0 %v299
  %402 = vmatprep.subr.bf16.mxu0 0
  %403 = vmatpush1.bf16.msra.mxu0 %v300
  %404 = vmatprep.subr.bf16.mxu0 0
  %405 = vmatpush1.bf16.msra.mxu0 %v301
  %406 = vmatprep.subr.bf16.mxu0 0
  %407 = vmatpush1.bf16.msra.mxu0 %v302
  %408 = vmatprep.subr.bf16.mxu0 0
  %409 = vmatpush1.bf16.msra.mxu0 %v303
  %410 = vmatprep.subr.bf16.mxu0 0
  %411 = vmatpush1.bf16.msra.mxu0 %v304
  %412 = vmatprep.subr.bf16.mxu0 0
  %413 = vmatpush1.bf16.msra.mxu0 %v305
  %414 = vmatprep.subr.bf16.mxu0 0
  %415 = vmatpush1.bf16.msra.mxu0 %v306
  %416 = vmatprep.subr.bf16.mxu0 0
  %417 = vmatpush1.bf16.msra.mxu0 %v307
  %418 = vmatprep.subr.bf16.mxu0 0
  %419 = vmatpush1.bf16.msra.mxu0 %v308
  %420 = vmatprep.subr.bf16.mxu0 0
  %421 = vmatpush1.bf16.msra.mxu0 %v309
  %422 = vmatprep.subr.bf16.mxu0 0
  %423 = vmatpush1.bf16.msra.mxu0 %v310
  %424 = vmatprep.mubr.bf16.mxu0 %v138
  %425 = vmatmul.mubr.bf16.gmra.mrb[0].mxu0 %v137
  %v426 = vpop.f32.mrb[0].mxu0
  %v427 = vadd.f32 %v378, %v426
  %v428 = vpop.f32.mrb[0].mxu0
  %v429 = vpop.f32.mrb[0].mxu0
  %v430 = vadd.f32 %v381, %v429
  %v431 = vpop.f32.mrb[0].mxu0
  %432 = vmatprep.mubr.bf16.mxu0 %v142
  %433 = vmatmul.mubr.bf16.gmra.mrb[0].mxu0 %v141
  %v434 = vpop.f32.mrb[0].mxu0
  %v435 = vadd.f32 %v386, %v434
  %v436 = vpop.f32.mrb[0].mxu0
  %v437 = vpop.f32.mrb[0].mxu0
  %v438 = vadd.f32 %v389, %v437
  %v439 = vpop.f32.mrb[0].mxu0
  %440 = vdwg.mxu0
  %vm441 = vcmp.gt.f32.partialorder %v427, 0.0
  %vm442 = vcmp.gt.f32.partialorder %v430, 0.0
  %vm443 = vcmp.gt.f32.partialorder %v435, 0.0
  %vm444 = vcmp.gt.f32.partialorder %v438, 0.0
  %v445 = vmul.f32 %v427, 0.01
  %v446 = vmul.f32 %v430, 0.01
  %v447 = vmul.f32 %v435, 0.01
  %v448 = vmul.f32 %v438, 0.01
  %v449 = vsel %vm441, %v427, %v445
  %v450 = vsel %vm442, %v430, %v446
  %v451 = vsel %vm443, %v435, %v447
  %v452 = vsel %vm444, %v438, %v448
  %v453 = vpack.c.bf16 %v450, %v449
  %v454 = vpack.c.bf16 %v452, %v451
  %v457 = vunpack.c.l.b16 %v453
  %v458 = vunpack.c.h.b16 %v453
  %v459 = vunpack.c.l.b16 %v454
  %v460 = vunpack.c.h.b16 %v454
  %v461 = vpack.c.b16 %v457, %v457
  %v462 = vpack.c.b16 %v458, %v458
  %v463 = vpack.c.b16 %v459, %v459
  %v464 = vpack.c.b16 %v460, %v460
  %469 = vst [vmem:[%s3] sm:$0xf] %v461
  %470 = vst [vmem:[%s3 + $0x4] sm:$0xf] %v462
  %471 = vst [vmem:[%s3 + $0x8] sm:$0xf] %v463
  %472 = vst [vmem:[%s3 + $0xc] sm:$0xf] %v464
  // Predicated region
  $region14: #{forward.10} parent=0 // pred_check
    _
  $region15: #{forward.10} parent=0 // pred_check_branch
    %474 = sbr.rel (0) target = $region17
  $region16: #{forward.10} parent=0 // pred_region
    _
  $region17: #{forward.10} parent=0 // pred_fallthru
    _
  // Predicated region
  $region18: #{forward.10} parent=0 // pred_check
    _
  $region19: #{forward.10} parent=0 // pred_check_branch
    %476 = sbr.rel (0) target = $region21
  $region20: #{forward.10} parent=0 // pred_region
    _
  $region21: #{forward.10} parent=0 // pred_fallthru
    _

// kernel: forward.11
$region0: #{forward.11}
  #allocation0 [shape = 'u32[]', space=smem, size = 0x4, offset = 0x4, fixed_abs, tag = 'smem constant byte address 0x4 - core index']
  #allocation1 [shape = 'u32[144,128]{1,0:T(1,128)}', space=vmem, size = 0x12000, scoped, tag = 'internal scratch']
  %s0 = inlined_call_operand.vmem [shape: bf16[2048,2], index: 0, kind: input, shape index: {}]
  %s1 = inlined_call_operand.vmem [shape: bf16[16,2048], index: 1, kind: input, shape index: {}]
  %s2 = inlined_call_operand.vmem [shape: f32[16,1], index: 2, kind: input, shape index: {}]
  %s3 = inlined_call_operand.vmem [shape: f32[16,2], index: 3, kind: output, shape index: {}]
  %s4 = sld [smem:[#allocation0]]
  $region22: #{forward.11} parent=0
    _
  %s6 = ssub.s32 1, %s4
  %s7 = scalar_select 0, %s6, %s4
  // Predicated region
  $region2: #{forward.11} parent=0 // pred_check
    _
  $region3: #{forward.11} parent=0 // pred_check_branch
    %9 = sbr.rel (0) target = $region5
  $region4: #{forward.11} parent=0 // pred_region
    _
  $region5: #{forward.11} parent=0 // pred_fallthru
    _
  // Predicated region
  $region6: #{forward.11} parent=0 // pred_check
    _
  $region7: #{forward.11} parent=0 // pred_check_branch
    %11 = sbr.rel (0) target = $region9
  $region8: #{forward.11} parent=0 // pred_region
    _
  $region9: #{forward.11} parent=0 // pred_fallthru
    _
  // Predicated region
  $region10: #{forward.11} parent=0 // pred_check
    _
  $region11: #{forward.11} parent=0 // pred_check_branch
    %13 = sbr.rel (0) target = $region13
  $region12: #{forward.11} parent=0 // pred_region
    _
  $region13: #{forward.11} parent=0 // pred_fallthru
    _
  %v15 = vld [vmem:[%s1] sm:$0xff]
  %v16 = vld [vmem:[%s1 + $0x8] sm:$0xff]
  %v17 = vld [vmem:[%s1 + $0x10] sm:$0xff]
  %v18 = vld [vmem:[%s1 + $0x18] sm:$0xff]
  %v19 = vld [vmem:[%s1 + $0x20] sm:$0xff]
  %v20 = vld [vmem:[%s1 + $0x28] sm:$0xff]
  %v21 = vld [vmem:[%s1 + $0x30] sm:$0xff]
  %v22 = vld [vmem:[%s1 + $0x38] sm:$0xff]
  %v23 = vld [vmem:[%s1 + $0x40] sm:$0xff]
  %v24 = vld [vmem:[%s1 + $0x48] sm:$0xff]
  %v25 = vld [vmem:[%s1 + $0x50] sm:$0xff]
  %v26 = vld [vmem:[%s1 + $0x58] sm:$0xff]
  %v27 = vld [vmem:[%s1 + $0x60] sm:$0xff]
  %v28 = vld [vmem:[%s1 + $0x68] sm:$0xff]
  %v29 = vld [vmem:[%s1 + $0x70] sm:$0xff]
  %v30 = vld [vmem:[%s1 + $0x78] sm:$0xff]
  %v31 = vld [vmem:[%s0] sm:$0xf]
  %v32 = vld [vmem:[%s0 + $0x4] sm:$0xf]
  %v33 = vld [vmem:[%s0 + $0x8] sm:$0xf]
  %v34 = vld [vmem:[%s0 + $0xc] sm:$0xf]
  %v35 = vld [vmem:[%s0 + $0x10] sm:$0xf]
  %v36 = vld [vmem:[%s0 + $0x14] sm:$0xf]
  %v37 = vld [vmem:[%s0 + $0x18] sm:$0xf]
  %v38 = vld [vmem:[%s0 + $0x1c] sm:$0xf]
  %v39 = vld [vmem:[%s0 + $0x20] sm:$0xf]
  %v40 = vld [vmem:[%s0 + $0x24] sm:$0xf]
  %v41 = vld [vmem:[%s0 + $0x28] sm:$0xf]
  %v42 = vld [vmem:[%s0 + $0x2c] sm:$0xf]
  %v43 = vld [vmem:[%s0 + $0x30] sm:$0xf]
  %v44 = vld [vmem:[%s0 + $0x34] sm:$0xf]
  %v45 = vld [vmem:[%s0 + $0x38] sm:$0xf]
  %v46 = vld [vmem:[%s0 + $0x3c] sm:$0xf]
  %v47 = vld [vmem:[%s0 + $0x40] sm:$0xf]
  %v48 = vld [vmem:[%s0 + $0x44] sm:$0xf]
  %v49 = vld [vmem:[%s0 + $0x48] sm:$0xf]
  %v50 = vld [vmem:[%s0 + $0x4c] sm:$0xf]
  %v51 = vld [vmem:[%s0 + $0x50] sm:$0xf]
  %v52 = vld [vmem:[%s0 + $0x54] sm:$0xf]
  %v53 = vld [vmem:[%s0 + $0x58] sm:$0xf]
  %v54 = vld [vmem:[%s0 + $0x5c] sm:$0xf]
  %v55 = vld [vmem:[%s0 + $0x60] sm:$0xf]
  %v56 = vld [vmem:[%s0 + $0x64] sm:$0xf]
  %v57 = vld [vmem:[%s0 + $0x68] sm:$0xf]
  %v58 = vld [vmem:[%s0 + $0x6c] sm:$0xf]
  %v59 = vld [vmem:[%s0 + $0x70] sm:$0xf]
  %v60 = vld [vmem:[%s0 + $0x74] sm:$0xf]
  %v61 = vld [vmem:[%s0 + $0x78] sm:$0xf]
  %v62 = vld [vmem:[%s0 + $0x7c] sm:$0xf]
  %v63 = vld [vmem:[%s0 + $0x80] sm:$0xf]
  %v64 = vld [vmem:[%s0 + $0x84] sm:$0xf]
  %v65 = vld [vmem:[%s0 + $0x88] sm:$0xf]
  %v66 = vld [vmem:[%s0 + $0x8c] sm:$0xf]
  %v67 = vld [vmem:[%s0 + $0x90] sm:$0xf]
  %v68 = vld [vmem:[%s0 + $0x94] sm:$0xf]
  %v69 = vld [vmem:[%s0 + $0x98] sm:$0xf]
  %v70 = vld [vmem:[%s0 + $0x9c] sm:$0xf]
  %v71 = vld [vmem:[%s0 + $0xa0] sm:$0xf]
  %v72 = vld [vmem:[%s0 + $0xa4] sm:$0xf]
  %v73 = vld [vmem:[%s0 + $0xa8] sm:$0xf]
  %v74 = vld [vmem:[%s0 + $0xac] sm:$0xf]
  %v75 = vld [vmem:[%s0 + $0xb0] sm:$0xf]
  %v76 = vld [vmem:[%s0 + $0xb4] sm:$0xf]
  %v77 = vld [vmem:[%s0 + $0xb8] sm:$0xf]
  %v78 = vld [vmem:[%s0 + $0xbc] sm:$0xf]
  %v79 = vld [vmem:[%s0 + $0xc0] sm:$0xf]
  %v80 = vld [vmem:[%s0 + $0xc4] sm:$0xf]
  %v81 = vld [vmem:[%s0 + $0xc8] sm:$0xf]
  %v82 = vld [vmem:[%s0 + $0xcc] sm:$0xf]
  %v83 = vld [vmem:[%s0 + $0xd0] sm:$0xf]
  %v84 = vld [vmem:[%s0 + $0xd4] sm:$0xf]
  %v85 = vld [vmem:[%s0 + $0xd8] sm:$0xf]
  %v86 = vld [vmem:[%s0 + $0xdc] sm:$0xf]
  %v87 = vld [vmem:[%s0 + $0xe0] sm:$0xf]
  %v88 = vld [vmem:[%s0 + $0xe4] sm:$0xf]
  %v89 = vld [vmem:[%s0 + $0xe8] sm:$0xf]
  %v90 = vld [vmem:[%s0 + $0xec] sm:$0xf]
  %v91 = vld [vmem:[%s0 + $0xf0] sm:$0xf]
  %v92 = vld [vmem:[%s0 + $0xf4] sm:$0xf]
  %v93 = vld [vmem:[%s0 + $0xf8] sm:$0xf]
  %v94 = vld [vmem:[%s0 + $0xfc] sm:$0xf]
  %v95 = vld [vmem:[%s0 + $0x100] sm:$0xf]
  %v96 = vld [vmem:[%s0 + $0x104] sm:$0xf]
  %v97 = vld [vmem:[%s0 + $0x108] sm:$0xf]
  %v98 = vld [vmem:[%s0 + $0x10c] sm:$0xf]
  %v99 = vld [vmem:[%s0 + $0x110] sm:$0xf]
  %v100 = vld [vmem:[%s0 + $0x114] sm:$0xf]
  %v101 = vld [vmem:[%s0 + $0x118] sm:$0xf]
  %v102 = vld [vmem:[%s0 + $0x11c] sm:$0xf]
  %v103 = vld [vmem:[%s0 + $0x120] sm:$0xf]
  %v104 = vld [vmem:[%s0 + $0x124] sm:$0xf]
  %v105 = vld [vmem:[%s0 + $0x128] sm:$0xf]
  %v106 = vld [vmem:[%s0 + $0x12c] sm:$0xf]
  %v107 = vld [vmem:[%s0 + $0x130] sm:$0xf]
  %v108 = vld [vmem:[%s0 + $0x134] sm:$0xf]
  %v109 = vld [vmem:[%s0 + $0x138] sm:$0xf]
  %v110 = vld [vmem:[%s0 + $0x13c] sm:$0xf]
  %v111 = vld [vmem:[%s0 + $0x140] sm:$0xf]
  %v112 = vld [vmem:[%s0 + $0x144] sm:$0xf]
  %v113 = vld [vmem:[%s0 + $0x148] sm:$0xf]
  %v114 = vld [vmem:[%s0 + $0x14c] sm:$0xf]
  %v115 = vld [vmem:[%s0 + $0x150] sm:$0xf]
  %v116 = vld [vmem:[%s0 + $0x154] sm:$0xf]
  %v117 = vld [vmem:[%s0 + $0x158] sm:$0xf]
  %v118 = vld [vmem:[%s0 + $0x15c] sm:$0xf]
  %v119 = vld [vmem:[%s0 + $0x160] sm:$0xf]
  %v120 = vld [vmem:[%s0 + $0x164] sm:$0xf]
  %v121 = vld [vmem:[%s0 + $0x168] sm:$0xf]
  %v122 = vld [vmem:[%s0 + $0x16c] sm:$0xf]
  %v123 = vld [vmem:[%s0 + $0x170] sm:$0xf]
  %v124 = vld [vmem:[%s0 + $0x174] sm:$0xf]
  %v125 = vld [vmem:[%s0 + $0x178] sm:$0xf]
  %v126 = vld [vmem:[%s0 + $0x17c] sm:$0xf]
  %v127 = vld [vmem:[%s0 + $0x180] sm:$0xf]
  %v128 = vld [vmem:[%s0 + $0x184] sm:$0xf]
  %v129 = vld [vmem:[%s0 + $0x188] sm:$0xf]
  %v130 = vld [vmem:[%s0 + $0x18c] sm:$0xf]
  %v131 = vld [vmem:[%s0 + $0x190] sm:$0xf]
  %v132 = vld [vmem:[%s0 + $0x194] sm:$0xf]
  %v133 = vld [vmem:[%s0 + $0x198] sm:$0xf]
  %v134 = vld [vmem:[%s0 + $0x19c] sm:$0xf]
  %v135 = vld [vmem:[%s0 + $0x1a0] sm:$0xf]
  %v136 = vld [vmem:[%s0 + $0x1a4] sm:$0xf]
  %v137 = vld [vmem:[%s0 + $0x1a8] sm:$0xf]
  %v138 = vld [vmem:[%s0 + $0x1ac] sm:$0xf]
  %v139 = vld [vmem:[%s0 + $0x1b0] sm:$0xf]
  %v140 = vld [vmem:[%s0 + $0x1b4] sm:$0xf]
  %v141 = vld [vmem:[%s0 + $0x1b8] sm:$0xf]
  %v142 = vld [vmem:[%s0 + $0x1bc] sm:$0xf]
  %v143 = vld [vmem:[%s0 + $0x1c0] sm:$0xf]
  %v144 = vld [vmem:[%s0 + $0x1c4] sm:$0xf]
  %v145 = vld [vmem:[%s0 + $0x1c8] sm:$0xf]
  %v146 = vld [vmem:[%s0 + $0x1cc] sm:$0xf]
  %v147 = vld [vmem:[%s0 + $0x1d0] sm:$0xf]
  %v148 = vld [vmem:[%s0 + $0x1d4] sm:$0xf]
  %v149 = vld [vmem:[%s0 + $0x1d8] sm:$0xf]
  %v150 = vld [vmem:[%s0 + $0x1dc] sm:$0xf]
  %v151 = vld [vmem:[%s0 + $0x1e0] sm:$0xf]
  %v152 = vld [vmem:[%s0 + $0x1e4] sm:$0xf]
  %v153 = vld [vmem:[%s0 + $0x1e8] sm:$0xf]
  %v154 = vld [vmem:[%s0 + $0x1ec] sm:$0xf]
  %v155 = vld [vmem:[%s0 + $0x1f0] sm:$0xf]
  %v156 = vld [vmem:[%s0 + $0x1f4] sm:$0xf]
  %v157 = vld [vmem:[%s0 + $0x1f8] sm:$0xf]
  %v158 = vld [vmem:[%s0 + $0x1fc] sm:$0xf]
  %v159 = vld [vmem:[%s0 + $0x200] sm:$0xf]
  %v160 = vld [vmem:[%s0 + $0x204] sm:$0xf]
  %v161 = vld [vmem:[%s0 + $0x208] sm:$0xf]
  %v162 = vld [vmem:[%s0 + $0x20c] sm:$0xf]
  %v163 = vld [vmem:[%s0 + $0x210] sm:$0xf]
  %v164 = vld [vmem:[%s0 + $0x214] sm:$0xf]
  %v165 = vld [vmem:[%s0 + $0x218] sm:$0xf]
  %v166 = vld [vmem:[%s0 + $0x21c] sm:$0xf]
  %v167 = vld [vmem:[%s0 + $0x220] sm:$0xf]
  %v168 = vld [vmem:[%s0 + $0x224] sm:$0xf]
  %v169 = vld [vmem:[%s0 + $0x228] sm:$0xf]
  %v170 = vld [vmem:[%s0 + $0x22c] sm:$0xf]
  %v171 = vld [vmem:[%s0 + $0x230] sm:$0xf]
  %v172 = vld [vmem:[%s0 + $0x234] sm:$0xf]
  %v173 = vld [vmem:[%s0 + $0x238] sm:$0xf]
  %v174 = vld [vmem:[%s0 + $0x23c] sm:$0xf]
  %v175 = vld [vmem:[%s0 + $0x240] sm:$0xf]
  %v176 = vld [vmem:[%s0 + $0x244] sm:$0xf]
  %v177 = vld [vmem:[%s0 + $0x248] sm:$0xf]
  %v178 = vld [vmem:[%s0 + $0x24c] sm:$0xf]
  %v179 = vld [vmem:[%s0 + $0x250] sm:$0xf]
  %v180 = vld [vmem:[%s0 + $0x254] sm:$0xf]
  %v181 = vld [vmem:[%s0 + $0x258] sm:$0xf]
  %v182 = vld [vmem:[%s0 + $0x25c] sm:$0xf]
  %v183 = vld [vmem:[%s0 + $0x260] sm:$0xf]
  %v184 = vld [vmem:[%s0 + $0x264] sm:$0xf]
  %v185 = vld [vmem:[%s0 + $0x268] sm:$0xf]
  %v186 = vld [vmem:[%s0 + $0x26c] sm:$0xf]
  %v187 = vld [vmem:[%s0 + $0x270] sm:$0xf]
  %v188 = vld [vmem:[%s0 + $0x274] sm:$0xf]
  %v189 = vld [vmem:[%s0 + $0x278] sm:$0xf]
  %v190 = vld [vmem:[%s0 + $0x27c] sm:$0xf]
  %v191 = vld [vmem:[%s0 + $0x280] sm:$0xf]
  %v192 = vld [vmem:[%s0 + $0x284] sm:$0xf]
  %v193 = vld [vmem:[%s0 + $0x288] sm:$0xf]
  %v194 = vld [vmem:[%s0 + $0x28c] sm:$0xf]
  %v195 = vld [vmem:[%s0 + $0x290] sm:$0xf]
  %v196 = vld [vmem:[%s0 + $0x294] sm:$0xf]
  %v197 = vld [vmem:[%s0 + $0x298] sm:$0xf]
  %v198 = vld [vmem:[%s0 + $0x29c] sm:$0xf]
  %v199 = vld [vmem:[%s0 + $0x2a0] sm:$0xf]
  %v200 = vld [vmem:[%s0 + $0x2a4] sm:$0xf]
  %v201 = vld [vmem:[%s0 + $0x2a8] sm:$0xf]
  %v202 = vld [vmem:[%s0 + $0x2ac] sm:$0xf]
  %v203 = vld [vmem:[%s0 + $0x2b0] sm:$0xf]
  %v204 = vld [vmem:[%s0 + $0x2b4] sm:$0xf]
  %v205 = vld [vmem:[%s0 + $0x2b8] sm:$0xf]
  %v206 = vld [vmem:[%s0 + $0x2bc] sm:$0xf]
  %v207 = vld [vmem:[%s0 + $0x2c0] sm:$0xf]
  %v208 = vld [vmem:[%s0 + $0x2c4] sm:$0xf]
  %v209 = vld [vmem:[%s0 + $0x2c8] sm:$0xf]
  %v210 = vld [vmem:[%s0 + $0x2cc] sm:$0xf]
  %v211 = vld [vmem:[%s0 + $0x2d0] sm:$0xf]
  %v212 = vld [vmem:[%s0 + $0x2d4] sm:$0xf]
  %v213 = vld [vmem:[%s0 + $0x2d8] sm:$0xf]
  %v214 = vld [vmem:[%s0 + $0x2dc] sm:$0xf]
  %v215 = vld [vmem:[%s0 + $0x2e0] sm:$0xf]
  %v216 = vld [vmem:[%s0 + $0x2e4] sm:$0xf]
  %v217 = vld [vmem:[%s0 + $0x2e8] sm:$0xf]
  %v218 = vld [vmem:[%s0 + $0x2ec] sm:$0xf]
  %v219 = vld [vmem:[%s0 + $0x2f0] sm:$0xf]
  %v220 = vld [vmem:[%s0 + $0x2f4] sm:$0xf]
  %v221 = vld [vmem:[%s0 + $0x2f8] sm:$0xf]
  %v222 = vld [vmem:[%s0 + $0x2fc] sm:$0xf]
  %v223 = vld [vmem:[%s0 + $0x300] sm:$0xf]
  %v224 = vld [vmem:[%s0 + $0x304] sm:$0xf]
  %v225 = vld [vmem:[%s0 + $0x308] sm:$0xf]
  %v226 = vld [vmem:[%s0 + $0x30c] sm:$0xf]
  %v227 = vld [vmem:[%s0 + $0x310] sm:$0xf]
  %v228 = vld [vmem:[%s0 + $0x314] sm:$0xf]
  %v229 = vld [vmem:[%s0 + $0x318] sm:$0xf]
  %v230 = vld [vmem:[%s0 + $0x31c] sm:$0xf]
  %v231 = vld [vmem:[%s0 + $0x320] sm:$0xf]
  %v232 = vld [vmem:[%s0 + $0x324] sm:$0xf]
  %v233 = vld [vmem:[%s0 + $0x328] sm:$0xf]
  %v234 = vld [vmem:[%s0 + $0x32c] sm:$0xf]
  %v235 = vld [vmem:[%s0 + $0x330] sm:$0xf]
  %v236 = vld [vmem:[%s0 + $0x334] sm:$0xf]
  %v237 = vld [vmem:[%s0 + $0x338] sm:$0xf]
  %v238 = vld [vmem:[%s0 + $0x33c] sm:$0xf]
  %v239 = vld [vmem:[%s0 + $0x340] sm:$0xf]
  %v240 = vld [vmem:[%s0 + $0x344] sm:$0xf]
  %v241 = vld [vmem:[%s0 + $0x348] sm:$0xf]
  %v242 = vld [vmem:[%s0 + $0x34c] sm:$0xf]
  %v243 = vld [vmem:[%s0 + $0x350] sm:$0xf]
  %v244 = vld [vmem:[%s0 + $0x354] sm:$0xf]
  %v245 = vld [vmem:[%s0 + $0x358] sm:$0xf]
  %v246 = vld [vmem:[%s0 + $0x35c] sm:$0xf]
  %v247 = vld [vmem:[%s0 + $0x360] sm:$0xf]
  %v248 = vld [vmem:[%s0 + $0x364] sm:$0xf]
  %v249 = vld [vmem:[%s0 + $0x368] sm:$0xf]
  %v250 = vld [vmem:[%s0 + $0x36c] sm:$0xf]
  %v251 = vld [vmem:[%s0 + $0x370] sm:$0xf]
  %v252 = vld [vmem:[%s0 + $0x374] sm:$0xf]
  %v253 = vld [vmem:[%s0 + $0x378] sm:$0xf]
  %v254 = vld [vmem:[%s0 + $0x37c] sm:$0xf]
  %v255 = vld [vmem:[%s0 + $0x380] sm:$0xf]
  %v256 = vld [vmem:[%s0 + $0x384] sm:$0xf]
  %v257 = vld [vmem:[%s0 + $0x388] sm:$0xf]
  %v258 = vld [vmem:[%s0 + $0x38c] sm:$0xf]
  %v259 = vld [vmem:[%s0 + $0x390] sm:$0xf]
  %v260 = vld [vmem:[%s0 + $0x394] sm:$0xf]
  %v261 = vld [vmem:[%s0 + $0x398] sm:$0xf]
  %v262 = vld [vmem:[%s0 + $0x39c] sm:$0xf]
  %v263 = vld [vmem:[%s0 + $0x3a0] sm:$0xf]
  %v264 = vld [vmem:[%s0 + $0x3a4] sm:$0xf]
  %v265 = vld [vmem:[%s0 + $0x3a8] sm:$0xf]
  %v266 = vld [vmem:[%s0 + $0x3ac] sm:$0xf]
  %v267 = vld [vmem:[%s0 + $0x3b0] sm:$0xf]
  %v268 = vld [vmem:[%s0 + $0x3b4] sm:$0xf]
  %v269 = vld [vmem:[%s0 + $0x3b8] sm:$0xf]
  %v270 = vld [vmem:[%s0 + $0x3bc] sm:$0xf]
  %v271 = vld [vmem:[%s0 + $0x3c0] sm:$0xf]
  %v272 = vld [vmem:[%s0 + $0x3c4] sm:$0xf]
  %v273 = vld [vmem:[%s0 + $0x3c8] sm:$0xf]
  %v274 = vld [vmem:[%s0 + $0x3cc] sm:$0xf]
  %v275 = vld [vmem:[%s0 + $0x3d0] sm:$0xf]
  %v276 = vld [vmem:[%s0 + $0x3d4] sm:$0xf]
  %v277 = vld [vmem:[%s0 + $0x3d8] sm:$0xf]
  %v278 = vld [vmem:[%s0 + $0x3dc] sm:$0xf]
  %v279 = vld [vmem:[%s0 + $0x3e0] sm:$0xf]
  %v280 = vld [vmem:[%s0 + $0x3e4] sm:$0xf]
  %v281 = vld [vmem:[%s0 + $0x3e8] sm:$0xf]
  %v282 = vld [vmem:[%s0 + $0x3ec] sm:$0xf]
  %v283 = vld [vmem:[%s0 + $0x3f0] sm:$0xf]
  %v284 = vld [vmem:[%s0 + $0x3f4] sm:$0xf]
  %v285 = vld [vmem:[%s0 + $0x3f8] sm:$0xf]
  %v286 = vld [vmem:[%s0 + $0x3fc] sm:$0xf]
  %v287 = vld [vmem:[%s2] sm:$0xff]
  %v288 = vld [vmem:[%s2 + $0x8] sm:$0xff]
  %290 = vset.pattern.permute.xlu0 0
  %291 = vperm.xlu0 %290, %v287
  %v292 = vpop.permute.xlu0 %291
  %295 = vset.pattern.permute.xlu0 0
  %296 = vperm.xlu0 %295, %v288
  %v297 = vpop.permute.xlu0 %296
  %v315 = vunpack.c.l.b16 %v15
  %v316 = vunpack.c.h.b16 %v15
  %v317 = vunpack.c.l.b16 %v16
  %v318 = vunpack.c.h.b16 %v16
  %v319 = vunpack.c.l.b16 %v17
  %v320 = vunpack.c.h.b16 %v17
  %v321 = vunpack.c.l.b16 %v18
  %v322 = vunpack.c.h.b16 %v18
  %v323 = vunpack.c.l.b16 %v19
  %v324 = vunpack.c.h.b16 %v19
  %v325 = vunpack.c.l.b16 %v20
  %v326 = vunpack.c.h.b16 %v20
  %v327 = vunpack.c.l.b16 %v21
  %v328 = vunpack.c.h.b16 %v21
  %v329 = vunpack.c.l.b16 %v22
  %v330 = vunpack.c.h.b16 %v22
  %v331 = vunpack.c.l.b16 %v23
  %v332 = vunpack.c.h.b16 %v23
  %v333 = vunpack.c.l.b16 %v24
  %v334 = vunpack.c.h.b16 %v24
  %v335 = vunpack.c.l.b16 %v25
  %v336 = vunpack.c.h.b16 %v25
  %v337 = vunpack.c.l.b16 %v26
  %v338 = vunpack.c.h.b16 %v26
  %v339 = vunpack.c.l.b16 %v27
  %v340 = vunpack.c.h.b16 %v27
  %v341 = vunpack.c.l.b16 %v28
  %v342 = vunpack.c.h.b16 %v28
  %v343 = vunpack.c.l.b16 %v29
  %v344 = vunpack.c.h.b16 %v29
  %v345 = vunpack.c.l.b16 %v30
  %v346 = vunpack.c.h.b16 %v30
  %v347 = vpack.c.b16 %v331, %v315
  %v348 = vpack.c.b16 %v332, %v316
  %v349 = vpack.c.b16 %v333, %v317
  %v350 = vpack.c.b16 %v334, %v318
  %v351 = vpack.c.b16 %v335, %v319
  %v352 = vpack.c.b16 %v336, %v320
  %v353 = vpack.c.b16 %v337, %v321
  %v354 = vpack.c.b16 %v338, %v322
  %v355 = vpack.c.b16 %v339, %v323
  %v356 = vpack.c.b16 %v340, %v324
  %v357 = vpack.c.b16 %v341, %v325
  %v358 = vpack.c.b16 %v342, %v326
  %v359 = vpack.c.b16 %v343, %v327
  %v360 = vpack.c.b16 %v344, %v328
  %v361 = vpack.c.b16 %v345, %v329
  %v362 = vpack.c.b16 %v346, %v330
  %v635 = vunpack.c.l.b16 %v31
  %v636 = vunpack.c.l.b16 %v32
  %v637 = vunpack.c.l.b16 %v33
  %v638 = vunpack.c.l.b16 %v34
  %v639 = vunpack.c.l.b16 %v35
  %v640 = vunpack.c.l.b16 %v36
  %v641 = vunpack.c.l.b16 %v37
  %v642 = vunpack.c.l.b16 %v38
  %v643 = vunpack.c.l.b16 %v39
  %v644 = vunpack.c.l.b16 %v40
  %v645 = vunpack.c.l.b16 %v41
  %v646 = vunpack.c.l.b16 %v42
  %v647 = vunpack.c.l.b16 %v43
  %v648 = vunpack.c.l.b16 %v44
  %v649 = vunpack.c.l.b16 %v45
  %v650 = vunpack.c.l.b16 %v46
  %v651 = vunpack.c.l.b16 %v47
  %v652 = vunpack.c.l.b16 %v48
  %v653 = vunpack.c.l.b16 %v49
  %v654 = vunpack.c.l.b16 %v50
  %v655 = vunpack.c.l.b16 %v51
  %v656 = vunpack.c.l.b16 %v52
  %v657 = vunpack.c.l.b16 %v53
  %v658 = vunpack.c.l.b16 %v54
  %v659 = vunpack.c.l.b16 %v55
  %v660 = vunpack.c.l.b16 %v56
  %v661 = vunpack.c.l.b16 %v57
  %v662 = vunpack.c.l.b16 %v58
  %v663 = vunpack.c.l.b16 %v59
  %v664 = vunpack.c.l.b16 %v60
  %v665 = vunpack.c.l.b16 %v61
  %v666 = vunpack.c.l.b16 %v62
  %v667 = vunpack.c.l.b16 %v63
  %v668 = vunpack.c.l.b16 %v64
  %v669 = vunpack.c.l.b16 %v65
  %v670 = vunpack.c.l.b16 %v66
  %v671 = vunpack.c.l.b16 %v67
  %v672 = vunpack.c.l.b16 %v68
  %v673 = vunpack.c.l.b16 %v69
  %v674 = vunpack.c.l.b16 %v70
  %v675 = vunpack.c.l.b16 %v71
  %v676 = vunpack.c.l.b16 %v72
  %v677 = vunpack.c.l.b16 %v73
  %v678 = vunpack.c.l.b16 %v74
  %v679 = vunpack.c.l.b16 %v75
  %v680 = vunpack.c.l.b16 %v76
  %v681 = vunpack.c.l.b16 %v77
  %v682 = vunpack.c.l.b16 %v78
  %v683 = vunpack.c.l.b16 %v79
  %v684 = vunpack.c.l.b16 %v80
  %v685 = vunpack.c.l.b16 %v81
  %v686 = vunpack.c.l.b16 %v82
  %v687 = vunpack.c.l.b16 %v83
  %v688 = vunpack.c.l.b16 %v84
  %v689 = vunpack.c.l.b16 %v85
  %v690 = vunpack.c.l.b16 %v86
  %v691 = vunpack.c.l.b16 %v87
  %v692 = vunpack.c.l.b16 %v88
  %v693 = vunpack.c.l.b16 %v89
  %v694 = vunpack.c.l.b16 %v90
  %v695 = vunpack.c.l.b16 %v91
  %v696 = vunpack.c.l.b16 %v92
  %v697 = vunpack.c.l.b16 %v93
  %v698 = vunpack.c.l.b16 %v94
  %v699 = vunpack.c.l.b16 %v95
  %v700 = vunpack.c.l.b16 %v96
  %v701 = vunpack.c.l.b16 %v97
  %v702 = vunpack.c.l.b16 %v98
  %v703 = vunpack.c.l.b16 %v99
  %v704 = vunpack.c.l.b16 %v100
  %v705 = vunpack.c.l.b16 %v101
  %v706 = vunpack.c.l.b16 %v102
  %v707 = vunpack.c.l.b16 %v103
  %v708 = vunpack.c.l.b16 %v104
  %v709 = vunpack.c.l.b16 %v105
  %v710 = vunpack.c.l.b16 %v106
  %v711 = vunpack.c.l.b16 %v107
  %v712 = vunpack.c.l.b16 %v108
  %v713 = vunpack.c.l.b16 %v109
  %v714 = vunpack.c.l.b16 %v110
  %v715 = vunpack.c.l.b16 %v111
  %v716 = vunpack.c.l.b16 %v112
  %v717 = vunpack.c.l.b16 %v113
  %v718 = vunpack.c.l.b16 %v114
  %v719 = vunpack.c.l.b16 %v115
  %v720 = vunpack.c.l.b16 %v116
  %v721 = vunpack.c.l.b16 %v117
  %v722 = vunpack.c.l.b16 %v118
  %v723 = vunpack.c.l.b16 %v119
  %v724 = vunpack.c.l.b16 %v120
  %v725 = vunpack.c.l.b16 %v121
  %v726 = vunpack.c.l.b16 %v122
  %v727 = vunpack.c.l.b16 %v123
  %v728 = vunpack.c.l.b16 %v124
  %v729 = vunpack.c.l.b16 %v125
  %v730 = vunpack.c.l.b16 %v126
  %v731 = vunpack.c.l.b16 %v127
  %v732 = vunpack.c.l.b16 %v128
  %v733 = vunpack.c.l.b16 %v129
  %v734 = vunpack.c.l.b16 %v130
  %v735 = vunpack.c.l.b16 %v131
  %v736 = vunpack.c.l.b16 %v132
  %v737 = vunpack.c.l.b16 %v133
  %v738 = vunpack.c.l.b16 %v134
  %v739 = vunpack.c.l.b16 %v135
  %v740 = vunpack.c.l.b16 %v136
  %v741 = vunpack.c.l.b16 %v137
  %v742 = vunpack.c.l.b16 %v138
  %v743 = vunpack.c.l.b16 %v139
  %v744 = vunpack.c.l.b16 %v140
  %v745 = vunpack.c.l.b16 %v141
  %v746 = vunpack.c.l.b16 %v142
  %v747 = vunpack.c.l.b16 %v143
  %v748 = vunpack.c.l.b16 %v144
  %v749 = vunpack.c.l.b16 %v145
  %v750 = vunpack.c.l.b16 %v146
  %v751 = vunpack.c.l.b16 %v147
  %v752 = vunpack.c.l.b16 %v148
  %v753 = vunpack.c.l.b16 %v149
  %v754 = vunpack.c.l.b16 %v150
  %v755 = vunpack.c.l.b16 %v151
  %v756 = vunpack.c.l.b16 %v152
  %v757 = vunpack.c.l.b16 %v153
  %v758 = vunpack.c.l.b16 %v154
  %v759 = vunpack.c.l.b16 %v155
  %v760 = vunpack.c.l.b16 %v156
  %v761 = vunpack.c.l.b16 %v157
  %v762 = vunpack.c.l.b16 %v158
  %v763 = vunpack.c.l.b16 %v159
  %v764 = vunpack.c.l.b16 %v160
  %v765 = vunpack.c.l.b16 %v161
  %v766 = vunpack.c.l.b16 %v162
  %v767 = vunpack.c.l.b16 %v163
  %v768 = vunpack.c.l.b16 %v164
  %v769 = vunpack.c.l.b16 %v165
  %v770 = vunpack.c.l.b16 %v166
  %v771 = vunpack.c.l.b16 %v167
  %v772 = vunpack.c.l.b16 %v168
  %v773 = vunpack.c.l.b16 %v169
  %v774 = vunpack.c.l.b16 %v170
  %v775 = vunpack.c.l.b16 %v171
  %v776 = vunpack.c.l.b16 %v172
  %v777 = vunpack.c.l.b16 %v173
  %v778 = vunpack.c.l.b16 %v174
  %v779 = vunpack.c.l.b16 %v175
  %v780 = vunpack.c.l.b16 %v176
  %v781 = vunpack.c.l.b16 %v177
  %v782 = vunpack.c.l.b16 %v178
  %v783 = vunpack.c.l.b16 %v179
  %v784 = vunpack.c.l.b16 %v180
  %v785 = vunpack.c.l.b16 %v181
  %v786 = vunpack.c.l.b16 %v182
  %v787 = vunpack.c.l.b16 %v183
  %v788 = vunpack.c.l.b16 %v184
  %v789 = vunpack.c.l.b16 %v185
  %v790 = vunpack.c.l.b16 %v186
  %v791 = vunpack.c.l.b16 %v187
  %v792 = vunpack.c.l.b16 %v188
  %v793 = vunpack.c.l.b16 %v189
  %v794 = vunpack.c.l.b16 %v190
  %v795 = vunpack.c.l.b16 %v191
  %v796 = vunpack.c.l.b16 %v192
  %v797 = vunpack.c.l.b16 %v193
  %v798 = vunpack.c.l.b16 %v194
  %v799 = vunpack.c.l.b16 %v195
  %v800 = vunpack.c.l.b16 %v196
  %v801 = vunpack.c.l.b16 %v197
  %v802 = vunpack.c.l.b16 %v198
  %v803 = vunpack.c.l.b16 %v199
  %v804 = vunpack.c.l.b16 %v200
  %v805 = vunpack.c.l.b16 %v201
  %v806 = vunpack.c.l.b16 %v202
  %v807 = vunpack.c.l.b16 %v203
  %v808 = vunpack.c.l.b16 %v204
  %v809 = vunpack.c.l.b16 %v205
  %v810 = vunpack.c.l.b16 %v206
  %v811 = vunpack.c.l.b16 %v207
  %v812 = vunpack.c.l.b16 %v208
  %v813 = vunpack.c.l.b16 %v209
  %v814 = vunpack.c.l.b16 %v210
  %v815 = vunpack.c.l.b16 %v211
  %v816 = vunpack.c.l.b16 %v212
  %v817 = vunpack.c.l.b16 %v213
  %v818 = vunpack.c.l.b16 %v214
  %v819 = vunpack.c.l.b16 %v215
  %v820 = vunpack.c.l.b16 %v216
  %v821 = vunpack.c.l.b16 %v217
  %v822 = vunpack.c.l.b16 %v218
  %v823 = vunpack.c.l.b16 %v219
  %v824 = vunpack.c.l.b16 %v220
  %v825 = vunpack.c.l.b16 %v221
  %v826 = vunpack.c.l.b16 %v222
  %v827 = vunpack.c.l.b16 %v223
  %v828 = vunpack.c.l.b16 %v224
  %v829 = vunpack.c.l.b16 %v225
  %v830 = vunpack.c.l.b16 %v226
  %v831 = vunpack.c.l.b16 %v227
  %v832 = vunpack.c.l.b16 %v228
  %v833 = vunpack.c.l.b16 %v229
  %v834 = vunpack.c.l.b16 %v230
  %v835 = vunpack.c.l.b16 %v231
  %v836 = vunpack.c.l.b16 %v232
  %v837 = vunpack.c.l.b16 %v233
  %v838 = vunpack.c.l.b16 %v234
  %v839 = vunpack.c.l.b16 %v235
  %v840 = vunpack.c.l.b16 %v236
  %v841 = vunpack.c.l.b16 %v237
  %v842 = vunpack.c.l.b16 %v238
  %v843 = vunpack.c.l.b16 %v239
  %v844 = vunpack.c.l.b16 %v240
  %v845 = vunpack.c.l.b16 %v241
  %v846 = vunpack.c.l.b16 %v242
  %v847 = vunpack.c.l.b16 %v243
  %v848 = vunpack.c.l.b16 %v244
  %v849 = vunpack.c.l.b16 %v245
  %v850 = vunpack.c.l.b16 %v246
  %v851 = vunpack.c.l.b16 %v247
  %v852 = vunpack.c.l.b16 %v248
  %v853 = vunpack.c.l.b16 %v249
  %v854 = vunpack.c.l.b16 %v250
  %v855 = vunpack.c.l.b16 %v251
  %v856 = vunpack.c.l.b16 %v252
  %v857 = vunpack.c.l.b16 %v253
  %v858 = vunpack.c.l.b16 %v254
  %v859 = vunpack.c.l.b16 %v255
  %v860 = vunpack.c.l.b16 %v256
  %v861 = vunpack.c.l.b16 %v257
  %v862 = vunpack.c.l.b16 %v258
  %v863 = vunpack.c.l.b16 %v259
  %v864 = vunpack.c.l.b16 %v260
  %v865 = vunpack.c.l.b16 %v261
  %v866 = vunpack.c.l.b16 %v262
  %v867 = vunpack.c.l.b16 %v263
  %v868 = vunpack.c.l.b16 %v264
  %v869 = vunpack.c.l.b16 %v265
  %v870 = vunpack.c.l.b16 %v266
  %v871 = vunpack.c.l.b16 %v267
  %v872 = vunpack.c.l.b16 %v268
  %v873 = vunpack.c.l.b16 %v269
  %v874 = vunpack.c.l.b16 %v270
  %v875 = vunpack.c.l.b16 %v271
  %v876 = vunpack.c.l.b16 %v272
  %v877 = vunpack.c.l.b16 %v273
  %v878 = vunpack.c.l.b16 %v274
  %v879 = vunpack.c.l.b16 %v275
  %v880 = vunpack.c.l.b16 %v276
  %v881 = vunpack.c.l.b16 %v277
  %v882 = vunpack.c.l.b16 %v278
  %v883 = vunpack.c.l.b16 %v279
  %v884 = vunpack.c.l.b16 %v280
  %v885 = vunpack.c.l.b16 %v281
  %v886 = vunpack.c.l.b16 %v282
  %v887 = vunpack.c.l.b16 %v283
  %v888 = vunpack.c.l.b16 %v284
  %v889 = vunpack.c.l.b16 %v285
  %v890 = vunpack.c.l.b16 %v286
  %v891 = vpack.c.b16 %v636, %v635
  %v892 = vpack.c.b16 %v638, %v637
  %v893 = vpack.c.b16 %v640, %v639
  %v894 = vpack.c.b16 %v642, %v641
  %v895 = vpack.c.b16 %v644, %v643
  %v896 = vpack.c.b16 %v646, %v645
  %v897 = vpack.c.b16 %v648, %v647
  %v898 = vpack.c.b16 %v650, %v649
  %v899 = vpack.c.b16 %v652, %v651
  %v900 = vpack.c.b16 %v654, %v653
  %v901 = vpack.c.b16 %v656, %v655
  %v902 = vpack.c.b16 %v658, %v657
  %v903 = vpack.c.b16 %v660, %v659
  %v904 = vpack.c.b16 %v662, %v661
  %v905 = vpack.c.b16 %v664, %v663
  %v906 = vpack.c.b16 %v666, %v665
  %v907 = vpack.c.b16 %v668, %v667
  %v908 = vpack.c.b16 %v670, %v669
  %v909 = vpack.c.b16 %v672, %v671
  %v910 = vpack.c.b16 %v674, %v673
  %v911 = vpack.c.b16 %v676, %v675
  %v912 = vpack.c.b16 %v678, %v677
  %v913 = vpack.c.b16 %v680, %v679
  %v914 = vpack.c.b16 %v682, %v681
  %v915 = vpack.c.b16 %v684, %v683
  %v916 = vpack.c.b16 %v686, %v685
  %v917 = vpack.c.b16 %v688, %v687
  %v918 = vpack.c.b16 %v690, %v689
  %v919 = vpack.c.b16 %v692, %v691
  %v920 = vpack.c.b16 %v694, %v693
  %v921 = vpack.c.b16 %v696, %v695
  %v922 = vpack.c.b16 %v698, %v697
  %v923 = vpack.c.b16 %v700, %v699
  %v924 = vpack.c.b16 %v702, %v701
  %v925 = vpack.c.b16 %v704, %v703
  %v926 = vpack.c.b16 %v706, %v705
  %v927 = vpack.c.b16 %v708, %v707
  %v928 = vpack.c.b16 %v710, %v709
  %v929 = vpack.c.b16 %v712, %v711
  %v930 = vpack.c.b16 %v714, %v713
  %v931 = vpack.c.b16 %v716, %v715
  %v932 = vpack.c.b16 %v718, %v717
  %v933 = vpack.c.b16 %v720, %v719
  %v934 = vpack.c.b16 %v722, %v721
  %v935 = vpack.c.b16 %v724, %v723
  %v936 = vpack.c.b16 %v726, %v725
  %v937 = vpack.c.b16 %v728, %v727
  %v938 = vpack.c.b16 %v730, %v729
  %v939 = vpack.c.b16 %v732, %v731
  %v940 = vpack.c.b16 %v734, %v733
  %v941 = vpack.c.b16 %v736, %v735
  %v942 = vpack.c.b16 %v738, %v737
  %v943 = vpack.c.b16 %v740, %v739
  %v944 = vpack.c.b16 %v742, %v741
  %v945 = vpack.c.b16 %v744, %v743
  %v946 = vpack.c.b16 %v746, %v745
  %v947 = vpack.c.b16 %v748, %v747
  %v948 = vpack.c.b16 %v750, %v749
  %v949 = vpack.c.b16 %v752, %v751
  %v950 = vpack.c.b16 %v754, %v753
  %v951 = vpack.c.b16 %v756, %v755
  %v952 = vpack.c.b16 %v758, %v757
  %v953 = vpack.c.b16 %v760, %v759
  %v954 = vpack.c.b16 %v762, %v761
  %v955 = vpack.c.b16 %v764, %v763
  %v956 = vpack.c.b16 %v766, %v765
  %v957 = vpack.c.b16 %v768, %v767
  %v958 = vpack.c.b16 %v770, %v769
  %v959 = vpack.c.b16 %v772, %v771
  %v960 = vpack.c.b16 %v774, %v773
  %v961 = vpack.c.b16 %v776, %v775
  %v962 = vpack.c.b16 %v778, %v777
  %v963 = vpack.c.b16 %v780, %v779
  %v964 = vpack.c.b16 %v782, %v781
  %v965 = vpack.c.b16 %v784, %v783
  %v966 = vpack.c.b16 %v786, %v785
  %v967 = vpack.c.b16 %v788, %v787
  %v968 = vpack.c.b16 %v790, %v789
  %v969 = vpack.c.b16 %v792, %v791
  %v970 = vpack.c.b16 %v794, %v793
  %v971 = vpack.c.b16 %v796, %v795
  %v972 = vpack.c.b16 %v798, %v797
  %v973 = vpack.c.b16 %v800, %v799
  %v974 = vpack.c.b16 %v802, %v801
  %v975 = vpack.c.b16 %v804, %v803
  %v976 = vpack.c.b16 %v806, %v805
  %v977 = vpack.c.b16 %v808, %v807
  %v978 = vpack.c.b16 %v810, %v809
  %v979 = vpack.c.b16 %v812, %v811
  %v980 = vpack.c.b16 %v814, %v813
  %v981 = vpack.c.b16 %v816, %v815
  %v982 = vpack.c.b16 %v818, %v817
  %v983 = vpack.c.b16 %v820, %v819
  %v984 = vpack.c.b16 %v822, %v821
  %v985 = vpack.c.b16 %v824, %v823
  %v986 = vpack.c.b16 %v826, %v825
  %v987 = vpack.c.b16 %v828, %v827
  %v988 = vpack.c.b16 %v830, %v829
  %v989 = vpack.c.b16 %v832, %v831
  %v990 = vpack.c.b16 %v834, %v833
  %v991 = vpack.c.b16 %v836, %v835
  %v992 = vpack.c.b16 %v838, %v837
  %v993 = vpack.c.b16 %v840, %v839
  %v994 = vpack.c.b16 %v842, %v841
  %v995 = vpack.c.b16 %v844, %v843
  %v996 = vpack.c.b16 %v846, %v845
  %v997 = vpack.c.b16 %v848, %v847
  %v998 = vpack.c.b16 %v850, %v849
  %v999 = vpack.c.b16 %v852, %v851
  %v1000 = vpack.c.b16 %v854, %v853
  %v1001 = vpack.c.b16 %v856, %v855
  %v1002 = vpack.c.b16 %v858, %v857
  %v1003 = vpack.c.b16 %v860, %v859
  %v1004 = vpack.c.b16 %v862, %v861
  %v1005 = vpack.c.b16 %v864, %v863
  %v1006 = vpack.c.b16 %v866, %v865
  %v1007 = vpack.c.b16 %v868, %v867
  %v1008 = vpack.c.b16 %v870, %v869
  %v1009 = vpack.c.b16 %v872, %v871
  %v1010 = vpack.c.b16 %v874, %v873
  %v1011 = vpack.c.b16 %v876, %v875
  %v1012 = vpack.c.b16 %v878, %v877
  %v1013 = vpack.c.b16 %v880, %v879
  %v1014 = vpack.c.b16 %v882, %v881
  %v1015 = vpack.c.b16 %v884, %v883
  %v1016 = vpack.c.b16 %v886, %v885
  %v1017 = vpack.c.b16 %v888, %v887
  %v1018 = vpack.c.b16 %v890, %v889
  %1147 = vmatprep.subr.bf16.mxu0 0
  %1148 = vmatpush1.bf16.msra.mxu0 %v891
  %1149 = vmatprep.subr.bf16.mxu0 0
  %1150 = vmatpush1.bf16.msra.mxu0 %v892
  %1151 = vmatprep.subr.bf16.mxu0 0
  %1152 = vmatpush1.bf16.msra.mxu0 %v893
  %1153 = vmatprep.subr.bf16.mxu0 0
  %1154 = vmatpush1.bf16.msra.mxu0 %v894
  %1155 = vmatprep.subr.bf16.mxu0 0
  %1156 = vmatpush1.bf16.msra.mxu0 %v895
  %1157 = vmatprep.subr.bf16.mxu0 0
  %1158 = vmatpush1.bf16.msra.mxu0 %v896
  %1159 = vmatprep.subr.bf16.mxu0 0
  %1160 = vmatpush1.bf16.msra.mxu0 %v897
  %1161 = vmatprep.subr.bf16.mxu0 0
  %1162 = vmatpush1.bf16.msra.mxu0 %v898
  %1163 = vmatprep.subr.bf16.mxu0 0
  %1164 = vmatpush1.bf16.msra.mxu0 %v899
  %1165 = vmatprep.subr.bf16.mxu0 0
  %1166 = vmatpush1.bf16.msra.mxu0 %v900
  %1167 = vmatprep.subr.bf16.mxu0 0
  %1168 = vmatpush1.bf16.msra.mxu0 %v901
  %1169 = vmatprep.subr.bf16.mxu0 0
  %1170 = vmatpush1.bf16.msra.mxu0 %v902
  %1171 = vmatprep.subr.bf16.mxu0 0
  %1172 = vmatpush1.bf16.msra.mxu0 %v903
  %1173 = vmatprep.subr.bf16.mxu0 0
  %1174 = vmatpush1.bf16.msra.mxu0 %v904
  %1175 = vmatprep.subr.bf16.mxu0 0
  %1176 = vmatpush1.bf16.msra.mxu0 %v905
  %1177 = vmatprep.subr.bf16.mxu0 0
  %1178 = vmatpush1.bf16.msra.mxu0 %v906
  %1179 = vmatprep.mubr.bf16.mxu0 %v348
  %1180 = vmatmul.mubr.bf16.gmra.mrb[0].mxu0 %v347
  %v1181 = vpop.f32.mrb[0].mxu0
  %v1182 = vadd.f32 %v292, %v1181
  %v1183 = vpop.f32.mrb[0].mxu0
  %v1184 = vpop.f32.mrb[0].mxu0
  %v1185 = vadd.f32 %v297, %v1184
  %v1186 = vpop.f32.mrb[0].mxu0
  %1187 = vdwg.mxu0
  %1188 = vmatprep.subr.bf16.mxu0 0
  %1189 = vmatpush1.bf16.msra.mxu0 %v907
  %1190 = vmatprep.subr.bf16.mxu0 0
  %1191 = vmatpush1.bf16.msra.mxu0 %v908
  %1192 = vmatprep.subr.bf16.mxu0 0
  %1193 = vmatpush1.bf16.msra.mxu0 %v909
  %1194 = vmatprep.subr.bf16.mxu0 0
  %1195 = vmatpush1.bf16.msra.mxu0 %v910
  %1196 = vmatprep.subr.bf16.mxu0 0
  %1197 = vmatpush1.bf16.msra.mxu0 %v911
  %1198 = vmatprep.subr.bf16.mxu0 0
  %1199 = vmatpush1.bf16.msra.mxu0 %v912
  %1200 = vmatprep.subr.bf16.mxu0 0
  %1201 = vmatpush1.bf16.msra.mxu0 %v913
  %1202 = vmatprep.subr.bf16.mxu0 0
  %1203 = vmatpush1.bf16.msra.mxu0 %v914
  %1204 = vmatprep.subr.bf16.mxu0 0
  %1205 = vmatpush1.bf16.msra.mxu0 %v915
  %1206 = vmatprep.subr.bf16.mxu0 0
  %1207 = vmatpush1.bf16.msra.mxu0 %v916
  %1208 = vmatprep.subr.bf16.mxu0 0
  %1209 = vmatpush1.bf16.msra.mxu0 %v917
  %1210 = vmatprep.subr.bf16.mxu0 0
  %1211 = vmatpush1.bf16.msra.mxu0 %v918
  %1212 = vmatprep.subr.bf16.mxu0 0
  %1213 = vmatpush1.bf16.msra.mxu0 %v919
  %1214 = vmatprep.subr.bf16.mxu0 0
  %1215 = vmatpush1.bf16.msra.mxu0 %v920
  %1216 = vmatprep.subr.bf16.mxu0 0
  %1217 = vmatpush1.bf16.msra.mxu0 %v921
  %1218 = vmatprep.subr.bf16.mxu0 0
  %1219 = vmatpush1.bf16.msra.mxu0 %v922
  %1220 = vmatprep.mubr.bf16.mxu0 %v350
  %1221 = vmatmul.mubr.bf16.gmra.mrb[0].mxu0 %v349
  %v1222 = vpop.f32.mrb[0].mxu0
  %v1223 = vadd.f32 %v1182, %v1222
  %v1224 = vpop.f32.mrb[0].mxu0
  %v1225 = vpop.f32.mrb[0].mxu0
  %v1226 = vadd.f32 %v1185, %v1225
  %v1227 = vpop.f32.mrb[0].mxu0
  %1228 = vdwg.mxu0
  %1229 = vmatprep.subr.bf16.mxu0 0
  %1230 = vmatpush1.bf16.msra.mxu0 %v923
  %1231 = vmatprep.subr.bf16.mxu0 0
  %1232 = vmatpush1.bf16.msra.mxu0 %v924
  %1233 = vmatprep.subr.bf16.mxu0 0
  %1234 = vmatpush1.bf16.msra.mxu0 %v925
  %1235 = vmatprep.subr.bf16.mxu0 0
  %1236 = vmatpush1.bf16.msra.mxu0 %v926
  %1237 = vmatprep.subr.bf16.mxu0 0
  %1238 = vmatpush1.bf16.msra.mxu0 %v927
  %1239 = vmatprep.subr.bf16.mxu0 0
  %1240 = vmatpush1.bf16.msra.mxu0 %v928
  %1241 = vmatprep.subr.bf16.mxu0 0
  %1242 = vmatpush1.bf16.msra.mxu0 %v929
  %1243 = vmatprep.subr.bf16.mxu0 0
  %1244 = vmatpush1.bf16.msra.mxu0 %v930
  %1245 = vmatprep.subr.bf16.mxu0 0
  %1246 = vmatpush1.bf16.msra.mxu0 %v931
  %1247 = vmatprep.subr.bf16.mxu0 0
  %1248 = vmatpush1.bf16.msra.mxu0 %v932
  %1249 = vmatprep.subr.bf16.mxu0 0
  %1250 = vmatpush1.bf16.msra.mxu0 %v933
  %1251 = vmatprep.subr.bf16.mxu0 0
  %1252 = vmatpush1.bf16.msra.mxu0 %v934
  %1253 = vmatprep.subr.bf16.mxu0 0
  %1254 = vmatpush1.bf16.msra.mxu0 %v935
  %1255 = vmatprep.subr.bf16.mxu0 0
  %1256 = vmatpush1.bf16.msra.mxu0 %v936
  %1257 = vmatprep.subr.bf16.mxu0 0
  %1258 = vmatpush1.bf16.msra.mxu0 %v937
  %1259 = vmatprep.subr.bf16.mxu0 0
  %1260 = vmatpush1.bf16.msra.mxu0 %v938
  %1261 = vmatprep.mubr.bf16.mxu0 %v352
  %1262 = vmatmul.mubr.bf16.gmra.mrb[0].mxu0 %v351
  %v1263 = vpop.f32.mrb[0].mxu0
  %v1264 = vadd.f32 %v1223, %v1263
  %v1265 = vpop.f32.mrb[0].mxu0
  %v1266 = vpop.f32.mrb[0].mxu0
  %v1267 = vadd.f32 %v1226, %v1266
  %v1268 = vpop.f32.mrb[0].mxu0
  %1269 = vdwg.mxu0
  %1270 = vmatprep.subr.bf16.mxu0 0
  %1271 = vmatpush1.bf16.msra.mxu0 %v939
  %1272 = vmatprep.subr.bf16.mxu0 0
  %1273 = vmatpush1.bf16.msra.mxu0 %v940
  %1274 = vmatprep.subr.bf16.mxu0 0
  %1275 = vmatpush1.bf16.msra.mxu0 %v941
  %1276 = vmatprep.subr.bf16.mxu0 0
  %1277 = vmatpush1.bf16.msra.mxu0 %v942
  %1278 = vmatprep.subr.bf16.mxu0 0
  %1279 = vmatpush1.bf16.msra.mxu0 %v943
  %1280 = vmatprep.subr.bf16.mxu0 0
  %1281 = vmatpush1.bf16.msra.mxu0 %v944
  %1282 = vmatprep.subr.bf16.mxu0 0
  %1283 = vmatpush1.bf16.msra.mxu0 %v945
  %1284 = vmatprep.subr.bf16.mxu0 0
  %1285 = vmatpush1.bf16.msra.mxu0 %v946
  %1286 = vmatprep.subr.bf16.mxu0 0
  %1287 = vmatpush1.bf16.msra.mxu0 %v947
  %1288 = vmatprep.subr.bf16.mxu0 0
  %1289 = vmatpush1.bf16.msra.mxu0 %v948
  %1290 = vmatprep.subr.bf16.mxu0 0
  %1291 = vmatpush1.bf16.msra.mxu0 %v949
  %1292 = vmatprep.subr.bf16.mxu0 0
  %1293 = vmatpush1.bf16.msra.mxu0 %v950
  %1294 = vmatprep.subr.bf16.mxu0 0
  %1295 = vmatpush1.bf16.msra.mxu0 %v951
  %1296 = vmatprep.subr.bf16.mxu0 0
  %1297 = vmatpush1.bf16.msra.mxu0 %v952
  %1298 = vmatprep.subr.bf16.mxu0 0
  %1299 = vmatpush1.bf16.msra.mxu0 %v953
  %1300 = vmatprep.subr.bf16.mxu0 0
  %1301 = vmatpush1.bf16.msra.mxu0 %v954
  %1302 = vmatprep.mubr.bf16.mxu0 %v354
  %1303 = vmatmul.mubr.bf16.gmra.mrb[0].mxu0 %v353
  %v1304 = vpop.f32.mrb[0].mxu0
  %v1305 = vadd.f32 %v1264, %v1304
  %v1306 = vpop.f32.mrb[0].mxu0
  %v1307 = vpop.f32.mrb[0].mxu0
  %v1308 = vadd.f32 %v1267, %v1307
  %v1309 = vpop.f32.mrb[0].mxu0
  %1310 = vdwg.mxu0
  %1311 = vmatprep.subr.bf16.mxu0 0
  %1312 = vmatpush1.bf16.msra.mxu0 %v955
  %1313 = vmatprep.subr.bf16.mxu0 0
  %1314 = vmatpush1.bf16.msra.mxu0 %v956
  %1315 = vmatprep.subr.bf16.mxu0 0
  %1316 = vmatpush1.bf16.msra.mxu0 %v957
  %1317 = vmatprep.subr.bf16.mxu0 0
  %1318 = vmatpush1.bf16.msra.mxu0 %v958
  %1319 = vmatprep.subr.bf16.mxu0 0
  %1320 = vmatpush1.bf16.msra.mxu0 %v959
  %1321 = vmatprep.subr.bf16.mxu0 0
  %1322 = vmatpush1.bf16.msra.mxu0 %v960
  %1323 = vmatprep.subr.bf16.mxu0 0
  %1324 = vmatpush1.bf16.msra.mxu0 %v961
  %1325 = vmatprep.subr.bf16.mxu0 0
  %1326 = vmatpush1.bf16.msra.mxu0 %v962
  %1327 = vmatprep.subr.bf16.mxu0 0
  %1328 = vmatpush1.bf16.msra.mxu0 %v963
  %1329 = vmatprep.subr.bf16.mxu0 0
  %1330 = vmatpush1.bf16.msra.mxu0 %v964
  %1331 = vmatprep.subr.bf16.mxu0 0
  %1332 = vmatpush1.bf16.msra.mxu0 %v965
  %1333 = vmatprep.subr.bf16.mxu0 0
  %1334 = vmatpush1.bf16.msra.mxu0 %v966
  %1335 = vmatprep.subr.bf16.mxu0 0
  %1336 = vmatpush1.bf16.msra.mxu0 %v967
  %1337 = vmatprep.subr.bf16.mxu0 0
  %1338 = vmatpush1.bf16.msra.mxu0 %v968
  %1339 = vmatprep.subr.bf16.mxu0 0
  %1340 = vmatpush1.bf16.msra.mxu0 %v969
  %1341 = vmatprep.subr.bf16.mxu0 0
  %1342 = vmatpush1.bf16.msra.mxu0 %v970
  %1343 = vmatprep.mubr.bf16.mxu0 %v356
  %1344 = vmatmul.mubr.bf16.gmra.mrb[0].mxu0 %v355
  %v1345 = vpop.f32.mrb[0].mxu0
  %v1346 = vadd.f32 %v1305, %v1345
  %v1347 = vpop.f32.mrb[0].mxu0
  %v1348 = vpop.f32.mrb[0].mxu0
  %v1349 = vadd.f32 %v1308, %v1348
  %v1350 = vpop.f32.mrb[0].mxu0
  %1351 = vdwg.mxu0
  %1352 = vmatprep.subr.bf16.mxu0 0
  %1353 = vmatpush1.bf16.msra.mxu0 %v971
  %1354 = vmatprep.subr.bf16.mxu0 0
  %1355 = vmatpush1.bf16.msra.mxu0 %v972
  %1356 = vmatprep.subr.bf16.mxu0 0
  %1357 = vmatpush1.bf16.msra.mxu0 %v973
  %1358 = vmatprep.subr.bf16.mxu0 0
  %1359 = vmatpush1.bf16.msra.mxu0 %v974
  %1360 = vmatprep.subr.bf16.mxu0 0
  %1361 = vmatpush1.bf16.msra.mxu0 %v975
  %1362 = vmatprep.subr.bf16.mxu0 0
  %1363 = vmatpush1.bf16.msra.mxu0 %v976
  %1364 = vmatprep.subr.bf16.mxu0 0
  %1365 = vmatpush1.bf16.msra.mxu0 %v977
  %1366 = vmatprep.subr.bf16.mxu0 0
  %1367 = vmatpush1.bf16.msra.mxu0 %v978
  %1368 = vmatprep.subr.bf16.mxu0 0
  %1369 = vmatpush1.bf16.msra.mxu0 %v979
  %1370 = vmatprep.subr.bf16.mxu0 0
  %1371 = vmatpush1.bf16.msra.mxu0 %v980
  %1372 = vmatprep.subr.bf16.mxu0 0
  %1373 = vmatpush1.bf16.msra.mxu0 %v981
  %1374 = vmatprep.subr.bf16.mxu0 0
  %1375 = vmatpush1.bf16.msra.mxu0 %v982
  %1376 = vmatprep.subr.bf16.mxu0 0
  %1377 = vmatpush1.bf16.msra.mxu0 %v983
  %1378 = vmatprep.subr.bf16.mxu0 0
  %1379 = vmatpush1.bf16.msra.mxu0 %v984
  %1380 = vmatprep.subr.bf16.mxu0 0
  %1381 = vmatpush1.bf16.msra.mxu0 %v985
  %1382 = vmatprep.subr.bf16.mxu0 0
  %1383 = vmatpush1.bf16.msra.mxu0 %v986
  %1384 = vmatprep.mubr.bf16.mxu0 %v358
  %1385 = vmatmul.mubr.bf16.gmra.mrb[0].mxu0 %v357
  %v1386 = vpop.f32.mrb[0].mxu0
  %v1387 = vadd.f32 %v1346, %v1386
  %v1388 = vpop.f32.mrb[0].mxu0
  %v1389 = vpop.f32.mrb[0].mxu0
  %v1390 = vadd.f32 %v1349, %v1389
  %v1391 = vpop.f32.mrb[0].mxu0
  %1392 = vdwg.mxu0
  %1393 = vmatprep.subr.bf16.mxu0 0
  %1394 = vmatpush1.bf16.msra.mxu0 %v987
  %1395 = vmatprep.subr.bf16.mxu0 0
  %1396 = vmatpush1.bf16.msra.mxu0 %v988
  %1397 = vmatprep.subr.bf16.mxu0 0
  %1398 = vmatpush1.bf16.msra.mxu0 %v989
  %1399 = vmatprep.subr.bf16.mxu0 0
  %1400 = vmatpush1.bf16.msra.mxu0 %v990
  %1401 = vmatprep.subr.bf16.mxu0 0
  %1402 = vmatpush1.bf16.msra.mxu0 %v991
  %1403 = vmatprep.subr.bf16.mxu0 0
  %1404 = vmatpush1.bf16.msra.mxu0 %v992
  %1405 = vmatprep.subr.bf16.mxu0 0
  %1406 = vmatpush1.bf16.msra.mxu0 %v993
  %1407 = vmatprep.subr.bf16.mxu0 0
  %1408 = vmatpush1.bf16.msra.mxu0 %v994
  %1409 = vmatprep.subr.bf16.mxu0 0
  %1410 = vmatpush1.bf16.msra.mxu0 %v995
  %1411 = vmatprep.subr.bf16.mxu0 0
  %1412 = vmatpush1.bf16.msra.mxu0 %v996
  %1413 = vmatprep.subr.bf16.mxu0 0
  %1414 = vmatpush1.bf16.msra.mxu0 %v997
  %1415 = vmatprep.subr.bf16.mxu0 0
  %1416 = vmatpush1.bf16.msra.mxu0 %v998
  %1417 = vmatprep.subr.bf16.mxu0 0
  %1418 = vmatpush1.bf16.msra.mxu0 %v999
  %1419 = vmatprep.subr.bf16.mxu0 0
  %1420 = vmatpush1.bf16.msra.mxu0 %v1000
  %1421 = vmatprep.subr.bf16.mxu0 0
  %1422 = vmatpush1.bf16.msra.mxu0 %v1001
  %1423 = vmatprep.subr.bf16.mxu0 0
  %1424 = vmatpush1.bf16.msra.mxu0 %v1002
  %1425 = vmatprep.mubr.bf16.mxu0 %v360
  %1426 = vmatmul.mubr.bf16.gmra.mrb[0].mxu0 %v359
  %v1427 = vpop.f32.mrb[0].mxu0
  %v1428 = vadd.f32 %v1387, %v1427
  %v1429 = vpop.f32.mrb[0].mxu0
  %v1430 = vpop.f32.mrb[0].mxu0
  %v1431 = vadd.f32 %v1390, %v1430
  %v1432 = vpop.f32.mrb[0].mxu0
  %1433 = vdwg.mxu0
  %1434 = vmatprep.subr.bf16.mxu0 0
  %1435 = vmatpush1.bf16.msra.mxu0 %v1003
  %1436 = vmatprep.subr.bf16.mxu0 0
  %1437 = vmatpush1.bf16.msra.mxu0 %v1004
  %1438 = vmatprep.subr.bf16.mxu0 0
  %1439 = vmatpush1.bf16.msra.mxu0 %v1005
  %1440 = vmatprep.subr.bf16.mxu0 0
  %1441 = vmatpush1.bf16.msra.mxu0 %v1006
  %1442 = vmatprep.subr.bf16.mxu0 0
  %1443 = vmatpush1.bf16.msra.mxu0 %v1007
  %1444 = vmatprep.subr.bf16.mxu0 0
  %1445 = vmatpush1.bf16.msra.mxu0 %v1008
  %1446 = vmatprep.subr.bf16.mxu0 0
  %1447 = vmatpush1.bf16.msra.mxu0 %v1009
  %1448 = vmatprep.subr.bf16.mxu0 0
  %1449 = vmatpush1.bf16.msra.mxu0 %v1010
  %1450 = vmatprep.subr.bf16.mxu0 0
  %1451 = vmatpush1.bf16.msra.mxu0 %v1011
  %1452 = vmatprep.subr.bf16.mxu0 0
  %1453 = vmatpush1.bf16.msra.mxu0 %v1012
  %1454 = vmatprep.subr.bf16.mxu0 0
  %1455 = vmatpush1.bf16.msra.mxu0 %v1013
  %1456 = vmatprep.subr.bf16.mxu0 0
  %1457 = vmatpush1.bf16.msra.mxu0 %v1014
  %1458 = vmatprep.subr.bf16.mxu0 0
  %1459 = vmatpush1.bf16.msra.mxu0 %v1015
  %1460 = vmatprep.subr.bf16.mxu0 0
  %1461 = vmatpush1.bf16.msra.mxu0 %v1016
  %1462 = vmatprep.subr.bf16.mxu0 0
  %1463 = vmatpush1.bf16.msra.mxu0 %v1017
  %1464 = vmatprep.subr.bf16.mxu0 0
  %1465 = vmatpush1.bf16.msra.mxu0 %v1018
  %1466 = vmatprep.mubr.bf16.mxu0 %v362
  %1467 = vmatmul.mubr.bf16.gmra.mrb[0].mxu0 %v361
  %v1468 = vpop.f32.mrb[0].mxu0
  %v1469 = vadd.f32 %v1428, %v1468
  %v1470 = vpop.f32.mrb[0].mxu0
  %v1471 = vpop.f32.mrb[0].mxu0
  %v1472 = vadd.f32 %v1431, %v1471
  %v1473 = vpop.f32.mrb[0].mxu0
  %1474 = vdwg.mxu0
  %vm1475 = vcmask 15360
  %1476 = vst.msk [vmem:[%s3] sm:$0xff] %vm1475, %v1469
  %1477 = vst.msk [vmem:[%s3 + $0x8] sm:$0xff] %vm1475, %v1472
  // Predicated region
  $region14: #{forward.11} parent=0 // pred_check
    _
  $region15: #{forward.11} parent=0 // pred_check_branch
    %1479 = sbr.rel (0) target = $region17
  $region16: #{forward.11} parent=0 // pred_region
    _
  $region17: #{forward.11} parent=0 // pred_fallthru
    _
  // Predicated region
  $region18: #{forward.11} parent=0 // pred_check
    _
  $region19: #{forward.11} parent=0 // pred_check_branch
    %1481 = sbr.rel (0) target = $region21
  $region20: #{forward.11} parent=0 // pred_region
    _
  $region21: #{forward.11} parent=0 // pred_fallthru
    _

</llo_original>
